<compile_context>
chip_gen: v7x
topology: tpu7x:2x2x1
jax: 0.10.0
libtpu: 0.0.40
codegen_flags: <defaults>
</compile_context>

<pallas_src>
import math
import numpy as np
import jax
import jax.numpy as jnp
from jax.experimental import pallas as pl
from jax.experimental.pallas import tpu as pltpu

_BN_EPS = 1e-5


def _round_up(x, m):
    return ((x + m - 1) // m) * m


def _phase_taps(r, f):
    """Polyphase taps of ConvTranspose2d(kernel=2f, stride=f, pad=f//2).

    For output phase r (0 <= r < f) returns two (offset into the 1-zero-padded
    input, kernel tap index) pairs (derived from k = o + pad - i*f).
    offset 0 / 1 / 2  <->  input index i = h-1 / h / h+1.
    """
    h = f // 2
    if r < h:
        return ((0, r + f + h), (1, r + h))
    return ((1, r + h), (2, r - h))


def _up_w1(f):
    """1-D bilinear kernel of DLA's fill_up_weights (2-D fill = outer(w1, w1))."""
    K = 2 * f
    fk = int(math.ceil(K / 2))
    c = (2 * fk - 1 - fk % 2) / (2.0 * fk)
    return np.array([1.0 - abs(i / fk - c) for i in range(K)], dtype=np.float32)


def _compiler_params():
    kw = dict(dimension_semantics=("parallel",))
    try:
        cap = pltpu.get_tpu_info().vmem_capacity_bytes
        kw["vmem_limit_bytes"] = int(cap * 3 // 4)   # ~48 MiB v7x, ~96 MiB v5e/v6e
    except Exception:
        pass   # fall back to the compiler default scoped-VMEM limit
    return pltpu.CompilerParams(**kw)


# ----------------------------------------------------------------------------
# Fused per-level kernel: proj (3x3 conv + folded mask/BN + ReLU) -> separable
# polyphase bilinear up -> residual add -> node (3x3 conv + folded BN + ReLU).
# Grid is (N,); everything between the HBM input and the HBM output stays in VMEM.
# ----------------------------------------------------------------------------
def _make_level_kernel(Hi, Wi, Cin, Cp, f):
    taps = [_phase_taps(r, f) for r in range(f)]
    HW = Hi * Wi

    def kernel(x_ref, prev_ref, wp_ref, bp_ref, w1_ref, wn_ref, bn_ref, o_ref,
               xpad, ypad, zbuf):
        f32 = jnp.float32

        # ---- zero only the 1-px border strips of the padded scratches: the
        #      interiors are fully overwritten below.  (Cheaper than full-buffer
        #      zeroing; done every step so it is safe if the parallel grid axis
        #      is partitioned across TensorCores with per-core scratch.) ----
        zrow_x = jnp.zeros((1, Wi + 2, Cin), f32)
        zcol_x = jnp.zeros((Hi + 2, 1, Cin), f32)
        xpad[0:1, :, :] = zrow_x
        xpad[Hi + 1:Hi + 2, :, :] = zrow_x
        xpad[:, 0:1, :] = zcol_x
        xpad[:, Wi + 1:Wi + 2, :] = zcol_x

        zrow_y = jnp.zeros((1, Wi + 2, Cp), f32)
        zcol_y = jnp.zeros((Hi + 2, 1, Cp), f32)
        ypad[0:1, :, :] = zrow_y
        ypad[Hi + 1:Hi + 2, :, :] = zrow_y
        ypad[:, 0:1, :] = zcol_y
        ypad[:, Wi + 1:Wi + 2, :] = zcol_y

        zrow_z = jnp.zeros((f * f, 1, Wi + 2, Cp), f32)
        zcol_z = jnp.zeros((f * f, Hi + 2, 1, Cp), f32)
        zbuf[:, 0:1, :, :] = zrow_z
        zbuf[:, Hi + 1:Hi + 2, :, :] = zrow_z
        zbuf[:, :, 0:1, :] = zcol_z
        zbuf[:, :, Wi + 1:Wi + 2, :] = zcol_z

        # ---- proj: 3x3 conv as 9 accumulating MXU matmuls (no im2col concat),
        #      scale (mask*BN) folded into the weights, then + shift, ReLU ----
        xpad[1:Hi + 1, 1:Wi + 1, :] = x_ref[...].astype(f32)
        wp = [wp_ref[k] for k in range(9)]                  # 9 x (Cin, Cp)
        acc = None
        for kh in range(3):
            for kw in range(3):
                tap = xpad[kh:kh + Hi, kw:kw + Wi, :].reshape(HW, Cin)
                d = jnp.dot(tap, wp[kh * 3 + kw], preferred_element_type=f32)
                acc = d if acc is None else acc + d
        y = jnp.maximum(acc + bp_ref[...], 0.0)
        ypad[1:Hi + 1, 1:Wi + 1, :] = y.reshape(Hi, Wi, Cp)

        # ---- grouped ConvTranspose2d (bilinear up) as a SEPARABLE polyphase:
        #      vertical pass (f phases x 2 taps, full padded width so the W
        #      border stays zero for free) then horizontal pass; the residual
        #      `prev` is added in de-interleaved form (free reshape on the
        #      wrapper side) and the result parked phase-major in zbuf. ----
        w1 = [w1_ref[k:k + 1, :] for k in range(2 * f)]     # (1, Cp) rows
        for ry in range(f):
            (dy0, ky0), (dy1, ky1) = taps[ry]
            vrow = (ypad[dy0:dy0 + Hi, :, :] * w1[ky0]
                    + ypad[dy1:dy1 + Hi, :, :] * w1[ky1])   # (Hi, Wi+2, Cp)
            for rx in range(f):
                (dx0, kx0), (dx1, kx1) = taps[rx]
                u_ph = (vrow[:, dx0:dx0 + Wi, :] * w1[kx0]
                        + vrow[:, dx1:dx1 + Wi, :] * w1[kx1])   # (Hi, Wi, Cp)
                res = prev_ref[:, ry:ry + 1, :, rx * Cp:(rx + 1) * Cp]
                res = res.reshape(Hi, Wi, Cp).astype(f32)
                zbuf[ry * f + rx, 1:Hi + 1, 1:Wi + 1, :] = u_ph + res

        # ---- node: 3x3 conv on the (virtually interleaved) residual sum,
        #      evaluated in phase space: per output phase, 9 accumulating
        #      matmuls over shifted windows of the right zbuf phase plane.
        #      Epilogue max(acc + shift, 0); store straight into the
        #      lane-concat output block (free reshape to NHWC outside). ----
        wn = [wn_ref[k] for k in range(9)]                  # 9 x (Cp, Cp)
        bshift = bn_ref[...]
        for ry in range(f):
            for rx in range(f):
                acc = None
                for dh in range(3):
                    qy = ry + dh - 1
                    pry, oh = qy % f, qy // f               # source H-phase, row shift
                    for dw in range(3):
                        qx = rx + dw - 1
                        prx, ow = qx % f, qx // f           # source W-phase, col shift
                        tap = zbuf[pry * f + prx,
                                   1 + oh:1 + oh + Hi,
                                   1 + ow:1 + ow + Wi, :].reshape(HW, Cp)
                        d = jnp.dot(tap, wn[dh * 3 + dw],
                                    preferred_element_type=f32)
                        acc = d if acc is None else acc + d
                out = jnp.maximum(acc + bshift, 0.0).reshape(Hi, 1, Wi, Cp)
                o_ref[:, ry:ry + 1, :, rx * Cp:(rx + 1) * Cp] = \
                    out.astype(o_ref.dtype)

    return kernel


def _ida_level_call(x, prev5, lv, cp):
    N, Hi, Wi, cin_p = x.shape
    f = lv["f"]
    kernel = _make_level_kernel(Hi, Wi, cin_p, cp, f)
    return pl.pallas_call(
        kernel,
        out_shape=jax.ShapeDtypeStruct((N, Hi, f, Wi, f * cp), x.dtype),
        grid=(N,),
        in_specs=[
            pl.BlockSpec((None, Hi, Wi, cin_p), lambda n: (n, 0, 0, 0)),
            pl.BlockSpec((None, Hi, f, Wi, f * cp), lambda n: (n, 0, 0, 0, 0)),
            pl.BlockSpec((9, cin_p, cp), lambda n: (0, 0, 0)),
            pl.BlockSpec((1, cp), lambda n: (0, 0)),
            pl.BlockSpec((2 * f, cp), lambda n: (0, 0)),
            pl.BlockSpec((9, cp, cp), lambda n: (0, 0, 0)),
            pl.BlockSpec((1, cp), lambda n: (0, 0)),
        ],
        out_specs=pl.BlockSpec((None, Hi, f, Wi, f * cp),
                               lambda n: (n, 0, 0, 0, 0)),
        scratch_shapes=[
            pltpu.VMEM((Hi + 2, Wi + 2, cin_p), jnp.float32),   # padded x
            pltpu.VMEM((Hi + 2, Wi + 2, cp), jnp.float32),      # padded proj out
            pltpu.VMEM((f * f, Hi + 2, Wi + 2, cp), jnp.float32),  # phase-major u+prev
        ],
        compiler_params=_compiler_params(),
    )(x, prev5, lv["wproj"], lv["bproj"], lv["w1"], lv["wnode"], lv["bnode"])


# ----------------------------------------------------------------------------
# Deterministic parameter init (mirrors the PyTorch __init__) + BN/mask folding
# ----------------------------------------------------------------------------
def _dcn_raw(key, cin, cout):
    stdv = 1.0 / math.sqrt(cin * 9)
    return dict(
        w=jax.random.uniform(key, (cout, cin, 3, 3), jnp.float32, -stdv, stdv),
        b=jnp.zeros((cout,), jnp.float32),
        gamma=jnp.ones((cout,), jnp.float32),
        beta=jnp.zeros((cout,), jnp.float32),
        rmean=jnp.zeros((cout,), jnp.float32),
        rvar=jnp.ones((cout,), jnp.float32),
    )


def _dcn_fold(raw, cin_pad, cout_pad):
    """Fold deform mask (0.5), bias and eval-BN into the conv weight / a shift."""
    inv = raw["gamma"] / jnp.sqrt(raw["rvar"] + _BN_EPS)
    scale = 0.5 * inv                                   # mask = sigmoid(0) = 0.5
    shift = (raw["b"] - raw["rmean"]) * inv + raw["beta"]
    w = jnp.transpose(raw["w"], (2, 3, 1, 0))           # OIHW -> HWIO
    w = w * scale[None, None, None, :]
    cin, cout = w.shape[2], w.shape[3]
    w = jnp.pad(w, ((0, 0), (0, 0), (0, cin_pad - cin), (0, cout_pad - cout)))
    wtaps = w.reshape(9, cin_pad, cout_pad).astype(jnp.float32)
    shift = jnp.pad(shift, (0, cout_pad - cout)).reshape(1, cout_pad)
    return wtaps, shift.astype(jnp.float32)


def init_ida_up(key, out_channels, in_channels, up_f):
    cp = _round_up(out_channels, 128)                   # lane-dense channel pad
    params = {"out_channels": out_channels, "cp": cp, "levels": {}}
    for i in range(1, len(in_channels)):
        key, kp, kn = jax.random.split(key, 3)
        f = int(up_f[i])
        assert f >= 2 and f % 2 == 0, "polyphase upsample assumes even f >= 2"
        cin = in_channels[i]
        cin_p = _round_up(cin, 128)                     # pad Cin for clean MXU K
        proj_raw = _dcn_raw(kp, cin, out_channels)
        node_raw = _dcn_raw(kn, out_channels, out_channels)
        wproj, bproj = _dcn_fold(proj_raw, cin_p, cp)
        wnode, bnode = _dcn_fold(node_raw, cp, cp)
        w1 = _up_w1(f)
        params["levels"][i] = dict(
            f=f, cin=cin, cin_p=cin_p,
            wproj=wproj, bproj=bproj, wnode=wnode, bnode=bnode,
            w1=jnp.asarray(np.tile(w1[:, None], (1, cp))),
            proj_raw=proj_raw, node_raw=node_raw, w1_raw=w1)
    return params


# ----------------------------------------------------------------------------
# IDAUp.forward
# ----------------------------------------------------------------------------
def ida_up_forward(params, layers, startp, endp):
    """`layers` is a list of NCHW float32 arrays; returns a new list with
    layers[startp+1:endp] replaced (matching the in-place PyTorch semantics)."""
    layers = list(layers)
    C, cp = params["out_channels"], params["cp"]

    prev = jnp.transpose(layers[startp], (0, 2, 3, 1))          # NCHW -> NHWC
    N, H0, W0, c0 = prev.shape
    assert c0 == C
    if cp > C:
        prev = jnp.pad(prev, ((0, 0), (0, 0), (0, 0), (0, cp - C)))

    for i in range(startp + 1, endp):
        lv = params["levels"][i - startp]
        f = lv["f"]
        x = jnp.transpose(layers[i], (0, 2, 3, 1))
        _, Hi, Wi, ci = x.shape
        assert ci == lv["cin"] and Hi * f == H0 and Wi * f == W0
        if lv["cin_p"] > ci:
            x = jnp.pad(x, ((0, 0), (0, 0), (0, 0), (0, lv["cin_p"] - ci)))
        # free reshapes: NHWC <-> (N, Hi, f, Wi, f*cp) lane-concat phase view
        prev5 = prev.reshape(N, Hi, f, Wi, f * cp)
        out5 = _ida_level_call(x, prev5, lv, cp)
        prev = out5.reshape(N, H0, W0, cp)                      # interleaved NHWC
        layers[i] = jnp.transpose(prev[..., :C], (0, 3, 1, 2))  # NHWC -> NCHW
    return layers


# ----------------------------------------------------------------------------
# Pure-JAX reference (built straight from the op definitions) for validation
# ----------------------------------------------------------------------------
def _ref_dcn_nhwc(x, p):
    w = jnp.transpose(p["w"], (2, 3, 1, 0))                     # OIHW -> HWIO
    y = jax.lax.conv_general_dilated(
        x, w, window_strides=(1, 1), padding=((1, 1), (1, 1)),
        dimension_numbers=("NHWC", "HWIO", "NHWC"),
        precision=jax.lax.Precision.HIGHEST)
    y = 0.5 * y + p["b"]
    y = (y - p["rmean"]) / jnp.sqrt(p["rvar"] + _BN_EPS) * p["gamma"] + p["beta"]
    return jnp.maximum(y, 0.0)


def _ref_up_nhwc(y, w1, f):
    # grouped ConvTranspose2d(kernel 2f, stride f, pad f//2), weight = outer(w1, w1)
    N, H, W, C = y.shape
    K, pd = 2 * f, f // 2
    A = np.zeros((H * f, H), np.float32)
    for oy in range(H * f):
        for iy in range(H):
            k = oy + pd - iy * f
            if 0 <= k < K:
                A[oy, iy] = w1[k]
    B = np.zeros((W * f, W), np.float32)
    for ox in range(W * f):
        for ix in range(W):
            k = ox + pd - ix * f
            if 0 <= k < K:
                B[ox, ix] = w1[k]
    return jnp.einsum("ai,nijc,bj->nabc", jnp.asarray(A), y, jnp.asarray(B),
                      precision=jax.lax.Precision.HIGHEST)


def _ref_ida_up(params, layers, startp, endp):
    layers = list(layers)
    for i in range(startp + 1, endp):
        lv = params["levels"][i - startp]
        x = jnp.transpose(layers[i], (0, 2, 3, 1))
        prev = jnp.transpose(layers[i - 1], (0, 2, 3, 1))
        u = _ref_up_nhwc(_ref_dcn_nhwc(x, lv["proj_raw"]), lv["w1_raw"], lv["f"])
        y = _ref_dcn_nhwc(u + prev, lv["node_raw"])
        layers[i] = jnp.transpose(y, (0, 3, 1, 2))
    return layers


# ----------------------------------------------------------------------------
if __name__ == "__main__":
    key = jax.random.PRNGKey(0)

    out_channels = 8
    in_channels = [8, 16, 32]          # in_channels[0] == out_channels (DLA)
    up_f = [1, 2, 4]
    N = 2
    spatial = [16, 8, 4]               # H == W per level

    key, kparam = jax.random.split(key)
    params = init_ida_up(kparam, out_channels, in_channels, up_f)

    layers = []
    for c, s in zip(in_channels, spatial):
        key, kx = jax.random.split(key)
        layers.append(jax.random.normal(kx, (N, c, s, s), jnp.float32))

    out_layers = ida_up_forward(params, layers, 0, len(layers))
    out_layers = jax.block_until_ready(out_layers)

    ref_layers = _ref_ida_up(params, layers, 0, len(layers))
    for i in range(1, len(out_layers)):
        assert out_layers[i].shape == (N, out_channels, spatial[0], spatial[0])
        assert bool(jnp.all(jnp.isfinite(out_layers[i])))
        np.testing.assert_allclose(np.asarray(out_layers[i]),
                                   np.asarray(ref_layers[i]),
                                   rtol=2e-2, atol=2e-2)

    print("KERNEL_OK")
</pallas_src>

<mosaic_0001>
module attributes {stable_mosaic.version = 11 : i64} {
  func.func @kernel(%arg0: i32, %arg1: memref<1x8x8x128xf32, #tpu.memory_space<vmem>>, %arg2: memref<1x8x2x8x256xf32, #tpu.memory_space<vmem>>, %arg3: memref<9x128x128xf32, #tpu.memory_space<vmem>>, %arg4: memref<1x128xf32, #tpu.memory_space<vmem>>, %arg5: memref<4x128xf32, #tpu.memory_space<vmem>>, %arg6: memref<9x128x128xf32, #tpu.memory_space<vmem>>, %arg7: memref<1x128xf32, #tpu.memory_space<vmem>>, %arg8: memref<1x8x2x8x256xf32, #tpu.memory_space<vmem>>, %arg9: memref<10x10x128xf32, #tpu.memory_space<vmem>>, %arg10: memref<10x10x128xf32, #tpu.memory_space<vmem>>, %arg11: memref<4x10x10x128xf32, #tpu.memory_space<vmem>>) attributes {dimension_semantics = [#tpu.dimension_semantics<parallel>], iteration_bounds = array<i64: 2>, scalar_prefetch = 0 : i64, scratch_operands = 3 : i64, tpu.core_type = #tpu.core_type<tc>, window_params = [{transform_indices = @transform_0, window_bounds = array<i64: 1, 8, 8, 128>}, {transform_indices = @transform_1, window_bounds = array<i64: 1, 8, 2, 8, 256>}, {pipeline_mode = #tpu.pipeline_mode<synchronous>, transform_indices = @transform_2, window_bounds = array<i64: 9, 128, 128>}, {pipeline_mode = #tpu.pipeline_mode<synchronous>, transform_indices = @transform_3, window_bounds = array<i64: 1, 128>}, {pipeline_mode = #tpu.pipeline_mode<synchronous>, transform_indices = @transform_4, window_bounds = array<i64: 4, 128>}, {pipeline_mode = #tpu.pipeline_mode<synchronous>, transform_indices = @transform_5, window_bounds = array<i64: 9, 128, 128>}, {pipeline_mode = #tpu.pipeline_mode<synchronous>, transform_indices = @transform_6, window_bounds = array<i64: 1, 128>}, {transform_indices = @transform_7, window_bounds = array<i64: 1, 8, 2, 8, 256>}]} {
    %cst = arith.constant 0.000000e+00 : f32
    %0 = vector.broadcast %cst : f32 to vector<1x10x128xf32>
    %cst_0 = arith.constant 0.000000e+00 : f32
    %1 = vector.broadcast %cst_0 : f32 to vector<10x1x128xf32>
    %c0 = arith.constant 0 : index
    %c0_1 = arith.constant 0 : index
    %c0_2 = arith.constant 0 : index
    %2 = vector.load %arg9[%c0, %c0_1, %c0_2] : memref<10x10x128xf32, #tpu.memory_space<vmem>>, vector<1x10x128xf32>
    tpu.vector_store %arg9[%c0, %c0_1, %c0_2], %0 {strides = array<i32>} : memref<10x10x128xf32, #tpu.memory_space<vmem>>, vector<1x10x128xf32>,
    %c9 = arith.constant 9 : index
    %c0_3 = arith.constant 0 : index
    %c0_4 = arith.constant 0 : index
    %3 = vector.load %arg9[%c9, %c0_3, %c0_4] : memref<10x10x128xf32, #tpu.memory_space<vmem>>, vector<1x10x128xf32>
    tpu.vector_store %arg9[%c9, %c0_3, %c0_4], %0 {strides = array<i32>} : memref<10x10x128xf32, #tpu.memory_space<vmem>>, vector<1x10x128xf32>,
    %c0_5 = arith.constant 0 : index
    %c0_6 = arith.constant 0 : index
    %c0_7 = arith.constant 0 : index
    %4 = vector.load %arg9[%c0_5, %c0_6, %c0_7] : memref<10x10x128xf32, #tpu.memory_space<vmem>>, vector<10x1x128xf32>
    tpu.vector_store %arg9[%c0_5, %c0_6, %c0_7], %1 {strides = array<i32>} : memref<10x10x128xf32, #tpu.memory_space<vmem>>, vector<10x1x128xf32>,
    %c0_8 = arith.constant 0 : index
    %c9_9 = arith.constant 9 : index
    %c0_10 = arith.constant 0 : index
    %5 = vector.load %arg9[%c0_8, %c9_9, %c0_10] : memref<10x10x128xf32, #tpu.memory_space<vmem>>, vector<10x1x128xf32>
    tpu.vector_store %arg9[%c0_8, %c9_9, %c0_10], %1 {strides = array<i32>} : memref<10x10x128xf32, #tpu.memory_space<vmem>>, vector<10x1x128xf32>,
    %cst_11 = arith.constant 0.000000e+00 : f32
    %6 = vector.broadcast %cst_11 : f32 to vector<1x10x128xf32>
    %cst_12 = arith.constant 0.000000e+00 : f32
    %7 = vector.broadcast %cst_12 : f32 to vector<10x1x128xf32>
    %c0_13 = arith.constant 0 : index
    %c0_14 = arith.constant 0 : index
    %c0_15 = arith.constant 0 : index
    %8 = vector.load %arg10[%c0_13, %c0_14, %c0_15] : memref<10x10x128xf32, #tpu.memory_space<vmem>>, vector<1x10x128xf32>
    tpu.vector_store %arg10[%c0_13, %c0_14, %c0_15], %6 {strides = array<i32>} : memref<10x10x128xf32, #tpu.memory_space<vmem>>, vector<1x10x128xf32>,
    %c9_16 = arith.constant 9 : index
    %c0_17 = arith.constant 0 : index
    %c0_18 = arith.constant 0 : index
    %9 = vector.load %arg10[%c9_16, %c0_17, %c0_18] : memref<10x10x128xf32, #tpu.memory_space<vmem>>, vector<1x10x128xf32>
    tpu.vector_store %arg10[%c9_16, %c0_17, %c0_18], %6 {strides = array<i32>} : memref<10x10x128xf32, #tpu.memory_space<vmem>>, vector<1x10x128xf32>,
    %c0_19 = arith.constant 0 : index
    %c0_20 = arith.constant 0 : index
    %c0_21 = arith.constant 0 : index
    %10 = vector.load %arg10[%c0_19, %c0_20, %c0_21] : memref<10x10x128xf32, #tpu.memory_space<vmem>>, vector<10x1x128xf32>
    tpu.vector_store %arg10[%c0_19, %c0_20, %c0_21], %7 {strides = array<i32>} : memref<10x10x128xf32, #tpu.memory_space<vmem>>, vector<10x1x128xf32>,
    %c0_22 = arith.constant 0 : index
    %c9_23 = arith.constant 9 : index
    %c0_24 = arith.constant 0 : index
    %11 = vector.load %arg10[%c0_22, %c9_23, %c0_24] : memref<10x10x128xf32, #tpu.memory_space<vmem>>, vector<10x1x128xf32>
    tpu.vector_store %arg10[%c0_22, %c9_23, %c0_24], %7 {strides = array<i32>} : memref<10x10x128xf32, #tpu.memory_space<vmem>>, vector<10x1x128xf32>,
    %cst_25 = arith.constant 0.000000e+00 : f32
    %12 = vector.broadcast %cst_25 : f32 to vector<4x1x10x128xf32>
    %cst_26 = arith.constant 0.000000e+00 : f32
    %13 = vector.broadcast %cst_26 : f32 to vector<4x10x1x128xf32>
    %c0_27 = arith.constant 0 : index
    %c0_28 = arith.constant 0 : index
    %c0_29 = arith.constant 0 : index
    %c0_30 = arith.constant 0 : index
    %14 = vector.load %arg11[%c0_27, %c0_28, %c0_29, %c0_30] : memref<4x10x10x128xf32, #tpu.memory_space<vmem>>, vector<4x1x10x128xf32>
    tpu.vector_store %arg11[%c0_27, %c0_28, %c0_29, %c0_30], %12 {strides = array<i32>} : memref<4x10x10x128xf32, #tpu.memory_space<vmem>>, vector<4x1x10x128xf32>,
    %c0_31 = arith.constant 0 : index
    %c9_32 = arith.constant 9 : index
    %c0_33 = arith.constant 0 : index
    %c0_34 = arith.constant 0 : index
    %15 = vector.load %arg11[%c0_31, %c9_32, %c0_33, %c0_34] : memref<4x10x10x128xf32, #tpu.memory_space<vmem>>, vector<4x1x10x128xf32>
    tpu.vector_store %arg11[%c0_31, %c9_32, %c0_33, %c0_34], %12 {strides = array<i32>} : memref<4x10x10x128xf32, #tpu.memory_space<vmem>>, vector<4x1x10x128xf32>,
    %c0_35 = arith.constant 0 : index
    %c0_36 = arith.constant 0 : index
    %c0_37 = arith.constant 0 : index
    %c0_38 = arith.constant 0 : index
    %16 = vector.load %arg11[%c0_35, %c0_36, %c0_37, %c0_38] : memref<4x10x10x128xf32, #tpu.memory_space<vmem>>, vector<4x10x1x128xf32>
    tpu.vector_store %arg11[%c0_35, %c0_36, %c0_37, %c0_38], %13 {strides = array<i32>} : memref<4x10x10x128xf32, #tpu.memory_space<vmem>>, vector<4x10x1x128xf32>,
    %c0_39 = arith.constant 0 : index
    %c0_40 = arith.constant 0 : index
    %c9_41 = arith.constant 9 : index
    %c0_42 = arith.constant 0 : index
    %17 = vector.load %arg11[%c0_39, %c0_40, %c9_41, %c0_42] : memref<4x10x10x128xf32, #tpu.memory_space<vmem>>, vector<4x10x1x128xf32>
    tpu.vector_store %arg11[%c0_39, %c0_40, %c9_41, %c0_42], %13 {strides = array<i32>} : memref<4x10x10x128xf32, #tpu.memory_space<vmem>>, vector<4x10x1x128xf32>,
    %c0_43 = arith.constant 0 : index
    %c0_44 = arith.constant 0 : index
    %c0_45 = arith.constant 0 : index
    %c0_46 = arith.constant 0 : index
    %18 = vector.load %arg1[%c0_43, %c0_44, %c0_45, %c0_46] : memref<1x8x8x128xf32, #tpu.memory_space<vmem>>, vector<1x8x8x128xf32>
    %19 = vector.shape_cast %18 : vector<1x8x8x128xf32> to vector<8x8x128xf32>
    %c1 = arith.constant 1 : index
    %c1_47 = arith.constant 1 : index
    %c0_48 = arith.constant 0 : index
    %20 = vector.load %arg9[%c1, %c1_47, %c0_48] : memref<10x10x128xf32, #tpu.memory_space<vmem>>, vector<8x8x128xf32>
    tpu.vector_store %arg9[%c1, %c1_47, %c0_48], %19 {strides = array<i32>} : memref<10x10x128xf32, #tpu.memory_space<vmem>>, vector<8x8x128xf32>,
    %c0_49 = arith.constant 0 : index
    %c0_50 = arith.constant 0 : index
    %c0_51 = arith.constant 0 : index
    %21 = vector.load %arg3[%c0_49, %c0_50, %c0_51] : memref<9x128x128xf32, #tpu.memory_space<vmem>>, vector<1x128x128xf32>
    %22 = vector.shape_cast %21 : vector<1x128x128xf32> to vector<128x128xf32>
    %c1_52 = arith.constant 1 : index
    %c0_53 = arith.constant 0 : index
    %c0_54 = arith.constant 0 : index
    %23 = vector.load %arg3[%c1_52, %c0_53, %c0_54] : memref<9x128x128xf32, #tpu.memory_space<vmem>>, vector<1x128x128xf32>
    %24 = vector.shape_cast %23 : vector<1x128x128xf32> to vector<128x128xf32>
    %c2 = arith.constant 2 : index
    %c0_55 = arith.constant 0 : index
    %c0_56 = arith.constant 0 : index
    %25 = vector.load %arg3[%c2, %c0_55, %c0_56] : memref<9x128x128xf32, #tpu.memory_space<vmem>>, vector<1x128x128xf32>
    %26 = vector.shape_cast %25 : vector<1x128x128xf32> to vector<128x128xf32>
    %c3 = arith.constant 3 : index
    %c0_57 = arith.constant 0 : index
    %c0_58 = arith.constant 0 : index
    %27 = vector.load %arg3[%c3, %c0_57, %c0_58] : memref<9x128x128xf32, #tpu.memory_space<vmem>>, vector<1x128x128xf32>
    %28 = vector.shape_cast %27 : vector<1x128x128xf32> to vector<128x128xf32>
    %c4 = arith.constant 4 : index
    %c0_59 = arith.constant 0 : index
    %c0_60 = arith.constant 0 : index
    %29 = vector.load %arg3[%c4, %c0_59, %c0_60] : memref<9x128x128xf32, #tpu.memory_space<vmem>>, vector<1x128x128xf32>
    %30 = vector.shape_cast %29 : vector<1x128x128xf32> to vector<128x128xf32>
    %c5 = arith.constant 5 : index
    %c0_61 = arith.constant 0 : index
    %c0_62 = arith.constant 0 : index
    %31 = vector.load %arg3[%c5, %c0_61, %c0_62] : memref<9x128x128xf32, #tpu.memory_space<vmem>>, vector<1x128x128xf32>
    %32 = vector.shape_cast %31 : vector<1x128x128xf32> to vector<128x128xf32>
    %c6 = arith.constant 6 : index
    %c0_63 = arith.constant 0 : index
    %c0_64 = arith.constant 0 : index
    %33 = vector.load %arg3[%c6, %c0_63, %c0_64] : memref<9x128x128xf32, #tpu.memory_space<vmem>>, vector<1x128x128xf32>
    %34 = vector.shape_cast %33 : vector<1x128x128xf32> to vector<128x128xf32>
    %c7 = arith.constant 7 : index
    %c0_65 = arith.constant 0 : index
    %c0_66 = arith.constant 0 : index
    %35 = vector.load %arg3[%c7, %c0_65, %c0_66] : memref<9x128x128xf32, #tpu.memory_space<vmem>>, vector<1x128x128xf32>
    %36 = vector.shape_cast %35 : vector<1x128x128xf32> to vector<128x128xf32>
    %c8 = arith.constant 8 : index
    %c0_67 = arith.constant 0 : index
    %c0_68 = arith.constant 0 : index
    %37 = vector.load %arg3[%c8, %c0_67, %c0_68] : memref<9x128x128xf32, #tpu.memory_space<vmem>>, vector<1x128x128xf32>
    %38 = vector.shape_cast %37 : vector<1x128x128xf32> to vector<128x128xf32>
    %c0_69 = arith.constant 0 : index
    %c0_70 = arith.constant 0 : index
    %c0_71 = arith.constant 0 : index
    %39 = vector.load %arg9[%c0_69, %c0_70, %c0_71] : memref<10x10x128xf32, #tpu.memory_space<vmem>>, vector<8x8x128xf32>
    %40 = vector.shape_cast %39 : vector<8x8x128xf32> to vector<64x128xf32>
    %cst_72 = arith.constant dense<0.000000e+00> : vector<64x128xf32>
    %41 = tpu.matmul %40, %22, %cst_72 {dimension_numbers = #tpu.dot_dimension_numbers<[1], [0], [0], [1], [0, 0, 1, 1], [], []>} : vector<64x128xf32>, vector<128x128xf32>, vector<64x128xf32> -> vector<64x128xf32>
    %c0_73 = arith.constant 0 : index
    %c1_74 = arith.constant 1 : index
    %c0_75 = arith.constant 0 : index
    %42 = vector.load %arg9[%c0_73, %c1_74, %c0_75] : memref<10x10x128xf32, #tpu.memory_space<vmem>>, vector<8x8x128xf32>
    %43 = vector.shape_cast %42 : vector<8x8x128xf32> to vector<64x128xf32>
    %cst_76 = arith.constant dense<0.000000e+00> : vector<64x128xf32>
    %44 = tpu.matmul %43, %24, %cst_76 {dimension_numbers = #tpu.dot_dimension_numbers<[1], [0], [0], [1], [0, 0, 1, 1], [], []>} : vector<64x128xf32>, vector<128x128xf32>, vector<64x128xf32> -> vector<64x128xf32>
    %45 = arith.addf %41, %44 : vector<64x128xf32>
    %c0_77 = arith.constant 0 : index
    %c2_78 = arith.constant 2 : index
    %c0_79 = arith.constant 0 : index
    %46 = vector.load %arg9[%c0_77, %c2_78, %c0_79] : memref<10x10x128xf32, #tpu.memory_space<vmem>>, vector<8x8x128xf32>
    %47 = vector.shape_cast %46 : vector<8x8x128xf32> to vector<64x128xf32>
    %cst_80 = arith.constant dense<0.000000e+00> : vector<64x128xf32>
    %48 = tpu.matmul %47, %26, %cst_80 {dimension_numbers = #tpu.dot_dimension_numbers<[1], [0], [0], [1], [0, 0, 1, 1], [], []>} : vector<64x128xf32>, vector<128x128xf32>, vector<64x128xf32> -> vector<64x128xf32>
    %49 = arith.addf %45, %48 : vector<64x128xf32>
    %c1_81 = arith.constant 1 : index
    %c0_82 = arith.constant 0 : index
    %c0_83 = arith.constant 0 : index
    %50 = vector.load %arg9[%c1_81, %c0_82, %c0_83] : memref<10x10x128xf32, #tpu.memory_space<vmem>>, vector<8x8x128xf32>
    %51 = vector.shape_cast %50 : vector<8x8x128xf32> to vector<64x128xf32>
    %cst_84 = arith.constant dense<0.000000e+00> : vector<64x128xf32>
    %52 = tpu.matmul %51, %28, %cst_84 {dimension_numbers = #tpu.dot_dimension_numbers<[1], [0], [0], [1], [0, 0, 1, 1], [], []>} : vector<64x128xf32>, vector<128x128xf32>, vector<64x128xf32> -> vector<64x128xf32>
    %53 = arith.addf %49, %52 : vector<64x128xf32>
    %c1_85 = arith.constant 1 : index
    %c1_86 = arith.constant 1 : index
    %c0_87 = arith.constant 0 : index
    %54 = vector.load %arg9[%c1_85, %c1_86, %c0_87] : memref<10x10x128xf32, #tpu.memory_space<vmem>>, vector<8x8x128xf32>
    %55 = vector.shape_cast %54 : vector<8x8x128xf32> to vector<64x128xf32>
    %cst_88 = arith.constant dense<0.000000e+00> : vector<64x128xf32>
    %56 = tpu.matmul %55, %30, %cst_88 {dimension_numbers = #tpu.dot_dimension_numbers<[1], [0], [0], [1], [0, 0, 1, 1], [], []>} : vector<64x128xf32>, vector<128x128xf32>, vector<64x128xf32> -> vector<64x128xf32>
    %57 = arith.addf %53, %56 : vector<64x128xf32>
    %c1_89 = arith.constant 1 : index
    %c2_90 = arith.constant 2 : index
    %c0_91 = arith.constant 0 : index
    %58 = vector.load %arg9[%c1_89, %c2_90, %c0_91] : memref<10x10x128xf32, #tpu.memory_space<vmem>>, vector<8x8x128xf32>
    %59 = vector.shape_cast %58 : vector<8x8x128xf32> to vector<64x128xf32>
    %cst_92 = arith.constant dense<0.000000e+00> : vector<64x128xf32>
    %60 = tpu.matmul %59, %32, %cst_92 {dimension_numbers = #tpu.dot_dimension_numbers<[1], [0], [0], [1], [0, 0, 1, 1], [], []>} : vector<64x128xf32>, vector<128x128xf32>, vector<64x128xf32> -> vector<64x128xf32>
    %61 = arith.addf %57, %60 : vector<64x128xf32>
    %c2_93 = arith.constant 2 : index
    %c0_94 = arith.constant 0 : index
    %c0_95 = arith.constant 0 : index
    %62 = vector.load %arg9[%c2_93, %c0_94, %c0_95] : memref<10x10x128xf32, #tpu.memory_space<vmem>>, vector<8x8x128xf32>
    %63 = vector.shape_cast %62 : vector<8x8x128xf32> to vector<64x128xf32>
    %cst_96 = arith.constant dense<0.000000e+00> : vector<64x128xf32>
    %64 = tpu.matmul %63, %34, %cst_96 {dimension_numbers = #tpu.dot_dimension_numbers<[1], [0], [0], [1], [0, 0, 1, 1], [], []>} : vector<64x128xf32>, vector<128x128xf32>, vector<64x128xf32> -> vector<64x128xf32>
    %65 = arith.addf %61, %64 : vector<64x128xf32>
    %c2_97 = arith.constant 2 : index
    %c1_98 = arith.constant 1 : index
    %c0_99 = arith.constant 0 : index
    %66 = vector.load %arg9[%c2_97, %c1_98, %c0_99] : memref<10x10x128xf32, #tpu.memory_space<vmem>>, vector<8x8x128xf32>
    %67 = vector.shape_cast %66 : vector<8x8x128xf32> to vector<64x128xf32>
    %cst_100 = arith.constant dense<0.000000e+00> : vector<64x128xf32>
    %68 = tpu.matmul %67, %36, %cst_100 {dimension_numbers = #tpu.dot_dimension_numbers<[1], [0], [0], [1], [0, 0, 1, 1], [], []>} : vector<64x128xf32>, vector<128x128xf32>, vector<64x128xf32> -> vector<64x128xf32>
    %69 = arith.addf %65, %68 : vector<64x128xf32>
    %c2_101 = arith.constant 2 : index
    %c2_102 = arith.constant 2 : index
    %c0_103 = arith.constant 0 : index
    %70 = vector.load %arg9[%c2_101, %c2_102, %c0_103] : memref<10x10x128xf32, #tpu.memory_space<vmem>>, vector<8x8x128xf32>
    %71 = vector.shape_cast %70 : vector<8x8x128xf32> to vector<64x128xf32>
    %cst_104 = arith.constant dense<0.000000e+00> : vector<64x128xf32>
    %72 = tpu.matmul %71, %38, %cst_104 {dimension_numbers = #tpu.dot_dimension_numbers<[1], [0], [0], [1], [0, 0, 1, 1], [], []>} : vector<64x128xf32>, vector<128x128xf32>, vector<64x128xf32> -> vector<64x128xf32>
    %73 = arith.addf %69, %72 : vector<64x128xf32>
    %c0_105 = arith.constant 0 : index
    %c0_106 = arith.constant 0 : index
    %74 = vector.load %arg4[%c0_105, %c0_106] : memref<1x128xf32, #tpu.memory_space<vmem>>, vector<1x128xf32>
    %75 = vector.broadcast %74 : vector<1x128xf32> to vector<64x128xf32>
    %76 = arith.addf %73, %75 : vector<64x128xf32>
    %cst_107 = arith.constant 0.000000e+00 : f32
    %77 = vector.broadcast %cst_107 : f32 to vector<64x128xf32>
    %78 = arith.maximumf %76, %77 : vector<64x128xf32>
    %79 = vector.shape_cast %78 : vector<64x128xf32> to vector<8x8x128xf32>
    %c1_108 = arith.constant 1 : index
    %c1_109 = arith.constant 1 : index
    %c0_110 = arith.constant 0 : index
    %80 = vector.load %arg10[%c1_108, %c1_109, %c0_110] : memref<10x10x128xf32, #tpu.memory_space<vmem>>, vector<8x8x128xf32>
    tpu.vector_store %arg10[%c1_108, %c1_109, %c0_110], %79 {strides = array<i32>} : memref<10x10x128xf32, #tpu.memory_space<vmem>>, vector<8x8x128xf32>,
    %c0_111 = arith.constant 0 : index
    %c0_112 = arith.constant 0 : index
    %81 = vector.load %arg5[%c0_111, %c0_112] : memref<4x128xf32, #tpu.memory_space<vmem>>, vector<1x128xf32>
    %c1_113 = arith.constant 1 : index
    %c0_114 = arith.constant 0 : index
    %82 = vector.load %arg5[%c1_113, %c0_114] : memref<4x128xf32, #tpu.memory_space<vmem>>, vector<1x128xf32>
    %c2_115 = arith.constant 2 : index
    %c0_116 = arith.constant 0 : index
    %83 = vector.load %arg5[%c2_115, %c0_116] : memref<4x128xf32, #tpu.memory_space<vmem>>, vector<1x128xf32>
    %c3_117 = arith.constant 3 : index
    %c0_118 = arith.constant 0 : index
    %84 = vector.load %arg5[%c3_117, %c0_118] : memref<4x128xf32, #tpu.memory_space<vmem>>, vector<1x128xf32>
    %c0_119 = arith.constant 0 : index
    %c0_120 = arith.constant 0 : index
    %c0_121 = arith.constant 0 : index
    %85 = vector.load %arg10[%c0_119, %c0_120, %c0_121] : memref<10x10x128xf32, #tpu.memory_space<vmem>>, vector<8x10x128xf32>
    %86 = vector.shape_cast %84 : vector<1x128xf32> to vector<1x1x128xf32>
    %87 = vector.broadcast %86 : vector<1x1x128xf32> to vector<8x10x128xf32>
    %88 = arith.mulf %85, %87 : vector<8x10x128xf32>
    %c1_122 = arith.constant 1 : index
    %c0_123 = arith.constant 0 : index
    %c0_124 = arith.constant 0 : index
    %89 = vector.load %arg10[%c1_122, %c0_123, %c0_124] : memref<10x10x128xf32, #tpu.memory_space<vmem>>, vector<8x10x128xf32>
    %90 = vector.shape_cast %82 : vector<1x128xf32> to vector<1x1x128xf32>
    %91 = vector.broadcast %90 : vector<1x1x128xf32> to vector<8x10x128xf32>
    %92 = arith.mulf %89, %91 : vector<8x10x128xf32>
    %93 = arith.addf %88, %92 : vector<8x10x128xf32>
    %94 = vector.extract_strided_slice %93 {offsets = [0, 0, 0], sizes = [8, 8, 128], strides = [1, 1, 1]} : vector<8x10x128xf32> to vector<8x8x128xf32>
    %95 = vector.shape_cast %84 : vector<1x128xf32> to vector<1x1x128xf32>
    %96 = vector.broadcast %95 : vector<1x1x128xf32> to vector<8x8x128xf32>
    %97 = arith.mulf %94, %96 : vector<8x8x128xf32>
    %98 = vector.extract_strided_slice %93 {offsets = [0, 1, 0], sizes = [8, 8, 128], strides = [1, 1, 1]} : vector<8x10x128xf32> to vector<8x8x128xf32>
    %99 = vector.shape_cast %82 : vector<1x128xf32> to vector<1x1x128xf32>
    %100 = vector.broadcast %99 : vector<1x1x128xf32> to vector<8x8x128xf32>
    %101 = arith.mulf %98, %100 : vector<8x8x128xf32>
    %102 = arith.addf %97, %101 : vector<8x8x128xf32>
    %c0_125 = arith.constant 0 : index
    %c0_126 = arith.constant 0 : index
    %c0_127 = arith.constant 0 : index
    %c0_128 = arith.constant 0 : index
    %c0_129 = arith.constant 0 : index
    %103 = vector.load %arg2[%c0_125, %c0_126, %c0_127, %c0_128, %c0_129] : memref<1x8x2x8x256xf32, #tpu.memory_space<vmem>>, vector<1x8x1x8x128xf32>
    %104 = vector.shape_cast %103 : vector<1x8x1x8x128xf32> to vector<8x1x8x128xf32>
    %105 = vector.shape_cast %104 : vector<8x1x8x128xf32> to vector<8x8x128xf32>
    %106 = arith.addf %102, %105 : vector<8x8x128xf32>
    %c0_130 = arith.constant 0 : index
    %c1_131 = arith.constant 1 : index
    %c1_132 = arith.constant 1 : index
    %c0_133 = arith.constant 0 : index
    %107 = vector.load %arg11[%c0_130, %c1_131, %c1_132, %c0_133] : memref<4x10x10x128xf32, #tpu.memory_space<vmem>>, vector<1x8x8x128xf32>
    %108 = vector.shape_cast %107 : vector<1x8x8x128xf32> to vector<8x8x128xf32>
    %109 = vector.shape_cast %106 : vector<8x8x128xf32> to vector<1x8x8x128xf32>
    tpu.vector_store %arg11[%c0_130, %c1_131, %c1_132, %c0_133], %109 {strides = array<i32>} : memref<4x10x10x128xf32, #tpu.memory_space<vmem>>, vector<1x8x8x128xf32>,
    %110 = vector.extract_strided_slice %93 {offsets = [0, 1, 0], sizes = [8, 8, 128], strides = [1, 1, 1]} : vector<8x10x128xf32> to vector<8x8x128xf32>
    %111 = vector.shape_cast %83 : vector<1x128xf32> to vector<1x1x128xf32>
    %112 = vector.broadcast %111 : vector<1x1x128xf32> to vector<8x8x128xf32>
    %113 = arith.mulf %110, %112 : vector<8x8x128xf32>
    %114 = vector.extract_strided_slice %93 {offsets = [0, 2, 0], sizes = [8, 8, 128], strides = [1, 1, 1]} : vector<8x10x128xf32> to vector<8x8x128xf32>
    %115 = vector.shape_cast %81 : vector<1x128xf32> to vector<1x1x128xf32>
    %116 = vector.broadcast %115 : vector<1x1x128xf32> to vector<8x8x128xf32>
    %117 = arith.mulf %114, %116 : vector<8x8x128xf32>
    %118 = arith.addf %113, %117 : vector<8x8x128xf32>
    %c0_134 = arith.constant 0 : index
    %c0_135 = arith.constant 0 : index
    %c0_136 = arith.constant 0 : index
    %c0_137 = arith.constant 0 : index
    %c128 = arith.constant 128 : index
    %119 = vector.load %arg2[%c0_134, %c0_135, %c0_136, %c0_137, %c128] : memref<1x8x2x8x256xf32, #tpu.memory_space<vmem>>, vector<1x8x1x8x128xf32>
    %120 = vector.shape_cast %119 : vector<1x8x1x8x128xf32> to vector<8x1x8x128xf32>
    %121 = vector.shape_cast %120 : vector<8x1x8x128xf32> to vector<8x8x128xf32>
    %122 = arith.addf %118, %121 : vector<8x8x128xf32>
    %c1_138 = arith.constant 1 : index
    %c1_139 = arith.constant 1 : index
    %c1_140 = arith.constant 1 : index
    %c0_141 = arith.constant 0 : index
    %123 = vector.load %arg11[%c1_138, %c1_139, %c1_140, %c0_141] : memref<4x10x10x128xf32, #tpu.memory_space<vmem>>, vector<1x8x8x128xf32>
    %124 = vector.shape_cast %123 : vector<1x8x8x128xf32> to vector<8x8x128xf32>
    %125 = vector.shape_cast %122 : vector<8x8x128xf32> to vector<1x8x8x128xf32>
    tpu.vector_store %arg11[%c1_138, %c1_139, %c1_140, %c0_141], %125 {strides = array<i32>} : memref<4x10x10x128xf32, #tpu.memory_space<vmem>>, vector<1x8x8x128xf32>,
    %c1_142 = arith.constant 1 : index
    %c0_143 = arith.constant 0 : index
    %c0_144 = arith.constant 0 : index
    %126 = vector.load %arg10[%c1_142, %c0_143, %c0_144] : memref<10x10x128xf32, #tpu.memory_space<vmem>>, vector<8x10x128xf32>
    %127 = vector.shape_cast %83 : vector<1x128xf32> to vector<1x1x128xf32>
    %128 = vector.broadcast %127 : vector<1x1x128xf32> to vector<8x10x128xf32>
    %129 = arith.mulf %126, %128 : vector<8x10x128xf32>
    %c2_145 = arith.constant 2 : index
    %c0_146 = arith.constant 0 : index
    %c0_147 = arith.constant 0 : index
    %130 = vector.load %arg10[%c2_145, %c0_146, %c0_147] : memref<10x10x128xf32, #tpu.memory_space<vmem>>, vector<8x10x128xf32>
    %131 = vector.shape_cast %81 : vector<1x128xf32> to vector<1x1x128xf32>
    %132 = vector.broadcast %131 : vector<1x1x128xf32> to vector<8x10x128xf32>
    %133 = arith.mulf %130, %132 : vector<8x10x128xf32>
    %134 = arith.addf %129, %133 : vector<8x10x128xf32>
    %135 = vector.extract_strided_slice %134 {offsets = [0, 0, 0], sizes = [8, 8, 128], strides = [1, 1, 1]} : vector<8x10x128xf32> to vector<8x8x128xf32>
    %136 = vector.shape_cast %84 : vector<1x128xf32> to vector<1x1x128xf32>
    %137 = vector.broadcast %136 : vector<1x1x128xf32> to vector<8x8x128xf32>
    %138 = arith.mulf %135, %137 : vector<8x8x128xf32>
    %139 = vector.extract_strided_slice %134 {offsets = [0, 1, 0], sizes = [8, 8, 128], strides = [1, 1, 1]} : vector<8x10x128xf32> to vector<8x8x128xf32>
    %140 = vector.shape_cast %82 : vector<1x128xf32> to vector<1x1x128xf32>
    %141 = vector.broadcast %140 : vector<1x1x128xf32> to vector<8x8x128xf32>
    %142 = arith.mulf %139, %141 : vector<8x8x128xf32>
    %143 = arith.addf %138, %142 : vector<8x8x128xf32>
    %c0_148 = arith.constant 0 : index
    %c0_149 = arith.constant 0 : index
    %c1_150 = arith.constant 1 : index
    %c0_151 = arith.constant 0 : index
    %c0_152 = arith.constant 0 : index
    %144 = vector.load %arg2[%c0_148, %c0_149, %c1_150, %c0_151, %c0_152] : memref<1x8x2x8x256xf32, #tpu.memory_space<vmem>>, vector<1x8x1x8x128xf32>
    %145 = vector.shape_cast %144 : vector<1x8x1x8x128xf32> to vector<8x1x8x128xf32>
    %146 = vector.shape_cast %145 : vector<8x1x8x128xf32> to vector<8x8x128xf32>
    %147 = arith.addf %143, %146 : vector<8x8x128xf32>
    %c2_153 = arith.constant 2 : index
    %c1_154 = arith.constant 1 : index
    %c1_155 = arith.constant 1 : index
    %c0_156 = arith.constant 0 : index
    %148 = vector.load %arg11[%c2_153, %c1_154, %c1_155, %c0_156] : memref<4x10x10x128xf32, #tpu.memory_space<vmem>>, vector<1x8x8x128xf32>
    %149 = vector.shape_cast %148 : vector<1x8x8x128xf32> to vector<8x8x128xf32>
    %150 = vector.shape_cast %147 : vector<8x8x128xf32> to vector<1x8x8x128xf32>
    tpu.vector_store %arg11[%c2_153, %c1_154, %c1_155, %c0_156], %150 {strides = array<i32>} : memref<4x10x10x128xf32, #tpu.memory_space<vmem>>, vector<1x8x8x128xf32>,
    %151 = vector.extract_strided_slice %134 {offsets = [0, 1, 0], sizes = [8, 8, 128], strides = [1, 1, 1]} : vector<8x10x128xf32> to vector<8x8x128xf32>
    %152 = vector.shape_cast %83 : vector<1x128xf32> to vector<1x1x128xf32>
    %153 = vector.broadcast %152 : vector<1x1x128xf32> to vector<8x8x128xf32>
    %154 = arith.mulf %151, %153 : vector<8x8x128xf32>
    %155 = vector.extract_strided_slice %134 {offsets = [0, 2, 0], sizes = [8, 8, 128], strides = [1, 1, 1]} : vector<8x10x128xf32> to vector<8x8x128xf32>
    %156 = vector.shape_cast %81 : vector<1x128xf32> to vector<1x1x128xf32>
    %157 = vector.broadcast %156 : vector<1x1x128xf32> to vector<8x8x128xf32>
    %158 = arith.mulf %155, %157 : vector<8x8x128xf32>
    %159 = arith.addf %154, %158 : vector<8x8x128xf32>
    %c0_157 = arith.constant 0 : index
    %c0_158 = arith.constant 0 : index
    %c1_159 = arith.constant 1 : index
    %c0_160 = arith.constant 0 : index
    %c128_161 = arith.constant 128 : index
    %160 = vector.load %arg2[%c0_157, %c0_158, %c1_159, %c0_160, %c128_161] : memref<1x8x2x8x256xf32, #tpu.memory_space<vmem>>, vector<1x8x1x8x128xf32>
    %161 = vector.shape_cast %160 : vector<1x8x1x8x128xf32> to vector<8x1x8x128xf32>
    %162 = vector.shape_cast %161 : vector<8x1x8x128xf32> to vector<8x8x128xf32>
    %163 = arith.addf %159, %162 : vector<8x8x128xf32>
    %c3_162 = arith.constant 3 : index
    %c1_163 = arith.constant 1 : index
    %c1_164 = arith.constant 1 : index
    %c0_165 = arith.constant 0 : index
    %164 = vector.load %arg11[%c3_162, %c1_163, %c1_164, %c0_165] : memref<4x10x10x128xf32, #tpu.memory_space<vmem>>, vector<1x8x8x128xf32>
    %165 = vector.shape_cast %164 : vector<1x8x8x128xf32> to vector<8x8x128xf32>
    %166 = vector.shape_cast %163 : vector<8x8x128xf32> to vector<1x8x8x128xf32>
    tpu.vector_store %arg11[%c3_162, %c1_163, %c1_164, %c0_165], %166 {strides = array<i32>} : memref<4x10x10x128xf32, #tpu.memory_space<vmem>>, vector<1x8x8x128xf32>,
    %c0_166 = arith.constant 0 : index
    %c0_167 = arith.constant 0 : index
    %c0_168 = arith.constant 0 : index
    %167 = vector.load %arg6[%c0_166, %c0_167, %c0_168] : memref<9x128x128xf32, #tpu.memory_space<vmem>>, vector<1x128x128xf32>
    %168 = vector.shape_cast %167 : vector<1x128x128xf32> to vector<128x128xf32>
    %c1_169 = arith.constant 1 : index
    %c0_170 = arith.constant 0 : index
    %c0_171 = arith.constant 0 : index
    %169 = vector.load %arg6[%c1_169, %c0_170, %c0_171] : memref<9x128x128xf32, #tpu.memory_space<vmem>>, vector<1x128x128xf32>
    %170 = vector.shape_cast %169 : vector<1x128x128xf32> to vector<128x128xf32>
    %c2_172 = arith.constant 2 : index
    %c0_173 = arith.constant 0 : index
    %c0_174 = arith.constant 0 : index
    %171 = vector.load %arg6[%c2_172, %c0_173, %c0_174] : memref<9x128x128xf32, #tpu.memory_space<vmem>>, vector<1x128x128xf32>
    %172 = vector.shape_cast %171 : vector<1x128x128xf32> to vector<128x128xf32>
    %c3_175 = arith.constant 3 : index
    %c0_176 = arith.constant 0 : index
    %c0_177 = arith.constant 0 : index
    %173 = vector.load %arg6[%c3_175, %c0_176, %c0_177] : memref<9x128x128xf32, #tpu.memory_space<vmem>>, vector<1x128x128xf32>
    %174 = vector.shape_cast %173 : vector<1x128x128xf32> to vector<128x128xf32>
    %c4_178 = arith.constant 4 : index
    %c0_179 = arith.constant 0 : index
    %c0_180 = arith.constant 0 : index
    %175 = vector.load %arg6[%c4_178, %c0_179, %c0_180] : memref<9x128x128xf32, #tpu.memory_space<vmem>>, vector<1x128x128xf32>
    %176 = vector.shape_cast %175 : vector<1x128x128xf32> to vector<128x128xf32>
    %c5_181 = arith.constant 5 : index
    %c0_182 = arith.constant 0 : index
    %c0_183 = arith.constant 0 : index
    %177 = vector.load %arg6[%c5_181, %c0_182, %c0_183] : memref<9x128x128xf32, #tpu.memory_space<vmem>>, vector<1x128x128xf32>
    %178 = vector.shape_cast %177 : vector<1x128x128xf32> to vector<128x128xf32>
    %c6_184 = arith.constant 6 : index
    %c0_185 = arith.constant 0 : index
    %c0_186 = arith.constant 0 : index
    %179 = vector.load %arg6[%c6_184, %c0_185, %c0_186] : memref<9x128x128xf32, #tpu.memory_space<vmem>>, vector<1x128x128xf32>
    %180 = vector.shape_cast %179 : vector<1x128x128xf32> to vector<128x128xf32>
    %c7_187 = arith.constant 7 : index
    %c0_188 = arith.constant 0 : index
    %c0_189 = arith.constant 0 : index
    %181 = vector.load %arg6[%c7_187, %c0_188, %c0_189] : memref<9x128x128xf32, #tpu.memory_space<vmem>>, vector<1x128x128xf32>
    %182 = vector.shape_cast %181 : vector<1x128x128xf32> to vector<128x128xf32>
    %c8_190 = arith.constant 8 : index
    %c0_191 = arith.constant 0 : index
    %c0_192 = arith.constant 0 : index
    %183 = vector.load %arg6[%c8_190, %c0_191, %c0_192] : memref<9x128x128xf32, #tpu.memory_space<vmem>>, vector<1x128x128xf32>
    %184 = vector.shape_cast %183 : vector<1x128x128xf32> to vector<128x128xf32>
    %c0_193 = arith.constant 0 : index
    %c0_194 = arith.constant 0 : index
    %185 = vector.load %arg7[%c0_193, %c0_194] : memref<1x128xf32, #tpu.memory_space<vmem>>, vector<1x128xf32>
    %c3_195 = arith.constant 3 : index
    %c0_196 = arith.constant 0 : index
    %c0_197 = arith.constant 0 : index
    %c0_198 = arith.constant 0 : index
    %186 = vector.load %arg11[%c3_195, %c0_196, %c0_197, %c0_198] : memref<4x10x10x128xf32, #tpu.memory_space<vmem>>, vector<1x8x8x128xf32>
    %187 = vector.shape_cast %186 : vector<1x8x8x128xf32> to vector<8x8x128xf32>
    %188 = vector.shape_cast %187 : vector<8x8x128xf32> to vector<64x128xf32>
    %cst_199 = arith.constant dense<0.000000e+00> : vector<64x128xf32>
    %189 = tpu.matmul %188, %168, %cst_199 {dimension_numbers = #tpu.dot_dimension_numbers<[1], [0], [0], [1], [0, 0, 1, 1], [], []>} : vector<64x128xf32>, vector<128x128xf32>, vector<64x128xf32> -> vector<64x128xf32>
    %c2_200 = arith.constant 2 : index
    %c0_201 = arith.constant 0 : index
    %c1_202 = arith.constant 1 : index
    %c0_203 = arith.constant 0 : index
    %190 = vector.load %arg11[%c2_200, %c0_201, %c1_202, %c0_203] : memref<4x10x10x128xf32, #tpu.memory_space<vmem>>, vector<1x8x8x128xf32>
    %191 = vector.shape_cast %190 : vector<1x8x8x128xf32> to vector<8x8x128xf32>
    %192 = vector.shape_cast %191 : vector<8x8x128xf32> to vector<64x128xf32>
    %cst_204 = arith.constant dense<0.000000e+00> : vector<64x128xf32>
    %193 = tpu.matmul %192, %170, %cst_204 {dimension_numbers = #tpu.dot_dimension_numbers<[1], [0], [0], [1], [0, 0, 1, 1], [], []>} : vector<64x128xf32>, vector<128x128xf32>, vector<64x128xf32> -> vector<64x128xf32>
    %194 = arith.addf %189, %193 : vector<64x128xf32>
    %c3_205 = arith.constant 3 : index
    %c0_206 = arith.constant 0 : index
    %c1_207 = arith.constant 1 : index
    %c0_208 = arith.constant 0 : index
    %195 = vector.load %arg11[%c3_205, %c0_206, %c1_207, %c0_208] : memref<4x10x10x128xf32, #tpu.memory_space<vmem>>, vector<1x8x8x128xf32>
    %196 = vector.shape_cast %195 : vector<1x8x8x128xf32> to vector<8x8x128xf32>
    %197 = vector.shape_cast %196 : vector<8x8x128xf32> to vector<64x128xf32>
    %cst_209 = arith.constant dense<0.000000e+00> : vector<64x128xf32>
    %198 = tpu.matmul %197, %172, %cst_209 {dimension_numbers = #tpu.dot_dimension_numbers<[1], [0], [0], [1], [0, 0, 1, 1], [], []>} : vector<64x128xf32>, vector<128x128xf32>, vector<64x128xf32> -> vector<64x128xf32>
    %199 = arith.addf %194, %198 : vector<64x128xf32>
    %c1_210 = arith.constant 1 : index
    %c1_211 = arith.constant 1 : index
    %c0_212 = arith.constant 0 : index
    %c0_213 = arith.constant 0 : index
    %200 = vector.load %arg11[%c1_210, %c1_211, %c0_212, %c0_213] : memref<4x10x10x128xf32, #tpu.memory_space<vmem>>, vector<1x8x8x128xf32>
    %201 = vector.shape_cast %200 : vector<1x8x8x128xf32> to vector<8x8x128xf32>
    %202 = vector.shape_cast %201 : vector<8x8x128xf32> to vector<64x128xf32>
    %cst_214 = arith.constant dense<0.000000e+00> : vector<64x128xf32>
    %203 = tpu.matmul %202, %174, %cst_214 {dimension_numbers = #tpu.dot_dimension_numbers<[1], [0], [0], [1], [0, 0, 1, 1], [], []>} : vector<64x128xf32>, vector<128x128xf32>, vector<64x128xf32> -> vector<64x128xf32>
    %204 = arith.addf %199, %203 : vector<64x128xf32>
    %c0_215 = arith.constant 0 : index
    %c1_216 = arith.constant 1 : index
    %c1_217 = arith.constant 1 : index
    %c0_218 = arith.constant 0 : index
    %205 = vector.load %arg11[%c0_215, %c1_216, %c1_217, %c0_218] : memref<4x10x10x128xf32, #tpu.memory_space<vmem>>, vector<1x8x8x128xf32>
    %206 = vector.shape_cast %205 : vector<1x8x8x128xf32> to vector<8x8x128xf32>
    %207 = vector.shape_cast %206 : vector<8x8x128xf32> to vector<64x128xf32>
    %cst_219 = arith.constant dense<0.000000e+00> : vector<64x128xf32>
    %208 = tpu.matmul %207, %176, %cst_219 {dimension_numbers = #tpu.dot_dimension_numbers<[1], [0], [0], [1], [0, 0, 1, 1], [], []>} : vector<64x128xf32>, vector<128x128xf32>, vector<64x128xf32> -> vector<64x128xf32>
    %209 = arith.addf %204, %208 : vector<64x128xf32>
    %c1_220 = arith.constant 1 : index
    %c1_221 = arith.constant 1 : index
    %c1_222 = arith.constant 1 : index
    %c0_223 = arith.constant 0 : index
    %210 = vector.load %arg11[%c1_220, %c1_221, %c1_222, %c0_223] : memref<4x10x10x128xf32, #tpu.memory_space<vmem>>, vector<1x8x8x128xf32>
    %211 = vector.shape_cast %210 : vector<1x8x8x128xf32> to vector<8x8x128xf32>
    %212 = vector.shape_cast %211 : vector<8x8x128xf32> to vector<64x128xf32>
    %cst_224 = arith.constant dense<0.000000e+00> : vector<64x128xf32>
    %213 = tpu.matmul %212, %178, %cst_224 {dimension_numbers = #tpu.dot_dimension_numbers<[1], [0], [0], [1], [0, 0, 1, 1], [], []>} : vector<64x128xf32>, vector<128x128xf32>, vector<64x128xf32> -> vector<64x128xf32>
    %214 = arith.addf %209, %213 : vector<64x128xf32>
    %c3_225 = arith.constant 3 : index
    %c1_226 = arith.constant 1 : index
    %c0_227 = arith.constant 0 : index
    %c0_228 = arith.constant 0 : index
    %215 = vector.load %arg11[%c3_225, %c1_226, %c0_227, %c0_228] : memref<4x10x10x128xf32, #tpu.memory_space<vmem>>, vector<1x8x8x128xf32>
    %216 = vector.shape_cast %215 : vector<1x8x8x128xf32> to vector<8x8x128xf32>
    %217 = vector.shape_cast %216 : vector<8x8x128xf32> to vector<64x128xf32>
    %cst_229 = arith.constant dense<0.000000e+00> : vector<64x128xf32>
    %218 = tpu.matmul %217, %180, %cst_229 {dimension_numbers = #tpu.dot_dimension_numbers<[1], [0], [0], [1], [0, 0, 1, 1], [], []>} : vector<64x128xf32>, vector<128x128xf32>, vector<64x128xf32> -> vector<64x128xf32>
    %219 = arith.addf %214, %218 : vector<64x128xf32>
    %c2_230 = arith.constant 2 : index
    %c1_231 = arith.constant 1 : index
    %c1_232 = arith.constant 1 : index
    %c0_233 = arith.constant 0 : index
    %220 = vector.load %arg11[%c2_230, %c1_231, %c1_232, %c0_233] : memref<4x10x10x128xf32, #tpu.memory_space<vmem>>, vector<1x8x8x128xf32>
    %221 = vector.shape_cast %220 : vector<1x8x8x128xf32> to vector<8x8x128xf32>
    %222 = vector.shape_cast %221 : vector<8x8x128xf32> to vector<64x128xf32>
    %cst_234 = arith.constant dense<0.000000e+00> : vector<64x128xf32>
    %223 = tpu.matmul %222, %182, %cst_234 {dimension_numbers = #tpu.dot_dimension_numbers<[1], [0], [0], [1], [0, 0, 1, 1], [], []>} : vector<64x128xf32>, vector<128x128xf32>, vector<64x128xf32> -> vector<64x128xf32>
    %224 = arith.addf %219, %223 : vector<64x128xf32>
    %c3_235 = arith.constant 3 : index
    %c1_236 = arith.constant 1 : index
    %c1_237 = arith.constant 1 : index
    %c0_238 = arith.constant 0 : index
    %225 = vector.load %arg11[%c3_235, %c1_236, %c1_237, %c0_238] : memref<4x10x10x128xf32, #tpu.memory_space<vmem>>, vector<1x8x8x128xf32>
    %226 = vector.shape_cast %225 : vector<1x8x8x128xf32> to vector<8x8x128xf32>
    %227 = vector.shape_cast %226 : vector<8x8x128xf32> to vector<64x128xf32>
    %cst_239 = arith.constant dense<0.000000e+00> : vector<64x128xf32>
    %228 = tpu.matmul %227, %184, %cst_239 {dimension_numbers = #tpu.dot_dimension_numbers<[1], [0], [0], [1], [0, 0, 1, 1], [], []>} : vector<64x128xf32>, vector<128x128xf32>, vector<64x128xf32> -> vector<64x128xf32>
    %229 = arith.addf %224, %228 : vector<64x128xf32>
    %230 = vector.broadcast %185 : vector<1x128xf32> to vector<64x128xf32>
    %231 = arith.addf %229, %230 : vector<64x128xf32>
    %cst_240 = arith.constant 0.000000e+00 : f32
    %232 = vector.broadcast %cst_240 : f32 to vector<64x128xf32>
    %233 = arith.maximumf %231, %232 : vector<64x128xf32>
    %234 = vector.shape_cast %233 : vector<64x128xf32> to vector<8x1x8x128xf32>
    %c0_241 = arith.constant 0 : index
    %c0_242 = arith.constant 0 : index
    %c0_243 = arith.constant 0 : index
    %c0_244 = arith.constant 0 : index
    %c0_245 = arith.constant 0 : index
    %235 = vector.load %arg8[%c0_241, %c0_242, %c0_243, %c0_244, %c0_245] : memref<1x8x2x8x256xf32, #tpu.memory_space<vmem>>, vector<1x8x1x8x128xf32>
    %236 = vector.shape_cast %235 : vector<1x8x1x8x128xf32> to vector<8x1x8x128xf32>
    %237 = vector.shape_cast %234 : vector<8x1x8x128xf32> to vector<1x8x1x8x128xf32>
    tpu.vector_store %arg8[%c0_241, %c0_242, %c0_243, %c0_244, %c0_245], %237 {strides = array<i32>} : memref<1x8x2x8x256xf32, #tpu.memory_space<vmem>>, vector<1x8x1x8x128xf32>,
    %c2_246 = arith.constant 2 : index
    %c0_247 = arith.constant 0 : index
    %c1_248 = arith.constant 1 : index
    %c0_249 = arith.constant 0 : index
    %238 = vector.load %arg11[%c2_246, %c0_247, %c1_248, %c0_249] : memref<4x10x10x128xf32, #tpu.memory_space<vmem>>, vector<1x8x8x128xf32>
    %239 = vector.shape_cast %238 : vector<1x8x8x128xf32> to vector<8x8x128xf32>
    %240 = vector.shape_cast %239 : vector<8x8x128xf32> to vector<64x128xf32>
    %cst_250 = arith.constant dense<0.000000e+00> : vector<64x128xf32>
    %241 = tpu.matmul %240, %168, %cst_250 {dimension_numbers = #tpu.dot_dimension_numbers<[1], [0], [0], [1], [0, 0, 1, 1], [], []>} : vector<64x128xf32>, vector<128x128xf32>, vector<64x128xf32> -> vector<64x128xf32>
    %c3_251 = arith.constant 3 : index
    %c0_252 = arith.constant 0 : index
    %c1_253 = arith.constant 1 : index
    %c0_254 = arith.constant 0 : index
    %242 = vector.load %arg11[%c3_251, %c0_252, %c1_253, %c0_254] : memref<4x10x10x128xf32, #tpu.memory_space<vmem>>, vector<1x8x8x128xf32>
    %243 = vector.shape_cast %242 : vector<1x8x8x128xf32> to vector<8x8x128xf32>
    %244 = vector.shape_cast %243 : vector<8x8x128xf32> to vector<64x128xf32>
    %cst_255 = arith.constant dense<0.000000e+00> : vector<64x128xf32>
    %245 = tpu.matmul %244, %170, %cst_255 {dimension_numbers = #tpu.dot_dimension_numbers<[1], [0], [0], [1], [0, 0, 1, 1], [], []>} : vector<64x128xf32>, vector<128x128xf32>, vector<64x128xf32> -> vector<64x128xf32>
    %246 = arith.addf %241, %245 : vector<64x128xf32>
    %c2_256 = arith.constant 2 : index
    %c0_257 = arith.constant 0 : index
    %c2_258 = arith.constant 2 : index
    %c0_259 = arith.constant 0 : index
    %247 = vector.load %arg11[%c2_256, %c0_257, %c2_258, %c0_259] : memref<4x10x10x128xf32, #tpu.memory_space<vmem>>, vector<1x8x8x128xf32>
    %248 = vector.shape_cast %247 : vector<1x8x8x128xf32> to vector<8x8x128xf32>
    %249 = vector.shape_cast %248 : vector<8x8x128xf32> to vector<64x128xf32>
    %cst_260 = arith.constant dense<0.000000e+00> : vector<64x128xf32>
    %250 = tpu.matmul %249, %172, %cst_260 {dimension_numbers = #tpu.dot_dimension_numbers<[1], [0], [0], [1], [0, 0, 1, 1], [], []>} : vector<64x128xf32>, vector<128x128xf32>, vector<64x128xf32> -> vector<64x128xf32>
    %251 = arith.addf %246, %250 : vector<64x128xf32>
    %c0_261 = arith.constant 0 : index
    %c1_262 = arith.constant 1 : index
    %c1_263 = arith.constant 1 : index
    %c0_264 = arith.constant 0 : index
    %252 = vector.load %arg11[%c0_261, %c1_262, %c1_263, %c0_264] : memref<4x10x10x128xf32, #tpu.memory_space<vmem>>, vector<1x8x8x128xf32>
    %253 = vector.shape_cast %252 : vector<1x8x8x128xf32> to vector<8x8x128xf32>
    %254 = vector.shape_cast %253 : vector<8x8x128xf32> to vector<64x128xf32>
    %cst_265 = arith.constant dense<0.000000e+00> : vector<64x128xf32>
    %255 = tpu.matmul %254, %174, %cst_265 {dimension_numbers = #tpu.dot_dimension_numbers<[1], [0], [0], [1], [0, 0, 1, 1], [], []>} : vector<64x128xf32>, vector<128x128xf32>, vector<64x128xf32> -> vector<64x128xf32>
    %256 = arith.addf %251, %255 : vector<64x128xf32>
    %c1_266 = arith.constant 1 : index
    %c1_267 = arith.constant 1 : index
    %c1_268 = arith.constant 1 : index
    %c0_269 = arith.constant 0 : index
    %257 = vector.load %arg11[%c1_266, %c1_267, %c1_268, %c0_269] : memref<4x10x10x128xf32, #tpu.memory_space<vmem>>, vector<1x8x8x128xf32>
    %258 = vector.shape_cast %257 : vector<1x8x8x128xf32> to vector<8x8x128xf32>
    %259 = vector.shape_cast %258 : vector<8x8x128xf32> to vector<64x128xf32>
    %cst_270 = arith.constant dense<0.000000e+00> : vector<64x128xf32>
    %260 = tpu.matmul %259, %176, %cst_270 {dimension_numbers = #tpu.dot_dimension_numbers<[1], [0], [0], [1], [0, 0, 1, 1], [], []>} : vector<64x128xf32>, vector<128x128xf32>, vector<64x128xf32> -> vector<64x128xf32>
    %261 = arith.addf %256, %260 : vector<64x128xf32>
    %c0_271 = arith.constant 0 : index
    %c1_272 = arith.constant 1 : index
    %c2_273 = arith.constant 2 : index
    %c0_274 = arith.constant 0 : index
    %262 = vector.load %arg11[%c0_271, %c1_272, %c2_273, %c0_274] : memref<4x10x10x128xf32, #tpu.memory_space<vmem>>, vector<1x8x8x128xf32>
    %263 = vector.shape_cast %262 : vector<1x8x8x128xf32> to vector<8x8x128xf32>
    %264 = vector.shape_cast %263 : vector<8x8x128xf32> to vector<64x128xf32>
    %cst_275 = arith.constant dense<0.000000e+00> : vector<64x128xf32>
    %265 = tpu.matmul %264, %178, %cst_275 {dimension_numbers = #tpu.dot_dimension_numbers<[1], [0], [0], [1], [0, 0, 1, 1], [], []>} : vector<64x128xf32>, vector<128x128xf32>, vector<64x128xf32> -> vector<64x128xf32>
    %266 = arith.addf %261, %265 : vector<64x128xf32>
    %c2_276 = arith.constant 2 : index
    %c1_277 = arith.constant 1 : index
    %c1_278 = arith.constant 1 : index
    %c0_279 = arith.constant 0 : index
    %267 = vector.load %arg11[%c2_276, %c1_277, %c1_278, %c0_279] : memref<4x10x10x128xf32, #tpu.memory_space<vmem>>, vector<1x8x8x128xf32>
    %268 = vector.shape_cast %267 : vector<1x8x8x128xf32> to vector<8x8x128xf32>
    %269 = vector.shape_cast %268 : vector<8x8x128xf32> to vector<64x128xf32>
    %cst_280 = arith.constant dense<0.000000e+00> : vector<64x128xf32>
    %270 = tpu.matmul %269, %180, %cst_280 {dimension_numbers = #tpu.dot_dimension_numbers<[1], [0], [0], [1], [0, 0, 1, 1], [], []>} : vector<64x128xf32>, vector<128x128xf32>, vector<64x128xf32> -> vector<64x128xf32>
    %271 = arith.addf %266, %270 : vector<64x128xf32>
    %c3_281 = arith.constant 3 : index
    %c1_282 = arith.constant 1 : index
    %c1_283 = arith.constant 1 : index
    %c0_284 = arith.constant 0 : index
    %272 = vector.load %arg11[%c3_281, %c1_282, %c1_283, %c0_284] : memref<4x10x10x128xf32, #tpu.memory_space<vmem>>, vector<1x8x8x128xf32>
    %273 = vector.shape_cast %272 : vector<1x8x8x128xf32> to vector<8x8x128xf32>
    %274 = vector.shape_cast %273 : vector<8x8x128xf32> to vector<64x128xf32>
    %cst_285 = arith.constant dense<0.000000e+00> : vector<64x128xf32>
    %275 = tpu.matmul %274, %182, %cst_285 {dimension_numbers = #tpu.dot_dimension_numbers<[1], [0], [0], [1], [0, 0, 1, 1], [], []>} : vector<64x128xf32>, vector<128x128xf32>, vector<64x128xf32> -> vector<64x128xf32>
    %276 = arith.addf %271, %275 : vector<64x128xf32>
    %c2_286 = arith.constant 2 : index
    %c1_287 = arith.constant 1 : index
    %c2_288 = arith.constant 2 : index
    %c0_289 = arith.constant 0 : index
    %277 = vector.load %arg11[%c2_286, %c1_287, %c2_288, %c0_289] : memref<4x10x10x128xf32, #tpu.memory_space<vmem>>, vector<1x8x8x128xf32>
    %278 = vector.shape_cast %277 : vector<1x8x8x128xf32> to vector<8x8x128xf32>
    %279 = vector.shape_cast %278 : vector<8x8x128xf32> to vector<64x128xf32>
    %cst_290 = arith.constant dense<0.000000e+00> : vector<64x128xf32>
    %280 = tpu.matmul %279, %184, %cst_290 {dimension_numbers = #tpu.dot_dimension_numbers<[1], [0], [0], [1], [0, 0, 1, 1], [], []>} : vector<64x128xf32>, vector<128x128xf32>, vector<64x128xf32> -> vector<64x128xf32>
    %281 = arith.addf %276, %280 : vector<64x128xf32>
    %282 = vector.broadcast %185 : vector<1x128xf32> to vector<64x128xf32>
    %283 = arith.addf %281, %282 : vector<64x128xf32>
    %cst_291 = arith.constant 0.000000e+00 : f32
    %284 = vector.broadcast %cst_291 : f32 to vector<64x128xf32>
    %285 = arith.maximumf %283, %284 : vector<64x128xf32>
    %286 = vector.shape_cast %285 : vector<64x128xf32> to vector<8x1x8x128xf32>
    %c0_292 = arith.constant 0 : index
    %c0_293 = arith.constant 0 : index
    %c0_294 = arith.constant 0 : index
    %c0_295 = arith.constant 0 : index
    %c128_296 = arith.constant 128 : index
    %287 = vector.load %arg8[%c0_292, %c0_293, %c0_294, %c0_295, %c128_296] : memref<1x8x2x8x256xf32, #tpu.memory_space<vmem>>, vector<1x8x1x8x128xf32>
    %288 = vector.shape_cast %287 : vector<1x8x1x8x128xf32> to vector<8x1x8x128xf32>
    %289 = vector.shape_cast %286 : vector<8x1x8x128xf32> to vector<1x8x1x8x128xf32>
    tpu.vector_store %arg8[%c0_292, %c0_293, %c0_294, %c0_295, %c128_296], %289 {strides = array<i32>} : memref<1x8x2x8x256xf32, #tpu.memory_space<vmem>>, vector<1x8x1x8x128xf32>,
    %c1_297 = arith.constant 1 : index
    %c1_298 = arith.constant 1 : index
    %c0_299 = arith.constant 0 : index
    %c0_300 = arith.constant 0 : index
    %290 = vector.load %arg11[%c1_297, %c1_298, %c0_299, %c0_300] : memref<4x10x10x128xf32, #tpu.memory_space<vmem>>, vector<1x8x8x128xf32>
    %291 = vector.shape_cast %290 : vector<1x8x8x128xf32> to vector<8x8x128xf32>
    %292 = vector.shape_cast %291 : vector<8x8x128xf32> to vector<64x128xf32>
    %cst_301 = arith.constant dense<0.000000e+00> : vector<64x128xf32>
    %293 = tpu.matmul %292, %168, %cst_301 {dimension_numbers = #tpu.dot_dimension_numbers<[1], [0], [0], [1], [0, 0, 1, 1], [], []>} : vector<64x128xf32>, vector<128x128xf32>, vector<64x128xf32> -> vector<64x128xf32>
    %c0_302 = arith.constant 0 : index
    %c1_303 = arith.constant 1 : index
    %c1_304 = arith.constant 1 : index
    %c0_305 = arith.constant 0 : index
    %294 = vector.load %arg11[%c0_302, %c1_303, %c1_304, %c0_305] : memref<4x10x10x128xf32, #tpu.memory_space<vmem>>, vector<1x8x8x128xf32>
    %295 = vector.shape_cast %294 : vector<1x8x8x128xf32> to vector<8x8x128xf32>
    %296 = vector.shape_cast %295 : vector<8x8x128xf32> to vector<64x128xf32>
    %cst_306 = arith.constant dense<0.000000e+00> : vector<64x128xf32>
    %297 = tpu.matmul %296, %170, %cst_306 {dimension_numbers = #tpu.dot_dimension_numbers<[1], [0], [0], [1], [0, 0, 1, 1], [], []>} : vector<64x128xf32>, vector<128x128xf32>, vector<64x128xf32> -> vector<64x128xf32>
    %298 = arith.addf %293, %297 : vector<64x128xf32>
    %c1_307 = arith.constant 1 : index
    %c1_308 = arith.constant 1 : index
    %c1_309 = arith.constant 1 : index
    %c0_310 = arith.constant 0 : index
    %299 = vector.load %arg11[%c1_307, %c1_308, %c1_309, %c0_310] : memref<4x10x10x128xf32, #tpu.memory_space<vmem>>, vector<1x8x8x128xf32>
    %300 = vector.shape_cast %299 : vector<1x8x8x128xf32> to vector<8x8x128xf32>
    %301 = vector.shape_cast %300 : vector<8x8x128xf32> to vector<64x128xf32>
    %cst_311 = arith.constant dense<0.000000e+00> : vector<64x128xf32>
    %302 = tpu.matmul %301, %172, %cst_311 {dimension_numbers = #tpu.dot_dimension_numbers<[1], [0], [0], [1], [0, 0, 1, 1], [], []>} : vector<64x128xf32>, vector<128x128xf32>, vector<64x128xf32> -> vector<64x128xf32>
    %303 = arith.addf %298, %302 : vector<64x128xf32>
    %c3_312 = arith.constant 3 : index
    %c1_313 = arith.constant 1 : index
    %c0_314 = arith.constant 0 : index
    %c0_315 = arith.constant 0 : index
    %304 = vector.load %arg11[%c3_312, %c1_313, %c0_314, %c0_315] : memref<4x10x10x128xf32, #tpu.memory_space<vmem>>, vector<1x8x8x128xf32>
    %305 = vector.shape_cast %304 : vector<1x8x8x128xf32> to vector<8x8x128xf32>
    %306 = vector.shape_cast %305 : vector<8x8x128xf32> to vector<64x128xf32>
    %cst_316 = arith.constant dense<0.000000e+00> : vector<64x128xf32>
    %307 = tpu.matmul %306, %174, %cst_316 {dimension_numbers = #tpu.dot_dimension_numbers<[1], [0], [0], [1], [0, 0, 1, 1], [], []>} : vector<64x128xf32>, vector<128x128xf32>, vector<64x128xf32> -> vector<64x128xf32>
    %308 = arith.addf %303, %307 : vector<64x128xf32>
    %c2_317 = arith.constant 2 : index
    %c1_318 = arith.constant 1 : index
    %c1_319 = arith.constant 1 : index
    %c0_320 = arith.constant 0 : index
    %309 = vector.load %arg11[%c2_317, %c1_318, %c1_319, %c0_320] : memref<4x10x10x128xf32, #tpu.memory_space<vmem>>, vector<1x8x8x128xf32>
    %310 = vector.shape_cast %309 : vector<1x8x8x128xf32> to vector<8x8x128xf32>
    %311 = vector.shape_cast %310 : vector<8x8x128xf32> to vector<64x128xf32>
    %cst_321 = arith.constant dense<0.000000e+00> : vector<64x128xf32>
    %312 = tpu.matmul %311, %176, %cst_321 {dimension_numbers = #tpu.dot_dimension_numbers<[1], [0], [0], [1], [0, 0, 1, 1], [], []>} : vector<64x128xf32>, vector<128x128xf32>, vector<64x128xf32> -> vector<64x128xf32>
    %313 = arith.addf %308, %312 : vector<64x128xf32>
    %c3_322 = arith.constant 3 : index
    %c1_323 = arith.constant 1 : index
    %c1_324 = arith.constant 1 : index
    %c0_325 = arith.constant 0 : index
    %314 = vector.load %arg11[%c3_322, %c1_323, %c1_324, %c0_325] : memref<4x10x10x128xf32, #tpu.memory_space<vmem>>, vector<1x8x8x128xf32>
    %315 = vector.shape_cast %314 : vector<1x8x8x128xf32> to vector<8x8x128xf32>
    %316 = vector.shape_cast %315 : vector<8x8x128xf32> to vector<64x128xf32>
    %cst_326 = arith.constant dense<0.000000e+00> : vector<64x128xf32>
    %317 = tpu.matmul %316, %178, %cst_326 {dimension_numbers = #tpu.dot_dimension_numbers<[1], [0], [0], [1], [0, 0, 1, 1], [], []>} : vector<64x128xf32>, vector<128x128xf32>, vector<64x128xf32> -> vector<64x128xf32>
    %318 = arith.addf %313, %317 : vector<64x128xf32>
    %c1_327 = arith.constant 1 : index
    %c2_328 = arith.constant 2 : index
    %c0_329 = arith.constant 0 : index
    %c0_330 = arith.constant 0 : index
    %319 = vector.load %arg11[%c1_327, %c2_328, %c0_329, %c0_330] : memref<4x10x10x128xf32, #tpu.memory_space<vmem>>, vector<1x8x8x128xf32>
    %320 = vector.shape_cast %319 : vector<1x8x8x128xf32> to vector<8x8x128xf32>
    %321 = vector.shape_cast %320 : vector<8x8x128xf32> to vector<64x128xf32>
    %cst_331 = arith.constant dense<0.000000e+00> : vector<64x128xf32>
    %322 = tpu.matmul %321, %180, %cst_331 {dimension_numbers = #tpu.dot_dimension_numbers<[1], [0], [0], [1], [0, 0, 1, 1], [], []>} : vector<64x128xf32>, vector<128x128xf32>, vector<64x128xf32> -> vector<64x128xf32>
    %323 = arith.addf %318, %322 : vector<64x128xf32>
    %c0_332 = arith.constant 0 : index
    %c2_333 = arith.constant 2 : index
    %c1_334 = arith.constant 1 : index
    %c0_335 = arith.constant 0 : index
    %324 = vector.load %arg11[%c0_332, %c2_333, %c1_334, %c0_335] : memref<4x10x10x128xf32, #tpu.memory_space<vmem>>, vector<1x8x8x128xf32>
    %325 = vector.shape_cast %324 : vector<1x8x8x128xf32> to vector<8x8x128xf32>
    %326 = vector.shape_cast %325 : vector<8x8x128xf32> to vector<64x128xf32>
    %cst_336 = arith.constant dense<0.000000e+00> : vector<64x128xf32>
    %327 = tpu.matmul %326, %182, %cst_336 {dimension_numbers = #tpu.dot_dimension_numbers<[1], [0], [0], [1], [0, 0, 1, 1], [], []>} : vector<64x128xf32>, vector<128x128xf32>, vector<64x128xf32> -> vector<64x128xf32>
    %328 = arith.addf %323, %327 : vector<64x128xf32>
    %c1_337 = arith.constant 1 : index
    %c2_338 = arith.constant 2 : index
    %c1_339 = arith.constant 1 : index
    %c0_340 = arith.constant 0 : index
    %329 = vector.load %arg11[%c1_337, %c2_338, %c1_339, %c0_340] : memref<4x10x10x128xf32, #tpu.memory_space<vmem>>, vector<1x8x8x128xf32>
    %330 = vector.shape_cast %329 : vector<1x8x8x128xf32> to vector<8x8x128xf32>
    %331 = vector.shape_cast %330 : vector<8x8x128xf32> to vector<64x128xf32>
    %cst_341 = arith.constant dense<0.000000e+00> : vector<64x128xf32>
    %332 = tpu.matmul %331, %184, %cst_341 {dimension_numbers = #tpu.dot_dimension_numbers<[1], [0], [0], [1], [0, 0, 1, 1], [], []>} : vector<64x128xf32>, vector<128x128xf32>, vector<64x128xf32> -> vector<64x128xf32>
    %333 = arith.addf %328, %332 : vector<64x128xf32>
    %334 = vector.broadcast %185 : vector<1x128xf32> to vector<64x128xf32>
    %335 = arith.addf %333, %334 : vector<64x128xf32>
    %cst_342 = arith.constant 0.000000e+00 : f32
    %336 = vector.broadcast %cst_342 : f32 to vector<64x128xf32>
    %337 = arith.maximumf %335, %336 : vector<64x128xf32>
    %338 = vector.shape_cast %337 : vector<64x128xf32> to vector<8x1x8x128xf32>
    %c0_343 = arith.constant 0 : index
    %c0_344 = arith.constant 0 : index
    %c1_345 = arith.constant 1 : index
    %c0_346 = arith.constant 0 : index
    %c0_347 = arith.constant 0 : index
    %339 = vector.load %arg8[%c0_343, %c0_344, %c1_345, %c0_346, %c0_347] : memref<1x8x2x8x256xf32, #tpu.memory_space<vmem>>, vector<1x8x1x8x128xf32>
    %340 = vector.shape_cast %339 : vector<1x8x1x8x128xf32> to vector<8x1x8x128xf32>
    %341 = vector.shape_cast %338 : vector<8x1x8x128xf32> to vector<1x8x1x8x128xf32>
    tpu.vector_store %arg8[%c0_343, %c0_344, %c1_345, %c0_346, %c0_347], %341 {strides = array<i32>} : memref<1x8x2x8x256xf32, #tpu.memory_space<vmem>>, vector<1x8x1x8x128xf32>,
    %c0_348 = arith.constant 0 : index
    %c1_349 = arith.constant 1 : index
    %c1_350 = arith.constant 1 : index
    %c0_351 = arith.constant 0 : index
    %342 = vector.load %arg11[%c0_348, %c1_349, %c1_350, %c0_351] : memref<4x10x10x128xf32, #tpu.memory_space<vmem>>, vector<1x8x8x128xf32>
    %343 = vector.shape_cast %342 : vector<1x8x8x128xf32> to vector<8x8x128xf32>
    %344 = vector.shape_cast %343 : vector<8x8x128xf32> to vector<64x128xf32>
    %cst_352 = arith.constant dense<0.000000e+00> : vector<64x128xf32>
    %345 = tpu.matmul %344, %168, %cst_352 {dimension_numbers = #tpu.dot_dimension_numbers<[1], [0], [0], [1], [0, 0, 1, 1], [], []>} : vector<64x128xf32>, vector<128x128xf32>, vector<64x128xf32> -> vector<64x128xf32>
    %c1_353 = arith.constant 1 : index
    %c1_354 = arith.constant 1 : index
    %c1_355 = arith.constant 1 : index
    %c0_356 = arith.constant 0 : index
    %346 = vector.load %arg11[%c1_353, %c1_354, %c1_355, %c0_356] : memref<4x10x10x128xf32, #tpu.memory_space<vmem>>, vector<1x8x8x128xf32>
    %347 = vector.shape_cast %346 : vector<1x8x8x128xf32> to vector<8x8x128xf32>
    %348 = vector.shape_cast %347 : vector<8x8x128xf32> to vector<64x128xf32>
    %cst_357 = arith.constant dense<0.000000e+00> : vector<64x128xf32>
    %349 = tpu.matmul %348, %170, %cst_357 {dimension_numbers = #tpu.dot_dimension_numbers<[1], [0], [0], [1], [0, 0, 1, 1], [], []>} : vector<64x128xf32>, vector<128x128xf32>, vector<64x128xf32> -> vector<64x128xf32>
    %350 = arith.addf %345, %349 : vector<64x128xf32>
    %c0_358 = arith.constant 0 : index
    %c1_359 = arith.constant 1 : index
    %c2_360 = arith.constant 2 : index
    %c0_361 = arith.constant 0 : index
    %351 = vector.load %arg11[%c0_358, %c1_359, %c2_360, %c0_361] : memref<4x10x10x128xf32, #tpu.memory_space<vmem>>, vector<1x8x8x128xf32>
    %352 = vector.shape_cast %351 : vector<1x8x8x128xf32> to vector<8x8x128xf32>
    %353 = vector.shape_cast %352 : vector<8x8x128xf32> to vector<64x128xf32>
    %cst_362 = arith.constant dense<0.000000e+00> : vector<64x128xf32>
    %354 = tpu.matmul %353, %172, %cst_362 {dimension_numbers = #tpu.dot_dimension_numbers<[1], [0], [0], [1], [0, 0, 1, 1], [], []>} : vector<64x128xf32>, vector<128x128xf32>, vector<64x128xf32> -> vector<64x128xf32>
    %355 = arith.addf %350, %354 : vector<64x128xf32>
    %c2_363 = arith.constant 2 : index
    %c1_364 = arith.constant 1 : index
    %c1_365 = arith.constant 1 : index
    %c0_366 = arith.constant 0 : index
    %356 = vector.load %arg11[%c2_363, %c1_364, %c1_365, %c0_366] : memref<4x10x10x128xf32, #tpu.memory_space<vmem>>, vector<1x8x8x128xf32>
    %357 = vector.shape_cast %356 : vector<1x8x8x128xf32> to vector<8x8x128xf32>
    %358 = vector.shape_cast %357 : vector<8x8x128xf32> to vector<64x128xf32>
    %cst_367 = arith.constant dense<0.000000e+00> : vector<64x128xf32>
    %359 = tpu.matmul %358, %174, %cst_367 {dimension_numbers = #tpu.dot_dimension_numbers<[1], [0], [0], [1], [0, 0, 1, 1], [], []>} : vector<64x128xf32>, vector<128x128xf32>, vector<64x128xf32> -> vector<64x128xf32>
    %360 = arith.addf %355, %359 : vector<64x128xf32>
    %c3_368 = arith.constant 3 : index
    %c1_369 = arith.constant 1 : index
    %c1_370 = arith.constant 1 : index
    %c0_371 = arith.constant 0 : index
    %361 = vector.load %arg11[%c3_368, %c1_369, %c1_370, %c0_371] : memref<4x10x10x128xf32, #tpu.memory_space<vmem>>, vector<1x8x8x128xf32>
    %362 = vector.shape_cast %361 : vector<1x8x8x128xf32> to vector<8x8x128xf32>
    %363 = vector.shape_cast %362 : vector<8x8x128xf32> to vector<64x128xf32>
    %cst_372 = arith.constant dense<0.000000e+00> : vector<64x128xf32>
    %364 = tpu.matmul %363, %176, %cst_372 {dimension_numbers = #tpu.dot_dimension_numbers<[1], [0], [0], [1], [0, 0, 1, 1], [], []>} : vector<64x128xf32>, vector<128x128xf32>, vector<64x128xf32> -> vector<64x128xf32>
    %365 = arith.addf %360, %364 : vector<64x128xf32>
    %c2_373 = arith.constant 2 : index
    %c1_374 = arith.constant 1 : index
    %c2_375 = arith.constant 2 : index
    %c0_376 = arith.constant 0 : index
    %366 = vector.load %arg11[%c2_373, %c1_374, %c2_375, %c0_376] : memref<4x10x10x128xf32, #tpu.memory_space<vmem>>, vector<1x8x8x128xf32>
    %367 = vector.shape_cast %366 : vector<1x8x8x128xf32> to vector<8x8x128xf32>
    %368 = vector.shape_cast %367 : vector<8x8x128xf32> to vector<64x128xf32>
    %cst_377 = arith.constant dense<0.000000e+00> : vector<64x128xf32>
    %369 = tpu.matmul %368, %178, %cst_377 {dimension_numbers = #tpu.dot_dimension_numbers<[1], [0], [0], [1], [0, 0, 1, 1], [], []>} : vector<64x128xf32>, vector<128x128xf32>, vector<64x128xf32> -> vector<64x128xf32>
    %370 = arith.addf %365, %369 : vector<64x128xf32>
    %c0_378 = arith.constant 0 : index
    %c2_379 = arith.constant 2 : index
    %c1_380 = arith.constant 1 : index
    %c0_381 = arith.constant 0 : index
    %371 = vector.load %arg11[%c0_378, %c2_379, %c1_380, %c0_381] : memref<4x10x10x128xf32, #tpu.memory_space<vmem>>, vector<1x8x8x128xf32>
    %372 = vector.shape_cast %371 : vector<1x8x8x128xf32> to vector<8x8x128xf32>
    %373 = vector.shape_cast %372 : vector<8x8x128xf32> to vector<64x128xf32>
    %cst_382 = arith.constant dense<0.000000e+00> : vector<64x128xf32>
    %374 = tpu.matmul %373, %180, %cst_382 {dimension_numbers = #tpu.dot_dimension_numbers<[1], [0], [0], [1], [0, 0, 1, 1], [], []>} : vector<64x128xf32>, vector<128x128xf32>, vector<64x128xf32> -> vector<64x128xf32>
    %375 = arith.addf %370, %374 : vector<64x128xf32>
    %c1_383 = arith.constant 1 : index
    %c2_384 = arith.constant 2 : index
    %c1_385 = arith.constant 1 : index
    %c0_386 = arith.constant 0 : index
    %376 = vector.load %arg11[%c1_383, %c2_384, %c1_385, %c0_386] : memref<4x10x10x128xf32, #tpu.memory_space<vmem>>, vector<1x8x8x128xf32>
    %377 = vector.shape_cast %376 : vector<1x8x8x128xf32> to vector<8x8x128xf32>
    %378 = vector.shape_cast %377 : vector<8x8x128xf32> to vector<64x128xf32>
    %cst_387 = arith.constant dense<0.000000e+00> : vector<64x128xf32>
    %379 = tpu.matmul %378, %182, %cst_387 {dimension_numbers = #tpu.dot_dimension_numbers<[1], [0], [0], [1], [0, 0, 1, 1], [], []>} : vector<64x128xf32>, vector<128x128xf32>, vector<64x128xf32> -> vector<64x128xf32>
    %380 = arith.addf %375, %379 : vector<64x128xf32>
    %c0_388 = arith.constant 0 : index
    %c2_389 = arith.constant 2 : index
    %c2_390 = arith.constant 2 : index
    %c0_391 = arith.constant 0 : index
    %381 = vector.load %arg11[%c0_388, %c2_389, %c2_390, %c0_391] : memref<4x10x10x128xf32, #tpu.memory_space<vmem>>, vector<1x8x8x128xf32>
    %382 = vector.shape_cast %381 : vector<1x8x8x128xf32> to vector<8x8x128xf32>
    %383 = vector.shape_cast %382 : vector<8x8x128xf32> to vector<64x128xf32>
    %cst_392 = arith.constant dense<0.000000e+00> : vector<64x128xf32>
    %384 = tpu.matmul %383, %184, %cst_392 {dimension_numbers = #tpu.dot_dimension_numbers<[1], [0], [0], [1], [0, 0, 1, 1], [], []>} : vector<64x128xf32>, vector<128x128xf32>, vector<64x128xf32> -> vector<64x128xf32>
    %385 = arith.addf %380, %384 : vector<64x128xf32>
    %386 = vector.broadcast %185 : vector<1x128xf32> to vector<64x128xf32>
    %387 = arith.addf %385, %386 : vector<64x128xf32>
    %cst_393 = arith.constant 0.000000e+00 : f32
    %388 = vector.broadcast %cst_393 : f32 to vector<64x128xf32>
    %389 = arith.maximumf %387, %388 : vector<64x128xf32>
    %390 = vector.shape_cast %389 : vector<64x128xf32> to vector<8x1x8x128xf32>
    %c0_394 = arith.constant 0 : index
    %c0_395 = arith.constant 0 : index
    %c1_396 = arith.constant 1 : index
    %c0_397 = arith.constant 0 : index
    %c128_398 = arith.constant 128 : index
    %391 = vector.load %arg8[%c0_394, %c0_395, %c1_396, %c0_397, %c128_398] : memref<1x8x2x8x256xf32, #tpu.memory_space<vmem>>, vector<1x8x1x8x128xf32>
    %392 = vector.shape_cast %391 : vector<1x8x1x8x128xf32> to vector<8x1x8x128xf32>
    %393 = vector.shape_cast %390 : vector<8x1x8x128xf32> to vector<1x8x1x8x128xf32>
    tpu.vector_store %arg8[%c0_394, %c0_395, %c1_396, %c0_397, %c128_398], %393 {strides = array<i32>} : memref<1x8x2x8x256xf32, #tpu.memory_space<vmem>>, vector<1x8x1x8x128xf32>,
    return
  }
  func.func @transform_0(%arg0: i32) -> (i32, i32, i32, i32) {
    %c0_i32 = arith.constant 0 : i32
    %c0_i32_0 = arith.constant 0 : i32
    %c0_i32_1 = arith.constant 0 : i32
    %c0_i32_2 = arith.constant 0 : i32
    return %arg0, %c0_i32, %c0_i32_0, %c0_i32_1 : i32, i32, i32, i32
  }
  func.func @transform_1(%arg0: i32) -> (i32, i32, i32, i32, i32) {
    %c0_i32 = arith.constant 0 : i32
    %c0_i32_0 = arith.constant 0 : i32
    %c0_i32_1 = arith.constant 0 : i32
    %c0_i32_2 = arith.constant 0 : i32
    %c0_i32_3 = arith.constant 0 : i32
    return %arg0, %c0_i32, %c0_i32_0, %c0_i32_1, %c0_i32_2 : i32, i32, i32, i32, i32
  }
  func.func @transform_2(%arg0: i32) -> (i32, i32, i32) {
    %c0_i32 = arith.constant 0 : i32
    %c0_i32_0 = arith.constant 0 : i32
    %c0_i32_1 = arith.constant 0 : i32
    %c0_i32_2 = arith.constant 0 : i32
    return %c0_i32, %c0_i32_0, %c0_i32_1 : i32, i32, i32
  }
  func.func @transform_3(%arg0: i32) -> (i32, i32) {
    %c0_i32 = arith.constant 0 : i32
    %c0_i32_0 = arith.constant 0 : i32
    %c0_i32_1 = arith.constant 0 : i32
    return %c0_i32, %c0_i32_0 : i32, i32
  }
  func.func @transform_4(%arg0: i32) -> (i32, i32) {
    %c0_i32 = arith.constant 0 : i32
    %c0_i32_0 = arith.constant 0 : i32
    %c0_i32_1 = arith.constant 0 : i32
    return %c0_i32, %c0_i32_0 : i32, i32
  }
  func.func @transform_5(%arg0: i32) -> (i32, i32, i32) {
    %c0_i32 = arith.constant 0 : i32
    %c0_i32_0 = arith.constant 0 : i32
    %c0_i32_1 = arith.constant 0 : i32
    %c0_i32_2 = arith.constant 0 : i32
    return %c0_i32, %c0_i32_0, %c0_i32_1 : i32, i32, i32
  }
  func.func @transform_6(%arg0: i32) -> (i32, i32) {
    %c0_i32 = arith.constant 0 : i32
    %c0_i32_0 = arith.constant 0 : i32
    %c0_i32_1 = arith.constant 0 : i32
    return %c0_i32, %c0_i32_0 : i32, i32
  }
  func.func @transform_7(%arg0: i32) -> (i32, i32, i32, i32, i32) {
    %c0_i32 = arith.constant 0 : i32
    %c0_i32_0 = arith.constant 0 : i32
    %c0_i32_1 = arith.constant 0 : i32
    %c0_i32_2 = arith.constant 0 : i32
    %c0_i32_3 = arith.constant 0 : i32
    return %arg0, %c0_i32, %c0_i32_0, %c0_i32_1, %c0_i32_2 : i32, i32, i32, i32, i32
  }
}

</mosaic_0001>

<llo_original>
// kernel: tpu_custom_call.1
$region0: #{tpu_custom_call.1}
  #allocation0 [shape = 'u32[]', space=smem, size = 0x4, offset = 0x4, fixed_abs, tag = 'smem constant byte address 0x4 - core index']
  #allocation1 [shape = 'u32[144,128]{1,0:T(1,128)}', space=vmem, size = 0x12000, scoped, tag = 'internal scratch']
  #allocation2 [shape = 'f32[10,10,128]{2,1,0:T(8,128)}', space=vmem, size = 0x14000, scoped, tag = 'scratch operand']
  #allocation3 [shape = 'f32[10,10,128]{2,1,0:T(8,128)}', space=vmem, size = 0x14000, scoped, tag = 'scratch operand']
  #allocation4 [shape = 'f32[4,10,10,128]{3,2,1,0:T(8,128)}', space=vmem, size = 0x50000, scoped, tag = 'scratch operand']
  %s0 = inlined_call_operand.hbm [shape: f32[2,8,8,128], index: 0, kind: input, shape index: {}]
  %s1 = inlined_call_operand.hbm [shape: f32[2,8,2,8,256], index: 1, kind: input, shape index: {}]
  %s2 = inlined_call_operand.hbm [shape: f32[9,128,128], index: 2, kind: input, shape index: {}]
  %s3 = inlined_call_operand.vmem [shape: f32[1,128], index: 3, kind: input, shape index: {}]
  %s4 = inlined_call_operand.vmem [shape: f32[4,128], index: 4, kind: input, shape index: {}]
  %s5 = inlined_call_operand.hbm [shape: f32[9,128,128], index: 5, kind: input, shape index: {}]
  %s6 = inlined_call_operand.vmem [shape: f32[1,128], index: 6, kind: input, shape index: {}]
  %s7 = inlined_call_operand.hbm [shape: f32[2,8,2,8,256], index: 7, kind: output, shape index: {}]
  %s8 = sld [smem:[#allocation0]]
  $region77: #{tpu_custom_call.1} parent=0
    _
  %s10 = ssub.s32 1, %s8
  %s11 = scalar_select 0, %s10, %s8
  $region1: #{tpu_custom_call.1} parent=0
    #allocation5 [shape = 'u8[65536]{0}', space=vmem, size = 0x10000, scoped, tag = 'input window, operand 0']
    #allocation6 [shape = 's32[2]{0}', space=sflag, size = 0x8, scoped, tag = 'scoped memory for tpu_custom_call.1']
    #allocation7 [shape = 's32[2]{0}', space=sflag, size = 0x8, scoped, tag = 'scoped memory for tpu_custom_call.1']
    #allocation8 [shape = 'u8[262144]{0}', space=vmem, size = 0x40000, scoped, tag = 'input window, operand 1']
    #allocation9 [shape = 's32[2]{0}', space=sflag, size = 0x8, scoped, tag = 'scoped memory for tpu_custom_call.1']
    #allocation10 [shape = 'u8[589824]{0}', space=vmem, size = 0x90000, scoped, tag = 'input window, operand 2, single buffered']
    #allocation11 [shape = 'u8[589824]{0}', space=vmem, size = 0x90000, scoped, tag = 'input window, operand 5, single buffered']
    #allocation12 [shape = 's32[1]{0}', space=sflag, size = 0x4, scoped, tag = 'scoped memory for tpu_custom_call.1']
    #allocation13 [shape = 'u8[262144]{0}', space=vmem, size = 0x40000, scoped, tag = 'output window, operand 0']
    %12 = vsyncpa [#allocation6], 0
    %s13 = scalar_lea.sflag [#allocation6], 1
    %14 = vsyncpa %s13, 0
    %15 = vsyncpa [#allocation9], 0
    %s16 = scalar_lea.sflag [#allocation9], 1
    %17 = vsyncpa %s16, 0
    %18 = vsyncpa [#allocation12], 0
    %19 = vsyncpa [#allocation7], 0
    %s20 = scalar_lea.sflag [#allocation7], 1
    %21 = vsyncpa %s20, 0
    loop: start=0, step=1, limit=4
    $region2: #{tpu_custom_call.1} parent=1 // loop_pre_header
      _
    $region3: #{tpu_custom_call.1} parent=1 // loop_header
      %s23 = sphi 0, %s27
      %p24 = scmp.ge.s32.totalorder %s23, 4
      %s33 = sphi 0, %s35
      %s36 = sphi 0, %s33
      %s37 = sphi 0, %s36
      %s53 = sphi 0, %s37
      %s59 = sphi 0, %s61
      %s62 = sphi 0, %s59
      %s63 = sphi 0, %s62
      %s79 = sphi 0, %s63
      %s83 = sphi 0, %s83
      %s85 = sphi 0, %s83
      %s86 = sphi 0, %s85
      %s100 = sphi 0, %s86
      %s104 = sphi 0, %s104
      %s106 = sphi 0, %s104
      %s107 = sphi 0, %s106
      %s121 = sphi 0, %s107
      %s125 = sphi 0, %s125
      %s127 = sphi 0, %s125
      %s128 = sphi 0, %s127
      %s142 = sphi 0, %s128
      %s146 = sphi 0, %s146
      %s148 = sphi 0, %s146
      %s149 = sphi 0, %s148
      %s163 = sphi 0, %s149
      %s167 = sphi 0, %s167
      %s169 = sphi 0, %s167
      %s170 = sphi 0, %s169
      %s184 = sphi 0, %s170
      %s190 = sphi 0, %s192
      %s193 = sphi 0, %s190
      %s194 = sphi 0, %s193
      %s210 = sphi 0, %s194
    $region4: #{tpu_custom_call.1} parent=1 // loop_header_branch
      %26 = sbr.rel (%p24) target = $region8
    $region5: #{tpu_custom_call.1} parent=1 // loop_body
      %s28 = ssub.s32 %s23, 1
      %s29 = ssub.s32 %s23, 2
      %s30 = sadd.s32 %s23, 1
      %s31 = ssub.s32 %s23, %s30
      %p32 = scmp.eq.s32.totalorder %s31, 0
      %s34 = sadd.s32 %s33, 1
      %s35 = scalar_select %p32, %s33, %s34
      %p38 = pneg %p32
      %p39 = scmp.eq.s32.totalorder %s23, 1
      %p40 = por %p38, %p39
      %p41 = scmp.ne.s32.totalorder %s33, %s36
      %p42 = scmp.eq.s32.totalorder %s23, 0
      %p43 = por %p41, %p42
      %p44 = scmp.ne.s32.totalorder %s33, %s36
      %p45 = scmp.eq.s32.totalorder %s28, 1
      %p46 = por %p44, %p45
      %p47 = scmp.ne.s32.totalorder %s36, %s37
      %p48 = scmp.eq.s32.totalorder %s28, 0
      %p49 = por %p47, %p48
      %p50 = scmp.ne.s32.totalorder %s36, %s37
      %p51 = scmp.eq.s32.totalorder %s29, 1
      %p52 = por %p50, %p51
      %p54 = scmp.ne.s32.totalorder %s37, %s53
      %p55 = scmp.eq.s32.totalorder %s29, 0
      %p56 = por %p54, %p55
      %s57 = ssub.s32 %s23, %s30
      %p58 = scmp.eq.s32.totalorder %s57, 0
      %s60 = sadd.s32 %s59, 1
      %s61 = scalar_select %p58, %s59, %s60
      %p64 = pneg %p58
      %p65 = scmp.eq.s32.totalorder %s23, 1
      %p66 = por %p64, %p65
      %p67 = scmp.ne.s32.totalorder %s59, %s62
      %p68 = scmp.eq.s32.totalorder %s23, 0
      %p69 = por %p67, %p68
      %p70 = scmp.ne.s32.totalorder %s59, %s62
      %p71 = scmp.eq.s32.totalorder %s28, 1
      %p72 = por %p70, %p71
      %p73 = scmp.ne.s32.totalorder %s62, %s63
      %p74 = scmp.eq.s32.totalorder %s28, 0
      %p75 = por %p73, %p74
      %p76 = scmp.ne.s32.totalorder %s62, %s63
      %p77 = scmp.eq.s32.totalorder %s29, 1
      %p78 = por %p76, %p77
      %p80 = scmp.ne.s32.totalorder %s63, %s79
      %p81 = scmp.eq.s32.totalorder %s29, 0
      %p82 = por %p80, %p81
      %s84 = sadd.s32 %s83, 1
      %p87 = scmp.eq.s32.totalorder %s23, 1
      %p88 = scmp.ne.s32.totalorder %s83, %s85
      %p89 = scmp.eq.s32.totalorder %s23, 0
      %p90 = por %p88, %p89
      %p91 = scmp.ne.s32.totalorder %s83, %s85
      %p92 = scmp.eq.s32.totalorder %s28, 1
      %p93 = por %p91, %p92
      %p94 = scmp.ne.s32.totalorder %s85, %s86
      %p95 = scmp.eq.s32.totalorder %s28, 0
      %p96 = por %p94, %p95
      %p97 = scmp.ne.s32.totalorder %s85, %s86
      %p98 = scmp.eq.s32.totalorder %s29, 1
      %p99 = por %p97, %p98
      %p101 = scmp.ne.s32.totalorder %s86, %s100
      %p102 = scmp.eq.s32.totalorder %s29, 0
      %p103 = por %p101, %p102
      %s105 = sadd.s32 %s104, 1
      %p108 = scmp.eq.s32.totalorder %s23, 1
      %p109 = scmp.ne.s32.totalorder %s104, %s106
      %p110 = scmp.eq.s32.totalorder %s23, 0
      %p111 = por %p109, %p110
      %p112 = scmp.ne.s32.totalorder %s104, %s106
      %p113 = scmp.eq.s32.totalorder %s28, 1
      %p114 = por %p112, %p113
      %p115 = scmp.ne.s32.totalorder %s106, %s107
      %p116 = scmp.eq.s32.totalorder %s28, 0
      %p117 = por %p115, %p116
      %p118 = scmp.ne.s32.totalorder %s106, %s107
      %p119 = scmp.eq.s32.totalorder %s29, 1
      %p120 = por %p118, %p119
      %p122 = scmp.ne.s32.totalorder %s107, %s121
      %p123 = scmp.eq.s32.totalorder %s29, 0
      %p124 = por %p122, %p123
      %s126 = sadd.s32 %s125, 1
      %p129 = scmp.eq.s32.totalorder %s23, 1
      %p130 = scmp.ne.s32.totalorder %s125, %s127
      %p131 = scmp.eq.s32.totalorder %s23, 0
      %p132 = por %p130, %p131
      %p133 = scmp.ne.s32.totalorder %s125, %s127
      %p134 = scmp.eq.s32.totalorder %s28, 1
      %p135 = por %p133, %p134
      %p136 = scmp.ne.s32.totalorder %s127, %s128
      %p137 = scmp.eq.s32.totalorder %s28, 0
      %p138 = por %p136, %p137
      %p139 = scmp.ne.s32.totalorder %s127, %s128
      %p140 = scmp.eq.s32.totalorder %s29, 1
      %p141 = por %p139, %p140
      %p143 = scmp.ne.s32.totalorder %s128, %s142
      %p144 = scmp.eq.s32.totalorder %s29, 0
      %p145 = por %p143, %p144
      %s147 = sadd.s32 %s146, 1
      %p150 = scmp.eq.s32.totalorder %s23, 1
      %p151 = scmp.ne.s32.totalorder %s146, %s148
      %p152 = scmp.eq.s32.totalorder %s23, 0
      %p153 = por %p151, %p152
      %p154 = scmp.ne.s32.totalorder %s146, %s148
      %p155 = scmp.eq.s32.totalorder %s28, 1
      %p156 = por %p154, %p155
      %p157 = scmp.ne.s32.totalorder %s148, %s149
      %p158 = scmp.eq.s32.totalorder %s28, 0
      %p159 = por %p157, %p158
      %p160 = scmp.ne.s32.totalorder %s148, %s149
      %p161 = scmp.eq.s32.totalorder %s29, 1
      %p162 = por %p160, %p161
      %p164 = scmp.ne.s32.totalorder %s149, %s163
      %p165 = scmp.eq.s32.totalorder %s29, 0
      %p166 = por %p164, %p165
      %s168 = sadd.s32 %s167, 1
      %p171 = scmp.eq.s32.totalorder %s23, 1
      %p172 = scmp.ne.s32.totalorder %s167, %s169
      %p173 = scmp.eq.s32.totalorder %s23, 0
      %p174 = por %p172, %p173
      %p175 = scmp.ne.s32.totalorder %s167, %s169
      %p176 = scmp.eq.s32.totalorder %s28, 1
      %p177 = por %p175, %p176
      %p178 = scmp.ne.s32.totalorder %s169, %s170
      %p179 = scmp.eq.s32.totalorder %s28, 0
      %p180 = por %p178, %p179
      %p181 = scmp.ne.s32.totalorder %s169, %s170
      %p182 = scmp.eq.s32.totalorder %s29, 1
      %p183 = por %p181, %p182
      %p185 = scmp.ne.s32.totalorder %s170, %s184
      %p186 = scmp.eq.s32.totalorder %s29, 0
      %p187 = por %p185, %p186
      %s188 = ssub.s32 %s23, %s30
      %p189 = scmp.eq.s32.totalorder %s188, 0
      %s191 = sadd.s32 %s190, 1
      %s192 = scalar_select %p189, %s190, %s191
      %p195 = pneg %p189
      %p196 = scmp.eq.s32.totalorder %s23, 1
      %p197 = por %p195, %p196
      %p198 = scmp.ne.s32.totalorder %s190, %s193
      %p199 = scmp.eq.s32.totalorder %s23, 0
      %p200 = por %p198, %p199
      %p201 = scmp.ne.s32.totalorder %s190, %s193
      %p202 = scmp.eq.s32.totalorder %s28, 1
      %p203 = por %p201, %p202
      %p204 = scmp.ne.s32.totalorder %s193, %s194
      %p205 = scmp.eq.s32.totalorder %s28, 0
      %p206 = por %p204, %p205
      %p207 = scmp.ne.s32.totalorder %s193, %s194
      %p208 = scmp.eq.s32.totalorder %s29, 1
      %p209 = por %p207, %p208
      %p211 = scmp.ne.s32.totalorder %s194, %s210
      %p212 = scmp.eq.s32.totalorder %s29, 0
      %p213 = por %p211, %p212
      %p214 = scmp.le.s32.totalorder 1, %s23
      %p215 = scmp.lt.s32.totalorder %s23, 3
      %p216 = pnand %p214, %p215
      %p217 = pneg %p216
      // Predicated region
      $region9: #{tpu_custom_call.1} parent=5 // pred_check
        _
      $region10: #{tpu_custom_call.1} parent=5 // pred_check_branch
        %219 = sbr.rel (%p216) target = $region12
      $region11: #{tpu_custom_call.1} parent=5 // pred_region
        %s220 = ssub.s32 %s23, 1
        // Predicated region
        $region13: #{tpu_custom_call.1} parent=11 // pred_check
          %p221 = pneg %p96
        $region14: #{tpu_custom_call.1} parent=11 // pred_check_branch
          %223 = sbr.rel (%p221) target = $region16
        $region15: #{tpu_custom_call.1} parent=11 // pred_region
          %s225 = ssub.s32 18432, 18432
          %226 = vsyncadd [#allocation9], %s225
          %s227 = sshll.u32 [#allocation10], 4
          %s228 = int_to_ptr.vmem [resolvable:$true] %s227
          %233 = dma.hbm_to_vmem [thread:$0]  %s2, 18432, %s228, [#allocation9], 128, 128, 8
        $region16: #{tpu_custom_call.1} parent=11 // pred_fallthru
          _
        // Predicated region
        $region17: #{tpu_custom_call.1} parent=11 // pred_check
          %p234 = pneg %p117
        $region18: #{tpu_custom_call.1} parent=11 // pred_check_branch
          %236 = sbr.rel (%p234) target = $region20
        $region19: #{tpu_custom_call.1} parent=11 // pred_region
          _
        $region20: #{tpu_custom_call.1} parent=11 // pred_fallthru
          _
        // Predicated region
        $region21: #{tpu_custom_call.1} parent=11 // pred_check
          %p237 = pneg %p138
        $region22: #{tpu_custom_call.1} parent=11 // pred_check_branch
          %239 = sbr.rel (%p237) target = $region24
        $region23: #{tpu_custom_call.1} parent=11 // pred_region
          _
        $region24: #{tpu_custom_call.1} parent=11 // pred_fallthru
          _
        // Predicated region
        $region25: #{tpu_custom_call.1} parent=11 // pred_check
          %p240 = pneg %p159
        $region26: #{tpu_custom_call.1} parent=11 // pred_check_branch
          %242 = sbr.rel (%p240) target = $region28
        $region27: #{tpu_custom_call.1} parent=11 // pred_region
          %s244 = ssub.s32 18432, 18432
          %245 = vsyncadd [#allocation12], %s244
          %s246 = sshll.u32 [#allocation11], 4
          %s247 = int_to_ptr.vmem [resolvable:$true] %s246
          %252 = dma.hbm_to_vmem [thread:$0]  %s5, 18432, %s247, [#allocation12], 128, 128, 8
        $region28: #{tpu_custom_call.1} parent=11 // pred_fallthru
          _
        // Predicated region
        $region29: #{tpu_custom_call.1} parent=11 // pred_check
          %p253 = pneg %p180
        $region30: #{tpu_custom_call.1} parent=11 // pred_check_branch
          %255 = sbr.rel (%p253) target = $region32
        $region31: #{tpu_custom_call.1} parent=11 // pred_region
          _
        $region32: #{tpu_custom_call.1} parent=11 // pred_fallthru
          _
      $region12: #{tpu_custom_call.1} parent=5 // pred_fallthru
        _
      %p256 = scmp.lt.s32.totalorder %s23, 2
      // Predicated region
      $region33: #{tpu_custom_call.1} parent=5 // pred_check
        %p257 = pneg %p256
      $region34: #{tpu_custom_call.1} parent=5 // pred_check_branch
        %259 = sbr.rel (%p257) target = $region36
      $region35: #{tpu_custom_call.1} parent=5 // pred_region
        // Predicated region
        $region37: #{tpu_custom_call.1} parent=35 // pred_check
          %p260 = pneg %p43
        $region38: #{tpu_custom_call.1} parent=35 // pred_check_branch
          %262 = sbr.rel (%p260) target = $region40
        $region39: #{tpu_custom_call.1} parent=35 // pred_region
          %s263 = sand.u32 %s33, 1
          %s264 = scalar_lea.sflag [#allocation6], %s263
          %s265 = sand.u32 %s33, 1
          %s266 = smul.addr %s265, 64
          %s267 = scalar_lea.vmem [#allocation5], %s266
          %s269 = ssub.s32 1024, 1024
          %270 = vsyncadd %s264, %s269
          %s271 = smul.addr %s23, 8
          %s272 = smul.addr %s271, 128
          %s273 = scalar_lea.hbm %s0, %s272
          %s274 = sshll.u32 %s267, 4
          %s275 = int_to_ptr.vmem [resolvable:$true] %s274
          %280 = dma.hbm_to_vmem [thread:$0]  %s273, 1024, %s275, %s264, 128, 128, 8
        $region40: #{tpu_custom_call.1} parent=35 // pred_fallthru
          _
        // Predicated region
        $region41: #{tpu_custom_call.1} parent=35 // pred_check
          %p281 = pneg %p69
        $region42: #{tpu_custom_call.1} parent=35 // pred_check_branch
          %283 = sbr.rel (%p281) target = $region44
        $region43: #{tpu_custom_call.1} parent=35 // pred_region
          %s284 = sand.u32 %s23, 1
          %s285 = scalar_lea.sflag [#allocation9], %s284
          %s286 = sand.u32 %s59, 1
          %s287 = smul.addr %s286, 256
          %s288 = scalar_lea.vmem [#allocation8], %s287
          %s290 = ssub.s32 4096, 4096
          %291 = vsyncadd %s285, %s290
          %s292 = smul.addr %s23, 32
          %s293 = smul.addr %s292, 128
          %s294 = scalar_lea.hbm %s1, %s293
          %s295 = sshll.u32 %s288, 4
          %s296 = int_to_ptr.vmem [resolvable:$true] %s295
          %301 = dma.hbm_to_vmem [thread:$0]  %s294, 4096, %s296, %s285, 256, 256, 16
        $region44: #{tpu_custom_call.1} parent=35 // pred_fallthru
          _
      $region36: #{tpu_custom_call.1} parent=5 // pred_fallthru
        _
      %p302 = scmp.le.s32.totalorder 1, %s23
      %p303 = scmp.lt.s32.totalorder %s23, 3
      %p304 = pnand %p302, %p303
      %p305 = pneg %p304
      // Predicated region
      $region45: #{tpu_custom_call.1} parent=5 // pred_check
        _
      $region46: #{tpu_custom_call.1} parent=5 // pred_check_branch
        %307 = sbr.rel (%p304) target = $region48
      $region47: #{tpu_custom_call.1} parent=5 // pred_region
        %s308 = ssub.s32 %s23, 1
        %s309 = sand.u32 %s36, 1
        %s310 = scalar_lea.sflag [#allocation6], %s309
        %s311 = sand.u32 %s36, 1
        %s312 = smul.addr %s311, 64
        %s313 = scalar_lea.vmem [#allocation5], %s312
        // Predicated region
        $region49: #{tpu_custom_call.1} parent=47 // pred_check
          %p314 = pneg %p49
        $region50: #{tpu_custom_call.1} parent=47 // pred_check_branch
          %316 = sbr.rel (%p314) target = $region52
        $region51: #{tpu_custom_call.1} parent=47 // pred_region
          %317 = dma.done %s310, 1024
        $region52: #{tpu_custom_call.1} parent=47 // pred_fallthru
          _
        %s318 = sand.u32 %s28, 1
        %s319 = scalar_lea.sflag [#allocation9], %s318
        %s320 = sand.u32 %s62, 1
        %s321 = smul.addr %s320, 256
        %s322 = scalar_lea.vmem [#allocation8], %s321
        // Predicated region
        $region53: #{tpu_custom_call.1} parent=47 // pred_check
          %p323 = pneg %p75
        $region54: #{tpu_custom_call.1} parent=47 // pred_check_branch
          %325 = sbr.rel (%p323) target = $region56
        $region55: #{tpu_custom_call.1} parent=47 // pred_region
          %326 = dma.done %s319, 4096
        $region56: #{tpu_custom_call.1} parent=47 // pred_fallthru
          _
        // Predicated region
        $region57: #{tpu_custom_call.1} parent=47 // pred_check
          %p327 = pneg %p96
        $region58: #{tpu_custom_call.1} parent=47 // pred_check_branch
          %329 = sbr.rel (%p327) target = $region60
        $region59: #{tpu_custom_call.1} parent=47 // pred_region
          %330 = dma.done [#allocation9], 18432
        $region60: #{tpu_custom_call.1} parent=47 // pred_fallthru
          _
        // Predicated region
        $region61: #{tpu_custom_call.1} parent=47 // pred_check
          %p331 = pneg %p159
        $region62: #{tpu_custom_call.1} parent=47 // pred_check_branch
          %333 = sbr.rel (%p331) target = $region64
        $region63: #{tpu_custom_call.1} parent=47 // pred_region
          %334 = dma.done [#allocation12], 18432
        $region64: #{tpu_custom_call.1} parent=47 // pred_fallthru
          _
        %s335 = sand.u32 %s36, 1
        %s336 = scalar_lea.sflag [#allocation6], %s335
        %s337 = sand.u32 %s36, 1
        %s338 = smul.addr %s337, 64
        %s339 = scalar_lea.vmem [#allocation5], %s338
        %p340 = pneg %p49
        %p341 = pneg %p46
        %s342 = sand.u32 %s28, 1
        %s343 = scalar_lea.sflag [#allocation9], %s342
        %s344 = sand.u32 %s62, 1
        %s345 = smul.addr %s344, 256
        %s346 = scalar_lea.vmem [#allocation8], %s345
        %p347 = pneg %p75
        %p348 = pneg %p72
        %p349 = pneg %p96
        %p350 = pneg %p93
        %p351 = pneg %p117
        %p352 = pneg %p114
        %p353 = pneg %p138
        %p354 = pneg %p135
        %p355 = pneg %p159
        %p356 = pneg %p156
        %p357 = pneg %p180
        %p358 = pneg %p177
        %p359 = pneg %p206
        %p360 = pneg %p203
        %s361 = sand.u32 %s193, 1
        %s362 = scalar_lea.sflag [#allocation7], %s361
        %s363 = sand.u32 %s193, 1
        %s364 = smul.addr %s363, 256
        %s365 = scalar_lea.vmem [#allocation13], %s364
        %366 = vst [vmem:[#allocation2] sm:$0xff] 0.0
        %367 = vst [vmem:[#allocation2 + $0x8] sm:$0x3] 0.0
        %s368 = scalar_lea.vmem [#allocation2], 144
        %369 = vst [vmem:[%s368] sm:$0xff] 0.0
        %370 = vst [vmem:[%s368 + $0x8] sm:$0x3] 0.0
        %371 = vst [vmem:[#allocation2] sm:$0x1] 0.0
        %372 = vst [vmem:[#allocation2 + $0x10] sm:$0x1] 0.0
        %373 = vst [vmem:[#allocation2 + $0x20] sm:$0x1] 0.0
        %374 = vst [vmem:[#allocation2 + $0x30] sm:$0x1] 0.0
        %375 = vst [vmem:[#allocation2 + $0x40] sm:$0x1] 0.0
        %376 = vst [vmem:[#allocation2 + $0x50] sm:$0x1] 0.0
        %377 = vst [vmem:[#allocation2 + $0x60] sm:$0x1] 0.0
        %378 = vst [vmem:[#allocation2 + $0x70] sm:$0x1] 0.0
        %379 = vst [vmem:[#allocation2 + $0x80] sm:$0x1] 0.0
        %380 = vst [vmem:[#allocation2 + $0x90] sm:$0x1] 0.0
        %381 = vst [vmem:[#allocation2 + $0x9] sm:$0x1] 0.0
        %382 = vst [vmem:[#allocation2 + $0x19] sm:$0x1] 0.0
        %383 = vst [vmem:[#allocation2 + $0x29] sm:$0x1] 0.0
        %384 = vst [vmem:[#allocation2 + $0x39] sm:$0x1] 0.0
        %385 = vst [vmem:[#allocation2 + $0x49] sm:$0x1] 0.0
        %386 = vst [vmem:[#allocation2 + $0x59] sm:$0x1] 0.0
        %387 = vst [vmem:[#allocation2 + $0x69] sm:$0x1] 0.0
        %388 = vst [vmem:[#allocation2 + $0x79] sm:$0x1] 0.0
        %389 = vst [vmem:[#allocation2 + $0x89] sm:$0x1] 0.0
        %390 = vst [vmem:[#allocation2 + $0x99] sm:$0x1] 0.0
        %391 = vst [vmem:[#allocation3] sm:$0xff] 0.0
        %392 = vst [vmem:[#allocation3 + $0x8] sm:$0x3] 0.0
        %s393 = scalar_lea.vmem [#allocation3], 144
        %394 = vst [vmem:[%s393] sm:$0xff] 0.0
        %395 = vst [vmem:[%s393 + $0x8] sm:$0x3] 0.0
        %396 = vst [vmem:[#allocation3] sm:$0x1] 0.0
        %397 = vst [vmem:[#allocation3 + $0x10] sm:$0x1] 0.0
        %398 = vst [vmem:[#allocation3 + $0x20] sm:$0x1] 0.0
        %399 = vst [vmem:[#allocation3 + $0x30] sm:$0x1] 0.0
        %400 = vst [vmem:[#allocation3 + $0x40] sm:$0x1] 0.0
        %401 = vst [vmem:[#allocation3 + $0x50] sm:$0x1] 0.0
        %402 = vst [vmem:[#allocation3 + $0x60] sm:$0x1] 0.0
        %403 = vst [vmem:[#allocation3 + $0x70] sm:$0x1] 0.0
        %404 = vst [vmem:[#allocation3 + $0x80] sm:$0x1] 0.0
        %405 = vst [vmem:[#allocation3 + $0x90] sm:$0x1] 0.0
        %406 = vst [vmem:[#allocation3 + $0x9] sm:$0x1] 0.0
        %407 = vst [vmem:[#allocation3 + $0x19] sm:$0x1] 0.0
        %408 = vst [vmem:[#allocation3 + $0x29] sm:$0x1] 0.0
        %409 = vst [vmem:[#allocation3 + $0x39] sm:$0x1] 0.0
        %410 = vst [vmem:[#allocation3 + $0x49] sm:$0x1] 0.0
        %411 = vst [vmem:[#allocation3 + $0x59] sm:$0x1] 0.0
        %412 = vst [vmem:[#allocation3 + $0x69] sm:$0x1] 0.0
        %413 = vst [vmem:[#allocation3 + $0x79] sm:$0x1] 0.0
        %414 = vst [vmem:[#allocation3 + $0x89] sm:$0x1] 0.0
        %415 = vst [vmem:[#allocation3 + $0x99] sm:$0x1] 0.0
        %416 = vst [vmem:[#allocation4] sm:$0xff] 0.0
        %417 = vst [vmem:[#allocation4 + $0x8] sm:$0x3] 0.0
        %418 = vst [vmem:[#allocation4 + $0xa0] sm:$0xff] 0.0
        %419 = vst [vmem:[#allocation4 + $0xa8] sm:$0x3] 0.0
        %420 = vst [vmem:[#allocation4 + $0x140] sm:$0xff] 0.0
        %421 = vst [vmem:[#allocation4 + $0x148] sm:$0x3] 0.0
        %422 = vst [vmem:[#allocation4 + $0x1e0] sm:$0xff] 0.0
        %423 = vst [vmem:[#allocation4 + $0x1e8] sm:$0x3] 0.0
        %s424 = scalar_lea.vmem [#allocation4], 144
        %425 = vst [vmem:[%s424] sm:$0xff] 0.0
        %426 = vst [vmem:[%s424 + $0x8] sm:$0x3] 0.0
        %427 = vst [vmem:[%s424 + $0xa0] sm:$0xff] 0.0
        %428 = vst [vmem:[%s424 + $0xa8] sm:$0x3] 0.0
        %429 = vst [vmem:[%s424 + $0x140] sm:$0xff] 0.0
        %430 = vst [vmem:[%s424 + $0x148] sm:$0x3] 0.0
        %431 = vst [vmem:[%s424 + $0x1e0] sm:$0xff] 0.0
        %432 = vst [vmem:[%s424 + $0x1e8] sm:$0x3] 0.0
        %433 = vst [vmem:[#allocation4] sm:$0x1] 0.0
        %434 = vst [vmem:[#allocation4 + $0x10] sm:$0x1] 0.0
        %435 = vst [vmem:[#allocation4 + $0x20] sm:$0x1] 0.0
        %436 = vst [vmem:[#allocation4 + $0x30] sm:$0x1] 0.0
        %437 = vst [vmem:[#allocation4 + $0x40] sm:$0x1] 0.0
        %438 = vst [vmem:[#allocation4 + $0x50] sm:$0x1] 0.0
        %439 = vst [vmem:[#allocation4 + $0x60] sm:$0x1] 0.0
        %440 = vst [vmem:[#allocation4 + $0x70] sm:$0x1] 0.0
        %441 = vst [vmem:[#allocation4 + $0x80] sm:$0x1] 0.0
        %442 = vst [vmem:[#allocation4 + $0x90] sm:$0x1] 0.0
        %443 = vst [vmem:[#allocation4 + $0xa0] sm:$0x1] 0.0
        %444 = vst [vmem:[#allocation4 + $0xb0] sm:$0x1] 0.0
        %445 = vst [vmem:[#allocation4 + $0xc0] sm:$0x1] 0.0
        %446 = vst [vmem:[#allocation4 + $0xd0] sm:$0x1] 0.0
        %447 = vst [vmem:[#allocation4 + $0xe0] sm:$0x1] 0.0
        %448 = vst [vmem:[#allocation4 + $0xf0] sm:$0x1] 0.0
        %449 = vst [vmem:[#allocation4 + $0x100] sm:$0x1] 0.0
        %450 = vst [vmem:[#allocation4 + $0x110] sm:$0x1] 0.0
        %451 = vst [vmem:[#allocation4 + $0x120] sm:$0x1] 0.0
        %452 = vst [vmem:[#allocation4 + $0x130] sm:$0x1] 0.0
        %453 = vst [vmem:[#allocation4 + $0x140] sm:$0x1] 0.0
        %454 = vst [vmem:[#allocation4 + $0x150] sm:$0x1] 0.0
        %455 = vst [vmem:[#allocation4 + $0x160] sm:$0x1] 0.0
        %456 = vst [vmem:[#allocation4 + $0x170] sm:$0x1] 0.0
        %457 = vst [vmem:[#allocation4 + $0x180] sm:$0x1] 0.0
        %458 = vst [vmem:[#allocation4 + $0x190] sm:$0x1] 0.0
        %459 = vst [vmem:[#allocation4 + $0x1a0] sm:$0x1] 0.0
        %460 = vst [vmem:[#allocation4 + $0x1b0] sm:$0x1] 0.0
        %461 = vst [vmem:[#allocation4 + $0x1c0] sm:$0x1] 0.0
        %462 = vst [vmem:[#allocation4 + $0x1d0] sm:$0x1] 0.0
        %463 = vst [vmem:[#allocation4 + $0x1e0] sm:$0x1] 0.0
        %464 = vst [vmem:[#allocation4 + $0x1f0] sm:$0x1] 0.0
        %465 = vst [vmem:[#allocation4 + $0x200] sm:$0x1] 0.0
        %466 = vst [vmem:[#allocation4 + $0x210] sm:$0x1] 0.0
        %467 = vst [vmem:[#allocation4 + $0x220] sm:$0x1] 0.0
        %468 = vst [vmem:[#allocation4 + $0x230] sm:$0x1] 0.0
        %469 = vst [vmem:[#allocation4 + $0x240] sm:$0x1] 0.0
        %470 = vst [vmem:[#allocation4 + $0x250] sm:$0x1] 0.0
        %471 = vst [vmem:[#allocation4 + $0x260] sm:$0x1] 0.0
        %472 = vst [vmem:[#allocation4 + $0x270] sm:$0x1] 0.0
        %473 = vst [vmem:[#allocation4 + $0x9] sm:$0x1] 0.0
        %474 = vst [vmem:[#allocation4 + $0x19] sm:$0x1] 0.0
        %475 = vst [vmem:[#allocation4 + $0x29] sm:$0x1] 0.0
        %476 = vst [vmem:[#allocation4 + $0x39] sm:$0x1] 0.0
        %477 = vst [vmem:[#allocation4 + $0x49] sm:$0x1] 0.0
        %478 = vst [vmem:[#allocation4 + $0x59] sm:$0x1] 0.0
        %479 = vst [vmem:[#allocation4 + $0x69] sm:$0x1] 0.0
        %480 = vst [vmem:[#allocation4 + $0x79] sm:$0x1] 0.0
        %481 = vst [vmem:[#allocation4 + $0x89] sm:$0x1] 0.0
        %482 = vst [vmem:[#allocation4 + $0x99] sm:$0x1] 0.0
        %483 = vst [vmem:[#allocation4 + $0xa9] sm:$0x1] 0.0
        %484 = vst [vmem:[#allocation4 + $0xb9] sm:$0x1] 0.0
        %485 = vst [vmem:[#allocation4 + $0xc9] sm:$0x1] 0.0
        %486 = vst [vmem:[#allocation4 + $0xd9] sm:$0x1] 0.0
        %487 = vst [vmem:[#allocation4 + $0xe9] sm:$0x1] 0.0
        %488 = vst [vmem:[#allocation4 + $0xf9] sm:$0x1] 0.0
        %489 = vst [vmem:[#allocation4 + $0x109] sm:$0x1] 0.0
        %490 = vst [vmem:[#allocation4 + $0x119] sm:$0x1] 0.0
        %491 = vst [vmem:[#allocation4 + $0x129] sm:$0x1] 0.0
        %492 = vst [vmem:[#allocation4 + $0x139] sm:$0x1] 0.0
        %493 = vst [vmem:[#allocation4 + $0x149] sm:$0x1] 0.0
        %494 = vst [vmem:[#allocation4 + $0x159] sm:$0x1] 0.0
        %495 = vst [vmem:[#allocation4 + $0x169] sm:$0x1] 0.0
        %496 = vst [vmem:[#allocation4 + $0x179] sm:$0x1] 0.0
        %497 = vst [vmem:[#allocation4 + $0x189] sm:$0x1] 0.0
        %498 = vst [vmem:[#allocation4 + $0x199] sm:$0x1] 0.0
        %499 = vst [vmem:[#allocation4 + $0x1a9] sm:$0x1] 0.0
        %500 = vst [vmem:[#allocation4 + $0x1b9] sm:$0x1] 0.0
        %501 = vst [vmem:[#allocation4 + $0x1c9] sm:$0x1] 0.0
        %502 = vst [vmem:[#allocation4 + $0x1d9] sm:$0x1] 0.0
        %503 = vst [vmem:[#allocation4 + $0x1e9] sm:$0x1] 0.0
        %504 = vst [vmem:[#allocation4 + $0x1f9] sm:$0x1] 0.0
        %505 = vst [vmem:[#allocation4 + $0x209] sm:$0x1] 0.0
        %506 = vst [vmem:[#allocation4 + $0x219] sm:$0x1] 0.0
        %507 = vst [vmem:[#allocation4 + $0x229] sm:$0x1] 0.0
        %508 = vst [vmem:[#allocation4 + $0x239] sm:$0x1] 0.0
        %509 = vst [vmem:[#allocation4 + $0x249] sm:$0x1] 0.0
        %510 = vst [vmem:[#allocation4 + $0x259] sm:$0x1] 0.0
        %511 = vst [vmem:[#allocation4 + $0x269] sm:$0x1] 0.0
        %512 = vst [vmem:[#allocation4 + $0x279] sm:$0x1] 0.0
        %v513 = vld [vmem:[%s313] sm:$0xff]
        %v514 = vld [vmem:[%s313 + $0x8] sm:$0xff]
        %v515 = vld [vmem:[%s313 + $0x10] sm:$0xff]
        %v516 = vld [vmem:[%s313 + $0x18] sm:$0xff]
        %v517 = vld [vmem:[%s313 + $0x20] sm:$0xff]
        %v518 = vld [vmem:[%s313 + $0x28] sm:$0xff]
        %v519 = vld [vmem:[%s313 + $0x30] sm:$0xff]
        %v520 = vld [vmem:[%s313 + $0x38] sm:$0xff]
        %s521 = scalar_lea.vmem [#allocation2], 16
        %522 = vst [vmem:[%s521 + $0x1] sm:$0xff] %v513
        %523 = vst [vmem:[%s521 + $0x11] sm:$0xff] %v514
        %524 = vst [vmem:[%s521 + $0x21] sm:$0xff] %v515
        %525 = vst [vmem:[%s521 + $0x31] sm:$0xff] %v516
        %526 = vst [vmem:[%s521 + $0x41] sm:$0xff] %v517
        %527 = vst [vmem:[%s521 + $0x51] sm:$0xff] %v518
        %528 = vst [vmem:[%s521 + $0x61] sm:$0xff] %v519
        %529 = vst [vmem:[%s521 + $0x71] sm:$0xff] %v520
        %v530 = vld [vmem:[#allocation10] sm:$0xff]
        %v531 = vld [vmem:[#allocation10 + $0x8] sm:$0xff]
        %v532 = vld [vmem:[#allocation10 + $0x10] sm:$0xff]
        %v533 = vld [vmem:[#allocation10 + $0x18] sm:$0xff]
        %v534 = vld [vmem:[#allocation10 + $0x20] sm:$0xff]
        %v535 = vld [vmem:[#allocation10 + $0x28] sm:$0xff]
        %v536 = vld [vmem:[#allocation10 + $0x30] sm:$0xff]
        %v537 = vld [vmem:[#allocation10 + $0x38] sm:$0xff]
        %v538 = vld [vmem:[#allocation10 + $0x40] sm:$0xff]
        %v539 = vld [vmem:[#allocation10 + $0x48] sm:$0xff]
        %v540 = vld [vmem:[#allocation10 + $0x50] sm:$0xff]
        %v541 = vld [vmem:[#allocation10 + $0x58] sm:$0xff]
        %v542 = vld [vmem:[#allocation10 + $0x60] sm:$0xff]
        %v543 = vld [vmem:[#allocation10 + $0x68] sm:$0xff]
        %v544 = vld [vmem:[#allocation10 + $0x70] sm:$0xff]
        %v545 = vld [vmem:[#allocation10 + $0x78] sm:$0xff]
        %s546 = scalar_lea.vmem [#allocation10], 128
        %v547 = vld [vmem:[%s546] sm:$0xff]
        %v548 = vld [vmem:[%s546 + $0x8] sm:$0xff]
        %v549 = vld [vmem:[%s546 + $0x10] sm:$0xff]
        %v550 = vld [vmem:[%s546 + $0x18] sm:$0xff]
        %v551 = vld [vmem:[%s546 + $0x20] sm:$0xff]
        %v552 = vld [vmem:[%s546 + $0x28] sm:$0xff]
        %v553 = vld [vmem:[%s546 + $0x30] sm:$0xff]
        %v554 = vld [vmem:[%s546 + $0x38] sm:$0xff]
        %v555 = vld [vmem:[%s546 + $0x40] sm:$0xff]
        %v556 = vld [vmem:[%s546 + $0x48] sm:$0xff]
        %v557 = vld [vmem:[%s546 + $0x50] sm:$0xff]
        %v558 = vld [vmem:[%s546 + $0x58] sm:$0xff]
        %v559 = vld [vmem:[%s546 + $0x60] sm:$0xff]
        %v560 = vld [vmem:[%s546 + $0x68] sm:$0xff]
        %v561 = vld [vmem:[%s546 + $0x70] sm:$0xff]
        %v562 = vld [vmem:[%s546 + $0x78] sm:$0xff]
        %s563 = scalar_lea.vmem [#allocation10], 256
        %v564 = vld [vmem:[%s563] sm:$0xff]
        %v565 = vld [vmem:[%s563 + $0x8] sm:$0xff]
        %v566 = vld [vmem:[%s563 + $0x10] sm:$0xff]
        %v567 = vld [vmem:[%s563 + $0x18] sm:$0xff]
        %v568 = vld [vmem:[%s563 + $0x20] sm:$0xff]
        %v569 = vld [vmem:[%s563 + $0x28] sm:$0xff]
        %v570 = vld [vmem:[%s563 + $0x30] sm:$0xff]
        %v571 = vld [vmem:[%s563 + $0x38] sm:$0xff]
        %v572 = vld [vmem:[%s563 + $0x40] sm:$0xff]
        %v573 = vld [vmem:[%s563 + $0x48] sm:$0xff]
        %v574 = vld [vmem:[%s563 + $0x50] sm:$0xff]
        %v575 = vld [vmem:[%s563 + $0x58] sm:$0xff]
        %v576 = vld [vmem:[%s563 + $0x60] sm:$0xff]
        %v577 = vld [vmem:[%s563 + $0x68] sm:$0xff]
        %v578 = vld [vmem:[%s563 + $0x70] sm:$0xff]
        %v579 = vld [vmem:[%s563 + $0x78] sm:$0xff]
        %s580 = scalar_lea.vmem [#allocation10], 384
        %v581 = vld [vmem:[%s580] sm:$0xff]
        %v582 = vld [vmem:[%s580 + $0x8] sm:$0xff]
        %v583 = vld [vmem:[%s580 + $0x10] sm:$0xff]
        %v584 = vld [vmem:[%s580 + $0x18] sm:$0xff]
        %v585 = vld [vmem:[%s580 + $0x20] sm:$0xff]
        %v586 = vld [vmem:[%s580 + $0x28] sm:$0xff]
        %v587 = vld [vmem:[%s580 + $0x30] sm:$0xff]
        %v588 = vld [vmem:[%s580 + $0x38] sm:$0xff]
        %v589 = vld [vmem:[%s580 + $0x40] sm:$0xff]
        %v590 = vld [vmem:[%s580 + $0x48] sm:$0xff]
        %v591 = vld [vmem:[%s580 + $0x50] sm:$0xff]
        %v592 = vld [vmem:[%s580 + $0x58] sm:$0xff]
        %v593 = vld [vmem:[%s580 + $0x60] sm:$0xff]
        %v594 = vld [vmem:[%s580 + $0x68] sm:$0xff]
        %v595 = vld [vmem:[%s580 + $0x70] sm:$0xff]
        %v596 = vld [vmem:[%s580 + $0x78] sm:$0xff]
        %s597 = scalar_lea.vmem [#allocation10], 512
        %v598 = vld [vmem:[%s597] sm:$0xff]
        %v599 = vld [vmem:[%s597 + $0x8] sm:$0xff]
        %v600 = vld [vmem:[%s597 + $0x10] sm:$0xff]
        %v601 = vld [vmem:[%s597 + $0x18] sm:$0xff]
        %v602 = vld [vmem:[%s597 + $0x20] sm:$0xff]
        %v603 = vld [vmem:[%s597 + $0x28] sm:$0xff]
        %v604 = vld [vmem:[%s597 + $0x30] sm:$0xff]
        %v605 = vld [vmem:[%s597 + $0x38] sm:$0xff]
        %v606 = vld [vmem:[%s597 + $0x40] sm:$0xff]
        %v607 = vld [vmem:[%s597 + $0x48] sm:$0xff]
        %v608 = vld [vmem:[%s597 + $0x50] sm:$0xff]
        %v609 = vld [vmem:[%s597 + $0x58] sm:$0xff]
        %v610 = vld [vmem:[%s597 + $0x60] sm:$0xff]
        %v611 = vld [vmem:[%s597 + $0x68] sm:$0xff]
        %v612 = vld [vmem:[%s597 + $0x70] sm:$0xff]
        %v613 = vld [vmem:[%s597 + $0x78] sm:$0xff]
        %s614 = scalar_lea.vmem [#allocation10], 640
        %v615 = vld [vmem:[%s614] sm:$0xff]
        %v616 = vld [vmem:[%s614 + $0x8] sm:$0xff]
        %v617 = vld [vmem:[%s614 + $0x10] sm:$0xff]
        %v618 = vld [vmem:[%s614 + $0x18] sm:$0xff]
        %v619 = vld [vmem:[%s614 + $0x20] sm:$0xff]
        %v620 = vld [vmem:[%s614 + $0x28] sm:$0xff]
        %v621 = vld [vmem:[%s614 + $0x30] sm:$0xff]
        %v622 = vld [vmem:[%s614 + $0x38] sm:$0xff]
        %v623 = vld [vmem:[%s614 + $0x40] sm:$0xff]
        %v624 = vld [vmem:[%s614 + $0x48] sm:$0xff]
        %v625 = vld [vmem:[%s614 + $0x50] sm:$0xff]
        %v626 = vld [vmem:[%s614 + $0x58] sm:$0xff]
        %v627 = vld [vmem:[%s614 + $0x60] sm:$0xff]
        %v628 = vld [vmem:[%s614 + $0x68] sm:$0xff]
        %v629 = vld [vmem:[%s614 + $0x70] sm:$0xff]
        %v630 = vld [vmem:[%s614 + $0x78] sm:$0xff]
        %s631 = scalar_lea.vmem [#allocation10], 768
        %v632 = vld [vmem:[%s631] sm:$0xff]
        %v633 = vld [vmem:[%s631 + $0x8] sm:$0xff]
        %v634 = vld [vmem:[%s631 + $0x10] sm:$0xff]
        %v635 = vld [vmem:[%s631 + $0x18] sm:$0xff]
        %v636 = vld [vmem:[%s631 + $0x20] sm:$0xff]
        %v637 = vld [vmem:[%s631 + $0x28] sm:$0xff]
        %v638 = vld [vmem:[%s631 + $0x30] sm:$0xff]
        %v639 = vld [vmem:[%s631 + $0x38] sm:$0xff]
        %v640 = vld [vmem:[%s631 + $0x40] sm:$0xff]
        %v641 = vld [vmem:[%s631 + $0x48] sm:$0xff]
        %v642 = vld [vmem:[%s631 + $0x50] sm:$0xff]
        %v643 = vld [vmem:[%s631 + $0x58] sm:$0xff]
        %v644 = vld [vmem:[%s631 + $0x60] sm:$0xff]
        %v645 = vld [vmem:[%s631 + $0x68] sm:$0xff]
        %v646 = vld [vmem:[%s631 + $0x70] sm:$0xff]
        %v647 = vld [vmem:[%s631 + $0x78] sm:$0xff]
        %s648 = scalar_lea.vmem [#allocation10], 896
        %v649 = vld [vmem:[%s648] sm:$0xff]
        %v650 = vld [vmem:[%s648 + $0x8] sm:$0xff]
        %v651 = vld [vmem:[%s648 + $0x10] sm:$0xff]
        %v652 = vld [vmem:[%s648 + $0x18] sm:$0xff]
        %v653 = vld [vmem:[%s648 + $0x20] sm:$0xff]
        %v654 = vld [vmem:[%s648 + $0x28] sm:$0xff]
        %v655 = vld [vmem:[%s648 + $0x30] sm:$0xff]
        %v656 = vld [vmem:[%s648 + $0x38] sm:$0xff]
        %v657 = vld [vmem:[%s648 + $0x40] sm:$0xff]
        %v658 = vld [vmem:[%s648 + $0x48] sm:$0xff]
        %v659 = vld [vmem:[%s648 + $0x50] sm:$0xff]
        %v660 = vld [vmem:[%s648 + $0x58] sm:$0xff]
        %v661 = vld [vmem:[%s648 + $0x60] sm:$0xff]
        %v662 = vld [vmem:[%s648 + $0x68] sm:$0xff]
        %v663 = vld [vmem:[%s648 + $0x70] sm:$0xff]
        %v664 = vld [vmem:[%s648 + $0x78] sm:$0xff]
        %s665 = scalar_lea.vmem [#allocation10], 1024
        %v666 = vld [vmem:[%s665] sm:$0xff]
        %v667 = vld [vmem:[%s665 + $0x8] sm:$0xff]
        %v668 = vld [vmem:[%s665 + $0x10] sm:$0xff]
        %v669 = vld [vmem:[%s665 + $0x18] sm:$0xff]
        %v670 = vld [vmem:[%s665 + $0x20] sm:$0xff]
        %v671 = vld [vmem:[%s665 + $0x28] sm:$0xff]
        %v672 = vld [vmem:[%s665 + $0x30] sm:$0xff]
        %v673 = vld [vmem:[%s665 + $0x38] sm:$0xff]
        %v674 = vld [vmem:[%s665 + $0x40] sm:$0xff]
        %v675 = vld [vmem:[%s665 + $0x48] sm:$0xff]
        %v676 = vld [vmem:[%s665 + $0x50] sm:$0xff]
        %v677 = vld [vmem:[%s665 + $0x58] sm:$0xff]
        %v678 = vld [vmem:[%s665 + $0x60] sm:$0xff]
        %v679 = vld [vmem:[%s665 + $0x68] sm:$0xff]
        %v680 = vld [vmem:[%s665 + $0x70] sm:$0xff]
        %v681 = vld [vmem:[%s665 + $0x78] sm:$0xff]
        %v682 = vld [vmem:[#allocation2] sm:$0xff]
        %v683 = vld [vmem:[#allocation2 + $0x10] sm:$0xff]
        %v684 = vld [vmem:[#allocation2 + $0x20] sm:$0xff]
        %v685 = vld [vmem:[#allocation2 + $0x30] sm:$0xff]
        %v686 = vld [vmem:[#allocation2 + $0x40] sm:$0xff]
        %v687 = vld [vmem:[#allocation2 + $0x50] sm:$0xff]
        %v688 = vld [vmem:[#allocation2 + $0x60] sm:$0xff]
        %v689 = vld [vmem:[#allocation2 + $0x70] sm:$0xff]
        %v690 = vld [vmem:[#allocation2 + $0x1] sm:$0xff]
        %v691 = vld [vmem:[#allocation2 + $0x11] sm:$0xff]
        %v692 = vld [vmem:[#allocation2 + $0x21] sm:$0xff]
        %v693 = vld [vmem:[#allocation2 + $0x31] sm:$0xff]
        %v694 = vld [vmem:[#allocation2 + $0x41] sm:$0xff]
        %v695 = vld [vmem:[#allocation2 + $0x51] sm:$0xff]
        %v696 = vld [vmem:[#allocation2 + $0x61] sm:$0xff]
        %v697 = vld [vmem:[#allocation2 + $0x71] sm:$0xff]
        %698 = vmatprep.subr.mxu0 0.0
        %699 = vmatpush1.msra.mxu0 %v547
        %700 = vmatprep.subr.mxu0 0.0
        %701 = vmatpush1.msra.mxu0 %v548
        %702 = vmatprep.subr.mxu0 0.0
        %703 = vmatpush1.msra.mxu0 %v549
        %704 = vmatprep.subr.mxu0 0.0
        %705 = vmatpush1.msra.mxu0 %v550
        %706 = vmatprep.subr.mxu0 0.0
        %707 = vmatpush1.msra.mxu0 %v551
        %708 = vmatprep.subr.mxu0 0.0
        %709 = vmatpush1.msra.mxu0 %v552
        %710 = vmatprep.subr.mxu0 0.0
        %711 = vmatpush1.msra.mxu0 %v553
        %712 = vmatprep.subr.mxu0 0.0
        %713 = vmatpush1.msra.mxu0 %v554
        %714 = vmatprep.subr.mxu0 0.0
        %715 = vmatpush1.msra.mxu0 %v555
        %716 = vmatprep.subr.mxu0 0.0
        %717 = vmatpush1.msra.mxu0 %v556
        %718 = vmatprep.subr.mxu0 0.0
        %719 = vmatpush1.msra.mxu0 %v557
        %720 = vmatprep.subr.mxu0 0.0
        %721 = vmatpush1.msra.mxu0 %v558
        %722 = vmatprep.subr.mxu0 0.0
        %723 = vmatpush1.msra.mxu0 %v559
        %724 = vmatprep.subr.mxu0 0.0
        %725 = vmatpush1.msra.mxu0 %v560
        %726 = vmatprep.subr.mxu0 0.0
        %727 = vmatpush1.msra.mxu0 %v561
        %728 = vmatprep.subr.mxu0 0.0
        %729 = vmatpush1.msra.mxu0 %v562
        %730 = vmatprep.subr.mxu0 0.0
        %731 = vmatpush1.msra.mxu0 0.0
        %732 = vmatprep.subr.mxu0 0.0
        %733 = vmatpush1.msra.mxu0 0.0
        %734 = vmatprep.subr.mxu0 0.0
        %735 = vmatpush1.msra.mxu0 0.0
        %736 = vmatprep.subr.mxu0 0.0
        %737 = vmatpush1.msra.mxu0 0.0
        %738 = vmatprep.subr.mxu0 0.0
        %739 = vmatpush1.msra.mxu0 0.0
        %740 = vmatprep.subr.mxu0 0.0
        %741 = vmatpush1.msra.mxu0 0.0
        %742 = vmatprep.subr.mxu0 0.0
        %743 = vmatpush1.msra.mxu0 0.0
        %744 = vmatprep.subr.mxu0 0.0
        %745 = vmatpush1.msra.mxu0 0.0
        %746 = vmatprep.subr.mxu0 0.0
        %747 = vmatpush1.msra.mxu0 0.0
        %748 = vmatprep.subr.mxu0 0.0
        %749 = vmatpush1.msra.mxu0 0.0
        %750 = vmatprep.subr.mxu0 0.0
        %751 = vmatpush1.msra.mxu0 0.0
        %752 = vmatprep.subr.mxu0 0.0
        %753 = vmatpush1.msra.mxu0 0.0
        %754 = vmatprep.subr.mxu0 0.0
        %755 = vmatpush1.msra.mxu0 0.0
        %756 = vmatprep.subr.mxu0 0.0
        %757 = vmatpush1.msra.mxu0 0.0
        %758 = vmatprep.subr.mxu0 0.0
        %759 = vmatpush1.msra.mxu0 0.0
        %760 = vmatprep.subr.mxu0 0.0
        %761 = vmatpush1.msra.mxu0 0.0
        %762 = vmatprep.mubr.f32.mxu0 0.0
        %763 = vmatmul.mubr.f32.gmra.mrb[0].mxu0 %v690
        %v764 = vpop.f32.mrb[0].mxu0
        %v765 = vadd.f32 0.0, %v764
        %v766 = vpop.f32.mrb[0].mxu0
        %767 = vmatprep.mubr.f32.mxu0 0.0
        %768 = vmatmul.mubr.f32.gmra.mrb[0].mxu0 %v691
        %v769 = vpop.f32.mrb[0].mxu0
        %v770 = vadd.f32 0.0, %v769
        %v771 = vpop.f32.mrb[0].mxu0
        %772 = vmatprep.mubr.f32.mxu0 0.0
        %773 = vmatmul.mubr.f32.gmra.mrb[0].mxu0 %v692
        %v774 = vpop.f32.mrb[0].mxu0
        %v775 = vadd.f32 0.0, %v774
        %v776 = vpop.f32.mrb[0].mxu0
        %777 = vmatprep.mubr.f32.mxu0 0.0
        %778 = vmatmul.mubr.f32.gmra.mrb[0].mxu0 %v693
        %v779 = vpop.f32.mrb[0].mxu0
        %v780 = vadd.f32 0.0, %v779
        %v781 = vpop.f32.mrb[0].mxu0
        %782 = vmatprep.mubr.f32.mxu0 0.0
        %783 = vmatmul.mubr.f32.gmra.mrb[0].mxu0 %v694
        %v784 = vpop.f32.mrb[0].mxu0
        %v785 = vadd.f32 0.0, %v784
        %v786 = vpop.f32.mrb[0].mxu0
        %787 = vmatprep.mubr.f32.mxu0 0.0
        %788 = vmatmul.mubr.f32.gmra.mrb[0].mxu0 %v695
        %v789 = vpop.f32.mrb[0].mxu0
        %v790 = vadd.f32 0.0, %v789
        %v791 = vpop.f32.mrb[0].mxu0
        %792 = vmatprep.mubr.f32.mxu0 0.0
        %793 = vmatmul.mubr.f32.gmra.mrb[0].mxu0 %v696
        %v794 = vpop.f32.mrb[0].mxu0
        %v795 = vadd.f32 0.0, %v794
        %v796 = vpop.f32.mrb[0].mxu0
        %797 = vmatprep.mubr.f32.mxu0 0.0
        %798 = vmatmul.mubr.f32.gmra.mrb[0].mxu0 %v697
        %v799 = vpop.f32.mrb[0].mxu0
        %v800 = vadd.f32 0.0, %v799
        %v801 = vpop.f32.mrb[0].mxu0
        %802 = vdwg.mxu0
        %803 = vmatprep.subr.mxu0 0.0
        %804 = vmatpush1.msra.mxu0 %v530
        %805 = vmatprep.subr.mxu0 0.0
        %806 = vmatpush1.msra.mxu0 %v531
        %807 = vmatprep.subr.mxu0 0.0
        %808 = vmatpush1.msra.mxu0 %v532
        %809 = vmatprep.subr.mxu0 0.0
        %810 = vmatpush1.msra.mxu0 %v533
        %811 = vmatprep.subr.mxu0 0.0
        %812 = vmatpush1.msra.mxu0 %v534
        %813 = vmatprep.subr.mxu0 0.0
        %814 = vmatpush1.msra.mxu0 %v535
        %815 = vmatprep.subr.mxu0 0.0
        %816 = vmatpush1.msra.mxu0 %v536
        %817 = vmatprep.subr.mxu0 0.0
        %818 = vmatpush1.msra.mxu0 %v537
        %819 = vmatprep.subr.mxu0 0.0
        %820 = vmatpush1.msra.mxu0 %v538
        %821 = vmatprep.subr.mxu0 0.0
        %822 = vmatpush1.msra.mxu0 %v539
        %823 = vmatprep.subr.mxu0 0.0
        %824 = vmatpush1.msra.mxu0 %v540
        %825 = vmatprep.subr.mxu0 0.0
        %826 = vmatpush1.msra.mxu0 %v541
        %827 = vmatprep.subr.mxu0 0.0
        %828 = vmatpush1.msra.mxu0 %v542
        %829 = vmatprep.subr.mxu0 0.0
        %830 = vmatpush1.msra.mxu0 %v543
        %831 = vmatprep.subr.mxu0 0.0
        %832 = vmatpush1.msra.mxu0 %v544
        %833 = vmatprep.subr.mxu0 0.0
        %834 = vmatpush1.msra.mxu0 %v545
        %835 = vmatprep.subr.mxu0 0.0
        %836 = vmatpush1.msra.mxu0 0.0
        %837 = vmatprep.subr.mxu0 0.0
        %838 = vmatpush1.msra.mxu0 0.0
        %839 = vmatprep.subr.mxu0 0.0
        %840 = vmatpush1.msra.mxu0 0.0
        %841 = vmatprep.subr.mxu0 0.0
        %842 = vmatpush1.msra.mxu0 0.0
        %843 = vmatprep.subr.mxu0 0.0
        %844 = vmatpush1.msra.mxu0 0.0
        %845 = vmatprep.subr.mxu0 0.0
        %846 = vmatpush1.msra.mxu0 0.0
        %847 = vmatprep.subr.mxu0 0.0
        %848 = vmatpush1.msra.mxu0 0.0
        %849 = vmatprep.subr.mxu0 0.0
        %850 = vmatpush1.msra.mxu0 0.0
        %851 = vmatprep.subr.mxu0 0.0
        %852 = vmatpush1.msra.mxu0 0.0
        %853 = vmatprep.subr.mxu0 0.0
        %854 = vmatpush1.msra.mxu0 0.0
        %855 = vmatprep.subr.mxu0 0.0
        %856 = vmatpush1.msra.mxu0 0.0
        %857 = vmatprep.subr.mxu0 0.0
        %858 = vmatpush1.msra.mxu0 0.0
        %859 = vmatprep.subr.mxu0 0.0
        %860 = vmatpush1.msra.mxu0 0.0
        %861 = vmatprep.subr.mxu0 0.0
        %862 = vmatpush1.msra.mxu0 0.0
        %863 = vmatprep.subr.mxu0 0.0
        %864 = vmatpush1.msra.mxu0 0.0
        %865 = vmatprep.subr.mxu0 0.0
        %866 = vmatpush1.msra.mxu0 0.0
        %867 = vmatprep.mubr.f32.mxu0 0.0
        %868 = vmatmul.mubr.f32.gmra.mrb[0].mxu0 %v682
        %v869 = vpop.f32.mrb[0].mxu0
        %v870 = vadd.f32 %v765, %v869
        %v871 = vpop.f32.mrb[0].mxu0
        %872 = vmatprep.mubr.f32.mxu0 0.0
        %873 = vmatmul.mubr.f32.gmra.mrb[0].mxu0 %v683
        %v874 = vpop.f32.mrb[0].mxu0
        %v875 = vadd.f32 %v770, %v874
        %v876 = vpop.f32.mrb[0].mxu0
        %877 = vmatprep.mubr.f32.mxu0 0.0
        %878 = vmatmul.mubr.f32.gmra.mrb[0].mxu0 %v684
        %v879 = vpop.f32.mrb[0].mxu0
        %v880 = vadd.f32 %v775, %v879
        %v881 = vpop.f32.mrb[0].mxu0
        %882 = vmatprep.mubr.f32.mxu0 0.0
        %883 = vmatmul.mubr.f32.gmra.mrb[0].mxu0 %v685
        %v884 = vpop.f32.mrb[0].mxu0
        %v885 = vadd.f32 %v780, %v884
        %v886 = vpop.f32.mrb[0].mxu0
        %887 = vmatprep.mubr.f32.mxu0 0.0
        %888 = vmatmul.mubr.f32.gmra.mrb[0].mxu0 %v686
        %v889 = vpop.f32.mrb[0].mxu0
        %v890 = vadd.f32 %v785, %v889
        %v891 = vpop.f32.mrb[0].mxu0
        %892 = vmatprep.mubr.f32.mxu0 0.0
        %893 = vmatmul.mubr.f32.gmra.mrb[0].mxu0 %v687
        %v894 = vpop.f32.mrb[0].mxu0
        %v895 = vadd.f32 %v790, %v894
        %v896 = vpop.f32.mrb[0].mxu0
        %897 = vmatprep.mubr.f32.mxu0 0.0
        %898 = vmatmul.mubr.f32.gmra.mrb[0].mxu0 %v688
        %v899 = vpop.f32.mrb[0].mxu0
        %v900 = vadd.f32 %v795, %v899
        %v901 = vpop.f32.mrb[0].mxu0
        %902 = vmatprep.mubr.f32.mxu0 0.0
        %903 = vmatmul.mubr.f32.gmra.mrb[0].mxu0 %v689
        %v904 = vpop.f32.mrb[0].mxu0
        %v905 = vadd.f32 %v800, %v904
        %v906 = vpop.f32.mrb[0].mxu0
        %907 = vdwg.mxu0
        %v908 = vld [vmem:[#allocation2 + $0x2] sm:$0xff]
        %v909 = vld [vmem:[#allocation2 + $0x12] sm:$0xff]
        %v910 = vld [vmem:[#allocation2 + $0x22] sm:$0xff]
        %v911 = vld [vmem:[#allocation2 + $0x32] sm:$0xff]
        %v912 = vld [vmem:[#allocation2 + $0x42] sm:$0xff]
        %v913 = vld [vmem:[#allocation2 + $0x52] sm:$0xff]
        %v914 = vld [vmem:[#allocation2 + $0x62] sm:$0xff]
        %v915 = vld [vmem:[#allocation2 + $0x72] sm:$0xff]
        %916 = vmatprep.subr.mxu0 0.0
        %917 = vmatpush1.msra.mxu0 %v564
        %918 = vmatprep.subr.mxu0 0.0
        %919 = vmatpush1.msra.mxu0 %v565
        %920 = vmatprep.subr.mxu0 0.0
        %921 = vmatpush1.msra.mxu0 %v566
        %922 = vmatprep.subr.mxu0 0.0
        %923 = vmatpush1.msra.mxu0 %v567
        %924 = vmatprep.subr.mxu0 0.0
        %925 = vmatpush1.msra.mxu0 %v568
        %926 = vmatprep.subr.mxu0 0.0
        %927 = vmatpush1.msra.mxu0 %v569
        %928 = vmatprep.subr.mxu0 0.0
        %929 = vmatpush1.msra.mxu0 %v570
        %930 = vmatprep.subr.mxu0 0.0
        %931 = vmatpush1.msra.mxu0 %v571
        %932 = vmatprep.subr.mxu0 0.0
        %933 = vmatpush1.msra.mxu0 %v572
        %934 = vmatprep.subr.mxu0 0.0
        %935 = vmatpush1.msra.mxu0 %v573
        %936 = vmatprep.subr.mxu0 0.0
        %937 = vmatpush1.msra.mxu0 %v574
        %938 = vmatprep.subr.mxu0 0.0
        %939 = vmatpush1.msra.mxu0 %v575
        %940 = vmatprep.subr.mxu0 0.0
        %941 = vmatpush1.msra.mxu0 %v576
        %942 = vmatprep.subr.mxu0 0.0
        %943 = vmatpush1.msra.mxu0 %v577
        %944 = vmatprep.subr.mxu0 0.0
        %945 = vmatpush1.msra.mxu0 %v578
        %946 = vmatprep.subr.mxu0 0.0
        %947 = vmatpush1.msra.mxu0 %v579
        %948 = vmatprep.subr.mxu0 0.0
        %949 = vmatpush1.msra.mxu0 0.0
        %950 = vmatprep.subr.mxu0 0.0
        %951 = vmatpush1.msra.mxu0 0.0
        %952 = vmatprep.subr.mxu0 0.0
        %953 = vmatpush1.msra.mxu0 0.0
        %954 = vmatprep.subr.mxu0 0.0
        %955 = vmatpush1.msra.mxu0 0.0
        %956 = vmatprep.subr.mxu0 0.0
        %957 = vmatpush1.msra.mxu0 0.0
        %958 = vmatprep.subr.mxu0 0.0
        %959 = vmatpush1.msra.mxu0 0.0
        %960 = vmatprep.subr.mxu0 0.0
        %961 = vmatpush1.msra.mxu0 0.0
        %962 = vmatprep.subr.mxu0 0.0
        %963 = vmatpush1.msra.mxu0 0.0
        %964 = vmatprep.subr.mxu0 0.0
        %965 = vmatpush1.msra.mxu0 0.0
        %966 = vmatprep.subr.mxu0 0.0
        %967 = vmatpush1.msra.mxu0 0.0
        %968 = vmatprep.subr.mxu0 0.0
        %969 = vmatpush1.msra.mxu0 0.0
        %970 = vmatprep.subr.mxu0 0.0
        %971 = vmatpush1.msra.mxu0 0.0
        %972 = vmatprep.subr.mxu0 0.0
        %973 = vmatpush1.msra.mxu0 0.0
        %974 = vmatprep.subr.mxu0 0.0
        %975 = vmatpush1.msra.mxu0 0.0
        %976 = vmatprep.subr.mxu0 0.0
        %977 = vmatpush1.msra.mxu0 0.0
        %978 = vmatprep.subr.mxu0 0.0
        %979 = vmatpush1.msra.mxu0 0.0
        %980 = vmatprep.mubr.f32.mxu0 0.0
        %981 = vmatmul.mubr.f32.gmra.mrb[0].mxu0 %v908
        %v982 = vpop.f32.mrb[0].mxu0
        %v983 = vadd.f32 0.0, %v982
        %v984 = vpop.f32.mrb[0].mxu0
        %985 = vmatprep.mubr.f32.mxu0 0.0
        %986 = vmatmul.mubr.f32.gmra.mrb[0].mxu0 %v909
        %v987 = vpop.f32.mrb[0].mxu0
        %v988 = vadd.f32 0.0, %v987
        %v989 = vpop.f32.mrb[0].mxu0
        %990 = vmatprep.mubr.f32.mxu0 0.0
        %991 = vmatmul.mubr.f32.gmra.mrb[0].mxu0 %v910
        %v992 = vpop.f32.mrb[0].mxu0
        %v993 = vadd.f32 0.0, %v992
        %v994 = vpop.f32.mrb[0].mxu0
        %995 = vmatprep.mubr.f32.mxu0 0.0
        %996 = vmatmul.mubr.f32.gmra.mrb[0].mxu0 %v911
        %v997 = vpop.f32.mrb[0].mxu0
        %v998 = vadd.f32 0.0, %v997
        %v999 = vpop.f32.mrb[0].mxu0
        %1000 = vmatprep.mubr.f32.mxu0 0.0
        %1001 = vmatmul.mubr.f32.gmra.mrb[0].mxu0 %v912
        %v1002 = vpop.f32.mrb[0].mxu0
        %v1003 = vadd.f32 0.0, %v1002
        %v1004 = vpop.f32.mrb[0].mxu0
        %1005 = vmatprep.mubr.f32.mxu0 0.0
        %1006 = vmatmul.mubr.f32.gmra.mrb[0].mxu0 %v913
        %v1007 = vpop.f32.mrb[0].mxu0
        %v1008 = vadd.f32 0.0, %v1007
        %v1009 = vpop.f32.mrb[0].mxu0
        %1010 = vmatprep.mubr.f32.mxu0 0.0
        %1011 = vmatmul.mubr.f32.gmra.mrb[0].mxu0 %v914
        %v1012 = vpop.f32.mrb[0].mxu0
        %v1013 = vadd.f32 0.0, %v1012
        %v1014 = vpop.f32.mrb[0].mxu0
        %1015 = vmatprep.mubr.f32.mxu0 0.0
        %1016 = vmatmul.mubr.f32.gmra.mrb[0].mxu0 %v915
        %v1017 = vpop.f32.mrb[0].mxu0
        %v1018 = vadd.f32 0.0, %v1017
        %v1019 = vpop.f32.mrb[0].mxu0
        %1020 = vdwg.mxu0
        %v1021 = vadd.f32 %v870, %v983
        %v1022 = vadd.f32 %v875, %v988
        %v1023 = vadd.f32 %v880, %v993
        %v1024 = vadd.f32 %v885, %v998
        %v1025 = vadd.f32 %v890, %v1003
        %v1026 = vadd.f32 %v895, %v1008
        %v1027 = vadd.f32 %v900, %v1013
        %v1028 = vadd.f32 %v905, %v1018
        %v1029 = vld [vmem:[%s521] sm:$0xff]
        %v1030 = vld [vmem:[%s521 + $0x10] sm:$0xff]
        %v1031 = vld [vmem:[%s521 + $0x20] sm:$0xff]
        %v1032 = vld [vmem:[%s521 + $0x30] sm:$0xff]
        %v1033 = vld [vmem:[%s521 + $0x40] sm:$0xff]
        %v1034 = vld [vmem:[%s521 + $0x50] sm:$0xff]
        %v1035 = vld [vmem:[%s521 + $0x60] sm:$0xff]
        %v1036 = vld [vmem:[%s521 + $0x70] sm:$0xff]
        %1037 = vmatprep.subr.mxu0 0.0
        %1038 = vmatpush1.msra.mxu0 %v581
        %1039 = vmatprep.subr.mxu0 0.0
        %1040 = vmatpush1.msra.mxu0 %v582
        %1041 = vmatprep.subr.mxu0 0.0
        %1042 = vmatpush1.msra.mxu0 %v583
        %1043 = vmatprep.subr.mxu0 0.0
        %1044 = vmatpush1.msra.mxu0 %v584
        %1045 = vmatprep.subr.mxu0 0.0
        %1046 = vmatpush1.msra.mxu0 %v585
        %1047 = vmatprep.subr.mxu0 0.0
        %1048 = vmatpush1.msra.mxu0 %v586
        %1049 = vmatprep.subr.mxu0 0.0
        %1050 = vmatpush1.msra.mxu0 %v587
        %1051 = vmatprep.subr.mxu0 0.0
        %1052 = vmatpush1.msra.mxu0 %v588
        %1053 = vmatprep.subr.mxu0 0.0
        %1054 = vmatpush1.msra.mxu0 %v589
        %1055 = vmatprep.subr.mxu0 0.0
        %1056 = vmatpush1.msra.mxu0 %v590
        %1057 = vmatprep.subr.mxu0 0.0
        %1058 = vmatpush1.msra.mxu0 %v591
        %1059 = vmatprep.subr.mxu0 0.0
        %1060 = vmatpush1.msra.mxu0 %v592
        %1061 = vmatprep.subr.mxu0 0.0
        %1062 = vmatpush1.msra.mxu0 %v593
        %1063 = vmatprep.subr.mxu0 0.0
        %1064 = vmatpush1.msra.mxu0 %v594
        %1065 = vmatprep.subr.mxu0 0.0
        %1066 = vmatpush1.msra.mxu0 %v595
        %1067 = vmatprep.subr.mxu0 0.0
        %1068 = vmatpush1.msra.mxu0 %v596
        %1069 = vmatprep.subr.mxu0 0.0
        %1070 = vmatpush1.msra.mxu0 0.0
        %1071 = vmatprep.subr.mxu0 0.0
        %1072 = vmatpush1.msra.mxu0 0.0
        %1073 = vmatprep.subr.mxu0 0.0
        %1074 = vmatpush1.msra.mxu0 0.0
        %1075 = vmatprep.subr.mxu0 0.0
        %1076 = vmatpush1.msra.mxu0 0.0
        %1077 = vmatprep.subr.mxu0 0.0
        %1078 = vmatpush1.msra.mxu0 0.0
        %1079 = vmatprep.subr.mxu0 0.0
        %1080 = vmatpush1.msra.mxu0 0.0
        %1081 = vmatprep.subr.mxu0 0.0
        %1082 = vmatpush1.msra.mxu0 0.0
        %1083 = vmatprep.subr.mxu0 0.0
        %1084 = vmatpush1.msra.mxu0 0.0
        %1085 = vmatprep.subr.mxu0 0.0
        %1086 = vmatpush1.msra.mxu0 0.0
        %1087 = vmatprep.subr.mxu0 0.0
        %1088 = vmatpush1.msra.mxu0 0.0
        %1089 = vmatprep.subr.mxu0 0.0
        %1090 = vmatpush1.msra.mxu0 0.0
        %1091 = vmatprep.subr.mxu0 0.0
        %1092 = vmatpush1.msra.mxu0 0.0
        %1093 = vmatprep.subr.mxu0 0.0
        %1094 = vmatpush1.msra.mxu0 0.0
        %1095 = vmatprep.subr.mxu0 0.0
        %1096 = vmatpush1.msra.mxu0 0.0
        %1097 = vmatprep.subr.mxu0 0.0
        %1098 = vmatpush1.msra.mxu0 0.0
        %1099 = vmatprep.subr.mxu0 0.0
        %1100 = vmatpush1.msra.mxu0 0.0
        %1101 = vmatprep.mubr.f32.mxu0 0.0
        %1102 = vmatmul.mubr.f32.gmra.mrb[0].mxu0 %v1029
        %v1103 = vpop.f32.mrb[0].mxu0
        %v1104 = vadd.f32 0.0, %v1103
        %v1105 = vpop.f32.mrb[0].mxu0
        %1106 = vmatprep.mubr.f32.mxu0 0.0
        %1107 = vmatmul.mubr.f32.gmra.mrb[0].mxu0 %v1030
        %v1108 = vpop.f32.mrb[0].mxu0
        %v1109 = vadd.f32 0.0, %v1108
        %v1110 = vpop.f32.mrb[0].mxu0
        %1111 = vmatprep.mubr.f32.mxu0 0.0
        %1112 = vmatmul.mubr.f32.gmra.mrb[0].mxu0 %v1031
        %v1113 = vpop.f32.mrb[0].mxu0
        %v1114 = vadd.f32 0.0, %v1113
        %v1115 = vpop.f32.mrb[0].mxu0
        %1116 = vmatprep.mubr.f32.mxu0 0.0
        %1117 = vmatmul.mubr.f32.gmra.mrb[0].mxu0 %v1032
        %v1118 = vpop.f32.mrb[0].mxu0
        %v1119 = vadd.f32 0.0, %v1118
        %v1120 = vpop.f32.mrb[0].mxu0
        %1121 = vmatprep.mubr.f32.mxu0 0.0
        %1122 = vmatmul.mubr.f32.gmra.mrb[0].mxu0 %v1033
        %v1123 = vpop.f32.mrb[0].mxu0
        %v1124 = vadd.f32 0.0, %v1123
        %v1125 = vpop.f32.mrb[0].mxu0
        %1126 = vmatprep.mubr.f32.mxu0 0.0
        %1127 = vmatmul.mubr.f32.gmra.mrb[0].mxu0 %v1034
        %v1128 = vpop.f32.mrb[0].mxu0
        %v1129 = vadd.f32 0.0, %v1128
        %v1130 = vpop.f32.mrb[0].mxu0
        %1131 = vmatprep.mubr.f32.mxu0 0.0
        %1132 = vmatmul.mubr.f32.gmra.mrb[0].mxu0 %v1035
        %v1133 = vpop.f32.mrb[0].mxu0
        %v1134 = vadd.f32 0.0, %v1133
        %v1135 = vpop.f32.mrb[0].mxu0
        %1136 = vmatprep.mubr.f32.mxu0 0.0
        %1137 = vmatmul.mubr.f32.gmra.mrb[0].mxu0 %v1036
        %v1138 = vpop.f32.mrb[0].mxu0
        %v1139 = vadd.f32 0.0, %v1138
        %v1140 = vpop.f32.mrb[0].mxu0
        %1141 = vdwg.mxu0
        %v1142 = vadd.f32 %v1021, %v1104
        %v1143 = vadd.f32 %v1022, %v1109
        %v1144 = vadd.f32 %v1023, %v1114
        %v1145 = vadd.f32 %v1024, %v1119
        %v1146 = vadd.f32 %v1025, %v1124
        %v1147 = vadd.f32 %v1026, %v1129
        %v1148 = vadd.f32 %v1027, %v1134
        %v1149 = vadd.f32 %v1028, %v1139
        %v1150 = vld [vmem:[%s521 + $0x1] sm:$0xff]
        %v1151 = vld [vmem:[%s521 + $0x11] sm:$0xff]
        %v1152 = vld [vmem:[%s521 + $0x21] sm:$0xff]
        %v1153 = vld [vmem:[%s521 + $0x31] sm:$0xff]
        %v1154 = vld [vmem:[%s521 + $0x41] sm:$0xff]
        %v1155 = vld [vmem:[%s521 + $0x51] sm:$0xff]
        %v1156 = vld [vmem:[%s521 + $0x61] sm:$0xff]
        %v1157 = vld [vmem:[%s521 + $0x71] sm:$0xff]
        %1158 = vmatprep.subr.mxu0 0.0
        %1159 = vmatpush1.msra.mxu0 %v598
        %1160 = vmatprep.subr.mxu0 0.0
        %1161 = vmatpush1.msra.mxu0 %v599
        %1162 = vmatprep.subr.mxu0 0.0
        %1163 = vmatpush1.msra.mxu0 %v600
        %1164 = vmatprep.subr.mxu0 0.0
        %1165 = vmatpush1.msra.mxu0 %v601
        %1166 = vmatprep.subr.mxu0 0.0
        %1167 = vmatpush1.msra.mxu0 %v602
        %1168 = vmatprep.subr.mxu0 0.0
        %1169 = vmatpush1.msra.mxu0 %v603
        %1170 = vmatprep.subr.mxu0 0.0
        %1171 = vmatpush1.msra.mxu0 %v604
        %1172 = vmatprep.subr.mxu0 0.0
        %1173 = vmatpush1.msra.mxu0 %v605
        %1174 = vmatprep.subr.mxu0 0.0
        %1175 = vmatpush1.msra.mxu0 %v606
        %1176 = vmatprep.subr.mxu0 0.0
        %1177 = vmatpush1.msra.mxu0 %v607
        %1178 = vmatprep.subr.mxu0 0.0
        %1179 = vmatpush1.msra.mxu0 %v608
        %1180 = vmatprep.subr.mxu0 0.0
        %1181 = vmatpush1.msra.mxu0 %v609
        %1182 = vmatprep.subr.mxu0 0.0
        %1183 = vmatpush1.msra.mxu0 %v610
        %1184 = vmatprep.subr.mxu0 0.0
        %1185 = vmatpush1.msra.mxu0 %v611
        %1186 = vmatprep.subr.mxu0 0.0
        %1187 = vmatpush1.msra.mxu0 %v612
        %1188 = vmatprep.subr.mxu0 0.0
        %1189 = vmatpush1.msra.mxu0 %v613
        %1190 = vmatprep.subr.mxu0 0.0
        %1191 = vmatpush1.msra.mxu0 0.0
        %1192 = vmatprep.subr.mxu0 0.0
        %1193 = vmatpush1.msra.mxu0 0.0
        %1194 = vmatprep.subr.mxu0 0.0
        %1195 = vmatpush1.msra.mxu0 0.0
        %1196 = vmatprep.subr.mxu0 0.0
        %1197 = vmatpush1.msra.mxu0 0.0
        %1198 = vmatprep.subr.mxu0 0.0
        %1199 = vmatpush1.msra.mxu0 0.0
        %1200 = vmatprep.subr.mxu0 0.0
        %1201 = vmatpush1.msra.mxu0 0.0
        %1202 = vmatprep.subr.mxu0 0.0
        %1203 = vmatpush1.msra.mxu0 0.0
        %1204 = vmatprep.subr.mxu0 0.0
        %1205 = vmatpush1.msra.mxu0 0.0
        %1206 = vmatprep.subr.mxu0 0.0
        %1207 = vmatpush1.msra.mxu0 0.0
        %1208 = vmatprep.subr.mxu0 0.0
        %1209 = vmatpush1.msra.mxu0 0.0
        %1210 = vmatprep.subr.mxu0 0.0
        %1211 = vmatpush1.msra.mxu0 0.0
        %1212 = vmatprep.subr.mxu0 0.0
        %1213 = vmatpush1.msra.mxu0 0.0
        %1214 = vmatprep.subr.mxu0 0.0
        %1215 = vmatpush1.msra.mxu0 0.0
        %1216 = vmatprep.subr.mxu0 0.0
        %1217 = vmatpush1.msra.mxu0 0.0
        %1218 = vmatprep.subr.mxu0 0.0
        %1219 = vmatpush1.msra.mxu0 0.0
        %1220 = vmatprep.subr.mxu0 0.0
        %1221 = vmatpush1.msra.mxu0 0.0
        %1222 = vmatprep.mubr.f32.mxu0 0.0
        %1223 = vmatmul.mubr.f32.gmra.mrb[0].mxu0 %v1150
        %v1224 = vpop.f32.mrb[0].mxu0
        %v1225 = vadd.f32 0.0, %v1224
        %v1226 = vpop.f32.mrb[0].mxu0
        %1227 = vmatprep.mubr.f32.mxu0 0.0
        %1228 = vmatmul.mubr.f32.gmra.mrb[0].mxu0 %v1151
        %v1229 = vpop.f32.mrb[0].mxu0
        %v1230 = vadd.f32 0.0, %v1229
        %v1231 = vpop.f32.mrb[0].mxu0
        %1232 = vmatprep.mubr.f32.mxu0 0.0
        %1233 = vmatmul.mubr.f32.gmra.mrb[0].mxu0 %v1152
        %v1234 = vpop.f32.mrb[0].mxu0
        %v1235 = vadd.f32 0.0, %v1234
        %v1236 = vpop.f32.mrb[0].mxu0
        %1237 = vmatprep.mubr.f32.mxu0 0.0
        %1238 = vmatmul.mubr.f32.gmra.mrb[0].mxu0 %v1153
        %v1239 = vpop.f32.mrb[0].mxu0
        %v1240 = vadd.f32 0.0, %v1239
        %v1241 = vpop.f32.mrb[0].mxu0
        %1242 = vmatprep.mubr.f32.mxu0 0.0
        %1243 = vmatmul.mubr.f32.gmra.mrb[0].mxu0 %v1154
        %v1244 = vpop.f32.mrb[0].mxu0
        %v1245 = vadd.f32 0.0, %v1244
        %v1246 = vpop.f32.mrb[0].mxu0
        %1247 = vmatprep.mubr.f32.mxu0 0.0
        %1248 = vmatmul.mubr.f32.gmra.mrb[0].mxu0 %v1155
        %v1249 = vpop.f32.mrb[0].mxu0
        %v1250 = vadd.f32 0.0, %v1249
        %v1251 = vpop.f32.mrb[0].mxu0
        %1252 = vmatprep.mubr.f32.mxu0 0.0
        %1253 = vmatmul.mubr.f32.gmra.mrb[0].mxu0 %v1156
        %v1254 = vpop.f32.mrb[0].mxu0
        %v1255 = vadd.f32 0.0, %v1254
        %v1256 = vpop.f32.mrb[0].mxu0
        %1257 = vmatprep.mubr.f32.mxu0 0.0
        %1258 = vmatmul.mubr.f32.gmra.mrb[0].mxu0 %v1157
        %v1259 = vpop.f32.mrb[0].mxu0
        %v1260 = vadd.f32 0.0, %v1259
        %v1261 = vpop.f32.mrb[0].mxu0
        %1262 = vdwg.mxu0
        %v1263 = vadd.f32 %v1142, %v1225
        %v1264 = vadd.f32 %v1143, %v1230
        %v1265 = vadd.f32 %v1144, %v1235
        %v1266 = vadd.f32 %v1145, %v1240
        %v1267 = vadd.f32 %v1146, %v1245
        %v1268 = vadd.f32 %v1147, %v1250
        %v1269 = vadd.f32 %v1148, %v1255
        %v1270 = vadd.f32 %v1149, %v1260
        %v1271 = vld [vmem:[%s521 + $0x2] sm:$0xff]
        %v1272 = vld [vmem:[%s521 + $0x12] sm:$0xff]
        %v1273 = vld [vmem:[%s521 + $0x22] sm:$0xff]
        %v1274 = vld [vmem:[%s521 + $0x32] sm:$0xff]
        %v1275 = vld [vmem:[%s521 + $0x42] sm:$0xff]
        %v1276 = vld [vmem:[%s521 + $0x52] sm:$0xff]
        %v1277 = vld [vmem:[%s521 + $0x62] sm:$0xff]
        %v1278 = vld [vmem:[%s521 + $0x72] sm:$0xff]
        %1279 = vmatprep.subr.mxu0 0.0
        %1280 = vmatpush1.msra.mxu0 %v615
        %1281 = vmatprep.subr.mxu0 0.0
        %1282 = vmatpush1.msra.mxu0 %v616
        %1283 = vmatprep.subr.mxu0 0.0
        %1284 = vmatpush1.msra.mxu0 %v617
        %1285 = vmatprep.subr.mxu0 0.0
        %1286 = vmatpush1.msra.mxu0 %v618
        %1287 = vmatprep.subr.mxu0 0.0
        %1288 = vmatpush1.msra.mxu0 %v619
        %1289 = vmatprep.subr.mxu0 0.0
        %1290 = vmatpush1.msra.mxu0 %v620
        %1291 = vmatprep.subr.mxu0 0.0
        %1292 = vmatpush1.msra.mxu0 %v621
        %1293 = vmatprep.subr.mxu0 0.0
        %1294 = vmatpush1.msra.mxu0 %v622
        %1295 = vmatprep.subr.mxu0 0.0
        %1296 = vmatpush1.msra.mxu0 %v623
        %1297 = vmatprep.subr.mxu0 0.0
        %1298 = vmatpush1.msra.mxu0 %v624
        %1299 = vmatprep.subr.mxu0 0.0
        %1300 = vmatpush1.msra.mxu0 %v625
        %1301 = vmatprep.subr.mxu0 0.0
        %1302 = vmatpush1.msra.mxu0 %v626
        %1303 = vmatprep.subr.mxu0 0.0
        %1304 = vmatpush1.msra.mxu0 %v627
        %1305 = vmatprep.subr.mxu0 0.0
        %1306 = vmatpush1.msra.mxu0 %v628
        %1307 = vmatprep.subr.mxu0 0.0
        %1308 = vmatpush1.msra.mxu0 %v629
        %1309 = vmatprep.subr.mxu0 0.0
        %1310 = vmatpush1.msra.mxu0 %v630
        %1311 = vmatprep.subr.mxu0 0.0
        %1312 = vmatpush1.msra.mxu0 0.0
        %1313 = vmatprep.subr.mxu0 0.0
        %1314 = vmatpush1.msra.mxu0 0.0
        %1315 = vmatprep.subr.mxu0 0.0
        %1316 = vmatpush1.msra.mxu0 0.0
        %1317 = vmatprep.subr.mxu0 0.0
        %1318 = vmatpush1.msra.mxu0 0.0
        %1319 = vmatprep.subr.mxu0 0.0
        %1320 = vmatpush1.msra.mxu0 0.0
        %1321 = vmatprep.subr.mxu0 0.0
        %1322 = vmatpush1.msra.mxu0 0.0
        %1323 = vmatprep.subr.mxu0 0.0
        %1324 = vmatpush1.msra.mxu0 0.0
        %1325 = vmatprep.subr.mxu0 0.0
        %1326 = vmatpush1.msra.mxu0 0.0
        %1327 = vmatprep.subr.mxu0 0.0
        %1328 = vmatpush1.msra.mxu0 0.0
        %1329 = vmatprep.subr.mxu0 0.0
        %1330 = vmatpush1.msra.mxu0 0.0
        %1331 = vmatprep.subr.mxu0 0.0
        %1332 = vmatpush1.msra.mxu0 0.0
        %1333 = vmatprep.subr.mxu0 0.0
        %1334 = vmatpush1.msra.mxu0 0.0
        %1335 = vmatprep.subr.mxu0 0.0
        %1336 = vmatpush1.msra.mxu0 0.0
        %1337 = vmatprep.subr.mxu0 0.0
        %1338 = vmatpush1.msra.mxu0 0.0
        %1339 = vmatprep.subr.mxu0 0.0
        %1340 = vmatpush1.msra.mxu0 0.0
        %1341 = vmatprep.subr.mxu0 0.0
        %1342 = vmatpush1.msra.mxu0 0.0
        %1343 = vmatprep.mubr.f32.mxu0 0.0
        %1344 = vmatmul.mubr.f32.gmra.mrb[0].mxu0 %v1271
        %v1345 = vpop.f32.mrb[0].mxu0
        %v1346 = vadd.f32 0.0, %v1345
        %v1347 = vpop.f32.mrb[0].mxu0
        %1348 = vmatprep.mubr.f32.mxu0 0.0
        %1349 = vmatmul.mubr.f32.gmra.mrb[0].mxu0 %v1272
        %v1350 = vpop.f32.mrb[0].mxu0
        %v1351 = vadd.f32 0.0, %v1350
        %v1352 = vpop.f32.mrb[0].mxu0
        %1353 = vmatprep.mubr.f32.mxu0 0.0
        %1354 = vmatmul.mubr.f32.gmra.mrb[0].mxu0 %v1273
        %v1355 = vpop.f32.mrb[0].mxu0
        %v1356 = vadd.f32 0.0, %v1355
        %v1357 = vpop.f32.mrb[0].mxu0
        %1358 = vmatprep.mubr.f32.mxu0 0.0
        %1359 = vmatmul.mubr.f32.gmra.mrb[0].mxu0 %v1274
        %v1360 = vpop.f32.mrb[0].mxu0
        %v1361 = vadd.f32 0.0, %v1360
        %v1362 = vpop.f32.mrb[0].mxu0
        %1363 = vmatprep.mubr.f32.mxu0 0.0
        %1364 = vmatmul.mubr.f32.gmra.mrb[0].mxu0 %v1275
        %v1365 = vpop.f32.mrb[0].mxu0
        %v1366 = vadd.f32 0.0, %v1365
        %v1367 = vpop.f32.mrb[0].mxu0
        %1368 = vmatprep.mubr.f32.mxu0 0.0
        %1369 = vmatmul.mubr.f32.gmra.mrb[0].mxu0 %v1276
        %v1370 = vpop.f32.mrb[0].mxu0
        %v1371 = vadd.f32 0.0, %v1370
        %v1372 = vpop.f32.mrb[0].mxu0
        %1373 = vmatprep.mubr.f32.mxu0 0.0
        %1374 = vmatmul.mubr.f32.gmra.mrb[0].mxu0 %v1277
        %v1375 = vpop.f32.mrb[0].mxu0
        %v1376 = vadd.f32 0.0, %v1375
        %v1377 = vpop.f32.mrb[0].mxu0
        %1378 = vmatprep.mubr.f32.mxu0 0.0
        %1379 = vmatmul.mubr.f32.gmra.mrb[0].mxu0 %v1278
        %v1380 = vpop.f32.mrb[0].mxu0
        %v1381 = vadd.f32 0.0, %v1380
        %v1382 = vpop.f32.mrb[0].mxu0
        %1383 = vdwg.mxu0
        %v1384 = vadd.f32 %v1263, %v1346
        %v1385 = vadd.f32 %v1264, %v1351
        %v1386 = vadd.f32 %v1265, %v1356
        %v1387 = vadd.f32 %v1266, %v1361
        %v1388 = vadd.f32 %v1267, %v1366
        %v1389 = vadd.f32 %v1268, %v1371
        %v1390 = vadd.f32 %v1269, %v1376
        %v1391 = vadd.f32 %v1270, %v1381
        %s1392 = scalar_lea.vmem [#allocation2], 32
        %v1393 = vld [vmem:[%s1392] sm:$0xff]
        %v1394 = vld [vmem:[%s1392 + $0x10] sm:$0xff]
        %v1395 = vld [vmem:[%s1392 + $0x20] sm:$0xff]
        %v1396 = vld [vmem:[%s1392 + $0x30] sm:$0xff]
        %v1397 = vld [vmem:[%s1392 + $0x40] sm:$0xff]
        %v1398 = vld [vmem:[%s1392 + $0x50] sm:$0xff]
        %v1399 = vld [vmem:[%s1392 + $0x60] sm:$0xff]
        %v1400 = vld [vmem:[%s1392 + $0x70] sm:$0xff]
        %1401 = vmatprep.subr.mxu0 0.0
        %1402 = vmatpush1.msra.mxu0 %v632
        %1403 = vmatprep.subr.mxu0 0.0
        %1404 = vmatpush1.msra.mxu0 %v633
        %1405 = vmatprep.subr.mxu0 0.0
        %1406 = vmatpush1.msra.mxu0 %v634
        %1407 = vmatprep.subr.mxu0 0.0
        %1408 = vmatpush1.msra.mxu0 %v635
        %1409 = vmatprep.subr.mxu0 0.0
        %1410 = vmatpush1.msra.mxu0 %v636
        %1411 = vmatprep.subr.mxu0 0.0
        %1412 = vmatpush1.msra.mxu0 %v637
        %1413 = vmatprep.subr.mxu0 0.0
        %1414 = vmatpush1.msra.mxu0 %v638
        %1415 = vmatprep.subr.mxu0 0.0
        %1416 = vmatpush1.msra.mxu0 %v639
        %1417 = vmatprep.subr.mxu0 0.0
        %1418 = vmatpush1.msra.mxu0 %v640
        %1419 = vmatprep.subr.mxu0 0.0
        %1420 = vmatpush1.msra.mxu0 %v641
        %1421 = vmatprep.subr.mxu0 0.0
        %1422 = vmatpush1.msra.mxu0 %v642
        %1423 = vmatprep.subr.mxu0 0.0
        %1424 = vmatpush1.msra.mxu0 %v643
        %1425 = vmatprep.subr.mxu0 0.0
        %1426 = vmatpush1.msra.mxu0 %v644
        %1427 = vmatprep.subr.mxu0 0.0
        %1428 = vmatpush1.msra.mxu0 %v645
        %1429 = vmatprep.subr.mxu0 0.0
        %1430 = vmatpush1.msra.mxu0 %v646
        %1431 = vmatprep.subr.mxu0 0.0
        %1432 = vmatpush1.msra.mxu0 %v647
        %1433 = vmatprep.subr.mxu0 0.0
        %1434 = vmatpush1.msra.mxu0 0.0
        %1435 = vmatprep.subr.mxu0 0.0
        %1436 = vmatpush1.msra.mxu0 0.0
        %1437 = vmatprep.subr.mxu0 0.0
        %1438 = vmatpush1.msra.mxu0 0.0
        %1439 = vmatprep.subr.mxu0 0.0
        %1440 = vmatpush1.msra.mxu0 0.0
        %1441 = vmatprep.subr.mxu0 0.0
        %1442 = vmatpush1.msra.mxu0 0.0
        %1443 = vmatprep.subr.mxu0 0.0
        %1444 = vmatpush1.msra.mxu0 0.0
        %1445 = vmatprep.subr.mxu0 0.0
        %1446 = vmatpush1.msra.mxu0 0.0
        %1447 = vmatprep.subr.mxu0 0.0
        %1448 = vmatpush1.msra.mxu0 0.0
        %1449 = vmatprep.subr.mxu0 0.0
        %1450 = vmatpush1.msra.mxu0 0.0
        %1451 = vmatprep.subr.mxu0 0.0
        %1452 = vmatpush1.msra.mxu0 0.0
        %1453 = vmatprep.subr.mxu0 0.0
        %1454 = vmatpush1.msra.mxu0 0.0
        %1455 = vmatprep.subr.mxu0 0.0
        %1456 = vmatpush1.msra.mxu0 0.0
        %1457 = vmatprep.subr.mxu0 0.0
        %1458 = vmatpush1.msra.mxu0 0.0
        %1459 = vmatprep.subr.mxu0 0.0
        %1460 = vmatpush1.msra.mxu0 0.0
        %1461 = vmatprep.subr.mxu0 0.0
        %1462 = vmatpush1.msra.mxu0 0.0
        %1463 = vmatprep.subr.mxu0 0.0
        %1464 = vmatpush1.msra.mxu0 0.0
        %1465 = vmatprep.mubr.f32.mxu0 0.0
        %1466 = vmatmul.mubr.f32.gmra.mrb[0].mxu0 %v1393
        %v1467 = vpop.f32.mrb[0].mxu0
        %v1468 = vadd.f32 0.0, %v1467
        %v1469 = vpop.f32.mrb[0].mxu0
        %1470 = vmatprep.mubr.f32.mxu0 0.0
        %1471 = vmatmul.mubr.f32.gmra.mrb[0].mxu0 %v1394
        %v1472 = vpop.f32.mrb[0].mxu0
        %v1473 = vadd.f32 0.0, %v1472
        %v1474 = vpop.f32.mrb[0].mxu0
        %1475 = vmatprep.mubr.f32.mxu0 0.0
        %1476 = vmatmul.mubr.f32.gmra.mrb[0].mxu0 %v1395
        %v1477 = vpop.f32.mrb[0].mxu0
        %v1478 = vadd.f32 0.0, %v1477
        %v1479 = vpop.f32.mrb[0].mxu0
        %1480 = vmatprep.mubr.f32.mxu0 0.0
        %1481 = vmatmul.mubr.f32.gmra.mrb[0].mxu0 %v1396
        %v1482 = vpop.f32.mrb[0].mxu0
        %v1483 = vadd.f32 0.0, %v1482
        %v1484 = vpop.f32.mrb[0].mxu0
        %1485 = vmatprep.mubr.f32.mxu0 0.0
        %1486 = vmatmul.mubr.f32.gmra.mrb[0].mxu0 %v1397
        %v1487 = vpop.f32.mrb[0].mxu0
        %v1488 = vadd.f32 0.0, %v1487
        %v1489 = vpop.f32.mrb[0].mxu0
        %1490 = vmatprep.mubr.f32.mxu0 0.0
        %1491 = vmatmul.mubr.f32.gmra.mrb[0].mxu0 %v1398
        %v1492 = vpop.f32.mrb[0].mxu0
        %v1493 = vadd.f32 0.0, %v1492
        %v1494 = vpop.f32.mrb[0].mxu0
        %1495 = vmatprep.mubr.f32.mxu0 0.0
        %1496 = vmatmul.mubr.f32.gmra.mrb[0].mxu0 %v1399
        %v1497 = vpop.f32.mrb[0].mxu0
        %v1498 = vadd.f32 0.0, %v1497
        %v1499 = vpop.f32.mrb[0].mxu0
        %1500 = vmatprep.mubr.f32.mxu0 0.0
        %1501 = vmatmul.mubr.f32.gmra.mrb[0].mxu0 %v1400
        %v1502 = vpop.f32.mrb[0].mxu0
        %v1503 = vadd.f32 0.0, %v1502
        %v1504 = vpop.f32.mrb[0].mxu0
        %1505 = vdwg.mxu0
        %v1506 = vadd.f32 %v1384, %v1468
        %v1507 = vadd.f32 %v1385, %v1473
        %v1508 = vadd.f32 %v1386, %v1478
        %v1509 = vadd.f32 %v1387, %v1483
        %v1510 = vadd.f32 %v1388, %v1488
        %v1511 = vadd.f32 %v1389, %v1493
        %v1512 = vadd.f32 %v1390, %v1498
        %v1513 = vadd.f32 %v1391, %v1503
        %v1514 = vld [vmem:[%s1392 + $0x1] sm:$0xff]
        %v1515 = vld [vmem:[%s1392 + $0x11] sm:$0xff]
        %v1516 = vld [vmem:[%s1392 + $0x21] sm:$0xff]
        %v1517 = vld [vmem:[%s1392 + $0x31] sm:$0xff]
        %v1518 = vld [vmem:[%s1392 + $0x41] sm:$0xff]
        %v1519 = vld [vmem:[%s1392 + $0x51] sm:$0xff]
        %v1520 = vld [vmem:[%s1392 + $0x61] sm:$0xff]
        %v1521 = vld [vmem:[%s1392 + $0x71] sm:$0xff]
        %1522 = vmatprep.subr.mxu0 0.0
        %1523 = vmatpush1.msra.mxu0 %v649
        %1524 = vmatprep.subr.mxu0 0.0
        %1525 = vmatpush1.msra.mxu0 %v650
        %1526 = vmatprep.subr.mxu0 0.0
        %1527 = vmatpush1.msra.mxu0 %v651
        %1528 = vmatprep.subr.mxu0 0.0
        %1529 = vmatpush1.msra.mxu0 %v652
        %1530 = vmatprep.subr.mxu0 0.0
        %1531 = vmatpush1.msra.mxu0 %v653
        %1532 = vmatprep.subr.mxu0 0.0
        %1533 = vmatpush1.msra.mxu0 %v654
        %1534 = vmatprep.subr.mxu0 0.0
        %1535 = vmatpush1.msra.mxu0 %v655
        %1536 = vmatprep.subr.mxu0 0.0
        %1537 = vmatpush1.msra.mxu0 %v656
        %1538 = vmatprep.subr.mxu0 0.0
        %1539 = vmatpush1.msra.mxu0 %v657
        %1540 = vmatprep.subr.mxu0 0.0
        %1541 = vmatpush1.msra.mxu0 %v658
        %1542 = vmatprep.subr.mxu0 0.0
        %1543 = vmatpush1.msra.mxu0 %v659
        %1544 = vmatprep.subr.mxu0 0.0
        %1545 = vmatpush1.msra.mxu0 %v660
        %1546 = vmatprep.subr.mxu0 0.0
        %1547 = vmatpush1.msra.mxu0 %v661
        %1548 = vmatprep.subr.mxu0 0.0
        %1549 = vmatpush1.msra.mxu0 %v662
        %1550 = vmatprep.subr.mxu0 0.0
        %1551 = vmatpush1.msra.mxu0 %v663
        %1552 = vmatprep.subr.mxu0 0.0
        %1553 = vmatpush1.msra.mxu0 %v664
        %1554 = vmatprep.subr.mxu0 0.0
        %1555 = vmatpush1.msra.mxu0 0.0
        %1556 = vmatprep.subr.mxu0 0.0
        %1557 = vmatpush1.msra.mxu0 0.0
        %1558 = vmatprep.subr.mxu0 0.0
        %1559 = vmatpush1.msra.mxu0 0.0
        %1560 = vmatprep.subr.mxu0 0.0
        %1561 = vmatpush1.msra.mxu0 0.0
        %1562 = vmatprep.subr.mxu0 0.0
        %1563 = vmatpush1.msra.mxu0 0.0
        %1564 = vmatprep.subr.mxu0 0.0
        %1565 = vmatpush1.msra.mxu0 0.0
        %1566 = vmatprep.subr.mxu0 0.0
        %1567 = vmatpush1.msra.mxu0 0.0
        %1568 = vmatprep.subr.mxu0 0.0
        %1569 = vmatpush1.msra.mxu0 0.0
        %1570 = vmatprep.subr.mxu0 0.0
        %1571 = vmatpush1.msra.mxu0 0.0
        %1572 = vmatprep.subr.mxu0 0.0
        %1573 = vmatpush1.msra.mxu0 0.0
        %1574 = vmatprep.subr.mxu0 0.0
        %1575 = vmatpush1.msra.mxu0 0.0
        %1576 = vmatprep.subr.mxu0 0.0
        %1577 = vmatpush1.msra.mxu0 0.0
        %1578 = vmatprep.subr.mxu0 0.0
        %1579 = vmatpush1.msra.mxu0 0.0
        %1580 = vmatprep.subr.mxu0 0.0
        %1581 = vmatpush1.msra.mxu0 0.0
        %1582 = vmatprep.subr.mxu0 0.0
        %1583 = vmatpush1.msra.mxu0 0.0
        %1584 = vmatprep.subr.mxu0 0.0
        %1585 = vmatpush1.msra.mxu0 0.0
        %1586 = vmatprep.mubr.f32.mxu0 0.0
        %1587 = vmatmul.mubr.f32.gmra.mrb[0].mxu0 %v1514
        %v1588 = vpop.f32.mrb[0].mxu0
        %v1589 = vadd.f32 0.0, %v1588
        %v1590 = vpop.f32.mrb[0].mxu0
        %1591 = vmatprep.mubr.f32.mxu0 0.0
        %1592 = vmatmul.mubr.f32.gmra.mrb[0].mxu0 %v1515
        %v1593 = vpop.f32.mrb[0].mxu0
        %v1594 = vadd.f32 0.0, %v1593
        %v1595 = vpop.f32.mrb[0].mxu0
        %1596 = vmatprep.mubr.f32.mxu0 0.0
        %1597 = vmatmul.mubr.f32.gmra.mrb[0].mxu0 %v1516
        %v1598 = vpop.f32.mrb[0].mxu0
        %v1599 = vadd.f32 0.0, %v1598
        %v1600 = vpop.f32.mrb[0].mxu0
        %1601 = vmatprep.mubr.f32.mxu0 0.0
        %1602 = vmatmul.mubr.f32.gmra.mrb[0].mxu0 %v1517
        %v1603 = vpop.f32.mrb[0].mxu0
        %v1604 = vadd.f32 0.0, %v1603
        %v1605 = vpop.f32.mrb[0].mxu0
        %1606 = vmatprep.mubr.f32.mxu0 0.0
        %1607 = vmatmul.mubr.f32.gmra.mrb[0].mxu0 %v1518
        %v1608 = vpop.f32.mrb[0].mxu0
        %v1609 = vadd.f32 0.0, %v1608
        %v1610 = vpop.f32.mrb[0].mxu0
        %1611 = vmatprep.mubr.f32.mxu0 0.0
        %1612 = vmatmul.mubr.f32.gmra.mrb[0].mxu0 %v1519
        %v1613 = vpop.f32.mrb[0].mxu0
        %v1614 = vadd.f32 0.0, %v1613
        %v1615 = vpop.f32.mrb[0].mxu0
        %1616 = vmatprep.mubr.f32.mxu0 0.0
        %1617 = vmatmul.mubr.f32.gmra.mrb[0].mxu0 %v1520
        %v1618 = vpop.f32.mrb[0].mxu0
        %v1619 = vadd.f32 0.0, %v1618
        %v1620 = vpop.f32.mrb[0].mxu0
        %1621 = vmatprep.mubr.f32.mxu0 0.0
        %1622 = vmatmul.mubr.f32.gmra.mrb[0].mxu0 %v1521
        %v1623 = vpop.f32.mrb[0].mxu0
        %v1624 = vadd.f32 0.0, %v1623
        %v1625 = vpop.f32.mrb[0].mxu0
        %1626 = vdwg.mxu0
        %v1627 = vadd.f32 %v1506, %v1589
        %v1628 = vadd.f32 %v1507, %v1594
        %v1629 = vadd.f32 %v1508, %v1599
        %v1630 = vadd.f32 %v1509, %v1604
        %v1631 = vadd.f32 %v1510, %v1609
        %v1632 = vadd.f32 %v1511, %v1614
        %v1633 = vadd.f32 %v1512, %v1619
        %v1634 = vadd.f32 %v1513, %v1624
        %v1635 = vld [vmem:[%s1392 + $0x2] sm:$0xff]
        %v1636 = vld [vmem:[%s1392 + $0x12] sm:$0xff]
        %v1637 = vld [vmem:[%s1392 + $0x22] sm:$0xff]
        %v1638 = vld [vmem:[%s1392 + $0x32] sm:$0xff]
        %v1639 = vld [vmem:[%s1392 + $0x42] sm:$0xff]
        %v1640 = vld [vmem:[%s1392 + $0x52] sm:$0xff]
        %v1641 = vld [vmem:[%s1392 + $0x62] sm:$0xff]
        %v1642 = vld [vmem:[%s1392 + $0x72] sm:$0xff]
        %1643 = vmatprep.subr.mxu0 0.0
        %1644 = vmatpush1.msra.mxu0 %v666
        %1645 = vmatprep.subr.mxu0 0.0
        %1646 = vmatpush1.msra.mxu0 %v667
        %1647 = vmatprep.subr.mxu0 0.0
        %1648 = vmatpush1.msra.mxu0 %v668
        %1649 = vmatprep.subr.mxu0 0.0
        %1650 = vmatpush1.msra.mxu0 %v669
        %1651 = vmatprep.subr.mxu0 0.0
        %1652 = vmatpush1.msra.mxu0 %v670
        %1653 = vmatprep.subr.mxu0 0.0
        %1654 = vmatpush1.msra.mxu0 %v671
        %1655 = vmatprep.subr.mxu0 0.0
        %1656 = vmatpush1.msra.mxu0 %v672
        %1657 = vmatprep.subr.mxu0 0.0
        %1658 = vmatpush1.msra.mxu0 %v673
        %1659 = vmatprep.subr.mxu0 0.0
        %1660 = vmatpush1.msra.mxu0 %v674
        %1661 = vmatprep.subr.mxu0 0.0
        %1662 = vmatpush1.msra.mxu0 %v675
        %1663 = vmatprep.subr.mxu0 0.0
        %1664 = vmatpush1.msra.mxu0 %v676
        %1665 = vmatprep.subr.mxu0 0.0
        %1666 = vmatpush1.msra.mxu0 %v677
        %1667 = vmatprep.subr.mxu0 0.0
        %1668 = vmatpush1.msra.mxu0 %v678
        %1669 = vmatprep.subr.mxu0 0.0
        %1670 = vmatpush1.msra.mxu0 %v679
        %1671 = vmatprep.subr.mxu0 0.0
        %1672 = vmatpush1.msra.mxu0 %v680
        %1673 = vmatprep.subr.mxu0 0.0
        %1674 = vmatpush1.msra.mxu0 %v681
        %1675 = vmatprep.subr.mxu0 0.0
        %1676 = vmatpush1.msra.mxu0 0.0
        %1677 = vmatprep.subr.mxu0 0.0
        %1678 = vmatpush1.msra.mxu0 0.0
        %1679 = vmatprep.subr.mxu0 0.0
        %1680 = vmatpush1.msra.mxu0 0.0
        %1681 = vmatprep.subr.mxu0 0.0
        %1682 = vmatpush1.msra.mxu0 0.0
        %1683 = vmatprep.subr.mxu0 0.0
        %1684 = vmatpush1.msra.mxu0 0.0
        %1685 = vmatprep.subr.mxu0 0.0
        %1686 = vmatpush1.msra.mxu0 0.0
        %1687 = vmatprep.subr.mxu0 0.0
        %1688 = vmatpush1.msra.mxu0 0.0
        %1689 = vmatprep.subr.mxu0 0.0
        %1690 = vmatpush1.msra.mxu0 0.0
        %1691 = vmatprep.subr.mxu0 0.0
        %1692 = vmatpush1.msra.mxu0 0.0
        %1693 = vmatprep.subr.mxu0 0.0
        %1694 = vmatpush1.msra.mxu0 0.0
        %1695 = vmatprep.subr.mxu0 0.0
        %1696 = vmatpush1.msra.mxu0 0.0
        %1697 = vmatprep.subr.mxu0 0.0
        %1698 = vmatpush1.msra.mxu0 0.0
        %1699 = vmatprep.subr.mxu0 0.0
        %1700 = vmatpush1.msra.mxu0 0.0
        %1701 = vmatprep.subr.mxu0 0.0
        %1702 = vmatpush1.msra.mxu0 0.0
        %1703 = vmatprep.subr.mxu0 0.0
        %1704 = vmatpush1.msra.mxu0 0.0
        %1705 = vmatprep.subr.mxu0 0.0
        %1706 = vmatpush1.msra.mxu0 0.0
        %1707 = vmatprep.mubr.f32.mxu0 0.0
        %1708 = vmatmul.mubr.f32.gmra.mrb[0].mxu0 %v1635
        %v1709 = vpop.f32.mrb[0].mxu0
        %v1710 = vadd.f32 0.0, %v1709
        %v1711 = vpop.f32.mrb[0].mxu0
        %1712 = vmatprep.mubr.f32.mxu0 0.0
        %1713 = vmatmul.mubr.f32.gmra.mrb[0].mxu0 %v1636
        %v1714 = vpop.f32.mrb[0].mxu0
        %v1715 = vadd.f32 0.0, %v1714
        %v1716 = vpop.f32.mrb[0].mxu0
        %1717 = vmatprep.mubr.f32.mxu0 0.0
        %1718 = vmatmul.mubr.f32.gmra.mrb[0].mxu0 %v1637
        %v1719 = vpop.f32.mrb[0].mxu0
        %v1720 = vadd.f32 0.0, %v1719
        %v1721 = vpop.f32.mrb[0].mxu0
        %1722 = vmatprep.mubr.f32.mxu0 0.0
        %1723 = vmatmul.mubr.f32.gmra.mrb[0].mxu0 %v1638
        %v1724 = vpop.f32.mrb[0].mxu0
        %v1725 = vadd.f32 0.0, %v1724
        %v1726 = vpop.f32.mrb[0].mxu0
        %1727 = vmatprep.mubr.f32.mxu0 0.0
        %1728 = vmatmul.mubr.f32.gmra.mrb[0].mxu0 %v1639
        %v1729 = vpop.f32.mrb[0].mxu0
        %v1730 = vadd.f32 0.0, %v1729
        %v1731 = vpop.f32.mrb[0].mxu0
        %1732 = vmatprep.mubr.f32.mxu0 0.0
        %1733 = vmatmul.mubr.f32.gmra.mrb[0].mxu0 %v1640
        %v1734 = vpop.f32.mrb[0].mxu0
        %v1735 = vadd.f32 0.0, %v1734
        %v1736 = vpop.f32.mrb[0].mxu0
        %1737 = vmatprep.mubr.f32.mxu0 0.0
        %1738 = vmatmul.mubr.f32.gmra.mrb[0].mxu0 %v1641
        %v1739 = vpop.f32.mrb[0].mxu0
        %v1740 = vadd.f32 0.0, %v1739
        %v1741 = vpop.f32.mrb[0].mxu0
        %1742 = vmatprep.mubr.f32.mxu0 0.0
        %1743 = vmatmul.mubr.f32.gmra.mrb[0].mxu0 %v1642
        %v1744 = vpop.f32.mrb[0].mxu0
        %v1745 = vadd.f32 0.0, %v1744
        %v1746 = vpop.f32.mrb[0].mxu0
        %1747 = vdwg.mxu0
        %v1748 = vadd.f32 %v1627, %v1710
        %v1749 = vadd.f32 %v1628, %v1715
        %v1750 = vadd.f32 %v1629, %v1720
        %v1751 = vadd.f32 %v1630, %v1725
        %v1752 = vadd.f32 %v1631, %v1730
        %v1753 = vadd.f32 %v1632, %v1735
        %v1754 = vadd.f32 %v1633, %v1740
        %v1755 = vadd.f32 %v1634, %v1745
        %v1756 = vld [vmem:[%s3] sm:$0x1]
        %v1758 = vlaneseq
        %v1759 = vshrl.u32 %v1758, 7
        %v1760 = vsub.s32 0, %v1759
        %v1761 = vrot.slane %v1756, %v1760
        %v1763 = vadd.f32 %v1748, %v1761
        %v1764 = vadd.f32 %v1749, %v1761
        %v1765 = vadd.f32 %v1750, %v1761
        %v1766 = vadd.f32 %v1751, %v1761
        %v1767 = vadd.f32 %v1752, %v1761
        %v1768 = vadd.f32 %v1753, %v1761
        %v1769 = vadd.f32 %v1754, %v1761
        %v1770 = vadd.f32 %v1755, %v1761
        %v1771 = vmax.f32 %v1763, 0.0
        %v1772 = vmax.f32 %v1764, 0.0
        %v1773 = vmax.f32 %v1765, 0.0
        %v1774 = vmax.f32 %v1766, 0.0
        %v1775 = vmax.f32 %v1767, 0.0
        %v1776 = vmax.f32 %v1768, 0.0
        %v1777 = vmax.f32 %v1769, 0.0
        %v1778 = vmax.f32 %v1770, 0.0
        %s1779 = scalar_lea.vmem [#allocation3], 16
        %1780 = vst [vmem:[%s1779 + $0x1] sm:$0xff] %v1771
        %1781 = vst [vmem:[%s1779 + $0x11] sm:$0xff] %v1772
        %1782 = vst [vmem:[%s1779 + $0x21] sm:$0xff] %v1773
        %1783 = vst [vmem:[%s1779 + $0x31] sm:$0xff] %v1774
        %1784 = vst [vmem:[%s1779 + $0x41] sm:$0xff] %v1775
        %1785 = vst [vmem:[%s1779 + $0x51] sm:$0xff] %v1776
        %1786 = vst [vmem:[%s1779 + $0x61] sm:$0xff] %v1777
        %1787 = vst [vmem:[%s1779 + $0x71] sm:$0xff] %v1778
        %v1788 = vld [vmem:[%s4] sm:$0x1]
        %v1789 = vld [vmem:[%s4 + $0x1] sm:$0x1]
        %v1790 = vld [vmem:[%s4 + $0x2] sm:$0x1]
        %v1791 = vld [vmem:[%s4 + $0x3] sm:$0x1]
        %v1792 = vld [vmem:[#allocation3] sm:$0xff]
        %v1793 = vld [vmem:[#allocation3 + $0x8] sm:$0x3]
        %v1794 = vld [vmem:[#allocation3 + $0x10] sm:$0xff]
        %v1795 = vld [vmem:[#allocation3 + $0x18] sm:$0x3]
        %v1796 = vld [vmem:[#allocation3 + $0x20] sm:$0xff]
        %v1797 = vld [vmem:[#allocation3 + $0x28] sm:$0x3]
        %v1798 = vld [vmem:[#allocation3 + $0x30] sm:$0xff]
        %v1799 = vld [vmem:[#allocation3 + $0x38] sm:$0x3]
        %v1800 = vld [vmem:[#allocation3 + $0x40] sm:$0xff]
        %v1801 = vld [vmem:[#allocation3 + $0x48] sm:$0x3]
        %v1802 = vld [vmem:[#allocation3 + $0x50] sm:$0xff]
        %v1803 = vld [vmem:[#allocation3 + $0x58] sm:$0x3]
        %v1804 = vld [vmem:[#allocation3 + $0x60] sm:$0xff]
        %v1805 = vld [vmem:[#allocation3 + $0x68] sm:$0x3]
        %v1806 = vld [vmem:[#allocation3 + $0x70] sm:$0xff]
        %v1807 = vld [vmem:[#allocation3 + $0x78] sm:$0x3]
        %v1808 = vlaneseq
        %v1809 = vshrl.u32 %v1808, 7
        %v1810 = vsub.s32 0, %v1809
        %v1811 = vrot.slane %v1791, %v1810
        %v1812 = vmul.f32 %v1792, %v1811
        %v1813 = vmul.f32 %v1793, %v1811
        %v1814 = vmul.f32 %v1794, %v1811
        %v1815 = vmul.f32 %v1795, %v1811
        %v1816 = vmul.f32 %v1796, %v1811
        %v1817 = vmul.f32 %v1797, %v1811
        %v1818 = vmul.f32 %v1798, %v1811
        %v1819 = vmul.f32 %v1799, %v1811
        %v1820 = vmul.f32 %v1800, %v1811
        %v1821 = vmul.f32 %v1801, %v1811
        %v1822 = vmul.f32 %v1802, %v1811
        %v1823 = vmul.f32 %v1803, %v1811
        %v1824 = vmul.f32 %v1804, %v1811
        %v1825 = vmul.f32 %v1805, %v1811
        %v1826 = vmul.f32 %v1806, %v1811
        %v1827 = vmul.f32 %v1807, %v1811
        %v1828 = vld [vmem:[%s1779] sm:$0xff]
        %v1829 = vld [vmem:[%s1779 + $0x8] sm:$0x3]
        %v1830 = vld [vmem:[%s1779 + $0x10] sm:$0xff]
        %v1831 = vld [vmem:[%s1779 + $0x18] sm:$0x3]
        %v1832 = vld [vmem:[%s1779 + $0x20] sm:$0xff]
        %v1833 = vld [vmem:[%s1779 + $0x28] sm:$0x3]
        %v1834 = vld [vmem:[%s1779 + $0x30] sm:$0xff]
        %v1835 = vld [vmem:[%s1779 + $0x38] sm:$0x3]
        %v1836 = vld [vmem:[%s1779 + $0x40] sm:$0xff]
        %v1837 = vld [vmem:[%s1779 + $0x48] sm:$0x3]
        %v1838 = vld [vmem:[%s1779 + $0x50] sm:$0xff]
        %v1839 = vld [vmem:[%s1779 + $0x58] sm:$0x3]
        %v1840 = vld [vmem:[%s1779 + $0x60] sm:$0xff]
        %v1841 = vld [vmem:[%s1779 + $0x68] sm:$0x3]
        %v1842 = vld [vmem:[%s1779 + $0x70] sm:$0xff]
        %v1843 = vld [vmem:[%s1779 + $0x78] sm:$0x3]
        %v1844 = vlaneseq
        %v1845 = vshrl.u32 %v1844, 7
        %v1846 = vsub.s32 0, %v1845
        %v1847 = vrot.slane %v1789, %v1846
        %v1848 = vmul.f32 %v1828, %v1847
        %v1849 = vmul.f32 %v1829, %v1847
        %v1850 = vmul.f32 %v1830, %v1847
        %v1851 = vmul.f32 %v1831, %v1847
        %v1852 = vmul.f32 %v1832, %v1847
        %v1853 = vmul.f32 %v1833, %v1847
        %v1854 = vmul.f32 %v1834, %v1847
        %v1855 = vmul.f32 %v1835, %v1847
        %v1856 = vmul.f32 %v1836, %v1847
        %v1857 = vmul.f32 %v1837, %v1847
        %v1858 = vmul.f32 %v1838, %v1847
        %v1859 = vmul.f32 %v1839, %v1847
        %v1860 = vmul.f32 %v1840, %v1847
        %v1861 = vmul.f32 %v1841, %v1847
        %v1862 = vmul.f32 %v1842, %v1847
        %v1863 = vmul.f32 %v1843, %v1847
        %v1864 = vadd.f32 %v1812, %v1848
        %v1865 = vadd.f32 %v1813, %v1849
        %v1866 = vadd.f32 %v1814, %v1850
        %v1867 = vadd.f32 %v1815, %v1851
        %v1868 = vadd.f32 %v1816, %v1852
        %v1869 = vadd.f32 %v1817, %v1853
        %v1870 = vadd.f32 %v1818, %v1854
        %v1871 = vadd.f32 %v1819, %v1855
        %v1872 = vadd.f32 %v1820, %v1856
        %v1873 = vadd.f32 %v1821, %v1857
        %v1874 = vadd.f32 %v1822, %v1858
        %v1875 = vadd.f32 %v1823, %v1859
        %v1876 = vadd.f32 %v1824, %v1860
        %v1877 = vadd.f32 %v1825, %v1861
        %v1878 = vadd.f32 %v1826, %v1862
        %v1879 = vadd.f32 %v1827, %v1863
        %v1880 = vmul.f32 %v1864, %v1811
        %v1881 = vmul.f32 %v1866, %v1811
        %v1882 = vmul.f32 %v1868, %v1811
        %v1883 = vmul.f32 %v1870, %v1811
        %v1884 = vmul.f32 %v1872, %v1811
        %v1885 = vmul.f32 %v1874, %v1811
        %v1886 = vmul.f32 %v1876, %v1811
        %v1887 = vmul.f32 %v1878, %v1811
        %v1888 = vmul.f32 %v1864, %v1847
        %v1889 = vmul.f32 %v1865, %v1847
        %v1890 = vmul.f32 %v1866, %v1847
        %v1891 = vmul.f32 %v1867, %v1847
        %v1892 = vmul.f32 %v1868, %v1847
        %v1893 = vmul.f32 %v1869, %v1847
        %v1894 = vmul.f32 %v1870, %v1847
        %v1895 = vmul.f32 %v1871, %v1847
        %v1896 = vmul.f32 %v1872, %v1847
        %v1897 = vmul.f32 %v1873, %v1847
        %v1898 = vmul.f32 %v1874, %v1847
        %v1899 = vmul.f32 %v1875, %v1847
        %v1900 = vmul.f32 %v1876, %v1847
        %v1901 = vmul.f32 %v1877, %v1847
        %v1902 = vmul.f32 %v1878, %v1847
        %v1903 = vmul.f32 %v1879, %v1847
        %vm1920 = vcmask 1046528
        %v1921 = vrot.slane %v1888, 1
        %v1922 = vrot.slane %v1889, 1
        %v1923 = vsel %vm1920, %v1921, %v1922
        %v1924 = vrot.slane %v1890, 1
        %v1925 = vrot.slane %v1891, 1
        %v1926 = vsel %vm1920, %v1924, %v1925
        %v1927 = vrot.slane %v1892, 1
        %v1928 = vrot.slane %v1893, 1
        %v1929 = vsel %vm1920, %v1927, %v1928
        %v1930 = vrot.slane %v1894, 1
        %v1931 = vrot.slane %v1895, 1
        %v1932 = vsel %vm1920, %v1930, %v1931
        %v1933 = vrot.slane %v1896, 1
        %v1934 = vrot.slane %v1897, 1
        %v1935 = vsel %vm1920, %v1933, %v1934
        %v1936 = vrot.slane %v1898, 1
        %v1937 = vrot.slane %v1899, 1
        %v1938 = vsel %vm1920, %v1936, %v1937
        %v1939 = vrot.slane %v1900, 1
        %v1940 = vrot.slane %v1901, 1
        %v1941 = vsel %vm1920, %v1939, %v1940
        %v1942 = vrot.slane %v1902, 1
        %v1943 = vrot.slane %v1903, 1
        %v1944 = vsel %vm1920, %v1942, %v1943
        %v1953 = vadd.f32 %v1880, %v1923
        %v1954 = vadd.f32 %v1881, %v1926
        %v1955 = vadd.f32 %v1882, %v1929
        %v1956 = vadd.f32 %v1883, %v1932
        %v1957 = vadd.f32 %v1884, %v1935
        %v1958 = vadd.f32 %v1885, %v1938
        %v1959 = vadd.f32 %v1886, %v1941
        %v1960 = vadd.f32 %v1887, %v1944
        %v1961 = vld [vmem:[%s322] sm:$0xff]
        %v1962 = vld [vmem:[%s322 + $0x20] sm:$0xff]
        %v1963 = vld [vmem:[%s322 + $0x40] sm:$0xff]
        %v1964 = vld [vmem:[%s322 + $0x60] sm:$0xff]
        %v1965 = vld [vmem:[%s322 + $0x80] sm:$0xff]
        %v1966 = vld [vmem:[%s322 + $0xa0] sm:$0xff]
        %v1967 = vld [vmem:[%s322 + $0xc0] sm:$0xff]
        %v1968 = vld [vmem:[%s322 + $0xe0] sm:$0xff]
        %v1969 = vadd.f32 %v1953, %v1961
        %v1970 = vadd.f32 %v1954, %v1962
        %v1971 = vadd.f32 %v1955, %v1963
        %v1972 = vadd.f32 %v1956, %v1964
        %v1973 = vadd.f32 %v1957, %v1965
        %v1974 = vadd.f32 %v1958, %v1966
        %v1975 = vadd.f32 %v1959, %v1967
        %v1976 = vadd.f32 %v1960, %v1968
        %s1977 = scalar_lea.vmem [#allocation4], 16
        %1978 = vst [vmem:[%s1977 + $0x1] sm:$0xff] %v1969
        %1979 = vst [vmem:[%s1977 + $0x11] sm:$0xff] %v1970
        %1980 = vst [vmem:[%s1977 + $0x21] sm:$0xff] %v1971
        %1981 = vst [vmem:[%s1977 + $0x31] sm:$0xff] %v1972
        %1982 = vst [vmem:[%s1977 + $0x41] sm:$0xff] %v1973
        %1983 = vst [vmem:[%s1977 + $0x51] sm:$0xff] %v1974
        %1984 = vst [vmem:[%s1977 + $0x61] sm:$0xff] %v1975
        %1985 = vst [vmem:[%s1977 + $0x71] sm:$0xff] %v1976
        %v1986 = vlaneseq
        %v1987 = vshrl.u32 %v1986, 7
        %v1988 = vsub.s32 0, %v1987
        %v1989 = vrot.slane %v1790, %v1988
        %v1990 = vmul.f32 %v1864, %v1989
        %v1991 = vmul.f32 %v1865, %v1989
        %v1992 = vmul.f32 %v1866, %v1989
        %v1993 = vmul.f32 %v1867, %v1989
        %v1994 = vmul.f32 %v1868, %v1989
        %v1995 = vmul.f32 %v1869, %v1989
        %v1996 = vmul.f32 %v1870, %v1989
        %v1997 = vmul.f32 %v1871, %v1989
        %v1998 = vmul.f32 %v1872, %v1989
        %v1999 = vmul.f32 %v1873, %v1989
        %v2000 = vmul.f32 %v1874, %v1989
        %v2001 = vmul.f32 %v1875, %v1989
        %v2002 = vmul.f32 %v1876, %v1989
        %v2003 = vmul.f32 %v1877, %v1989
        %v2004 = vmul.f32 %v1878, %v1989
        %v2005 = vmul.f32 %v1879, %v1989
        %v2006 = vlaneseq
        %v2007 = vshrl.u32 %v2006, 7
        %v2008 = vsub.s32 0, %v2007
        %v2009 = vrot.slane %v1788, %v2008
        %v2010 = vmul.f32 %v1864, %v2009
        %v2011 = vmul.f32 %v1865, %v2009
        %v2012 = vmul.f32 %v1866, %v2009
        %v2013 = vmul.f32 %v1867, %v2009
        %v2014 = vmul.f32 %v1868, %v2009
        %v2015 = vmul.f32 %v1869, %v2009
        %v2016 = vmul.f32 %v1870, %v2009
        %v2017 = vmul.f32 %v1871, %v2009
        %v2018 = vmul.f32 %v1872, %v2009
        %v2019 = vmul.f32 %v1873, %v2009
        %v2020 = vmul.f32 %v1874, %v2009
        %v2021 = vmul.f32 %v1875, %v2009
        %v2022 = vmul.f32 %v1876, %v2009
        %v2023 = vmul.f32 %v1877, %v2009
        %v2024 = vmul.f32 %v1878, %v2009
        %v2025 = vmul.f32 %v1879, %v2009
        %v2042 = vrot.slane %v2010, 1
        %v2043 = vrot.slane %v2011, 1
        %v2044 = vsel %vm1920, %v2042, %v2043
        %v2045 = vrot.slane %v2012, 1
        %v2046 = vrot.slane %v2013, 1
        %v2047 = vsel %vm1920, %v2045, %v2046
        %v2048 = vrot.slane %v2014, 1
        %v2049 = vrot.slane %v2015, 1
        %v2050 = vsel %vm1920, %v2048, %v2049
        %v2051 = vrot.slane %v2016, 1
        %v2052 = vrot.slane %v2017, 1
        %v2053 = vsel %vm1920, %v2051, %v2052
        %v2054 = vrot.slane %v2018, 1
        %v2055 = vrot.slane %v2019, 1
        %v2056 = vsel %vm1920, %v2054, %v2055
        %v2057 = vrot.slane %v2020, 1
        %v2058 = vrot.slane %v2021, 1
        %v2059 = vsel %vm1920, %v2057, %v2058
        %v2060 = vrot.slane %v2022, 1
        %v2061 = vrot.slane %v2023, 1
        %v2062 = vsel %vm1920, %v2060, %v2061
        %v2063 = vrot.slane %v2024, 1
        %v2064 = vrot.slane %v2025, 1
        %v2065 = vsel %vm1920, %v2063, %v2064
        %v2082 = vadd.f32 %v1990, %v2044
        %v2083 = vadd.f32 %v1991, %v2043
        %v2084 = vadd.f32 %v1992, %v2047
        %v2085 = vadd.f32 %v1993, %v2046
        %v2086 = vadd.f32 %v1994, %v2050
        %v2087 = vadd.f32 %v1995, %v2049
        %v2088 = vadd.f32 %v1996, %v2053
        %v2089 = vadd.f32 %v1997, %v2052
        %v2090 = vadd.f32 %v1998, %v2056
        %v2091 = vadd.f32 %v1999, %v2055
        %v2092 = vadd.f32 %v2000, %v2059
        %v2093 = vadd.f32 %v2001, %v2058
        %v2094 = vadd.f32 %v2002, %v2062
        %v2095 = vadd.f32 %v2003, %v2061
        %v2096 = vadd.f32 %v2004, %v2065
        %v2097 = vadd.f32 %v2005, %v2064
        %v2098 = vld [vmem:[%s322 + $0x8] sm:$0xff]
        %v2099 = vld [vmem:[%s322 + $0x28] sm:$0xff]
        %v2100 = vld [vmem:[%s322 + $0x48] sm:$0xff]
        %v2101 = vld [vmem:[%s322 + $0x68] sm:$0xff]
        %v2102 = vld [vmem:[%s322 + $0x88] sm:$0xff]
        %v2103 = vld [vmem:[%s322 + $0xa8] sm:$0xff]
        %v2104 = vld [vmem:[%s322 + $0xc8] sm:$0xff]
        %v2105 = vld [vmem:[%s322 + $0xe8] sm:$0xff]
        %v2114 = vrot.slane %v2098, 7
        %v2115 = vrot.slane %v2099, 7
        %v2116 = vrot.slane %v2100, 7
        %v2117 = vrot.slane %v2101, 7
        %v2118 = vrot.slane %v2102, 7
        %v2119 = vrot.slane %v2103, 7
        %v2120 = vrot.slane %v2104, 7
        %v2121 = vrot.slane %v2105, 7
        %v2130 = vadd.f32 %v2082, %v2114
        %v2131 = vadd.f32 %v2083, %v2114
        %v2132 = vadd.f32 %v2084, %v2115
        %v2133 = vadd.f32 %v2085, %v2115
        %v2134 = vadd.f32 %v2086, %v2116
        %v2135 = vadd.f32 %v2087, %v2116
        %v2136 = vadd.f32 %v2088, %v2117
        %v2137 = vadd.f32 %v2089, %v2117
        %v2138 = vadd.f32 %v2090, %v2118
        %v2139 = vadd.f32 %v2091, %v2118
        %v2140 = vadd.f32 %v2092, %v2119
        %v2141 = vadd.f32 %v2093, %v2119
        %v2142 = vadd.f32 %v2094, %v2120
        %v2143 = vadd.f32 %v2095, %v2120
        %v2144 = vadd.f32 %v2096, %v2121
        %v2145 = vadd.f32 %v2097, %v2121
        %s2146 = scalar_lea.vmem [#allocation4], 176
        %2147 = vst [vmem:[%s2146] sm:$0xfe] %v2130
        %2148 = vst [vmem:[%s2146 + $0x8] sm:$0x1] %v2131
        %2149 = vst [vmem:[%s2146 + $0x10] sm:$0xfe] %v2132
        %2150 = vst [vmem:[%s2146 + $0x18] sm:$0x1] %v2133
        %2151 = vst [vmem:[%s2146 + $0x20] sm:$0xfe] %v2134
        %2152 = vst [vmem:[%s2146 + $0x28] sm:$0x1] %v2135
        %2153 = vst [vmem:[%s2146 + $0x30] sm:$0xfe] %v2136
        %2154 = vst [vmem:[%s2146 + $0x38] sm:$0x1] %v2137
        %2155 = vst [vmem:[%s2146 + $0x40] sm:$0xfe] %v2138
        %2156 = vst [vmem:[%s2146 + $0x48] sm:$0x1] %v2139
        %2157 = vst [vmem:[%s2146 + $0x50] sm:$0xfe] %v2140
        %2158 = vst [vmem:[%s2146 + $0x58] sm:$0x1] %v2141
        %2159 = vst [vmem:[%s2146 + $0x60] sm:$0xfe] %v2142
        %2160 = vst [vmem:[%s2146 + $0x68] sm:$0x1] %v2143
        %2161 = vst [vmem:[%s2146 + $0x70] sm:$0xfe] %v2144
        %2162 = vst [vmem:[%s2146 + $0x78] sm:$0x1] %v2145
        %v2163 = vld [vmem:[%s1779] sm:$0xff]
        %v2164 = vld [vmem:[%s1779 + $0x8] sm:$0x3]
        %v2165 = vld [vmem:[%s1779 + $0x10] sm:$0xff]
        %v2166 = vld [vmem:[%s1779 + $0x18] sm:$0x3]
        %v2167 = vld [vmem:[%s1779 + $0x20] sm:$0xff]
        %v2168 = vld [vmem:[%s1779 + $0x28] sm:$0x3]
        %v2169 = vld [vmem:[%s1779 + $0x30] sm:$0xff]
        %v2170 = vld [vmem:[%s1779 + $0x38] sm:$0x3]
        %v2171 = vld [vmem:[%s1779 + $0x40] sm:$0xff]
        %v2172 = vld [vmem:[%s1779 + $0x48] sm:$0x3]
        %v2173 = vld [vmem:[%s1779 + $0x50] sm:$0xff]
        %v2174 = vld [vmem:[%s1779 + $0x58] sm:$0x3]
        %v2175 = vld [vmem:[%s1779 + $0x60] sm:$0xff]
        %v2176 = vld [vmem:[%s1779 + $0x68] sm:$0x3]
        %v2177 = vld [vmem:[%s1779 + $0x70] sm:$0xff]
        %v2178 = vld [vmem:[%s1779 + $0x78] sm:$0x3]
        %v2179 = vmul.f32 %v2163, %v1989
        %v2180 = vmul.f32 %v2164, %v1989
        %v2181 = vmul.f32 %v2165, %v1989
        %v2182 = vmul.f32 %v2166, %v1989
        %v2183 = vmul.f32 %v2167, %v1989
        %v2184 = vmul.f32 %v2168, %v1989
        %v2185 = vmul.f32 %v2169, %v1989
        %v2186 = vmul.f32 %v2170, %v1989
        %v2187 = vmul.f32 %v2171, %v1989
        %v2188 = vmul.f32 %v2172, %v1989
        %v2189 = vmul.f32 %v2173, %v1989
        %v2190 = vmul.f32 %v2174, %v1989
        %v2191 = vmul.f32 %v2175, %v1989
        %v2192 = vmul.f32 %v2176, %v1989
        %v2193 = vmul.f32 %v2177, %v1989
        %v2194 = vmul.f32 %v2178, %v1989
        %s2195 = scalar_lea.vmem [#allocation3], 32
        %v2196 = vld [vmem:[%s2195] sm:$0xff]
        %v2197 = vld [vmem:[%s2195 + $0x8] sm:$0x3]
        %v2198 = vld [vmem:[%s2195 + $0x10] sm:$0xff]
        %v2199 = vld [vmem:[%s2195 + $0x18] sm:$0x3]
        %v2200 = vld [vmem:[%s2195 + $0x20] sm:$0xff]
        %v2201 = vld [vmem:[%s2195 + $0x28] sm:$0x3]
        %v2202 = vld [vmem:[%s2195 + $0x30] sm:$0xff]
        %v2203 = vld [vmem:[%s2195 + $0x38] sm:$0x3]
        %v2204 = vld [vmem:[%s2195 + $0x40] sm:$0xff]
        %v2205 = vld [vmem:[%s2195 + $0x48] sm:$0x3]
        %v2206 = vld [vmem:[%s2195 + $0x50] sm:$0xff]
        %v2207 = vld [vmem:[%s2195 + $0x58] sm:$0x3]
        %v2208 = vld [vmem:[%s2195 + $0x60] sm:$0xff]
        %v2209 = vld [vmem:[%s2195 + $0x68] sm:$0x3]
        %v2210 = vld [vmem:[%s2195 + $0x70] sm:$0xff]
        %v2211 = vld [vmem:[%s2195 + $0x78] sm:$0x3]
        %v2212 = vmul.f32 %v2196, %v2009
        %v2213 = vmul.f32 %v2197, %v2009
        %v2214 = vmul.f32 %v2198, %v2009
        %v2215 = vmul.f32 %v2199, %v2009
        %v2216 = vmul.f32 %v2200, %v2009
        %v2217 = vmul.f32 %v2201, %v2009
        %v2218 = vmul.f32 %v2202, %v2009
        %v2219 = vmul.f32 %v2203, %v2009
        %v2220 = vmul.f32 %v2204, %v2009
        %v2221 = vmul.f32 %v2205, %v2009
        %v2222 = vmul.f32 %v2206, %v2009
        %v2223 = vmul.f32 %v2207, %v2009
        %v2224 = vmul.f32 %v2208, %v2009
        %v2225 = vmul.f32 %v2209, %v2009
        %v2226 = vmul.f32 %v2210, %v2009
        %v2227 = vmul.f32 %v2211, %v2009
        %v2228 = vadd.f32 %v2179, %v2212
        %v2229 = vadd.f32 %v2180, %v2213
        %v2230 = vadd.f32 %v2181, %v2214
        %v2231 = vadd.f32 %v2182, %v2215
        %v2232 = vadd.f32 %v2183, %v2216
        %v2233 = vadd.f32 %v2184, %v2217
        %v2234 = vadd.f32 %v2185, %v2218
        %v2235 = vadd.f32 %v2186, %v2219
        %v2236 = vadd.f32 %v2187, %v2220
        %v2237 = vadd.f32 %v2188, %v2221
        %v2238 = vadd.f32 %v2189, %v2222
        %v2239 = vadd.f32 %v2190, %v2223
        %v2240 = vadd.f32 %v2191, %v2224
        %v2241 = vadd.f32 %v2192, %v2225
        %v2242 = vadd.f32 %v2193, %v2226
        %v2243 = vadd.f32 %v2194, %v2227
        %v2244 = vmul.f32 %v2228, %v1811
        %v2245 = vmul.f32 %v2230, %v1811
        %v2246 = vmul.f32 %v2232, %v1811
        %v2247 = vmul.f32 %v2234, %v1811
        %v2248 = vmul.f32 %v2236, %v1811
        %v2249 = vmul.f32 %v2238, %v1811
        %v2250 = vmul.f32 %v2240, %v1811
        %v2251 = vmul.f32 %v2242, %v1811
        %v2252 = vmul.f32 %v2228, %v1847
        %v2253 = vmul.f32 %v2229, %v1847
        %v2254 = vmul.f32 %v2230, %v1847
        %v2255 = vmul.f32 %v2231, %v1847
        %v2256 = vmul.f32 %v2232, %v1847
        %v2257 = vmul.f32 %v2233, %v1847
        %v2258 = vmul.f32 %v2234, %v1847
        %v2259 = vmul.f32 %v2235, %v1847
        %v2260 = vmul.f32 %v2236, %v1847
        %v2261 = vmul.f32 %v2237, %v1847
        %v2262 = vmul.f32 %v2238, %v1847
        %v2263 = vmul.f32 %v2239, %v1847
        %v2264 = vmul.f32 %v2240, %v1847
        %v2265 = vmul.f32 %v2241, %v1847
        %v2266 = vmul.f32 %v2242, %v1847
        %v2267 = vmul.f32 %v2243, %v1847
        %v2284 = vrot.slane %v2252, 1
        %v2285 = vrot.slane %v2253, 1
        %v2286 = vsel %vm1920, %v2284, %v2285
        %v2287 = vrot.slane %v2254, 1
        %v2288 = vrot.slane %v2255, 1
        %v2289 = vsel %vm1920, %v2287, %v2288
        %v2290 = vrot.slane %v2256, 1
        %v2291 = vrot.slane %v2257, 1
        %v2292 = vsel %vm1920, %v2290, %v2291
        %v2293 = vrot.slane %v2258, 1
        %v2294 = vrot.slane %v2259, 1
        %v2295 = vsel %vm1920, %v2293, %v2294
        %v2296 = vrot.slane %v2260, 1
        %v2297 = vrot.slane %v2261, 1
        %v2298 = vsel %vm1920, %v2296, %v2297
        %v2299 = vrot.slane %v2262, 1
        %v2300 = vrot.slane %v2263, 1
        %v2301 = vsel %vm1920, %v2299, %v2300
        %v2302 = vrot.slane %v2264, 1
        %v2303 = vrot.slane %v2265, 1
        %v2304 = vsel %vm1920, %v2302, %v2303
        %v2305 = vrot.slane %v2266, 1
        %v2306 = vrot.slane %v2267, 1
        %v2307 = vsel %vm1920, %v2305, %v2306
        %v2316 = vadd.f32 %v2244, %v2286
        %v2317 = vadd.f32 %v2245, %v2289
        %v2318 = vadd.f32 %v2246, %v2292
        %v2319 = vadd.f32 %v2247, %v2295
        %v2320 = vadd.f32 %v2248, %v2298
        %v2321 = vadd.f32 %v2249, %v2301
        %v2322 = vadd.f32 %v2250, %v2304
        %v2323 = vadd.f32 %v2251, %v2307
        %s2324 = scalar_lea.vmem %s322, 16 [#allocation8]
        %v2325 = vld [vmem:[%s2324] sm:$0xff]
        %v2326 = vld [vmem:[%s2324 + $0x20] sm:$0xff]
        %v2327 = vld [vmem:[%s2324 + $0x40] sm:$0xff]
        %v2328 = vld [vmem:[%s2324 + $0x60] sm:$0xff]
        %v2329 = vld [vmem:[%s2324 + $0x80] sm:$0xff]
        %v2330 = vld [vmem:[%s2324 + $0xa0] sm:$0xff]
        %v2331 = vld [vmem:[%s2324 + $0xc0] sm:$0xff]
        %v2332 = vld [vmem:[%s2324 + $0xe0] sm:$0xff]
        %v2333 = vadd.f32 %v2316, %v2325
        %v2334 = vadd.f32 %v2317, %v2326
        %v2335 = vadd.f32 %v2318, %v2327
        %v2336 = vadd.f32 %v2319, %v2328
        %v2337 = vadd.f32 %v2320, %v2329
        %v2338 = vadd.f32 %v2321, %v2330
        %v2339 = vadd.f32 %v2322, %v2331
        %v2340 = vadd.f32 %v2323, %v2332
        %s2341 = scalar_lea.vmem [#allocation4], 336
        %2342 = vst [vmem:[%s2341 + $0x1] sm:$0xff] %v2333
        %2343 = vst [vmem:[%s2341 + $0x11] sm:$0xff] %v2334
        %2344 = vst [vmem:[%s2341 + $0x21] sm:$0xff] %v2335
        %2345 = vst [vmem:[%s2341 + $0x31] sm:$0xff] %v2336
        %2346 = vst [vmem:[%s2341 + $0x41] sm:$0xff] %v2337
        %2347 = vst [vmem:[%s2341 + $0x51] sm:$0xff] %v2338
        %2348 = vst [vmem:[%s2341 + $0x61] sm:$0xff] %v2339
        %2349 = vst [vmem:[%s2341 + $0x71] sm:$0xff] %v2340
        %v2350 = vmul.f32 %v2228, %v1989
        %v2351 = vmul.f32 %v2229, %v1989
        %v2352 = vmul.f32 %v2230, %v1989
        %v2353 = vmul.f32 %v2231, %v1989
        %v2354 = vmul.f32 %v2232, %v1989
        %v2355 = vmul.f32 %v2233, %v1989
        %v2356 = vmul.f32 %v2234, %v1989
        %v2357 = vmul.f32 %v2235, %v1989
        %v2358 = vmul.f32 %v2236, %v1989
        %v2359 = vmul.f32 %v2237, %v1989
        %v2360 = vmul.f32 %v2238, %v1989
        %v2361 = vmul.f32 %v2239, %v1989
        %v2362 = vmul.f32 %v2240, %v1989
        %v2363 = vmul.f32 %v2241, %v1989
        %v2364 = vmul.f32 %v2242, %v1989
        %v2365 = vmul.f32 %v2243, %v1989
        %v2366 = vmul.f32 %v2228, %v2009
        %v2367 = vmul.f32 %v2229, %v2009
        %v2368 = vmul.f32 %v2230, %v2009
        %v2369 = vmul.f32 %v2231, %v2009
        %v2370 = vmul.f32 %v2232, %v2009
        %v2371 = vmul.f32 %v2233, %v2009
        %v2372 = vmul.f32 %v2234, %v2009
        %v2373 = vmul.f32 %v2235, %v2009
        %v2374 = vmul.f32 %v2236, %v2009
        %v2375 = vmul.f32 %v2237, %v2009
        %v2376 = vmul.f32 %v2238, %v2009
        %v2377 = vmul.f32 %v2239, %v2009
        %v2378 = vmul.f32 %v2240, %v2009
        %v2379 = vmul.f32 %v2241, %v2009
        %v2380 = vmul.f32 %v2242, %v2009
        %v2381 = vmul.f32 %v2243, %v2009
        %v2398 = vrot.slane %v2366, 1
        %v2399 = vrot.slane %v2367, 1
        %v2400 = vsel %vm1920, %v2398, %v2399
        %v2401 = vrot.slane %v2368, 1
        %v2402 = vrot.slane %v2369, 1
        %v2403 = vsel %vm1920, %v2401, %v2402
        %v2404 = vrot.slane %v2370, 1
        %v2405 = vrot.slane %v2371, 1
        %v2406 = vsel %vm1920, %v2404, %v2405
        %v2407 = vrot.slane %v2372, 1
        %v2408 = vrot.slane %v2373, 1
        %v2409 = vsel %vm1920, %v2407, %v2408
        %v2410 = vrot.slane %v2374, 1
        %v2411 = vrot.slane %v2375, 1
        %v2412 = vsel %vm1920, %v2410, %v2411
        %v2413 = vrot.slane %v2376, 1
        %v2414 = vrot.slane %v2377, 1
        %v2415 = vsel %vm1920, %v2413, %v2414
        %v2416 = vrot.slane %v2378, 1
        %v2417 = vrot.slane %v2379, 1
        %v2418 = vsel %vm1920, %v2416, %v2417
        %v2419 = vrot.slane %v2380, 1
        %v2420 = vrot.slane %v2381, 1
        %v2421 = vsel %vm1920, %v2419, %v2420
        %v2438 = vadd.f32 %v2350, %v2400
        %v2439 = vadd.f32 %v2351, %v2399
        %v2440 = vadd.f32 %v2352, %v2403
        %v2441 = vadd.f32 %v2353, %v2402
        %v2442 = vadd.f32 %v2354, %v2406
        %v2443 = vadd.f32 %v2355, %v2405
        %v2444 = vadd.f32 %v2356, %v2409
        %v2445 = vadd.f32 %v2357, %v2408
        %v2446 = vadd.f32 %v2358, %v2412
        %v2447 = vadd.f32 %v2359, %v2411
        %v2448 = vadd.f32 %v2360, %v2415
        %v2449 = vadd.f32 %v2361, %v2414
        %v2450 = vadd.f32 %v2362, %v2418
        %v2451 = vadd.f32 %v2363, %v2417
        %v2452 = vadd.f32 %v2364, %v2421
        %v2453 = vadd.f32 %v2365, %v2420
        %v2454 = vld [vmem:[%s2324 + $0x8] sm:$0xff]
        %v2455 = vld [vmem:[%s2324 + $0x28] sm:$0xff]
        %v2456 = vld [vmem:[%s2324 + $0x48] sm:$0xff]
        %v2457 = vld [vmem:[%s2324 + $0x68] sm:$0xff]
        %v2458 = vld [vmem:[%s2324 + $0x88] sm:$0xff]
        %v2459 = vld [vmem:[%s2324 + $0xa8] sm:$0xff]
        %v2460 = vld [vmem:[%s2324 + $0xc8] sm:$0xff]
        %v2461 = vld [vmem:[%s2324 + $0xe8] sm:$0xff]
        %v2470 = vrot.slane %v2454, 7
        %v2471 = vrot.slane %v2455, 7
        %v2472 = vrot.slane %v2456, 7
        %v2473 = vrot.slane %v2457, 7
        %v2474 = vrot.slane %v2458, 7
        %v2475 = vrot.slane %v2459, 7
        %v2476 = vrot.slane %v2460, 7
        %v2477 = vrot.slane %v2461, 7
        %v2486 = vadd.f32 %v2438, %v2470
        %v2487 = vadd.f32 %v2439, %v2470
        %v2488 = vadd.f32 %v2440, %v2471
        %v2489 = vadd.f32 %v2441, %v2471
        %v2490 = vadd.f32 %v2442, %v2472
        %v2491 = vadd.f32 %v2443, %v2472
        %v2492 = vadd.f32 %v2444, %v2473
        %v2493 = vadd.f32 %v2445, %v2473
        %v2494 = vadd.f32 %v2446, %v2474
        %v2495 = vadd.f32 %v2447, %v2474
        %v2496 = vadd.f32 %v2448, %v2475
        %v2497 = vadd.f32 %v2449, %v2475
        %v2498 = vadd.f32 %v2450, %v2476
        %v2499 = vadd.f32 %v2451, %v2476
        %v2500 = vadd.f32 %v2452, %v2477
        %v2501 = vadd.f32 %v2453, %v2477
        %s2502 = scalar_lea.vmem [#allocation4], 496
        %2503 = vst [vmem:[%s2502] sm:$0xfe] %v2486
        %2504 = vst [vmem:[%s2502 + $0x8] sm:$0x1] %v2487
        %2505 = vst [vmem:[%s2502 + $0x10] sm:$0xfe] %v2488
        %2506 = vst [vmem:[%s2502 + $0x18] sm:$0x1] %v2489
        %2507 = vst [vmem:[%s2502 + $0x20] sm:$0xfe] %v2490
        %2508 = vst [vmem:[%s2502 + $0x28] sm:$0x1] %v2491
        %2509 = vst [vmem:[%s2502 + $0x30] sm:$0xfe] %v2492
        %2510 = vst [vmem:[%s2502 + $0x38] sm:$0x1] %v2493
        %2511 = vst [vmem:[%s2502 + $0x40] sm:$0xfe] %v2494
        %2512 = vst [vmem:[%s2502 + $0x48] sm:$0x1] %v2495
        %2513 = vst [vmem:[%s2502 + $0x50] sm:$0xfe] %v2496
        %2514 = vst [vmem:[%s2502 + $0x58] sm:$0x1] %v2497
        %2515 = vst [vmem:[%s2502 + $0x60] sm:$0xfe] %v2498
        %2516 = vst [vmem:[%s2502 + $0x68] sm:$0x1] %v2499
        %2517 = vst [vmem:[%s2502 + $0x70] sm:$0xfe] %v2500
        %2518 = vst [vmem:[%s2502 + $0x78] sm:$0x1] %v2501
        %v2519 = vld [vmem:[#allocation11] sm:$0xff]
        %v2520 = vld [vmem:[#allocation11 + $0x8] sm:$0xff]
        %v2521 = vld [vmem:[#allocation11 + $0x10] sm:$0xff]
        %v2522 = vld [vmem:[#allocation11 + $0x18] sm:$0xff]
        %v2523 = vld [vmem:[#allocation11 + $0x20] sm:$0xff]
        %v2524 = vld [vmem:[#allocation11 + $0x28] sm:$0xff]
        %v2525 = vld [vmem:[#allocation11 + $0x30] sm:$0xff]
        %v2526 = vld [vmem:[#allocation11 + $0x38] sm:$0xff]
        %v2527 = vld [vmem:[#allocation11 + $0x40] sm:$0xff]
        %v2528 = vld [vmem:[#allocation11 + $0x48] sm:$0xff]
        %v2529 = vld [vmem:[#allocation11 + $0x50] sm:$0xff]
        %v2530 = vld [vmem:[#allocation11 + $0x58] sm:$0xff]
        %v2531 = vld [vmem:[#allocation11 + $0x60] sm:$0xff]
        %v2532 = vld [vmem:[#allocation11 + $0x68] sm:$0xff]
        %v2533 = vld [vmem:[#allocation11 + $0x70] sm:$0xff]
        %v2534 = vld [vmem:[#allocation11 + $0x78] sm:$0xff]
        %s2535 = scalar_lea.vmem [#allocation11], 128
        %v2536 = vld [vmem:[%s2535] sm:$0xff]
        %v2537 = vld [vmem:[%s2535 + $0x8] sm:$0xff]
        %v2538 = vld [vmem:[%s2535 + $0x10] sm:$0xff]
        %v2539 = vld [vmem:[%s2535 + $0x18] sm:$0xff]
        %v2540 = vld [vmem:[%s2535 + $0x20] sm:$0xff]
        %v2541 = vld [vmem:[%s2535 + $0x28] sm:$0xff]
        %v2542 = vld [vmem:[%s2535 + $0x30] sm:$0xff]
        %v2543 = vld [vmem:[%s2535 + $0x38] sm:$0xff]
        %v2544 = vld [vmem:[%s2535 + $0x40] sm:$0xff]
        %v2545 = vld [vmem:[%s2535 + $0x48] sm:$0xff]
        %v2546 = vld [vmem:[%s2535 + $0x50] sm:$0xff]
        %v2547 = vld [vmem:[%s2535 + $0x58] sm:$0xff]
        %v2548 = vld [vmem:[%s2535 + $0x60] sm:$0xff]
        %v2549 = vld [vmem:[%s2535 + $0x68] sm:$0xff]
        %v2550 = vld [vmem:[%s2535 + $0x70] sm:$0xff]
        %v2551 = vld [vmem:[%s2535 + $0x78] sm:$0xff]
        %s2552 = scalar_lea.vmem [#allocation11], 256
        %v2553 = vld [vmem:[%s2552] sm:$0xff]
        %v2554 = vld [vmem:[%s2552 + $0x8] sm:$0xff]
        %v2555 = vld [vmem:[%s2552 + $0x10] sm:$0xff]
        %v2556 = vld [vmem:[%s2552 + $0x18] sm:$0xff]
        %v2557 = vld [vmem:[%s2552 + $0x20] sm:$0xff]
        %v2558 = vld [vmem:[%s2552 + $0x28] sm:$0xff]
        %v2559 = vld [vmem:[%s2552 + $0x30] sm:$0xff]
        %v2560 = vld [vmem:[%s2552 + $0x38] sm:$0xff]
        %v2561 = vld [vmem:[%s2552 + $0x40] sm:$0xff]
        %v2562 = vld [vmem:[%s2552 + $0x48] sm:$0xff]
        %v2563 = vld [vmem:[%s2552 + $0x50] sm:$0xff]
        %v2564 = vld [vmem:[%s2552 + $0x58] sm:$0xff]
        %v2565 = vld [vmem:[%s2552 + $0x60] sm:$0xff]
        %v2566 = vld [vmem:[%s2552 + $0x68] sm:$0xff]
        %v2567 = vld [vmem:[%s2552 + $0x70] sm:$0xff]
        %v2568 = vld [vmem:[%s2552 + $0x78] sm:$0xff]
        %s2569 = scalar_lea.vmem [#allocation11], 384
        %v2570 = vld [vmem:[%s2569] sm:$0xff]
        %v2571 = vld [vmem:[%s2569 + $0x8] sm:$0xff]
        %v2572 = vld [vmem:[%s2569 + $0x10] sm:$0xff]
        %v2573 = vld [vmem:[%s2569 + $0x18] sm:$0xff]
        %v2574 = vld [vmem:[%s2569 + $0x20] sm:$0xff]
        %v2575 = vld [vmem:[%s2569 + $0x28] sm:$0xff]
        %v2576 = vld [vmem:[%s2569 + $0x30] sm:$0xff]
        %v2577 = vld [vmem:[%s2569 + $0x38] sm:$0xff]
        %v2578 = vld [vmem:[%s2569 + $0x40] sm:$0xff]
        %v2579 = vld [vmem:[%s2569 + $0x48] sm:$0xff]
        %v2580 = vld [vmem:[%s2569 + $0x50] sm:$0xff]
        %v2581 = vld [vmem:[%s2569 + $0x58] sm:$0xff]
        %v2582 = vld [vmem:[%s2569 + $0x60] sm:$0xff]
        %v2583 = vld [vmem:[%s2569 + $0x68] sm:$0xff]
        %v2584 = vld [vmem:[%s2569 + $0x70] sm:$0xff]
        %v2585 = vld [vmem:[%s2569 + $0x78] sm:$0xff]
        %s2586 = scalar_lea.vmem [#allocation11], 512
        %v2587 = vld [vmem:[%s2586] sm:$0xff]
        %v2588 = vld [vmem:[%s2586 + $0x8] sm:$0xff]
        %v2589 = vld [vmem:[%s2586 + $0x10] sm:$0xff]
        %v2590 = vld [vmem:[%s2586 + $0x18] sm:$0xff]
        %v2591 = vld [vmem:[%s2586 + $0x20] sm:$0xff]
        %v2592 = vld [vmem:[%s2586 + $0x28] sm:$0xff]
        %v2593 = vld [vmem:[%s2586 + $0x30] sm:$0xff]
        %v2594 = vld [vmem:[%s2586 + $0x38] sm:$0xff]
        %v2595 = vld [vmem:[%s2586 + $0x40] sm:$0xff]
        %v2596 = vld [vmem:[%s2586 + $0x48] sm:$0xff]
        %v2597 = vld [vmem:[%s2586 + $0x50] sm:$0xff]
        %v2598 = vld [vmem:[%s2586 + $0x58] sm:$0xff]
        %v2599 = vld [vmem:[%s2586 + $0x60] sm:$0xff]
        %v2600 = vld [vmem:[%s2586 + $0x68] sm:$0xff]
        %v2601 = vld [vmem:[%s2586 + $0x70] sm:$0xff]
        %v2602 = vld [vmem:[%s2586 + $0x78] sm:$0xff]
        %s2603 = scalar_lea.vmem [#allocation11], 640
        %v2604 = vld [vmem:[%s2603] sm:$0xff]
        %v2605 = vld [vmem:[%s2603 + $0x8] sm:$0xff]
        %v2606 = vld [vmem:[%s2603 + $0x10] sm:$0xff]
        %v2607 = vld [vmem:[%s2603 + $0x18] sm:$0xff]
        %v2608 = vld [vmem:[%s2603 + $0x20] sm:$0xff]
        %v2609 = vld [vmem:[%s2603 + $0x28] sm:$0xff]
        %v2610 = vld [vmem:[%s2603 + $0x30] sm:$0xff]
        %v2611 = vld [vmem:[%s2603 + $0x38] sm:$0xff]
        %v2612 = vld [vmem:[%s2603 + $0x40] sm:$0xff]
        %v2613 = vld [vmem:[%s2603 + $0x48] sm:$0xff]
        %v2614 = vld [vmem:[%s2603 + $0x50] sm:$0xff]
        %v2615 = vld [vmem:[%s2603 + $0x58] sm:$0xff]
        %v2616 = vld [vmem:[%s2603 + $0x60] sm:$0xff]
        %v2617 = vld [vmem:[%s2603 + $0x68] sm:$0xff]
        %v2618 = vld [vmem:[%s2603 + $0x70] sm:$0xff]
        %v2619 = vld [vmem:[%s2603 + $0x78] sm:$0xff]
        %s2620 = scalar_lea.vmem [#allocation11], 768
        %v2621 = vld [vmem:[%s2620] sm:$0xff]
        %v2622 = vld [vmem:[%s2620 + $0x8] sm:$0xff]
        %v2623 = vld [vmem:[%s2620 + $0x10] sm:$0xff]
        %v2624 = vld [vmem:[%s2620 + $0x18] sm:$0xff]
        %v2625 = vld [vmem:[%s2620 + $0x20] sm:$0xff]
        %v2626 = vld [vmem:[%s2620 + $0x28] sm:$0xff]
        %v2627 = vld [vmem:[%s2620 + $0x30] sm:$0xff]
        %v2628 = vld [vmem:[%s2620 + $0x38] sm:$0xff]
        %v2629 = vld [vmem:[%s2620 + $0x40] sm:$0xff]
        %v2630 = vld [vmem:[%s2620 + $0x48] sm:$0xff]
        %v2631 = vld [vmem:[%s2620 + $0x50] sm:$0xff]
        %v2632 = vld [vmem:[%s2620 + $0x58] sm:$0xff]
        %v2633 = vld [vmem:[%s2620 + $0x60] sm:$0xff]
        %v2634 = vld [vmem:[%s2620 + $0x68] sm:$0xff]
        %v2635 = vld [vmem:[%s2620 + $0x70] sm:$0xff]
        %v2636 = vld [vmem:[%s2620 + $0x78] sm:$0xff]
        %s2637 = scalar_lea.vmem [#allocation11], 896
        %v2638 = vld [vmem:[%s2637] sm:$0xff]
        %v2639 = vld [vmem:[%s2637 + $0x8] sm:$0xff]
        %v2640 = vld [vmem:[%s2637 + $0x10] sm:$0xff]
        %v2641 = vld [vmem:[%s2637 + $0x18] sm:$0xff]
        %v2642 = vld [vmem:[%s2637 + $0x20] sm:$0xff]
        %v2643 = vld [vmem:[%s2637 + $0x28] sm:$0xff]
        %v2644 = vld [vmem:[%s2637 + $0x30] sm:$0xff]
        %v2645 = vld [vmem:[%s2637 + $0x38] sm:$0xff]
        %v2646 = vld [vmem:[%s2637 + $0x40] sm:$0xff]
        %v2647 = vld [vmem:[%s2637 + $0x48] sm:$0xff]
        %v2648 = vld [vmem:[%s2637 + $0x50] sm:$0xff]
        %v2649 = vld [vmem:[%s2637 + $0x58] sm:$0xff]
        %v2650 = vld [vmem:[%s2637 + $0x60] sm:$0xff]
        %v2651 = vld [vmem:[%s2637 + $0x68] sm:$0xff]
        %v2652 = vld [vmem:[%s2637 + $0x70] sm:$0xff]
        %v2653 = vld [vmem:[%s2637 + $0x78] sm:$0xff]
        %s2654 = scalar_lea.vmem [#allocation11], 1024
        %v2655 = vld [vmem:[%s2654] sm:$0xff]
        %v2656 = vld [vmem:[%s2654 + $0x8] sm:$0xff]
        %v2657 = vld [vmem:[%s2654 + $0x10] sm:$0xff]
        %v2658 = vld [vmem:[%s2654 + $0x18] sm:$0xff]
        %v2659 = vld [vmem:[%s2654 + $0x20] sm:$0xff]
        %v2660 = vld [vmem:[%s2654 + $0x28] sm:$0xff]
        %v2661 = vld [vmem:[%s2654 + $0x30] sm:$0xff]
        %v2662 = vld [vmem:[%s2654 + $0x38] sm:$0xff]
        %v2663 = vld [vmem:[%s2654 + $0x40] sm:$0xff]
        %v2664 = vld [vmem:[%s2654 + $0x48] sm:$0xff]
        %v2665 = vld [vmem:[%s2654 + $0x50] sm:$0xff]
        %v2666 = vld [vmem:[%s2654 + $0x58] sm:$0xff]
        %v2667 = vld [vmem:[%s2654 + $0x60] sm:$0xff]
        %v2668 = vld [vmem:[%s2654 + $0x68] sm:$0xff]
        %v2669 = vld [vmem:[%s2654 + $0x70] sm:$0xff]
        %v2670 = vld [vmem:[%s2654 + $0x78] sm:$0xff]
        %v2671 = vld [vmem:[%s6] sm:$0x1]
        %s2672 = scalar_lea.vmem [#allocation4], 480
        %v2673 = vld [vmem:[%s2672] sm:$0xff]
        %v2674 = vld [vmem:[%s2672 + $0x10] sm:$0xff]
        %v2675 = vld [vmem:[%s2672 + $0x20] sm:$0xff]
        %v2676 = vld [vmem:[%s2672 + $0x30] sm:$0xff]
        %v2677 = vld [vmem:[%s2672 + $0x40] sm:$0xff]
        %v2678 = vld [vmem:[%s2672 + $0x50] sm:$0xff]
        %v2679 = vld [vmem:[%s2672 + $0x60] sm:$0xff]
        %v2680 = vld [vmem:[%s2672 + $0x70] sm:$0xff]
        %s2681 = scalar_lea.vmem [#allocation4], 320
        %v2682 = vld [vmem:[%s2681 + $0x1] sm:$0xff]
        %v2683 = vld [vmem:[%s2681 + $0x11] sm:$0xff]
        %v2684 = vld [vmem:[%s2681 + $0x21] sm:$0xff]
        %v2685 = vld [vmem:[%s2681 + $0x31] sm:$0xff]
        %v2686 = vld [vmem:[%s2681 + $0x41] sm:$0xff]
        %v2687 = vld [vmem:[%s2681 + $0x51] sm:$0xff]
        %v2688 = vld [vmem:[%s2681 + $0x61] sm:$0xff]
        %v2689 = vld [vmem:[%s2681 + $0x71] sm:$0xff]
        %2690 = vmatprep.subr.mxu0 0.0
        %2691 = vmatpush1.msra.mxu0 %v2536
        %2692 = vmatprep.subr.mxu0 0.0
        %2693 = vmatpush1.msra.mxu0 %v2537
        %2694 = vmatprep.subr.mxu0 0.0
        %2695 = vmatpush1.msra.mxu0 %v2538
        %2696 = vmatprep.subr.mxu0 0.0
        %2697 = vmatpush1.msra.mxu0 %v2539
        %2698 = vmatprep.subr.mxu0 0.0
        %2699 = vmatpush1.msra.mxu0 %v2540
        %2700 = vmatprep.subr.mxu0 0.0
        %2701 = vmatpush1.msra.mxu0 %v2541
        %2702 = vmatprep.subr.mxu0 0.0
        %2703 = vmatpush1.msra.mxu0 %v2542
        %2704 = vmatprep.subr.mxu0 0.0
        %2705 = vmatpush1.msra.mxu0 %v2543
        %2706 = vmatprep.subr.mxu0 0.0
        %2707 = vmatpush1.msra.mxu0 %v2544
        %2708 = vmatprep.subr.mxu0 0.0
        %2709 = vmatpush1.msra.mxu0 %v2545
        %2710 = vmatprep.subr.mxu0 0.0
        %2711 = vmatpush1.msra.mxu0 %v2546
        %2712 = vmatprep.subr.mxu0 0.0
        %2713 = vmatpush1.msra.mxu0 %v2547
        %2714 = vmatprep.subr.mxu0 0.0
        %2715 = vmatpush1.msra.mxu0 %v2548
        %2716 = vmatprep.subr.mxu0 0.0
        %2717 = vmatpush1.msra.mxu0 %v2549
        %2718 = vmatprep.subr.mxu0 0.0
        %2719 = vmatpush1.msra.mxu0 %v2550
        %2720 = vmatprep.subr.mxu0 0.0
        %2721 = vmatpush1.msra.mxu0 %v2551
        %2722 = vmatprep.subr.mxu0 0.0
        %2723 = vmatpush1.msra.mxu0 0.0
        %2724 = vmatprep.subr.mxu0 0.0
        %2725 = vmatpush1.msra.mxu0 0.0
        %2726 = vmatprep.subr.mxu0 0.0
        %2727 = vmatpush1.msra.mxu0 0.0
        %2728 = vmatprep.subr.mxu0 0.0
        %2729 = vmatpush1.msra.mxu0 0.0
        %2730 = vmatprep.subr.mxu0 0.0
        %2731 = vmatpush1.msra.mxu0 0.0
        %2732 = vmatprep.subr.mxu0 0.0
        %2733 = vmatpush1.msra.mxu0 0.0
        %2734 = vmatprep.subr.mxu0 0.0
        %2735 = vmatpush1.msra.mxu0 0.0
        %2736 = vmatprep.subr.mxu0 0.0
        %2737 = vmatpush1.msra.mxu0 0.0
        %2738 = vmatprep.subr.mxu0 0.0
        %2739 = vmatpush1.msra.mxu0 0.0
        %2740 = vmatprep.subr.mxu0 0.0
        %2741 = vmatpush1.msra.mxu0 0.0
        %2742 = vmatprep.subr.mxu0 0.0
        %2743 = vmatpush1.msra.mxu0 0.0
        %2744 = vmatprep.subr.mxu0 0.0
        %2745 = vmatpush1.msra.mxu0 0.0
        %2746 = vmatprep.subr.mxu0 0.0
        %2747 = vmatpush1.msra.mxu0 0.0
        %2748 = vmatprep.subr.mxu0 0.0
        %2749 = vmatpush1.msra.mxu0 0.0
        %2750 = vmatprep.subr.mxu0 0.0
        %2751 = vmatpush1.msra.mxu0 0.0
        %2752 = vmatprep.subr.mxu0 0.0
        %2753 = vmatpush1.msra.mxu0 0.0
        %2754 = vmatprep.mubr.f32.mxu0 0.0
        %2755 = vmatmul.mubr.f32.gmra.mrb[0].mxu0 %v2682
        %v2756 = vpop.f32.mrb[0].mxu0
        %v2757 = vadd.f32 0.0, %v2756
        %v2758 = vpop.f32.mrb[0].mxu0
        %2759 = vmatprep.mubr.f32.mxu0 0.0
        %2760 = vmatmul.mubr.f32.gmra.mrb[0].mxu0 %v2683
        %v2761 = vpop.f32.mrb[0].mxu0
        %v2762 = vadd.f32 0.0, %v2761
        %v2763 = vpop.f32.mrb[0].mxu0
        %2764 = vmatprep.mubr.f32.mxu0 0.0
        %2765 = vmatmul.mubr.f32.gmra.mrb[0].mxu0 %v2684
        %v2766 = vpop.f32.mrb[0].mxu0
        %v2767 = vadd.f32 0.0, %v2766
        %v2768 = vpop.f32.mrb[0].mxu0
        %2769 = vmatprep.mubr.f32.mxu0 0.0
        %2770 = vmatmul.mubr.f32.gmra.mrb[0].mxu0 %v2685
        %v2771 = vpop.f32.mrb[0].mxu0
        %v2772 = vadd.f32 0.0, %v2771
        %v2773 = vpop.f32.mrb[0].mxu0
        %2774 = vmatprep.mubr.f32.mxu0 0.0
        %2775 = vmatmul.mubr.f32.gmra.mrb[0].mxu0 %v2686
        %v2776 = vpop.f32.mrb[0].mxu0
        %v2777 = vadd.f32 0.0, %v2776
        %v2778 = vpop.f32.mrb[0].mxu0
        %2779 = vmatprep.mubr.f32.mxu0 0.0
        %2780 = vmatmul.mubr.f32.gmra.mrb[0].mxu0 %v2687
        %v2781 = vpop.f32.mrb[0].mxu0
        %v2782 = vadd.f32 0.0, %v2781
        %v2783 = vpop.f32.mrb[0].mxu0
        %2784 = vmatprep.mubr.f32.mxu0 0.0
        %2785 = vmatmul.mubr.f32.gmra.mrb[0].mxu0 %v2688
        %v2786 = vpop.f32.mrb[0].mxu0
        %v2787 = vadd.f32 0.0, %v2786
        %v2788 = vpop.f32.mrb[0].mxu0
        %2789 = vmatprep.mubr.f32.mxu0 0.0
        %2790 = vmatmul.mubr.f32.gmra.mrb[0].mxu0 %v2689
        %v2791 = vpop.f32.mrb[0].mxu0
        %v2792 = vadd.f32 0.0, %v2791
        %v2793 = vpop.f32.mrb[0].mxu0
        %2794 = vdwg.mxu0
        %2795 = vmatprep.subr.mxu0 0.0
        %2796 = vmatpush1.msra.mxu0 %v2519
        %2797 = vmatprep.subr.mxu0 0.0
        %2798 = vmatpush1.msra.mxu0 %v2520
        %2799 = vmatprep.subr.mxu0 0.0
        %2800 = vmatpush1.msra.mxu0 %v2521
        %2801 = vmatprep.subr.mxu0 0.0
        %2802 = vmatpush1.msra.mxu0 %v2522
        %2803 = vmatprep.subr.mxu0 0.0
        %2804 = vmatpush1.msra.mxu0 %v2523
        %2805 = vmatprep.subr.mxu0 0.0
        %2806 = vmatpush1.msra.mxu0 %v2524
        %2807 = vmatprep.subr.mxu0 0.0
        %2808 = vmatpush1.msra.mxu0 %v2525
        %2809 = vmatprep.subr.mxu0 0.0
        %2810 = vmatpush1.msra.mxu0 %v2526
        %2811 = vmatprep.subr.mxu0 0.0
        %2812 = vmatpush1.msra.mxu0 %v2527
        %2813 = vmatprep.subr.mxu0 0.0
        %2814 = vmatpush1.msra.mxu0 %v2528
        %2815 = vmatprep.subr.mxu0 0.0
        %2816 = vmatpush1.msra.mxu0 %v2529
        %2817 = vmatprep.subr.mxu0 0.0
        %2818 = vmatpush1.msra.mxu0 %v2530
        %2819 = vmatprep.subr.mxu0 0.0
        %2820 = vmatpush1.msra.mxu0 %v2531
        %2821 = vmatprep.subr.mxu0 0.0
        %2822 = vmatpush1.msra.mxu0 %v2532
        %2823 = vmatprep.subr.mxu0 0.0
        %2824 = vmatpush1.msra.mxu0 %v2533
        %2825 = vmatprep.subr.mxu0 0.0
        %2826 = vmatpush1.msra.mxu0 %v2534
        %2827 = vmatprep.subr.mxu0 0.0
        %2828 = vmatpush1.msra.mxu0 0.0
        %2829 = vmatprep.subr.mxu0 0.0
        %2830 = vmatpush1.msra.mxu0 0.0
        %2831 = vmatprep.subr.mxu0 0.0
        %2832 = vmatpush1.msra.mxu0 0.0
        %2833 = vmatprep.subr.mxu0 0.0
        %2834 = vmatpush1.msra.mxu0 0.0
        %2835 = vmatprep.subr.mxu0 0.0
        %2836 = vmatpush1.msra.mxu0 0.0
        %2837 = vmatprep.subr.mxu0 0.0
        %2838 = vmatpush1.msra.mxu0 0.0
        %2839 = vmatprep.subr.mxu0 0.0
        %2840 = vmatpush1.msra.mxu0 0.0
        %2841 = vmatprep.subr.mxu0 0.0
        %2842 = vmatpush1.msra.mxu0 0.0
        %2843 = vmatprep.subr.mxu0 0.0
        %2844 = vmatpush1.msra.mxu0 0.0
        %2845 = vmatprep.subr.mxu0 0.0
        %2846 = vmatpush1.msra.mxu0 0.0
        %2847 = vmatprep.subr.mxu0 0.0
        %2848 = vmatpush1.msra.mxu0 0.0
        %2849 = vmatprep.subr.mxu0 0.0
        %2850 = vmatpush1.msra.mxu0 0.0
        %2851 = vmatprep.subr.mxu0 0.0
        %2852 = vmatpush1.msra.mxu0 0.0
        %2853 = vmatprep.subr.mxu0 0.0
        %2854 = vmatpush1.msra.mxu0 0.0
        %2855 = vmatprep.subr.mxu0 0.0
        %2856 = vmatpush1.msra.mxu0 0.0
        %2857 = vmatprep.subr.mxu0 0.0
        %2858 = vmatpush1.msra.mxu0 0.0
        %2859 = vmatprep.mubr.f32.mxu0 0.0
        %2860 = vmatmul.mubr.f32.gmra.mrb[0].mxu0 %v2673
        %v2861 = vpop.f32.mrb[0].mxu0
        %v2862 = vadd.f32 %v2757, %v2861
        %v2863 = vpop.f32.mrb[0].mxu0
        %2864 = vmatprep.mubr.f32.mxu0 0.0
        %2865 = vmatmul.mubr.f32.gmra.mrb[0].mxu0 %v2674
        %v2866 = vpop.f32.mrb[0].mxu0
        %v2867 = vadd.f32 %v2762, %v2866
        %v2868 = vpop.f32.mrb[0].mxu0
        %2869 = vmatprep.mubr.f32.mxu0 0.0
        %2870 = vmatmul.mubr.f32.gmra.mrb[0].mxu0 %v2675
        %v2871 = vpop.f32.mrb[0].mxu0
        %v2872 = vadd.f32 %v2767, %v2871
        %v2873 = vpop.f32.mrb[0].mxu0
        %2874 = vmatprep.mubr.f32.mxu0 0.0
        %2875 = vmatmul.mubr.f32.gmra.mrb[0].mxu0 %v2676
        %v2876 = vpop.f32.mrb[0].mxu0
        %v2877 = vadd.f32 %v2772, %v2876
        %v2878 = vpop.f32.mrb[0].mxu0
        %2879 = vmatprep.mubr.f32.mxu0 0.0
        %2880 = vmatmul.mubr.f32.gmra.mrb[0].mxu0 %v2677
        %v2881 = vpop.f32.mrb[0].mxu0
        %v2882 = vadd.f32 %v2777, %v2881
        %v2883 = vpop.f32.mrb[0].mxu0
        %2884 = vmatprep.mubr.f32.mxu0 0.0
        %2885 = vmatmul.mubr.f32.gmra.mrb[0].mxu0 %v2678
        %v2886 = vpop.f32.mrb[0].mxu0
        %v2887 = vadd.f32 %v2782, %v2886
        %v2888 = vpop.f32.mrb[0].mxu0
        %2889 = vmatprep.mubr.f32.mxu0 0.0
        %2890 = vmatmul.mubr.f32.gmra.mrb[0].mxu0 %v2679
        %v2891 = vpop.f32.mrb[0].mxu0
        %v2892 = vadd.f32 %v2787, %v2891
        %v2893 = vpop.f32.mrb[0].mxu0
        %2894 = vmatprep.mubr.f32.mxu0 0.0
        %2895 = vmatmul.mubr.f32.gmra.mrb[0].mxu0 %v2680
        %v2896 = vpop.f32.mrb[0].mxu0
        %v2897 = vadd.f32 %v2792, %v2896
        %v2898 = vpop.f32.mrb[0].mxu0
        %2899 = vdwg.mxu0
        %v2900 = vld [vmem:[%s2672 + $0x1] sm:$0xff]
        %v2901 = vld [vmem:[%s2672 + $0x11] sm:$0xff]
        %v2902 = vld [vmem:[%s2672 + $0x21] sm:$0xff]
        %v2903 = vld [vmem:[%s2672 + $0x31] sm:$0xff]
        %v2904 = vld [vmem:[%s2672 + $0x41] sm:$0xff]
        %v2905 = vld [vmem:[%s2672 + $0x51] sm:$0xff]
        %v2906 = vld [vmem:[%s2672 + $0x61] sm:$0xff]
        %v2907 = vld [vmem:[%s2672 + $0x71] sm:$0xff]
        %2908 = vmatprep.subr.mxu0 0.0
        %2909 = vmatpush1.msra.mxu0 %v2553
        %2910 = vmatprep.subr.mxu0 0.0
        %2911 = vmatpush1.msra.mxu0 %v2554
        %2912 = vmatprep.subr.mxu0 0.0
        %2913 = vmatpush1.msra.mxu0 %v2555
        %2914 = vmatprep.subr.mxu0 0.0
        %2915 = vmatpush1.msra.mxu0 %v2556
        %2916 = vmatprep.subr.mxu0 0.0
        %2917 = vmatpush1.msra.mxu0 %v2557
        %2918 = vmatprep.subr.mxu0 0.0
        %2919 = vmatpush1.msra.mxu0 %v2558
        %2920 = vmatprep.subr.mxu0 0.0
        %2921 = vmatpush1.msra.mxu0 %v2559
        %2922 = vmatprep.subr.mxu0 0.0
        %2923 = vmatpush1.msra.mxu0 %v2560
        %2924 = vmatprep.subr.mxu0 0.0
        %2925 = vmatpush1.msra.mxu0 %v2561
        %2926 = vmatprep.subr.mxu0 0.0
        %2927 = vmatpush1.msra.mxu0 %v2562
        %2928 = vmatprep.subr.mxu0 0.0
        %2929 = vmatpush1.msra.mxu0 %v2563
        %2930 = vmatprep.subr.mxu0 0.0
        %2931 = vmatpush1.msra.mxu0 %v2564
        %2932 = vmatprep.subr.mxu0 0.0
        %2933 = vmatpush1.msra.mxu0 %v2565
        %2934 = vmatprep.subr.mxu0 0.0
        %2935 = vmatpush1.msra.mxu0 %v2566
        %2936 = vmatprep.subr.mxu0 0.0
        %2937 = vmatpush1.msra.mxu0 %v2567
        %2938 = vmatprep.subr.mxu0 0.0
        %2939 = vmatpush1.msra.mxu0 %v2568
        %2940 = vmatprep.subr.mxu0 0.0
        %2941 = vmatpush1.msra.mxu0 0.0
        %2942 = vmatprep.subr.mxu0 0.0
        %2943 = vmatpush1.msra.mxu0 0.0
        %2944 = vmatprep.subr.mxu0 0.0
        %2945 = vmatpush1.msra.mxu0 0.0
        %2946 = vmatprep.subr.mxu0 0.0
        %2947 = vmatpush1.msra.mxu0 0.0
        %2948 = vmatprep.subr.mxu0 0.0
        %2949 = vmatpush1.msra.mxu0 0.0
        %2950 = vmatprep.subr.mxu0 0.0
        %2951 = vmatpush1.msra.mxu0 0.0
        %2952 = vmatprep.subr.mxu0 0.0
        %2953 = vmatpush1.msra.mxu0 0.0
        %2954 = vmatprep.subr.mxu0 0.0
        %2955 = vmatpush1.msra.mxu0 0.0
        %2956 = vmatprep.subr.mxu0 0.0
        %2957 = vmatpush1.msra.mxu0 0.0
        %2958 = vmatprep.subr.mxu0 0.0
        %2959 = vmatpush1.msra.mxu0 0.0
        %2960 = vmatprep.subr.mxu0 0.0
        %2961 = vmatpush1.msra.mxu0 0.0
        %2962 = vmatprep.subr.mxu0 0.0
        %2963 = vmatpush1.msra.mxu0 0.0
        %2964 = vmatprep.subr.mxu0 0.0
        %2965 = vmatpush1.msra.mxu0 0.0
        %2966 = vmatprep.subr.mxu0 0.0
        %2967 = vmatpush1.msra.mxu0 0.0
        %2968 = vmatprep.subr.mxu0 0.0
        %2969 = vmatpush1.msra.mxu0 0.0
        %2970 = vmatprep.subr.mxu0 0.0
        %2971 = vmatpush1.msra.mxu0 0.0
        %2972 = vmatprep.mubr.f32.mxu0 0.0
        %2973 = vmatmul.mubr.f32.gmra.mrb[0].mxu0 %v2900
        %v2974 = vpop.f32.mrb[0].mxu0
        %v2975 = vadd.f32 0.0, %v2974
        %v2976 = vpop.f32.mrb[0].mxu0
        %2977 = vmatprep.mubr.f32.mxu0 0.0
        %2978 = vmatmul.mubr.f32.gmra.mrb[0].mxu0 %v2901
        %v2979 = vpop.f32.mrb[0].mxu0
        %v2980 = vadd.f32 0.0, %v2979
        %v2981 = vpop.f32.mrb[0].mxu0
        %2982 = vmatprep.mubr.f32.mxu0 0.0
        %2983 = vmatmul.mubr.f32.gmra.mrb[0].mxu0 %v2902
        %v2984 = vpop.f32.mrb[0].mxu0
        %v2985 = vadd.f32 0.0, %v2984
        %v2986 = vpop.f32.mrb[0].mxu0
        %2987 = vmatprep.mubr.f32.mxu0 0.0
        %2988 = vmatmul.mubr.f32.gmra.mrb[0].mxu0 %v2903
        %v2989 = vpop.f32.mrb[0].mxu0
        %v2990 = vadd.f32 0.0, %v2989
        %v2991 = vpop.f32.mrb[0].mxu0
        %2992 = vmatprep.mubr.f32.mxu0 0.0
        %2993 = vmatmul.mubr.f32.gmra.mrb[0].mxu0 %v2904
        %v2994 = vpop.f32.mrb[0].mxu0
        %v2995 = vadd.f32 0.0, %v2994
        %v2996 = vpop.f32.mrb[0].mxu0
        %2997 = vmatprep.mubr.f32.mxu0 0.0
        %2998 = vmatmul.mubr.f32.gmra.mrb[0].mxu0 %v2905
        %v2999 = vpop.f32.mrb[0].mxu0
        %v3000 = vadd.f32 0.0, %v2999
        %v3001 = vpop.f32.mrb[0].mxu0
        %3002 = vmatprep.mubr.f32.mxu0 0.0
        %3003 = vmatmul.mubr.f32.gmra.mrb[0].mxu0 %v2906
        %v3004 = vpop.f32.mrb[0].mxu0
        %v3005 = vadd.f32 0.0, %v3004
        %v3006 = vpop.f32.mrb[0].mxu0
        %3007 = vmatprep.mubr.f32.mxu0 0.0
        %3008 = vmatmul.mubr.f32.gmra.mrb[0].mxu0 %v2907
        %v3009 = vpop.f32.mrb[0].mxu0
        %v3010 = vadd.f32 0.0, %v3009
        %v3011 = vpop.f32.mrb[0].mxu0
        %3012 = vdwg.mxu0
        %v3013 = vadd.f32 %v2862, %v2975
        %v3014 = vadd.f32 %v2867, %v2980
        %v3015 = vadd.f32 %v2872, %v2985
        %v3016 = vadd.f32 %v2877, %v2990
        %v3017 = vadd.f32 %v2882, %v2995
        %v3018 = vadd.f32 %v2887, %v3000
        %v3019 = vadd.f32 %v2892, %v3005
        %v3020 = vadd.f32 %v2897, %v3010
        %v3021 = vld [vmem:[%s2146] sm:$0xff]
        %v3022 = vld [vmem:[%s2146 + $0x10] sm:$0xff]
        %v3023 = vld [vmem:[%s2146 + $0x20] sm:$0xff]
        %v3024 = vld [vmem:[%s2146 + $0x30] sm:$0xff]
        %v3025 = vld [vmem:[%s2146 + $0x40] sm:$0xff]
        %v3026 = vld [vmem:[%s2146 + $0x50] sm:$0xff]
        %v3027 = vld [vmem:[%s2146 + $0x60] sm:$0xff]
        %v3028 = vld [vmem:[%s2146 + $0x70] sm:$0xff]
        %3029 = vmatprep.subr.mxu0 0.0
        %3030 = vmatpush1.msra.mxu0 %v2570
        %3031 = vmatprep.subr.mxu0 0.0
        %3032 = vmatpush1.msra.mxu0 %v2571
        %3033 = vmatprep.subr.mxu0 0.0
        %3034 = vmatpush1.msra.mxu0 %v2572
        %3035 = vmatprep.subr.mxu0 0.0
        %3036 = vmatpush1.msra.mxu0 %v2573
        %3037 = vmatprep.subr.mxu0 0.0
        %3038 = vmatpush1.msra.mxu0 %v2574
        %3039 = vmatprep.subr.mxu0 0.0
        %3040 = vmatpush1.msra.mxu0 %v2575
        %3041 = vmatprep.subr.mxu0 0.0
        %3042 = vmatpush1.msra.mxu0 %v2576
        %3043 = vmatprep.subr.mxu0 0.0
        %3044 = vmatpush1.msra.mxu0 %v2577
        %3045 = vmatprep.subr.mxu0 0.0
        %3046 = vmatpush1.msra.mxu0 %v2578
        %3047 = vmatprep.subr.mxu0 0.0
        %3048 = vmatpush1.msra.mxu0 %v2579
        %3049 = vmatprep.subr.mxu0 0.0
        %3050 = vmatpush1.msra.mxu0 %v2580
        %3051 = vmatprep.subr.mxu0 0.0
        %3052 = vmatpush1.msra.mxu0 %v2581
        %3053 = vmatprep.subr.mxu0 0.0
        %3054 = vmatpush1.msra.mxu0 %v2582
        %3055 = vmatprep.subr.mxu0 0.0
        %3056 = vmatpush1.msra.mxu0 %v2583
        %3057 = vmatprep.subr.mxu0 0.0
        %3058 = vmatpush1.msra.mxu0 %v2584
        %3059 = vmatprep.subr.mxu0 0.0
        %3060 = vmatpush1.msra.mxu0 %v2585
        %3061 = vmatprep.subr.mxu0 0.0
        %3062 = vmatpush1.msra.mxu0 0.0
        %3063 = vmatprep.subr.mxu0 0.0
        %3064 = vmatpush1.msra.mxu0 0.0
        %3065 = vmatprep.subr.mxu0 0.0
        %3066 = vmatpush1.msra.mxu0 0.0
        %3067 = vmatprep.subr.mxu0 0.0
        %3068 = vmatpush1.msra.mxu0 0.0
        %3069 = vmatprep.subr.mxu0 0.0
        %3070 = vmatpush1.msra.mxu0 0.0
        %3071 = vmatprep.subr.mxu0 0.0
        %3072 = vmatpush1.msra.mxu0 0.0
        %3073 = vmatprep.subr.mxu0 0.0
        %3074 = vmatpush1.msra.mxu0 0.0
        %3075 = vmatprep.subr.mxu0 0.0
        %3076 = vmatpush1.msra.mxu0 0.0
        %3077 = vmatprep.subr.mxu0 0.0
        %3078 = vmatpush1.msra.mxu0 0.0
        %3079 = vmatprep.subr.mxu0 0.0
        %3080 = vmatpush1.msra.mxu0 0.0
        %3081 = vmatprep.subr.mxu0 0.0
        %3082 = vmatpush1.msra.mxu0 0.0
        %3083 = vmatprep.subr.mxu0 0.0
        %3084 = vmatpush1.msra.mxu0 0.0
        %3085 = vmatprep.subr.mxu0 0.0
        %3086 = vmatpush1.msra.mxu0 0.0
        %3087 = vmatprep.subr.mxu0 0.0
        %3088 = vmatpush1.msra.mxu0 0.0
        %3089 = vmatprep.subr.mxu0 0.0
        %3090 = vmatpush1.msra.mxu0 0.0
        %3091 = vmatprep.subr.mxu0 0.0
        %3092 = vmatpush1.msra.mxu0 0.0
        %3093 = vmatprep.mubr.f32.mxu0 0.0
        %3094 = vmatmul.mubr.f32.gmra.mrb[0].mxu0 %v3021
        %v3095 = vpop.f32.mrb[0].mxu0
        %v3096 = vadd.f32 0.0, %v3095
        %v3097 = vpop.f32.mrb[0].mxu0
        %3098 = vmatprep.mubr.f32.mxu0 0.0
        %3099 = vmatmul.mubr.f32.gmra.mrb[0].mxu0 %v3022
        %v3100 = vpop.f32.mrb[0].mxu0
        %v3101 = vadd.f32 0.0, %v3100
        %v3102 = vpop.f32.mrb[0].mxu0
        %3103 = vmatprep.mubr.f32.mxu0 0.0
        %3104 = vmatmul.mubr.f32.gmra.mrb[0].mxu0 %v3023
        %v3105 = vpop.f32.mrb[0].mxu0
        %v3106 = vadd.f32 0.0, %v3105
        %v3107 = vpop.f32.mrb[0].mxu0
        %3108 = vmatprep.mubr.f32.mxu0 0.0
        %3109 = vmatmul.mubr.f32.gmra.mrb[0].mxu0 %v3024
        %v3110 = vpop.f32.mrb[0].mxu0
        %v3111 = vadd.f32 0.0, %v3110
        %v3112 = vpop.f32.mrb[0].mxu0
        %3113 = vmatprep.mubr.f32.mxu0 0.0
        %3114 = vmatmul.mubr.f32.gmra.mrb[0].mxu0 %v3025
        %v3115 = vpop.f32.mrb[0].mxu0
        %v3116 = vadd.f32 0.0, %v3115
        %v3117 = vpop.f32.mrb[0].mxu0
        %3118 = vmatprep.mubr.f32.mxu0 0.0
        %3119 = vmatmul.mubr.f32.gmra.mrb[0].mxu0 %v3026
        %v3120 = vpop.f32.mrb[0].mxu0
        %v3121 = vadd.f32 0.0, %v3120
        %v3122 = vpop.f32.mrb[0].mxu0
        %3123 = vmatprep.mubr.f32.mxu0 0.0
        %3124 = vmatmul.mubr.f32.gmra.mrb[0].mxu0 %v3027
        %v3125 = vpop.f32.mrb[0].mxu0
        %v3126 = vadd.f32 0.0, %v3125
        %v3127 = vpop.f32.mrb[0].mxu0
        %3128 = vmatprep.mubr.f32.mxu0 0.0
        %3129 = vmatmul.mubr.f32.gmra.mrb[0].mxu0 %v3028
        %v3130 = vpop.f32.mrb[0].mxu0
        %v3131 = vadd.f32 0.0, %v3130
        %v3132 = vpop.f32.mrb[0].mxu0
        %3133 = vdwg.mxu0
        %v3134 = vadd.f32 %v3013, %v3096
        %v3135 = vadd.f32 %v3014, %v3101
        %v3136 = vadd.f32 %v3015, %v3106
        %v3137 = vadd.f32 %v3016, %v3111
        %v3138 = vadd.f32 %v3017, %v3116
        %v3139 = vadd.f32 %v3018, %v3121
        %v3140 = vadd.f32 %v3019, %v3126
        %v3141 = vadd.f32 %v3020, %v3131
        %v3142 = vld [vmem:[%s1977 + $0x1] sm:$0xff]
        %v3143 = vld [vmem:[%s1977 + $0x11] sm:$0xff]
        %v3144 = vld [vmem:[%s1977 + $0x21] sm:$0xff]
        %v3145 = vld [vmem:[%s1977 + $0x31] sm:$0xff]
        %v3146 = vld [vmem:[%s1977 + $0x41] sm:$0xff]
        %v3147 = vld [vmem:[%s1977 + $0x51] sm:$0xff]
        %v3148 = vld [vmem:[%s1977 + $0x61] sm:$0xff]
        %v3149 = vld [vmem:[%s1977 + $0x71] sm:$0xff]
        %3150 = vmatprep.subr.mxu0 0.0
        %3151 = vmatpush1.msra.mxu0 %v2587
        %3152 = vmatprep.subr.mxu0 0.0
        %3153 = vmatpush1.msra.mxu0 %v2588
        %3154 = vmatprep.subr.mxu0 0.0
        %3155 = vmatpush1.msra.mxu0 %v2589
        %3156 = vmatprep.subr.mxu0 0.0
        %3157 = vmatpush1.msra.mxu0 %v2590
        %3158 = vmatprep.subr.mxu0 0.0
        %3159 = vmatpush1.msra.mxu0 %v2591
        %3160 = vmatprep.subr.mxu0 0.0
        %3161 = vmatpush1.msra.mxu0 %v2592
        %3162 = vmatprep.subr.mxu0 0.0
        %3163 = vmatpush1.msra.mxu0 %v2593
        %3164 = vmatprep.subr.mxu0 0.0
        %3165 = vmatpush1.msra.mxu0 %v2594
        %3166 = vmatprep.subr.mxu0 0.0
        %3167 = vmatpush1.msra.mxu0 %v2595
        %3168 = vmatprep.subr.mxu0 0.0
        %3169 = vmatpush1.msra.mxu0 %v2596
        %3170 = vmatprep.subr.mxu0 0.0
        %3171 = vmatpush1.msra.mxu0 %v2597
        %3172 = vmatprep.subr.mxu0 0.0
        %3173 = vmatpush1.msra.mxu0 %v2598
        %3174 = vmatprep.subr.mxu0 0.0
        %3175 = vmatpush1.msra.mxu0 %v2599
        %3176 = vmatprep.subr.mxu0 0.0
        %3177 = vmatpush1.msra.mxu0 %v2600
        %3178 = vmatprep.subr.mxu0 0.0
        %3179 = vmatpush1.msra.mxu0 %v2601
        %3180 = vmatprep.subr.mxu0 0.0
        %3181 = vmatpush1.msra.mxu0 %v2602
        %3182 = vmatprep.subr.mxu0 0.0
        %3183 = vmatpush1.msra.mxu0 0.0
        %3184 = vmatprep.subr.mxu0 0.0
        %3185 = vmatpush1.msra.mxu0 0.0
        %3186 = vmatprep.subr.mxu0 0.0
        %3187 = vmatpush1.msra.mxu0 0.0
        %3188 = vmatprep.subr.mxu0 0.0
        %3189 = vmatpush1.msra.mxu0 0.0
        %3190 = vmatprep.subr.mxu0 0.0
        %3191 = vmatpush1.msra.mxu0 0.0
        %3192 = vmatprep.subr.mxu0 0.0
        %3193 = vmatpush1.msra.mxu0 0.0
        %3194 = vmatprep.subr.mxu0 0.0
        %3195 = vmatpush1.msra.mxu0 0.0
        %3196 = vmatprep.subr.mxu0 0.0
        %3197 = vmatpush1.msra.mxu0 0.0
        %3198 = vmatprep.subr.mxu0 0.0
        %3199 = vmatpush1.msra.mxu0 0.0
        %3200 = vmatprep.subr.mxu0 0.0
        %3201 = vmatpush1.msra.mxu0 0.0
        %3202 = vmatprep.subr.mxu0 0.0
        %3203 = vmatpush1.msra.mxu0 0.0
        %3204 = vmatprep.subr.mxu0 0.0
        %3205 = vmatpush1.msra.mxu0 0.0
        %3206 = vmatprep.subr.mxu0 0.0
        %3207 = vmatpush1.msra.mxu0 0.0
        %3208 = vmatprep.subr.mxu0 0.0
        %3209 = vmatpush1.msra.mxu0 0.0
        %3210 = vmatprep.subr.mxu0 0.0
        %3211 = vmatpush1.msra.mxu0 0.0
        %3212 = vmatprep.subr.mxu0 0.0
        %3213 = vmatpush1.msra.mxu0 0.0
        %3214 = vmatprep.mubr.f32.mxu0 0.0
        %3215 = vmatmul.mubr.f32.gmra.mrb[0].mxu0 %v3142
        %v3216 = vpop.f32.mrb[0].mxu0
        %v3217 = vadd.f32 0.0, %v3216
        %v3218 = vpop.f32.mrb[0].mxu0
        %3219 = vmatprep.mubr.f32.mxu0 0.0
        %3220 = vmatmul.mubr.f32.gmra.mrb[0].mxu0 %v3143
        %v3221 = vpop.f32.mrb[0].mxu0
        %v3222 = vadd.f32 0.0, %v3221
        %v3223 = vpop.f32.mrb[0].mxu0
        %3224 = vmatprep.mubr.f32.mxu0 0.0
        %3225 = vmatmul.mubr.f32.gmra.mrb[0].mxu0 %v3144
        %v3226 = vpop.f32.mrb[0].mxu0
        %v3227 = vadd.f32 0.0, %v3226
        %v3228 = vpop.f32.mrb[0].mxu0
        %3229 = vmatprep.mubr.f32.mxu0 0.0
        %3230 = vmatmul.mubr.f32.gmra.mrb[0].mxu0 %v3145
        %v3231 = vpop.f32.mrb[0].mxu0
        %v3232 = vadd.f32 0.0, %v3231
        %v3233 = vpop.f32.mrb[0].mxu0
        %3234 = vmatprep.mubr.f32.mxu0 0.0
        %3235 = vmatmul.mubr.f32.gmra.mrb[0].mxu0 %v3146
        %v3236 = vpop.f32.mrb[0].mxu0
        %v3237 = vadd.f32 0.0, %v3236
        %v3238 = vpop.f32.mrb[0].mxu0
        %3239 = vmatprep.mubr.f32.mxu0 0.0
        %3240 = vmatmul.mubr.f32.gmra.mrb[0].mxu0 %v3147
        %v3241 = vpop.f32.mrb[0].mxu0
        %v3242 = vadd.f32 0.0, %v3241
        %v3243 = vpop.f32.mrb[0].mxu0
        %3244 = vmatprep.mubr.f32.mxu0 0.0
        %3245 = vmatmul.mubr.f32.gmra.mrb[0].mxu0 %v3148
        %v3246 = vpop.f32.mrb[0].mxu0
        %v3247 = vadd.f32 0.0, %v3246
        %v3248 = vpop.f32.mrb[0].mxu0
        %3249 = vmatprep.mubr.f32.mxu0 0.0
        %3250 = vmatmul.mubr.f32.gmra.mrb[0].mxu0 %v3149
        %v3251 = vpop.f32.mrb[0].mxu0
        %v3252 = vadd.f32 0.0, %v3251
        %v3253 = vpop.f32.mrb[0].mxu0
        %3254 = vdwg.mxu0
        %v3255 = vadd.f32 %v3134, %v3217
        %v3256 = vadd.f32 %v3135, %v3222
        %v3257 = vadd.f32 %v3136, %v3227
        %v3258 = vadd.f32 %v3137, %v3232
        %v3259 = vadd.f32 %v3138, %v3237
        %v3260 = vadd.f32 %v3139, %v3242
        %v3261 = vadd.f32 %v3140, %v3247
        %v3262 = vadd.f32 %v3141, %v3252
        %v3263 = vld [vmem:[%s2146 + $0x1] sm:$0xff]
        %v3264 = vld [vmem:[%s2146 + $0x11] sm:$0xff]
        %v3265 = vld [vmem:[%s2146 + $0x21] sm:$0xff]
        %v3266 = vld [vmem:[%s2146 + $0x31] sm:$0xff]
        %v3267 = vld [vmem:[%s2146 + $0x41] sm:$0xff]
        %v3268 = vld [vmem:[%s2146 + $0x51] sm:$0xff]
        %v3269 = vld [vmem:[%s2146 + $0x61] sm:$0xff]
        %v3270 = vld [vmem:[%s2146 + $0x71] sm:$0xff]
        %3271 = vmatprep.subr.mxu0 0.0
        %3272 = vmatpush1.msra.mxu0 %v2604
        %3273 = vmatprep.subr.mxu0 0.0
        %3274 = vmatpush1.msra.mxu0 %v2605
        %3275 = vmatprep.subr.mxu0 0.0
        %3276 = vmatpush1.msra.mxu0 %v2606
        %3277 = vmatprep.subr.mxu0 0.0
        %3278 = vmatpush1.msra.mxu0 %v2607
        %3279 = vmatprep.subr.mxu0 0.0
        %3280 = vmatpush1.msra.mxu0 %v2608
        %3281 = vmatprep.subr.mxu0 0.0
        %3282 = vmatpush1.msra.mxu0 %v2609
        %3283 = vmatprep.subr.mxu0 0.0
        %3284 = vmatpush1.msra.mxu0 %v2610
        %3285 = vmatprep.subr.mxu0 0.0
        %3286 = vmatpush1.msra.mxu0 %v2611
        %3287 = vmatprep.subr.mxu0 0.0
        %3288 = vmatpush1.msra.mxu0 %v2612
        %3289 = vmatprep.subr.mxu0 0.0
        %3290 = vmatpush1.msra.mxu0 %v2613
        %3291 = vmatprep.subr.mxu0 0.0
        %3292 = vmatpush1.msra.mxu0 %v2614
        %3293 = vmatprep.subr.mxu0 0.0
        %3294 = vmatpush1.msra.mxu0 %v2615
        %3295 = vmatprep.subr.mxu0 0.0
        %3296 = vmatpush1.msra.mxu0 %v2616
        %3297 = vmatprep.subr.mxu0 0.0
        %3298 = vmatpush1.msra.mxu0 %v2617
        %3299 = vmatprep.subr.mxu0 0.0
        %3300 = vmatpush1.msra.mxu0 %v2618
        %3301 = vmatprep.subr.mxu0 0.0
        %3302 = vmatpush1.msra.mxu0 %v2619
        %3303 = vmatprep.subr.mxu0 0.0
        %3304 = vmatpush1.msra.mxu0 0.0
        %3305 = vmatprep.subr.mxu0 0.0
        %3306 = vmatpush1.msra.mxu0 0.0
        %3307 = vmatprep.subr.mxu0 0.0
        %3308 = vmatpush1.msra.mxu0 0.0
        %3309 = vmatprep.subr.mxu0 0.0
        %3310 = vmatpush1.msra.mxu0 0.0
        %3311 = vmatprep.subr.mxu0 0.0
        %3312 = vmatpush1.msra.mxu0 0.0
        %3313 = vmatprep.subr.mxu0 0.0
        %3314 = vmatpush1.msra.mxu0 0.0
        %3315 = vmatprep.subr.mxu0 0.0
        %3316 = vmatpush1.msra.mxu0 0.0
        %3317 = vmatprep.subr.mxu0 0.0
        %3318 = vmatpush1.msra.mxu0 0.0
        %3319 = vmatprep.subr.mxu0 0.0
        %3320 = vmatpush1.msra.mxu0 0.0
        %3321 = vmatprep.subr.mxu0 0.0
        %3322 = vmatpush1.msra.mxu0 0.0
        %3323 = vmatprep.subr.mxu0 0.0
        %3324 = vmatpush1.msra.mxu0 0.0
        %3325 = vmatprep.subr.mxu0 0.0
        %3326 = vmatpush1.msra.mxu0 0.0
        %3327 = vmatprep.subr.mxu0 0.0
        %3328 = vmatpush1.msra.mxu0 0.0
        %3329 = vmatprep.subr.mxu0 0.0
        %3330 = vmatpush1.msra.mxu0 0.0
        %3331 = vmatprep.subr.mxu0 0.0
        %3332 = vmatpush1.msra.mxu0 0.0
        %3333 = vmatprep.subr.mxu0 0.0
        %3334 = vmatpush1.msra.mxu0 0.0
        %3335 = vmatprep.mubr.f32.mxu0 0.0
        %3336 = vmatmul.mubr.f32.gmra.mrb[0].mxu0 %v3263
        %v3337 = vpop.f32.mrb[0].mxu0
        %v3338 = vadd.f32 0.0, %v3337
        %v3339 = vpop.f32.mrb[0].mxu0
        %3340 = vmatprep.mubr.f32.mxu0 0.0
        %3341 = vmatmul.mubr.f32.gmra.mrb[0].mxu0 %v3264
        %v3342 = vpop.f32.mrb[0].mxu0
        %v3343 = vadd.f32 0.0, %v3342
        %v3344 = vpop.f32.mrb[0].mxu0
        %3345 = vmatprep.mubr.f32.mxu0 0.0
        %3346 = vmatmul.mubr.f32.gmra.mrb[0].mxu0 %v3265
        %v3347 = vpop.f32.mrb[0].mxu0
        %v3348 = vadd.f32 0.0, %v3347
        %v3349 = vpop.f32.mrb[0].mxu0
        %3350 = vmatprep.mubr.f32.mxu0 0.0
        %3351 = vmatmul.mubr.f32.gmra.mrb[0].mxu0 %v3266
        %v3352 = vpop.f32.mrb[0].mxu0
        %v3353 = vadd.f32 0.0, %v3352
        %v3354 = vpop.f32.mrb[0].mxu0
        %3355 = vmatprep.mubr.f32.mxu0 0.0
        %3356 = vmatmul.mubr.f32.gmra.mrb[0].mxu0 %v3267
        %v3357 = vpop.f32.mrb[0].mxu0
        %v3358 = vadd.f32 0.0, %v3357
        %v3359 = vpop.f32.mrb[0].mxu0
        %3360 = vmatprep.mubr.f32.mxu0 0.0
        %3361 = vmatmul.mubr.f32.gmra.mrb[0].mxu0 %v3268
        %v3362 = vpop.f32.mrb[0].mxu0
        %v3363 = vadd.f32 0.0, %v3362
        %v3364 = vpop.f32.mrb[0].mxu0
        %3365 = vmatprep.mubr.f32.mxu0 0.0
        %3366 = vmatmul.mubr.f32.gmra.mrb[0].mxu0 %v3269
        %v3367 = vpop.f32.mrb[0].mxu0
        %v3368 = vadd.f32 0.0, %v3367
        %v3369 = vpop.f32.mrb[0].mxu0
        %3370 = vmatprep.mubr.f32.mxu0 0.0
        %3371 = vmatmul.mubr.f32.gmra.mrb[0].mxu0 %v3270
        %v3372 = vpop.f32.mrb[0].mxu0
        %v3373 = vadd.f32 0.0, %v3372
        %v3374 = vpop.f32.mrb[0].mxu0
        %3375 = vdwg.mxu0
        %v3376 = vadd.f32 %v3255, %v3338
        %v3377 = vadd.f32 %v3256, %v3343
        %v3378 = vadd.f32 %v3257, %v3348
        %v3379 = vadd.f32 %v3258, %v3353
        %v3380 = vadd.f32 %v3259, %v3358
        %v3381 = vadd.f32 %v3260, %v3363
        %v3382 = vadd.f32 %v3261, %v3368
        %v3383 = vadd.f32 %v3262, %v3373
        %v3384 = vld [vmem:[%s2502] sm:$0xff]
        %v3385 = vld [vmem:[%s2502 + $0x10] sm:$0xff]
        %v3386 = vld [vmem:[%s2502 + $0x20] sm:$0xff]
        %v3387 = vld [vmem:[%s2502 + $0x30] sm:$0xff]
        %v3388 = vld [vmem:[%s2502 + $0x40] sm:$0xff]
        %v3389 = vld [vmem:[%s2502 + $0x50] sm:$0xff]
        %v3390 = vld [vmem:[%s2502 + $0x60] sm:$0xff]
        %v3391 = vld [vmem:[%s2502 + $0x70] sm:$0xff]
        %3392 = vmatprep.subr.mxu0 0.0
        %3393 = vmatpush1.msra.mxu0 %v2621
        %3394 = vmatprep.subr.mxu0 0.0
        %3395 = vmatpush1.msra.mxu0 %v2622
        %3396 = vmatprep.subr.mxu0 0.0
        %3397 = vmatpush1.msra.mxu0 %v2623
        %3398 = vmatprep.subr.mxu0 0.0
        %3399 = vmatpush1.msra.mxu0 %v2624
        %3400 = vmatprep.subr.mxu0 0.0
        %3401 = vmatpush1.msra.mxu0 %v2625
        %3402 = vmatprep.subr.mxu0 0.0
        %3403 = vmatpush1.msra.mxu0 %v2626
        %3404 = vmatprep.subr.mxu0 0.0
        %3405 = vmatpush1.msra.mxu0 %v2627
        %3406 = vmatprep.subr.mxu0 0.0
        %3407 = vmatpush1.msra.mxu0 %v2628
        %3408 = vmatprep.subr.mxu0 0.0
        %3409 = vmatpush1.msra.mxu0 %v2629
        %3410 = vmatprep.subr.mxu0 0.0
        %3411 = vmatpush1.msra.mxu0 %v2630
        %3412 = vmatprep.subr.mxu0 0.0
        %3413 = vmatpush1.msra.mxu0 %v2631
        %3414 = vmatprep.subr.mxu0 0.0
        %3415 = vmatpush1.msra.mxu0 %v2632
        %3416 = vmatprep.subr.mxu0 0.0
        %3417 = vmatpush1.msra.mxu0 %v2633
        %3418 = vmatprep.subr.mxu0 0.0
        %3419 = vmatpush1.msra.mxu0 %v2634
        %3420 = vmatprep.subr.mxu0 0.0
        %3421 = vmatpush1.msra.mxu0 %v2635
        %3422 = vmatprep.subr.mxu0 0.0
        %3423 = vmatpush1.msra.mxu0 %v2636
        %3424 = vmatprep.subr.mxu0 0.0
        %3425 = vmatpush1.msra.mxu0 0.0
        %3426 = vmatprep.subr.mxu0 0.0
        %3427 = vmatpush1.msra.mxu0 0.0
        %3428 = vmatprep.subr.mxu0 0.0
        %3429 = vmatpush1.msra.mxu0 0.0
        %3430 = vmatprep.subr.mxu0 0.0
        %3431 = vmatpush1.msra.mxu0 0.0
        %3432 = vmatprep.subr.mxu0 0.0
        %3433 = vmatpush1.msra.mxu0 0.0
        %3434 = vmatprep.subr.mxu0 0.0
        %3435 = vmatpush1.msra.mxu0 0.0
        %3436 = vmatprep.subr.mxu0 0.0
        %3437 = vmatpush1.msra.mxu0 0.0
        %3438 = vmatprep.subr.mxu0 0.0
        %3439 = vmatpush1.msra.mxu0 0.0
        %3440 = vmatprep.subr.mxu0 0.0
        %3441 = vmatpush1.msra.mxu0 0.0
        %3442 = vmatprep.subr.mxu0 0.0
        %3443 = vmatpush1.msra.mxu0 0.0
        %3444 = vmatprep.subr.mxu0 0.0
        %3445 = vmatpush1.msra.mxu0 0.0
        %3446 = vmatprep.subr.mxu0 0.0
        %3447 = vmatpush1.msra.mxu0 0.0
        %3448 = vmatprep.subr.mxu0 0.0
        %3449 = vmatpush1.msra.mxu0 0.0
        %3450 = vmatprep.subr.mxu0 0.0
        %3451 = vmatpush1.msra.mxu0 0.0
        %3452 = vmatprep.subr.mxu0 0.0
        %3453 = vmatpush1.msra.mxu0 0.0
        %3454 = vmatprep.subr.mxu0 0.0
        %3455 = vmatpush1.msra.mxu0 0.0
        %3456 = vmatprep.mubr.f32.mxu0 0.0
        %3457 = vmatmul.mubr.f32.gmra.mrb[0].mxu0 %v3384
        %v3458 = vpop.f32.mrb[0].mxu0
        %v3459 = vadd.f32 0.0, %v3458
        %v3460 = vpop.f32.mrb[0].mxu0
        %3461 = vmatprep.mubr.f32.mxu0 0.0
        %3462 = vmatmul.mubr.f32.gmra.mrb[0].mxu0 %v3385
        %v3463 = vpop.f32.mrb[0].mxu0
        %v3464 = vadd.f32 0.0, %v3463
        %v3465 = vpop.f32.mrb[0].mxu0
        %3466 = vmatprep.mubr.f32.mxu0 0.0
        %3467 = vmatmul.mubr.f32.gmra.mrb[0].mxu0 %v3386
        %v3468 = vpop.f32.mrb[0].mxu0
        %v3469 = vadd.f32 0.0, %v3468
        %v3470 = vpop.f32.mrb[0].mxu0
        %3471 = vmatprep.mubr.f32.mxu0 0.0
        %3472 = vmatmul.mubr.f32.gmra.mrb[0].mxu0 %v3387
        %v3473 = vpop.f32.mrb[0].mxu0
        %v3474 = vadd.f32 0.0, %v3473
        %v3475 = vpop.f32.mrb[0].mxu0
        %3476 = vmatprep.mubr.f32.mxu0 0.0
        %3477 = vmatmul.mubr.f32.gmra.mrb[0].mxu0 %v3388
        %v3478 = vpop.f32.mrb[0].mxu0
        %v3479 = vadd.f32 0.0, %v3478
        %v3480 = vpop.f32.mrb[0].mxu0
        %3481 = vmatprep.mubr.f32.mxu0 0.0
        %3482 = vmatmul.mubr.f32.gmra.mrb[0].mxu0 %v3389
        %v3483 = vpop.f32.mrb[0].mxu0
        %v3484 = vadd.f32 0.0, %v3483
        %v3485 = vpop.f32.mrb[0].mxu0
        %3486 = vmatprep.mubr.f32.mxu0 0.0
        %3487 = vmatmul.mubr.f32.gmra.mrb[0].mxu0 %v3390
        %v3488 = vpop.f32.mrb[0].mxu0
        %v3489 = vadd.f32 0.0, %v3488
        %v3490 = vpop.f32.mrb[0].mxu0
        %3491 = vmatprep.mubr.f32.mxu0 0.0
        %3492 = vmatmul.mubr.f32.gmra.mrb[0].mxu0 %v3391
        %v3493 = vpop.f32.mrb[0].mxu0
        %v3494 = vadd.f32 0.0, %v3493
        %v3495 = vpop.f32.mrb[0].mxu0
        %3496 = vdwg.mxu0
        %v3497 = vadd.f32 %v3376, %v3459
        %v3498 = vadd.f32 %v3377, %v3464
        %v3499 = vadd.f32 %v3378, %v3469
        %v3500 = vadd.f32 %v3379, %v3474
        %v3501 = vadd.f32 %v3380, %v3479
        %v3502 = vadd.f32 %v3381, %v3484
        %v3503 = vadd.f32 %v3382, %v3489
        %v3504 = vadd.f32 %v3383, %v3494
        %v3505 = vld [vmem:[%s2341 + $0x1] sm:$0xff]
        %v3506 = vld [vmem:[%s2341 + $0x11] sm:$0xff]
        %v3507 = vld [vmem:[%s2341 + $0x21] sm:$0xff]
        %v3508 = vld [vmem:[%s2341 + $0x31] sm:$0xff]
        %v3509 = vld [vmem:[%s2341 + $0x41] sm:$0xff]
        %v3510 = vld [vmem:[%s2341 + $0x51] sm:$0xff]
        %v3511 = vld [vmem:[%s2341 + $0x61] sm:$0xff]
        %v3512 = vld [vmem:[%s2341 + $0x71] sm:$0xff]
        %3513 = vmatprep.subr.mxu0 0.0
        %3514 = vmatpush1.msra.mxu0 %v2638
        %3515 = vmatprep.subr.mxu0 0.0
        %3516 = vmatpush1.msra.mxu0 %v2639
        %3517 = vmatprep.subr.mxu0 0.0
        %3518 = vmatpush1.msra.mxu0 %v2640
        %3519 = vmatprep.subr.mxu0 0.0
        %3520 = vmatpush1.msra.mxu0 %v2641
        %3521 = vmatprep.subr.mxu0 0.0
        %3522 = vmatpush1.msra.mxu0 %v2642
        %3523 = vmatprep.subr.mxu0 0.0
        %3524 = vmatpush1.msra.mxu0 %v2643
        %3525 = vmatprep.subr.mxu0 0.0
        %3526 = vmatpush1.msra.mxu0 %v2644
        %3527 = vmatprep.subr.mxu0 0.0
        %3528 = vmatpush1.msra.mxu0 %v2645
        %3529 = vmatprep.subr.mxu0 0.0
        %3530 = vmatpush1.msra.mxu0 %v2646
        %3531 = vmatprep.subr.mxu0 0.0
        %3532 = vmatpush1.msra.mxu0 %v2647
        %3533 = vmatprep.subr.mxu0 0.0
        %3534 = vmatpush1.msra.mxu0 %v2648
        %3535 = vmatprep.subr.mxu0 0.0
        %3536 = vmatpush1.msra.mxu0 %v2649
        %3537 = vmatprep.subr.mxu0 0.0
        %3538 = vmatpush1.msra.mxu0 %v2650
        %3539 = vmatprep.subr.mxu0 0.0
        %3540 = vmatpush1.msra.mxu0 %v2651
        %3541 = vmatprep.subr.mxu0 0.0
        %3542 = vmatpush1.msra.mxu0 %v2652
        %3543 = vmatprep.subr.mxu0 0.0
        %3544 = vmatpush1.msra.mxu0 %v2653
        %3545 = vmatprep.subr.mxu0 0.0
        %3546 = vmatpush1.msra.mxu0 0.0
        %3547 = vmatprep.subr.mxu0 0.0
        %3548 = vmatpush1.msra.mxu0 0.0
        %3549 = vmatprep.subr.mxu0 0.0
        %3550 = vmatpush1.msra.mxu0 0.0
        %3551 = vmatprep.subr.mxu0 0.0
        %3552 = vmatpush1.msra.mxu0 0.0
        %3553 = vmatprep.subr.mxu0 0.0
        %3554 = vmatpush1.msra.mxu0 0.0
        %3555 = vmatprep.subr.mxu0 0.0
        %3556 = vmatpush1.msra.mxu0 0.0
        %3557 = vmatprep.subr.mxu0 0.0
        %3558 = vmatpush1.msra.mxu0 0.0
        %3559 = vmatprep.subr.mxu0 0.0
        %3560 = vmatpush1.msra.mxu0 0.0
        %3561 = vmatprep.subr.mxu0 0.0
        %3562 = vmatpush1.msra.mxu0 0.0
        %3563 = vmatprep.subr.mxu0 0.0
        %3564 = vmatpush1.msra.mxu0 0.0
        %3565 = vmatprep.subr.mxu0 0.0
        %3566 = vmatpush1.msra.mxu0 0.0
        %3567 = vmatprep.subr.mxu0 0.0
        %3568 = vmatpush1.msra.mxu0 0.0
        %3569 = vmatprep.subr.mxu0 0.0
        %3570 = vmatpush1.msra.mxu0 0.0
        %3571 = vmatprep.subr.mxu0 0.0
        %3572 = vmatpush1.msra.mxu0 0.0
        %3573 = vmatprep.subr.mxu0 0.0
        %3574 = vmatpush1.msra.mxu0 0.0
        %3575 = vmatprep.subr.mxu0 0.0
        %3576 = vmatpush1.msra.mxu0 0.0
        %3577 = vmatprep.mubr.f32.mxu0 0.0
        %3578 = vmatmul.mubr.f32.gmra.mrb[0].mxu0 %v3505
        %v3579 = vpop.f32.mrb[0].mxu0
        %v3580 = vadd.f32 0.0, %v3579
        %v3581 = vpop.f32.mrb[0].mxu0
        %3582 = vmatprep.mubr.f32.mxu0 0.0
        %3583 = vmatmul.mubr.f32.gmra.mrb[0].mxu0 %v3506
        %v3584 = vpop.f32.mrb[0].mxu0
        %v3585 = vadd.f32 0.0, %v3584
        %v3586 = vpop.f32.mrb[0].mxu0
        %3587 = vmatprep.mubr.f32.mxu0 0.0
        %3588 = vmatmul.mubr.f32.gmra.mrb[0].mxu0 %v3507
        %v3589 = vpop.f32.mrb[0].mxu0
        %v3590 = vadd.f32 0.0, %v3589
        %v3591 = vpop.f32.mrb[0].mxu0
        %3592 = vmatprep.mubr.f32.mxu0 0.0
        %3593 = vmatmul.mubr.f32.gmra.mrb[0].mxu0 %v3508
        %v3594 = vpop.f32.mrb[0].mxu0
        %v3595 = vadd.f32 0.0, %v3594
        %v3596 = vpop.f32.mrb[0].mxu0
        %3597 = vmatprep.mubr.f32.mxu0 0.0
        %3598 = vmatmul.mubr.f32.gmra.mrb[0].mxu0 %v3509
        %v3599 = vpop.f32.mrb[0].mxu0
        %v3600 = vadd.f32 0.0, %v3599
        %v3601 = vpop.f32.mrb[0].mxu0
        %3602 = vmatprep.mubr.f32.mxu0 0.0
        %3603 = vmatmul.mubr.f32.gmra.mrb[0].mxu0 %v3510
        %v3604 = vpop.f32.mrb[0].mxu0
        %v3605 = vadd.f32 0.0, %v3604
        %v3606 = vpop.f32.mrb[0].mxu0
        %3607 = vmatprep.mubr.f32.mxu0 0.0
        %3608 = vmatmul.mubr.f32.gmra.mrb[0].mxu0 %v3511
        %v3609 = vpop.f32.mrb[0].mxu0
        %v3610 = vadd.f32 0.0, %v3609
        %v3611 = vpop.f32.mrb[0].mxu0
        %3612 = vmatprep.mubr.f32.mxu0 0.0
        %3613 = vmatmul.mubr.f32.gmra.mrb[0].mxu0 %v3512
        %v3614 = vpop.f32.mrb[0].mxu0
        %v3615 = vadd.f32 0.0, %v3614
        %v3616 = vpop.f32.mrb[0].mxu0
        %3617 = vdwg.mxu0
        %v3618 = vadd.f32 %v3497, %v3580
        %v3619 = vadd.f32 %v3498, %v3585
        %v3620 = vadd.f32 %v3499, %v3590
        %v3621 = vadd.f32 %v3500, %v3595
        %v3622 = vadd.f32 %v3501, %v3600
        %v3623 = vadd.f32 %v3502, %v3605
        %v3624 = vadd.f32 %v3503, %v3610
        %v3625 = vadd.f32 %v3504, %v3615
        %v3626 = vld [vmem:[%s2502 + $0x1] sm:$0xff]
        %v3627 = vld [vmem:[%s2502 + $0x11] sm:$0xff]
        %v3628 = vld [vmem:[%s2502 + $0x21] sm:$0xff]
        %v3629 = vld [vmem:[%s2502 + $0x31] sm:$0xff]
        %v3630 = vld [vmem:[%s2502 + $0x41] sm:$0xff]
        %v3631 = vld [vmem:[%s2502 + $0x51] sm:$0xff]
        %v3632 = vld [vmem:[%s2502 + $0x61] sm:$0xff]
        %v3633 = vld [vmem:[%s2502 + $0x71] sm:$0xff]
        %3634 = vmatprep.subr.mxu0 0.0
        %3635 = vmatpush1.msra.mxu0 %v2655
        %3636 = vmatprep.subr.mxu0 0.0
        %3637 = vmatpush1.msra.mxu0 %v2656
        %3638 = vmatprep.subr.mxu0 0.0
        %3639 = vmatpush1.msra.mxu0 %v2657
        %3640 = vmatprep.subr.mxu0 0.0
        %3641 = vmatpush1.msra.mxu0 %v2658
        %3642 = vmatprep.subr.mxu0 0.0
        %3643 = vmatpush1.msra.mxu0 %v2659
        %3644 = vmatprep.subr.mxu0 0.0
        %3645 = vmatpush1.msra.mxu0 %v2660
        %3646 = vmatprep.subr.mxu0 0.0
        %3647 = vmatpush1.msra.mxu0 %v2661
        %3648 = vmatprep.subr.mxu0 0.0
        %3649 = vmatpush1.msra.mxu0 %v2662
        %3650 = vmatprep.subr.mxu0 0.0
        %3651 = vmatpush1.msra.mxu0 %v2663
        %3652 = vmatprep.subr.mxu0 0.0
        %3653 = vmatpush1.msra.mxu0 %v2664
        %3654 = vmatprep.subr.mxu0 0.0
        %3655 = vmatpush1.msra.mxu0 %v2665
        %3656 = vmatprep.subr.mxu0 0.0
        %3657 = vmatpush1.msra.mxu0 %v2666
        %3658 = vmatprep.subr.mxu0 0.0
        %3659 = vmatpush1.msra.mxu0 %v2667
        %3660 = vmatprep.subr.mxu0 0.0
        %3661 = vmatpush1.msra.mxu0 %v2668
        %3662 = vmatprep.subr.mxu0 0.0
        %3663 = vmatpush1.msra.mxu0 %v2669
        %3664 = vmatprep.subr.mxu0 0.0
        %3665 = vmatpush1.msra.mxu0 %v2670
        %3666 = vmatprep.subr.mxu0 0.0
        %3667 = vmatpush1.msra.mxu0 0.0
        %3668 = vmatprep.subr.mxu0 0.0
        %3669 = vmatpush1.msra.mxu0 0.0
        %3670 = vmatprep.subr.mxu0 0.0
        %3671 = vmatpush1.msra.mxu0 0.0
        %3672 = vmatprep.subr.mxu0 0.0
        %3673 = vmatpush1.msra.mxu0 0.0
        %3674 = vmatprep.subr.mxu0 0.0
        %3675 = vmatpush1.msra.mxu0 0.0
        %3676 = vmatprep.subr.mxu0 0.0
        %3677 = vmatpush1.msra.mxu0 0.0
        %3678 = vmatprep.subr.mxu0 0.0
        %3679 = vmatpush1.msra.mxu0 0.0
        %3680 = vmatprep.subr.mxu0 0.0
        %3681 = vmatpush1.msra.mxu0 0.0
        %3682 = vmatprep.subr.mxu0 0.0
        %3683 = vmatpush1.msra.mxu0 0.0
        %3684 = vmatprep.subr.mxu0 0.0
        %3685 = vmatpush1.msra.mxu0 0.0
        %3686 = vmatprep.subr.mxu0 0.0
        %3687 = vmatpush1.msra.mxu0 0.0
        %3688 = vmatprep.subr.mxu0 0.0
        %3689 = vmatpush1.msra.mxu0 0.0
        %3690 = vmatprep.subr.mxu0 0.0
        %3691 = vmatpush1.msra.mxu0 0.0
        %3692 = vmatprep.subr.mxu0 0.0
        %3693 = vmatpush1.msra.mxu0 0.0
        %3694 = vmatprep.subr.mxu0 0.0
        %3695 = vmatpush1.msra.mxu0 0.0
        %3696 = vmatprep.subr.mxu0 0.0
        %3697 = vmatpush1.msra.mxu0 0.0
        %3698 = vmatprep.mubr.f32.mxu0 0.0
        %3699 = vmatmul.mubr.f32.gmra.mrb[0].mxu0 %v3626
        %v3700 = vpop.f32.mrb[0].mxu0
        %v3701 = vadd.f32 0.0, %v3700
        %v3702 = vpop.f32.mrb[0].mxu0
        %3703 = vmatprep.mubr.f32.mxu0 0.0
        %3704 = vmatmul.mubr.f32.gmra.mrb[0].mxu0 %v3627
        %v3705 = vpop.f32.mrb[0].mxu0
        %v3706 = vadd.f32 0.0, %v3705
        %v3707 = vpop.f32.mrb[0].mxu0
        %3708 = vmatprep.mubr.f32.mxu0 0.0
        %3709 = vmatmul.mubr.f32.gmra.mrb[0].mxu0 %v3628
        %v3710 = vpop.f32.mrb[0].mxu0
        %v3711 = vadd.f32 0.0, %v3710
        %v3712 = vpop.f32.mrb[0].mxu0
        %3713 = vmatprep.mubr.f32.mxu0 0.0
        %3714 = vmatmul.mubr.f32.gmra.mrb[0].mxu0 %v3629
        %v3715 = vpop.f32.mrb[0].mxu0
        %v3716 = vadd.f32 0.0, %v3715
        %v3717 = vpop.f32.mrb[0].mxu0
        %3718 = vmatprep.mubr.f32.mxu0 0.0
        %3719 = vmatmul.mubr.f32.gmra.mrb[0].mxu0 %v3630
        %v3720 = vpop.f32.mrb[0].mxu0
        %v3721 = vadd.f32 0.0, %v3720
        %v3722 = vpop.f32.mrb[0].mxu0
        %3723 = vmatprep.mubr.f32.mxu0 0.0
        %3724 = vmatmul.mubr.f32.gmra.mrb[0].mxu0 %v3631
        %v3725 = vpop.f32.mrb[0].mxu0
        %v3726 = vadd.f32 0.0, %v3725
        %v3727 = vpop.f32.mrb[0].mxu0
        %3728 = vmatprep.mubr.f32.mxu0 0.0
        %3729 = vmatmul.mubr.f32.gmra.mrb[0].mxu0 %v3632
        %v3730 = vpop.f32.mrb[0].mxu0
        %v3731 = vadd.f32 0.0, %v3730
        %v3732 = vpop.f32.mrb[0].mxu0
        %3733 = vmatprep.mubr.f32.mxu0 0.0
        %3734 = vmatmul.mubr.f32.gmra.mrb[0].mxu0 %v3633
        %v3735 = vpop.f32.mrb[0].mxu0
        %v3736 = vadd.f32 0.0, %v3735
        %v3737 = vpop.f32.mrb[0].mxu0
        %3738 = vdwg.mxu0
        %v3739 = vadd.f32 %v3618, %v3701
        %v3740 = vadd.f32 %v3619, %v3706
        %v3741 = vadd.f32 %v3620, %v3711
        %v3742 = vadd.f32 %v3621, %v3716
        %v3743 = vadd.f32 %v3622, %v3721
        %v3744 = vadd.f32 %v3623, %v3726
        %v3745 = vadd.f32 %v3624, %v3731
        %v3746 = vadd.f32 %v3625, %v3736
        %v3748 = vlaneseq
        %v3749 = vshrl.u32 %v3748, 7
        %v3750 = vsub.s32 0, %v3749
        %v3751 = vrot.slane %v2671, %v3750
        %v3753 = vadd.f32 %v3739, %v3751
        %v3754 = vadd.f32 %v3740, %v3751
        %v3755 = vadd.f32 %v3741, %v3751
        %v3756 = vadd.f32 %v3742, %v3751
        %v3757 = vadd.f32 %v3743, %v3751
        %v3758 = vadd.f32 %v3744, %v3751
        %v3759 = vadd.f32 %v3745, %v3751
        %v3760 = vadd.f32 %v3746, %v3751
        %v3761 = vmax.f32 %v3753, 0.0
        %v3762 = vmax.f32 %v3754, 0.0
        %v3763 = vmax.f32 %v3755, 0.0
        %v3764 = vmax.f32 %v3756, 0.0
        %v3765 = vmax.f32 %v3757, 0.0
        %v3766 = vmax.f32 %v3758, 0.0
        %v3767 = vmax.f32 %v3759, 0.0
        %v3768 = vmax.f32 %v3760, 0.0
        %3769 = vst [vmem:[%s365] sm:$0xff] %v3761
        %3770 = vst [vmem:[%s365 + $0x20] sm:$0xff] %v3762
        %3771 = vst [vmem:[%s365 + $0x40] sm:$0xff] %v3763
        %3772 = vst [vmem:[%s365 + $0x60] sm:$0xff] %v3764
        %3773 = vst [vmem:[%s365 + $0x80] sm:$0xff] %v3765
        %3774 = vst [vmem:[%s365 + $0xa0] sm:$0xff] %v3766
        %3775 = vst [vmem:[%s365 + $0xc0] sm:$0xff] %v3767
        %3776 = vst [vmem:[%s365 + $0xe0] sm:$0xff] %v3768
        %v3777 = vld [vmem:[%s2681 + $0x1] sm:$0xff]
        %v3778 = vld [vmem:[%s2681 + $0x11] sm:$0xff]
        %v3779 = vld [vmem:[%s2681 + $0x21] sm:$0xff]
        %v3780 = vld [vmem:[%s2681 + $0x31] sm:$0xff]
        %v3781 = vld [vmem:[%s2681 + $0x41] sm:$0xff]
        %v3782 = vld [vmem:[%s2681 + $0x51] sm:$0xff]
        %v3783 = vld [vmem:[%s2681 + $0x61] sm:$0xff]
        %v3784 = vld [vmem:[%s2681 + $0x71] sm:$0xff]
        %v3785 = vld [vmem:[%s2672 + $0x1] sm:$0xff]
        %v3786 = vld [vmem:[%s2672 + $0x11] sm:$0xff]
        %v3787 = vld [vmem:[%s2672 + $0x21] sm:$0xff]
        %v3788 = vld [vmem:[%s2672 + $0x31] sm:$0xff]
        %v3789 = vld [vmem:[%s2672 + $0x41] sm:$0xff]
        %v3790 = vld [vmem:[%s2672 + $0x51] sm:$0xff]
        %v3791 = vld [vmem:[%s2672 + $0x61] sm:$0xff]
        %v3792 = vld [vmem:[%s2672 + $0x71] sm:$0xff]
        %3793 = vmatprep.subr.mxu0 0.0
        %3794 = vmatpush1.msra.mxu0 %v2536
        %3795 = vmatprep.subr.mxu0 0.0
        %3796 = vmatpush1.msra.mxu0 %v2537
        %3797 = vmatprep.subr.mxu0 0.0
        %3798 = vmatpush1.msra.mxu0 %v2538
        %3799 = vmatprep.subr.mxu0 0.0
        %3800 = vmatpush1.msra.mxu0 %v2539
        %3801 = vmatprep.subr.mxu0 0.0
        %3802 = vmatpush1.msra.mxu0 %v2540
        %3803 = vmatprep.subr.mxu0 0.0
        %3804 = vmatpush1.msra.mxu0 %v2541
        %3805 = vmatprep.subr.mxu0 0.0
        %3806 = vmatpush1.msra.mxu0 %v2542
        %3807 = vmatprep.subr.mxu0 0.0
        %3808 = vmatpush1.msra.mxu0 %v2543
        %3809 = vmatprep.subr.mxu0 0.0
        %3810 = vmatpush1.msra.mxu0 %v2544
        %3811 = vmatprep.subr.mxu0 0.0
        %3812 = vmatpush1.msra.mxu0 %v2545
        %3813 = vmatprep.subr.mxu0 0.0
        %3814 = vmatpush1.msra.mxu0 %v2546
        %3815 = vmatprep.subr.mxu0 0.0
        %3816 = vmatpush1.msra.mxu0 %v2547
        %3817 = vmatprep.subr.mxu0 0.0
        %3818 = vmatpush1.msra.mxu0 %v2548
        %3819 = vmatprep.subr.mxu0 0.0
        %3820 = vmatpush1.msra.mxu0 %v2549
        %3821 = vmatprep.subr.mxu0 0.0
        %3822 = vmatpush1.msra.mxu0 %v2550
        %3823 = vmatprep.subr.mxu0 0.0
        %3824 = vmatpush1.msra.mxu0 %v2551
        %3825 = vmatprep.subr.mxu0 0.0
        %3826 = vmatpush1.msra.mxu0 0.0
        %3827 = vmatprep.subr.mxu0 0.0
        %3828 = vmatpush1.msra.mxu0 0.0
        %3829 = vmatprep.subr.mxu0 0.0
        %3830 = vmatpush1.msra.mxu0 0.0
        %3831 = vmatprep.subr.mxu0 0.0
        %3832 = vmatpush1.msra.mxu0 0.0
        %3833 = vmatprep.subr.mxu0 0.0
        %3834 = vmatpush1.msra.mxu0 0.0
        %3835 = vmatprep.subr.mxu0 0.0
        %3836 = vmatpush1.msra.mxu0 0.0
        %3837 = vmatprep.subr.mxu0 0.0
        %3838 = vmatpush1.msra.mxu0 0.0
        %3839 = vmatprep.subr.mxu0 0.0
        %3840 = vmatpush1.msra.mxu0 0.0
        %3841 = vmatprep.subr.mxu0 0.0
        %3842 = vmatpush1.msra.mxu0 0.0
        %3843 = vmatprep.subr.mxu0 0.0
        %3844 = vmatpush1.msra.mxu0 0.0
        %3845 = vmatprep.subr.mxu0 0.0
        %3846 = vmatpush1.msra.mxu0 0.0
        %3847 = vmatprep.subr.mxu0 0.0
        %3848 = vmatpush1.msra.mxu0 0.0
        %3849 = vmatprep.subr.mxu0 0.0
        %3850 = vmatpush1.msra.mxu0 0.0
        %3851 = vmatprep.subr.mxu0 0.0
        %3852 = vmatpush1.msra.mxu0 0.0
        %3853 = vmatprep.subr.mxu0 0.0
        %3854 = vmatpush1.msra.mxu0 0.0
        %3855 = vmatprep.subr.mxu0 0.0
        %3856 = vmatpush1.msra.mxu0 0.0
        %3857 = vmatprep.mubr.f32.mxu0 0.0
        %3858 = vmatmul.mubr.f32.gmra.mrb[0].mxu0 %v3785
        %v3859 = vpop.f32.mrb[0].mxu0
        %v3860 = vadd.f32 0.0, %v3859
        %v3861 = vpop.f32.mrb[0].mxu0
        %3862 = vmatprep.mubr.f32.mxu0 0.0
        %3863 = vmatmul.mubr.f32.gmra.mrb[0].mxu0 %v3786
        %v3864 = vpop.f32.mrb[0].mxu0
        %v3865 = vadd.f32 0.0, %v3864
        %v3866 = vpop.f32.mrb[0].mxu0
        %3867 = vmatprep.mubr.f32.mxu0 0.0
        %3868 = vmatmul.mubr.f32.gmra.mrb[0].mxu0 %v3787
        %v3869 = vpop.f32.mrb[0].mxu0
        %v3870 = vadd.f32 0.0, %v3869
        %v3871 = vpop.f32.mrb[0].mxu0
        %3872 = vmatprep.mubr.f32.mxu0 0.0
        %3873 = vmatmul.mubr.f32.gmra.mrb[0].mxu0 %v3788
        %v3874 = vpop.f32.mrb[0].mxu0
        %v3875 = vadd.f32 0.0, %v3874
        %v3876 = vpop.f32.mrb[0].mxu0
        %3877 = vmatprep.mubr.f32.mxu0 0.0
        %3878 = vmatmul.mubr.f32.gmra.mrb[0].mxu0 %v3789
        %v3879 = vpop.f32.mrb[0].mxu0
        %v3880 = vadd.f32 0.0, %v3879
        %v3881 = vpop.f32.mrb[0].mxu0
        %3882 = vmatprep.mubr.f32.mxu0 0.0
        %3883 = vmatmul.mubr.f32.gmra.mrb[0].mxu0 %v3790
        %v3884 = vpop.f32.mrb[0].mxu0
        %v3885 = vadd.f32 0.0, %v3884
        %v3886 = vpop.f32.mrb[0].mxu0
        %3887 = vmatprep.mubr.f32.mxu0 0.0
        %3888 = vmatmul.mubr.f32.gmra.mrb[0].mxu0 %v3791
        %v3889 = vpop.f32.mrb[0].mxu0
        %v3890 = vadd.f32 0.0, %v3889
        %v3891 = vpop.f32.mrb[0].mxu0
        %3892 = vmatprep.mubr.f32.mxu0 0.0
        %3893 = vmatmul.mubr.f32.gmra.mrb[0].mxu0 %v3792
        %v3894 = vpop.f32.mrb[0].mxu0
        %v3895 = vadd.f32 0.0, %v3894
        %v3896 = vpop.f32.mrb[0].mxu0
        %3897 = vdwg.mxu0
        %3898 = vmatprep.subr.mxu0 0.0
        %3899 = vmatpush1.msra.mxu0 %v2519
        %3900 = vmatprep.subr.mxu0 0.0
        %3901 = vmatpush1.msra.mxu0 %v2520
        %3902 = vmatprep.subr.mxu0 0.0
        %3903 = vmatpush1.msra.mxu0 %v2521
        %3904 = vmatprep.subr.mxu0 0.0
        %3905 = vmatpush1.msra.mxu0 %v2522
        %3906 = vmatprep.subr.mxu0 0.0
        %3907 = vmatpush1.msra.mxu0 %v2523
        %3908 = vmatprep.subr.mxu0 0.0
        %3909 = vmatpush1.msra.mxu0 %v2524
        %3910 = vmatprep.subr.mxu0 0.0
        %3911 = vmatpush1.msra.mxu0 %v2525
        %3912 = vmatprep.subr.mxu0 0.0
        %3913 = vmatpush1.msra.mxu0 %v2526
        %3914 = vmatprep.subr.mxu0 0.0
        %3915 = vmatpush1.msra.mxu0 %v2527
        %3916 = vmatprep.subr.mxu0 0.0
        %3917 = vmatpush1.msra.mxu0 %v2528
        %3918 = vmatprep.subr.mxu0 0.0
        %3919 = vmatpush1.msra.mxu0 %v2529
        %3920 = vmatprep.subr.mxu0 0.0
        %3921 = vmatpush1.msra.mxu0 %v2530
        %3922 = vmatprep.subr.mxu0 0.0
        %3923 = vmatpush1.msra.mxu0 %v2531
        %3924 = vmatprep.subr.mxu0 0.0
        %3925 = vmatpush1.msra.mxu0 %v2532
        %3926 = vmatprep.subr.mxu0 0.0
        %3927 = vmatpush1.msra.mxu0 %v2533
        %3928 = vmatprep.subr.mxu0 0.0
        %3929 = vmatpush1.msra.mxu0 %v2534
        %3930 = vmatprep.subr.mxu0 0.0
        %3931 = vmatpush1.msra.mxu0 0.0
        %3932 = vmatprep.subr.mxu0 0.0
        %3933 = vmatpush1.msra.mxu0 0.0
        %3934 = vmatprep.subr.mxu0 0.0
        %3935 = vmatpush1.msra.mxu0 0.0
        %3936 = vmatprep.subr.mxu0 0.0
        %3937 = vmatpush1.msra.mxu0 0.0
        %3938 = vmatprep.subr.mxu0 0.0
        %3939 = vmatpush1.msra.mxu0 0.0
        %3940 = vmatprep.subr.mxu0 0.0
        %3941 = vmatpush1.msra.mxu0 0.0
        %3942 = vmatprep.subr.mxu0 0.0
        %3943 = vmatpush1.msra.mxu0 0.0
        %3944 = vmatprep.subr.mxu0 0.0
        %3945 = vmatpush1.msra.mxu0 0.0
        %3946 = vmatprep.subr.mxu0 0.0
        %3947 = vmatpush1.msra.mxu0 0.0
        %3948 = vmatprep.subr.mxu0 0.0
        %3949 = vmatpush1.msra.mxu0 0.0
        %3950 = vmatprep.subr.mxu0 0.0
        %3951 = vmatpush1.msra.mxu0 0.0
        %3952 = vmatprep.subr.mxu0 0.0
        %3953 = vmatpush1.msra.mxu0 0.0
        %3954 = vmatprep.subr.mxu0 0.0
        %3955 = vmatpush1.msra.mxu0 0.0
        %3956 = vmatprep.subr.mxu0 0.0
        %3957 = vmatpush1.msra.mxu0 0.0
        %3958 = vmatprep.subr.mxu0 0.0
        %3959 = vmatpush1.msra.mxu0 0.0
        %3960 = vmatprep.subr.mxu0 0.0
        %3961 = vmatpush1.msra.mxu0 0.0
        %3962 = vmatprep.mubr.f32.mxu0 0.0
        %3963 = vmatmul.mubr.f32.gmra.mrb[0].mxu0 %v3777
        %v3964 = vpop.f32.mrb[0].mxu0
        %v3965 = vadd.f32 %v3860, %v3964
        %v3966 = vpop.f32.mrb[0].mxu0
        %3967 = vmatprep.mubr.f32.mxu0 0.0
        %3968 = vmatmul.mubr.f32.gmra.mrb[0].mxu0 %v3778
        %v3969 = vpop.f32.mrb[0].mxu0
        %v3970 = vadd.f32 %v3865, %v3969
        %v3971 = vpop.f32.mrb[0].mxu0
        %3972 = vmatprep.mubr.f32.mxu0 0.0
        %3973 = vmatmul.mubr.f32.gmra.mrb[0].mxu0 %v3779
        %v3974 = vpop.f32.mrb[0].mxu0
        %v3975 = vadd.f32 %v3870, %v3974
        %v3976 = vpop.f32.mrb[0].mxu0
        %3977 = vmatprep.mubr.f32.mxu0 0.0
        %3978 = vmatmul.mubr.f32.gmra.mrb[0].mxu0 %v3780
        %v3979 = vpop.f32.mrb[0].mxu0
        %v3980 = vadd.f32 %v3875, %v3979
        %v3981 = vpop.f32.mrb[0].mxu0
        %3982 = vmatprep.mubr.f32.mxu0 0.0
        %3983 = vmatmul.mubr.f32.gmra.mrb[0].mxu0 %v3781
        %v3984 = vpop.f32.mrb[0].mxu0
        %v3985 = vadd.f32 %v3880, %v3984
        %v3986 = vpop.f32.mrb[0].mxu0
        %3987 = vmatprep.mubr.f32.mxu0 0.0
        %3988 = vmatmul.mubr.f32.gmra.mrb[0].mxu0 %v3782
        %v3989 = vpop.f32.mrb[0].mxu0
        %v3990 = vadd.f32 %v3885, %v3989
        %v3991 = vpop.f32.mrb[0].mxu0
        %3992 = vmatprep.mubr.f32.mxu0 0.0
        %3993 = vmatmul.mubr.f32.gmra.mrb[0].mxu0 %v3783
        %v3994 = vpop.f32.mrb[0].mxu0
        %v3995 = vadd.f32 %v3890, %v3994
        %v3996 = vpop.f32.mrb[0].mxu0
        %3997 = vmatprep.mubr.f32.mxu0 0.0
        %3998 = vmatmul.mubr.f32.gmra.mrb[0].mxu0 %v3784
        %v3999 = vpop.f32.mrb[0].mxu0
        %v4000 = vadd.f32 %v3895, %v3999
        %v4001 = vpop.f32.mrb[0].mxu0
        %4002 = vdwg.mxu0
        %v4003 = vld [vmem:[%s2681 + $0x2] sm:$0xff]
        %v4004 = vld [vmem:[%s2681 + $0x12] sm:$0xff]
        %v4005 = vld [vmem:[%s2681 + $0x22] sm:$0xff]
        %v4006 = vld [vmem:[%s2681 + $0x32] sm:$0xff]
        %v4007 = vld [vmem:[%s2681 + $0x42] sm:$0xff]
        %v4008 = vld [vmem:[%s2681 + $0x52] sm:$0xff]
        %v4009 = vld [vmem:[%s2681 + $0x62] sm:$0xff]
        %v4010 = vld [vmem:[%s2681 + $0x72] sm:$0xff]
        %4011 = vmatprep.subr.mxu0 0.0
        %4012 = vmatpush1.msra.mxu0 %v2553
        %4013 = vmatprep.subr.mxu0 0.0
        %4014 = vmatpush1.msra.mxu0 %v2554
        %4015 = vmatprep.subr.mxu0 0.0
        %4016 = vmatpush1.msra.mxu0 %v2555
        %4017 = vmatprep.subr.mxu0 0.0
        %4018 = vmatpush1.msra.mxu0 %v2556
        %4019 = vmatprep.subr.mxu0 0.0
        %4020 = vmatpush1.msra.mxu0 %v2557
        %4021 = vmatprep.subr.mxu0 0.0
        %4022 = vmatpush1.msra.mxu0 %v2558
        %4023 = vmatprep.subr.mxu0 0.0
        %4024 = vmatpush1.msra.mxu0 %v2559
        %4025 = vmatprep.subr.mxu0 0.0
        %4026 = vmatpush1.msra.mxu0 %v2560
        %4027 = vmatprep.subr.mxu0 0.0
        %4028 = vmatpush1.msra.mxu0 %v2561
        %4029 = vmatprep.subr.mxu0 0.0
        %4030 = vmatpush1.msra.mxu0 %v2562
        %4031 = vmatprep.subr.mxu0 0.0
        %4032 = vmatpush1.msra.mxu0 %v2563
        %4033 = vmatprep.subr.mxu0 0.0
        %4034 = vmatpush1.msra.mxu0 %v2564
        %4035 = vmatprep.subr.mxu0 0.0
        %4036 = vmatpush1.msra.mxu0 %v2565
        %4037 = vmatprep.subr.mxu0 0.0
        %4038 = vmatpush1.msra.mxu0 %v2566
        %4039 = vmatprep.subr.mxu0 0.0
        %4040 = vmatpush1.msra.mxu0 %v2567
        %4041 = vmatprep.subr.mxu0 0.0
        %4042 = vmatpush1.msra.mxu0 %v2568
        %4043 = vmatprep.subr.mxu0 0.0
        %4044 = vmatpush1.msra.mxu0 0.0
        %4045 = vmatprep.subr.mxu0 0.0
        %4046 = vmatpush1.msra.mxu0 0.0
        %4047 = vmatprep.subr.mxu0 0.0
        %4048 = vmatpush1.msra.mxu0 0.0
        %4049 = vmatprep.subr.mxu0 0.0
        %4050 = vmatpush1.msra.mxu0 0.0
        %4051 = vmatprep.subr.mxu0 0.0
        %4052 = vmatpush1.msra.mxu0 0.0
        %4053 = vmatprep.subr.mxu0 0.0
        %4054 = vmatpush1.msra.mxu0 0.0
        %4055 = vmatprep.subr.mxu0 0.0
        %4056 = vmatpush1.msra.mxu0 0.0
        %4057 = vmatprep.subr.mxu0 0.0
        %4058 = vmatpush1.msra.mxu0 0.0
        %4059 = vmatprep.subr.mxu0 0.0
        %4060 = vmatpush1.msra.mxu0 0.0
        %4061 = vmatprep.subr.mxu0 0.0
        %4062 = vmatpush1.msra.mxu0 0.0
        %4063 = vmatprep.subr.mxu0 0.0
        %4064 = vmatpush1.msra.mxu0 0.0
        %4065 = vmatprep.subr.mxu0 0.0
        %4066 = vmatpush1.msra.mxu0 0.0
        %4067 = vmatprep.subr.mxu0 0.0
        %4068 = vmatpush1.msra.mxu0 0.0
        %4069 = vmatprep.subr.mxu0 0.0
        %4070 = vmatpush1.msra.mxu0 0.0
        %4071 = vmatprep.subr.mxu0 0.0
        %4072 = vmatpush1.msra.mxu0 0.0
        %4073 = vmatprep.subr.mxu0 0.0
        %4074 = vmatpush1.msra.mxu0 0.0
        %4075 = vmatprep.mubr.f32.mxu0 0.0
        %4076 = vmatmul.mubr.f32.gmra.mrb[0].mxu0 %v4003
        %v4077 = vpop.f32.mrb[0].mxu0
        %v4078 = vadd.f32 0.0, %v4077
        %v4079 = vpop.f32.mrb[0].mxu0
        %4080 = vmatprep.mubr.f32.mxu0 0.0
        %4081 = vmatmul.mubr.f32.gmra.mrb[0].mxu0 %v4004
        %v4082 = vpop.f32.mrb[0].mxu0
        %v4083 = vadd.f32 0.0, %v4082
        %v4084 = vpop.f32.mrb[0].mxu0
        %4085 = vmatprep.mubr.f32.mxu0 0.0
        %4086 = vmatmul.mubr.f32.gmra.mrb[0].mxu0 %v4005
        %v4087 = vpop.f32.mrb[0].mxu0
        %v4088 = vadd.f32 0.0, %v4087
        %v4089 = vpop.f32.mrb[0].mxu0
        %4090 = vmatprep.mubr.f32.mxu0 0.0
        %4091 = vmatmul.mubr.f32.gmra.mrb[0].mxu0 %v4006
        %v4092 = vpop.f32.mrb[0].mxu0
        %v4093 = vadd.f32 0.0, %v4092
        %v4094 = vpop.f32.mrb[0].mxu0
        %4095 = vmatprep.mubr.f32.mxu0 0.0
        %4096 = vmatmul.mubr.f32.gmra.mrb[0].mxu0 %v4007
        %v4097 = vpop.f32.mrb[0].mxu0
        %v4098 = vadd.f32 0.0, %v4097
        %v4099 = vpop.f32.mrb[0].mxu0
        %4100 = vmatprep.mubr.f32.mxu0 0.0
        %4101 = vmatmul.mubr.f32.gmra.mrb[0].mxu0 %v4008
        %v4102 = vpop.f32.mrb[0].mxu0
        %v4103 = vadd.f32 0.0, %v4102
        %v4104 = vpop.f32.mrb[0].mxu0
        %4105 = vmatprep.mubr.f32.mxu0 0.0
        %4106 = vmatmul.mubr.f32.gmra.mrb[0].mxu0 %v4009
        %v4107 = vpop.f32.mrb[0].mxu0
        %v4108 = vadd.f32 0.0, %v4107
        %v4109 = vpop.f32.mrb[0].mxu0
        %4110 = vmatprep.mubr.f32.mxu0 0.0
        %4111 = vmatmul.mubr.f32.gmra.mrb[0].mxu0 %v4010
        %v4112 = vpop.f32.mrb[0].mxu0
        %v4113 = vadd.f32 0.0, %v4112
        %v4114 = vpop.f32.mrb[0].mxu0
        %4115 = vdwg.mxu0
        %v4116 = vadd.f32 %v3965, %v4078
        %v4117 = vadd.f32 %v3970, %v4083
        %v4118 = vadd.f32 %v3975, %v4088
        %v4119 = vadd.f32 %v3980, %v4093
        %v4120 = vadd.f32 %v3985, %v4098
        %v4121 = vadd.f32 %v3990, %v4103
        %v4122 = vadd.f32 %v3995, %v4108
        %v4123 = vadd.f32 %v4000, %v4113
        %v4124 = vld [vmem:[%s1977 + $0x1] sm:$0xff]
        %v4125 = vld [vmem:[%s1977 + $0x11] sm:$0xff]
        %v4126 = vld [vmem:[%s1977 + $0x21] sm:$0xff]
        %v4127 = vld [vmem:[%s1977 + $0x31] sm:$0xff]
        %v4128 = vld [vmem:[%s1977 + $0x41] sm:$0xff]
        %v4129 = vld [vmem:[%s1977 + $0x51] sm:$0xff]
        %v4130 = vld [vmem:[%s1977 + $0x61] sm:$0xff]
        %v4131 = vld [vmem:[%s1977 + $0x71] sm:$0xff]
        %4132 = vmatprep.subr.mxu0 0.0
        %4133 = vmatpush1.msra.mxu0 %v2570
        %4134 = vmatprep.subr.mxu0 0.0
        %4135 = vmatpush1.msra.mxu0 %v2571
        %4136 = vmatprep.subr.mxu0 0.0
        %4137 = vmatpush1.msra.mxu0 %v2572
        %4138 = vmatprep.subr.mxu0 0.0
        %4139 = vmatpush1.msra.mxu0 %v2573
        %4140 = vmatprep.subr.mxu0 0.0
        %4141 = vmatpush1.msra.mxu0 %v2574
        %4142 = vmatprep.subr.mxu0 0.0
        %4143 = vmatpush1.msra.mxu0 %v2575
        %4144 = vmatprep.subr.mxu0 0.0
        %4145 = vmatpush1.msra.mxu0 %v2576
        %4146 = vmatprep.subr.mxu0 0.0
        %4147 = vmatpush1.msra.mxu0 %v2577
        %4148 = vmatprep.subr.mxu0 0.0
        %4149 = vmatpush1.msra.mxu0 %v2578
        %4150 = vmatprep.subr.mxu0 0.0
        %4151 = vmatpush1.msra.mxu0 %v2579
        %4152 = vmatprep.subr.mxu0 0.0
        %4153 = vmatpush1.msra.mxu0 %v2580
        %4154 = vmatprep.subr.mxu0 0.0
        %4155 = vmatpush1.msra.mxu0 %v2581
        %4156 = vmatprep.subr.mxu0 0.0
        %4157 = vmatpush1.msra.mxu0 %v2582
        %4158 = vmatprep.subr.mxu0 0.0
        %4159 = vmatpush1.msra.mxu0 %v2583
        %4160 = vmatprep.subr.mxu0 0.0
        %4161 = vmatpush1.msra.mxu0 %v2584
        %4162 = vmatprep.subr.mxu0 0.0
        %4163 = vmatpush1.msra.mxu0 %v2585
        %4164 = vmatprep.subr.mxu0 0.0
        %4165 = vmatpush1.msra.mxu0 0.0
        %4166 = vmatprep.subr.mxu0 0.0
        %4167 = vmatpush1.msra.mxu0 0.0
        %4168 = vmatprep.subr.mxu0 0.0
        %4169 = vmatpush1.msra.mxu0 0.0
        %4170 = vmatprep.subr.mxu0 0.0
        %4171 = vmatpush1.msra.mxu0 0.0
        %4172 = vmatprep.subr.mxu0 0.0
        %4173 = vmatpush1.msra.mxu0 0.0
        %4174 = vmatprep.subr.mxu0 0.0
        %4175 = vmatpush1.msra.mxu0 0.0
        %4176 = vmatprep.subr.mxu0 0.0
        %4177 = vmatpush1.msra.mxu0 0.0
        %4178 = vmatprep.subr.mxu0 0.0
        %4179 = vmatpush1.msra.mxu0 0.0
        %4180 = vmatprep.subr.mxu0 0.0
        %4181 = vmatpush1.msra.mxu0 0.0
        %4182 = vmatprep.subr.mxu0 0.0
        %4183 = vmatpush1.msra.mxu0 0.0
        %4184 = vmatprep.subr.mxu0 0.0
        %4185 = vmatpush1.msra.mxu0 0.0
        %4186 = vmatprep.subr.mxu0 0.0
        %4187 = vmatpush1.msra.mxu0 0.0
        %4188 = vmatprep.subr.mxu0 0.0
        %4189 = vmatpush1.msra.mxu0 0.0
        %4190 = vmatprep.subr.mxu0 0.0
        %4191 = vmatpush1.msra.mxu0 0.0
        %4192 = vmatprep.subr.mxu0 0.0
        %4193 = vmatpush1.msra.mxu0 0.0
        %4194 = vmatprep.subr.mxu0 0.0
        %4195 = vmatpush1.msra.mxu0 0.0
        %4196 = vmatprep.mubr.f32.mxu0 0.0
        %4197 = vmatmul.mubr.f32.gmra.mrb[0].mxu0 %v4124
        %v4198 = vpop.f32.mrb[0].mxu0
        %v4199 = vadd.f32 0.0, %v4198
        %v4200 = vpop.f32.mrb[0].mxu0
        %4201 = vmatprep.mubr.f32.mxu0 0.0
        %4202 = vmatmul.mubr.f32.gmra.mrb[0].mxu0 %v4125
        %v4203 = vpop.f32.mrb[0].mxu0
        %v4204 = vadd.f32 0.0, %v4203
        %v4205 = vpop.f32.mrb[0].mxu0
        %4206 = vmatprep.mubr.f32.mxu0 0.0
        %4207 = vmatmul.mubr.f32.gmra.mrb[0].mxu0 %v4126
        %v4208 = vpop.f32.mrb[0].mxu0
        %v4209 = vadd.f32 0.0, %v4208
        %v4210 = vpop.f32.mrb[0].mxu0
        %4211 = vmatprep.mubr.f32.mxu0 0.0
        %4212 = vmatmul.mubr.f32.gmra.mrb[0].mxu0 %v4127
        %v4213 = vpop.f32.mrb[0].mxu0
        %v4214 = vadd.f32 0.0, %v4213
        %v4215 = vpop.f32.mrb[0].mxu0
        %4216 = vmatprep.mubr.f32.mxu0 0.0
        %4217 = vmatmul.mubr.f32.gmra.mrb[0].mxu0 %v4128
        %v4218 = vpop.f32.mrb[0].mxu0
        %v4219 = vadd.f32 0.0, %v4218
        %v4220 = vpop.f32.mrb[0].mxu0
        %4221 = vmatprep.mubr.f32.mxu0 0.0
        %4222 = vmatmul.mubr.f32.gmra.mrb[0].mxu0 %v4129
        %v4223 = vpop.f32.mrb[0].mxu0
        %v4224 = vadd.f32 0.0, %v4223
        %v4225 = vpop.f32.mrb[0].mxu0
        %4226 = vmatprep.mubr.f32.mxu0 0.0
        %4227 = vmatmul.mubr.f32.gmra.mrb[0].mxu0 %v4130
        %v4228 = vpop.f32.mrb[0].mxu0
        %v4229 = vadd.f32 0.0, %v4228
        %v4230 = vpop.f32.mrb[0].mxu0
        %4231 = vmatprep.mubr.f32.mxu0 0.0
        %4232 = vmatmul.mubr.f32.gmra.mrb[0].mxu0 %v4131
        %v4233 = vpop.f32.mrb[0].mxu0
        %v4234 = vadd.f32 0.0, %v4233
        %v4235 = vpop.f32.mrb[0].mxu0
        %4236 = vdwg.mxu0
        %v4237 = vadd.f32 %v4116, %v4199
        %v4238 = vadd.f32 %v4117, %v4204
        %v4239 = vadd.f32 %v4118, %v4209
        %v4240 = vadd.f32 %v4119, %v4214
        %v4241 = vadd.f32 %v4120, %v4219
        %v4242 = vadd.f32 %v4121, %v4224
        %v4243 = vadd.f32 %v4122, %v4229
        %v4244 = vadd.f32 %v4123, %v4234
        %v4245 = vld [vmem:[%s2146 + $0x1] sm:$0xff]
        %v4246 = vld [vmem:[%s2146 + $0x11] sm:$0xff]
        %v4247 = vld [vmem:[%s2146 + $0x21] sm:$0xff]
        %v4248 = vld [vmem:[%s2146 + $0x31] sm:$0xff]
        %v4249 = vld [vmem:[%s2146 + $0x41] sm:$0xff]
        %v4250 = vld [vmem:[%s2146 + $0x51] sm:$0xff]
        %v4251 = vld [vmem:[%s2146 + $0x61] sm:$0xff]
        %v4252 = vld [vmem:[%s2146 + $0x71] sm:$0xff]
        %4253 = vmatprep.subr.mxu0 0.0
        %4254 = vmatpush1.msra.mxu0 %v2587
        %4255 = vmatprep.subr.mxu0 0.0
        %4256 = vmatpush1.msra.mxu0 %v2588
        %4257 = vmatprep.subr.mxu0 0.0
        %4258 = vmatpush1.msra.mxu0 %v2589
        %4259 = vmatprep.subr.mxu0 0.0
        %4260 = vmatpush1.msra.mxu0 %v2590
        %4261 = vmatprep.subr.mxu0 0.0
        %4262 = vmatpush1.msra.mxu0 %v2591
        %4263 = vmatprep.subr.mxu0 0.0
        %4264 = vmatpush1.msra.mxu0 %v2592
        %4265 = vmatprep.subr.mxu0 0.0
        %4266 = vmatpush1.msra.mxu0 %v2593
        %4267 = vmatprep.subr.mxu0 0.0
        %4268 = vmatpush1.msra.mxu0 %v2594
        %4269 = vmatprep.subr.mxu0 0.0
        %4270 = vmatpush1.msra.mxu0 %v2595
        %4271 = vmatprep.subr.mxu0 0.0
        %4272 = vmatpush1.msra.mxu0 %v2596
        %4273 = vmatprep.subr.mxu0 0.0
        %4274 = vmatpush1.msra.mxu0 %v2597
        %4275 = vmatprep.subr.mxu0 0.0
        %4276 = vmatpush1.msra.mxu0 %v2598
        %4277 = vmatprep.subr.mxu0 0.0
        %4278 = vmatpush1.msra.mxu0 %v2599
        %4279 = vmatprep.subr.mxu0 0.0
        %4280 = vmatpush1.msra.mxu0 %v2600
        %4281 = vmatprep.subr.mxu0 0.0
        %4282 = vmatpush1.msra.mxu0 %v2601
        %4283 = vmatprep.subr.mxu0 0.0
        %4284 = vmatpush1.msra.mxu0 %v2602
        %4285 = vmatprep.subr.mxu0 0.0
        %4286 = vmatpush1.msra.mxu0 0.0
        %4287 = vmatprep.subr.mxu0 0.0
        %4288 = vmatpush1.msra.mxu0 0.0
        %4289 = vmatprep.subr.mxu0 0.0
        %4290 = vmatpush1.msra.mxu0 0.0
        %4291 = vmatprep.subr.mxu0 0.0
        %4292 = vmatpush1.msra.mxu0 0.0
        %4293 = vmatprep.subr.mxu0 0.0
        %4294 = vmatpush1.msra.mxu0 0.0
        %4295 = vmatprep.subr.mxu0 0.0
        %4296 = vmatpush1.msra.mxu0 0.0
        %4297 = vmatprep.subr.mxu0 0.0
        %4298 = vmatpush1.msra.mxu0 0.0
        %4299 = vmatprep.subr.mxu0 0.0
        %4300 = vmatpush1.msra.mxu0 0.0
        %4301 = vmatprep.subr.mxu0 0.0
        %4302 = vmatpush1.msra.mxu0 0.0
        %4303 = vmatprep.subr.mxu0 0.0
        %4304 = vmatpush1.msra.mxu0 0.0
        %4305 = vmatprep.subr.mxu0 0.0
        %4306 = vmatpush1.msra.mxu0 0.0
        %4307 = vmatprep.subr.mxu0 0.0
        %4308 = vmatpush1.msra.mxu0 0.0
        %4309 = vmatprep.subr.mxu0 0.0
        %4310 = vmatpush1.msra.mxu0 0.0
        %4311 = vmatprep.subr.mxu0 0.0
        %4312 = vmatpush1.msra.mxu0 0.0
        %4313 = vmatprep.subr.mxu0 0.0
        %4314 = vmatpush1.msra.mxu0 0.0
        %4315 = vmatprep.subr.mxu0 0.0
        %4316 = vmatpush1.msra.mxu0 0.0
        %4317 = vmatprep.mubr.f32.mxu0 0.0
        %4318 = vmatmul.mubr.f32.gmra.mrb[0].mxu0 %v4245
        %v4319 = vpop.f32.mrb[0].mxu0
        %v4320 = vadd.f32 0.0, %v4319
        %v4321 = vpop.f32.mrb[0].mxu0
        %4322 = vmatprep.mubr.f32.mxu0 0.0
        %4323 = vmatmul.mubr.f32.gmra.mrb[0].mxu0 %v4246
        %v4324 = vpop.f32.mrb[0].mxu0
        %v4325 = vadd.f32 0.0, %v4324
        %v4326 = vpop.f32.mrb[0].mxu0
        %4327 = vmatprep.mubr.f32.mxu0 0.0
        %4328 = vmatmul.mubr.f32.gmra.mrb[0].mxu0 %v4247
        %v4329 = vpop.f32.mrb[0].mxu0
        %v4330 = vadd.f32 0.0, %v4329
        %v4331 = vpop.f32.mrb[0].mxu0
        %4332 = vmatprep.mubr.f32.mxu0 0.0
        %4333 = vmatmul.mubr.f32.gmra.mrb[0].mxu0 %v4248
        %v4334 = vpop.f32.mrb[0].mxu0
        %v4335 = vadd.f32 0.0, %v4334
        %v4336 = vpop.f32.mrb[0].mxu0
        %4337 = vmatprep.mubr.f32.mxu0 0.0
        %4338 = vmatmul.mubr.f32.gmra.mrb[0].mxu0 %v4249
        %v4339 = vpop.f32.mrb[0].mxu0
        %v4340 = vadd.f32 0.0, %v4339
        %v4341 = vpop.f32.mrb[0].mxu0
        %4342 = vmatprep.mubr.f32.mxu0 0.0
        %4343 = vmatmul.mubr.f32.gmra.mrb[0].mxu0 %v4250
        %v4344 = vpop.f32.mrb[0].mxu0
        %v4345 = vadd.f32 0.0, %v4344
        %v4346 = vpop.f32.mrb[0].mxu0
        %4347 = vmatprep.mubr.f32.mxu0 0.0
        %4348 = vmatmul.mubr.f32.gmra.mrb[0].mxu0 %v4251
        %v4349 = vpop.f32.mrb[0].mxu0
        %v4350 = vadd.f32 0.0, %v4349
        %v4351 = vpop.f32.mrb[0].mxu0
        %4352 = vmatprep.mubr.f32.mxu0 0.0
        %4353 = vmatmul.mubr.f32.gmra.mrb[0].mxu0 %v4252
        %v4354 = vpop.f32.mrb[0].mxu0
        %v4355 = vadd.f32 0.0, %v4354
        %v4356 = vpop.f32.mrb[0].mxu0
        %4357 = vdwg.mxu0
        %v4358 = vadd.f32 %v4237, %v4320
        %v4359 = vadd.f32 %v4238, %v4325
        %v4360 = vadd.f32 %v4239, %v4330
        %v4361 = vadd.f32 %v4240, %v4335
        %v4362 = vadd.f32 %v4241, %v4340
        %v4363 = vadd.f32 %v4242, %v4345
        %v4364 = vadd.f32 %v4243, %v4350
        %v4365 = vadd.f32 %v4244, %v4355
        %v4366 = vld [vmem:[%s1977 + $0x2] sm:$0xff]
        %v4367 = vld [vmem:[%s1977 + $0x12] sm:$0xff]
        %v4368 = vld [vmem:[%s1977 + $0x22] sm:$0xff]
        %v4369 = vld [vmem:[%s1977 + $0x32] sm:$0xff]
        %v4370 = vld [vmem:[%s1977 + $0x42] sm:$0xff]
        %v4371 = vld [vmem:[%s1977 + $0x52] sm:$0xff]
        %v4372 = vld [vmem:[%s1977 + $0x62] sm:$0xff]
        %v4373 = vld [vmem:[%s1977 + $0x72] sm:$0xff]
        %4374 = vmatprep.subr.mxu0 0.0
        %4375 = vmatpush1.msra.mxu0 %v2604
        %4376 = vmatprep.subr.mxu0 0.0
        %4377 = vmatpush1.msra.mxu0 %v2605
        %4378 = vmatprep.subr.mxu0 0.0
        %4379 = vmatpush1.msra.mxu0 %v2606
        %4380 = vmatprep.subr.mxu0 0.0
        %4381 = vmatpush1.msra.mxu0 %v2607
        %4382 = vmatprep.subr.mxu0 0.0
        %4383 = vmatpush1.msra.mxu0 %v2608
        %4384 = vmatprep.subr.mxu0 0.0
        %4385 = vmatpush1.msra.mxu0 %v2609
        %4386 = vmatprep.subr.mxu0 0.0
        %4387 = vmatpush1.msra.mxu0 %v2610
        %4388 = vmatprep.subr.mxu0 0.0
        %4389 = vmatpush1.msra.mxu0 %v2611
        %4390 = vmatprep.subr.mxu0 0.0
        %4391 = vmatpush1.msra.mxu0 %v2612
        %4392 = vmatprep.subr.mxu0 0.0
        %4393 = vmatpush1.msra.mxu0 %v2613
        %4394 = vmatprep.subr.mxu0 0.0
        %4395 = vmatpush1.msra.mxu0 %v2614
        %4396 = vmatprep.subr.mxu0 0.0
        %4397 = vmatpush1.msra.mxu0 %v2615
        %4398 = vmatprep.subr.mxu0 0.0
        %4399 = vmatpush1.msra.mxu0 %v2616
        %4400 = vmatprep.subr.mxu0 0.0
        %4401 = vmatpush1.msra.mxu0 %v2617
        %4402 = vmatprep.subr.mxu0 0.0
        %4403 = vmatpush1.msra.mxu0 %v2618
        %4404 = vmatprep.subr.mxu0 0.0
        %4405 = vmatpush1.msra.mxu0 %v2619
        %4406 = vmatprep.subr.mxu0 0.0
        %4407 = vmatpush1.msra.mxu0 0.0
        %4408 = vmatprep.subr.mxu0 0.0
        %4409 = vmatpush1.msra.mxu0 0.0
        %4410 = vmatprep.subr.mxu0 0.0
        %4411 = vmatpush1.msra.mxu0 0.0
        %4412 = vmatprep.subr.mxu0 0.0
        %4413 = vmatpush1.msra.mxu0 0.0
        %4414 = vmatprep.subr.mxu0 0.0
        %4415 = vmatpush1.msra.mxu0 0.0
        %4416 = vmatprep.subr.mxu0 0.0
        %4417 = vmatpush1.msra.mxu0 0.0
        %4418 = vmatprep.subr.mxu0 0.0
        %4419 = vmatpush1.msra.mxu0 0.0
        %4420 = vmatprep.subr.mxu0 0.0
        %4421 = vmatpush1.msra.mxu0 0.0
        %4422 = vmatprep.subr.mxu0 0.0
        %4423 = vmatpush1.msra.mxu0 0.0
        %4424 = vmatprep.subr.mxu0 0.0
        %4425 = vmatpush1.msra.mxu0 0.0
        %4426 = vmatprep.subr.mxu0 0.0
        %4427 = vmatpush1.msra.mxu0 0.0
        %4428 = vmatprep.subr.mxu0 0.0
        %4429 = vmatpush1.msra.mxu0 0.0
        %4430 = vmatprep.subr.mxu0 0.0
        %4431 = vmatpush1.msra.mxu0 0.0
        %4432 = vmatprep.subr.mxu0 0.0
        %4433 = vmatpush1.msra.mxu0 0.0
        %4434 = vmatprep.subr.mxu0 0.0
        %4435 = vmatpush1.msra.mxu0 0.0
        %4436 = vmatprep.subr.mxu0 0.0
        %4437 = vmatpush1.msra.mxu0 0.0
        %4438 = vmatprep.mubr.f32.mxu0 0.0
        %4439 = vmatmul.mubr.f32.gmra.mrb[0].mxu0 %v4366
        %v4440 = vpop.f32.mrb[0].mxu0
        %v4441 = vadd.f32 0.0, %v4440
        %v4442 = vpop.f32.mrb[0].mxu0
        %4443 = vmatprep.mubr.f32.mxu0 0.0
        %4444 = vmatmul.mubr.f32.gmra.mrb[0].mxu0 %v4367
        %v4445 = vpop.f32.mrb[0].mxu0
        %v4446 = vadd.f32 0.0, %v4445
        %v4447 = vpop.f32.mrb[0].mxu0
        %4448 = vmatprep.mubr.f32.mxu0 0.0
        %4449 = vmatmul.mubr.f32.gmra.mrb[0].mxu0 %v4368
        %v4450 = vpop.f32.mrb[0].mxu0
        %v4451 = vadd.f32 0.0, %v4450
        %v4452 = vpop.f32.mrb[0].mxu0
        %4453 = vmatprep.mubr.f32.mxu0 0.0
        %4454 = vmatmul.mubr.f32.gmra.mrb[0].mxu0 %v4369
        %v4455 = vpop.f32.mrb[0].mxu0
        %v4456 = vadd.f32 0.0, %v4455
        %v4457 = vpop.f32.mrb[0].mxu0
        %4458 = vmatprep.mubr.f32.mxu0 0.0
        %4459 = vmatmul.mubr.f32.gmra.mrb[0].mxu0 %v4370
        %v4460 = vpop.f32.mrb[0].mxu0
        %v4461 = vadd.f32 0.0, %v4460
        %v4462 = vpop.f32.mrb[0].mxu0
        %4463 = vmatprep.mubr.f32.mxu0 0.0
        %4464 = vmatmul.mubr.f32.gmra.mrb[0].mxu0 %v4371
        %v4465 = vpop.f32.mrb[0].mxu0
        %v4466 = vadd.f32 0.0, %v4465
        %v4467 = vpop.f32.mrb[0].mxu0
        %4468 = vmatprep.mubr.f32.mxu0 0.0
        %4469 = vmatmul.mubr.f32.gmra.mrb[0].mxu0 %v4372
        %v4470 = vpop.f32.mrb[0].mxu0
        %v4471 = vadd.f32 0.0, %v4470
        %v4472 = vpop.f32.mrb[0].mxu0
        %4473 = vmatprep.mubr.f32.mxu0 0.0
        %4474 = vmatmul.mubr.f32.gmra.mrb[0].mxu0 %v4373
        %v4475 = vpop.f32.mrb[0].mxu0
        %v4476 = vadd.f32 0.0, %v4475
        %v4477 = vpop.f32.mrb[0].mxu0
        %4478 = vdwg.mxu0
        %v4479 = vadd.f32 %v4358, %v4441
        %v4480 = vadd.f32 %v4359, %v4446
        %v4481 = vadd.f32 %v4360, %v4451
        %v4482 = vadd.f32 %v4361, %v4456
        %v4483 = vadd.f32 %v4362, %v4461
        %v4484 = vadd.f32 %v4363, %v4466
        %v4485 = vadd.f32 %v4364, %v4471
        %v4486 = vadd.f32 %v4365, %v4476
        %v4487 = vld [vmem:[%s2341 + $0x1] sm:$0xff]
        %v4488 = vld [vmem:[%s2341 + $0x11] sm:$0xff]
        %v4489 = vld [vmem:[%s2341 + $0x21] sm:$0xff]
        %v4490 = vld [vmem:[%s2341 + $0x31] sm:$0xff]
        %v4491 = vld [vmem:[%s2341 + $0x41] sm:$0xff]
        %v4492 = vld [vmem:[%s2341 + $0x51] sm:$0xff]
        %v4493 = vld [vmem:[%s2341 + $0x61] sm:$0xff]
        %v4494 = vld [vmem:[%s2341 + $0x71] sm:$0xff]
        %4495 = vmatprep.subr.mxu0 0.0
        %4496 = vmatpush1.msra.mxu0 %v2621
        %4497 = vmatprep.subr.mxu0 0.0
        %4498 = vmatpush1.msra.mxu0 %v2622
        %4499 = vmatprep.subr.mxu0 0.0
        %4500 = vmatpush1.msra.mxu0 %v2623
        %4501 = vmatprep.subr.mxu0 0.0
        %4502 = vmatpush1.msra.mxu0 %v2624
        %4503 = vmatprep.subr.mxu0 0.0
        %4504 = vmatpush1.msra.mxu0 %v2625
        %4505 = vmatprep.subr.mxu0 0.0
        %4506 = vmatpush1.msra.mxu0 %v2626
        %4507 = vmatprep.subr.mxu0 0.0
        %4508 = vmatpush1.msra.mxu0 %v2627
        %4509 = vmatprep.subr.mxu0 0.0
        %4510 = vmatpush1.msra.mxu0 %v2628
        %4511 = vmatprep.subr.mxu0 0.0
        %4512 = vmatpush1.msra.mxu0 %v2629
        %4513 = vmatprep.subr.mxu0 0.0
        %4514 = vmatpush1.msra.mxu0 %v2630
        %4515 = vmatprep.subr.mxu0 0.0
        %4516 = vmatpush1.msra.mxu0 %v2631
        %4517 = vmatprep.subr.mxu0 0.0
        %4518 = vmatpush1.msra.mxu0 %v2632
        %4519 = vmatprep.subr.mxu0 0.0
        %4520 = vmatpush1.msra.mxu0 %v2633
        %4521 = vmatprep.subr.mxu0 0.0
        %4522 = vmatpush1.msra.mxu0 %v2634
        %4523 = vmatprep.subr.mxu0 0.0
        %4524 = vmatpush1.msra.mxu0 %v2635
        %4525 = vmatprep.subr.mxu0 0.0
        %4526 = vmatpush1.msra.mxu0 %v2636
        %4527 = vmatprep.subr.mxu0 0.0
        %4528 = vmatpush1.msra.mxu0 0.0
        %4529 = vmatprep.subr.mxu0 0.0
        %4530 = vmatpush1.msra.mxu0 0.0
        %4531 = vmatprep.subr.mxu0 0.0
        %4532 = vmatpush1.msra.mxu0 0.0
        %4533 = vmatprep.subr.mxu0 0.0
        %4534 = vmatpush1.msra.mxu0 0.0
        %4535 = vmatprep.subr.mxu0 0.0
        %4536 = vmatpush1.msra.mxu0 0.0
        %4537 = vmatprep.subr.mxu0 0.0
        %4538 = vmatpush1.msra.mxu0 0.0
        %4539 = vmatprep.subr.mxu0 0.0
        %4540 = vmatpush1.msra.mxu0 0.0
        %4541 = vmatprep.subr.mxu0 0.0
        %4542 = vmatpush1.msra.mxu0 0.0
        %4543 = vmatprep.subr.mxu0 0.0
        %4544 = vmatpush1.msra.mxu0 0.0
        %4545 = vmatprep.subr.mxu0 0.0
        %4546 = vmatpush1.msra.mxu0 0.0
        %4547 = vmatprep.subr.mxu0 0.0
        %4548 = vmatpush1.msra.mxu0 0.0
        %4549 = vmatprep.subr.mxu0 0.0
        %4550 = vmatpush1.msra.mxu0 0.0
        %4551 = vmatprep.subr.mxu0 0.0
        %4552 = vmatpush1.msra.mxu0 0.0
        %4553 = vmatprep.subr.mxu0 0.0
        %4554 = vmatpush1.msra.mxu0 0.0
        %4555 = vmatprep.subr.mxu0 0.0
        %4556 = vmatpush1.msra.mxu0 0.0
        %4557 = vmatprep.subr.mxu0 0.0
        %4558 = vmatpush1.msra.mxu0 0.0
        %4559 = vmatprep.mubr.f32.mxu0 0.0
        %4560 = vmatmul.mubr.f32.gmra.mrb[0].mxu0 %v4487
        %v4561 = vpop.f32.mrb[0].mxu0
        %v4562 = vadd.f32 0.0, %v4561
        %v4563 = vpop.f32.mrb[0].mxu0
        %4564 = vmatprep.mubr.f32.mxu0 0.0
        %4565 = vmatmul.mubr.f32.gmra.mrb[0].mxu0 %v4488
        %v4566 = vpop.f32.mrb[0].mxu0
        %v4567 = vadd.f32 0.0, %v4566
        %v4568 = vpop.f32.mrb[0].mxu0
        %4569 = vmatprep.mubr.f32.mxu0 0.0
        %4570 = vmatmul.mubr.f32.gmra.mrb[0].mxu0 %v4489
        %v4571 = vpop.f32.mrb[0].mxu0
        %v4572 = vadd.f32 0.0, %v4571
        %v4573 = vpop.f32.mrb[0].mxu0
        %4574 = vmatprep.mubr.f32.mxu0 0.0
        %4575 = vmatmul.mubr.f32.gmra.mrb[0].mxu0 %v4490
        %v4576 = vpop.f32.mrb[0].mxu0
        %v4577 = vadd.f32 0.0, %v4576
        %v4578 = vpop.f32.mrb[0].mxu0
        %4579 = vmatprep.mubr.f32.mxu0 0.0
        %4580 = vmatmul.mubr.f32.gmra.mrb[0].mxu0 %v4491
        %v4581 = vpop.f32.mrb[0].mxu0
        %v4582 = vadd.f32 0.0, %v4581
        %v4583 = vpop.f32.mrb[0].mxu0
        %4584 = vmatprep.mubr.f32.mxu0 0.0
        %4585 = vmatmul.mubr.f32.gmra.mrb[0].mxu0 %v4492
        %v4586 = vpop.f32.mrb[0].mxu0
        %v4587 = vadd.f32 0.0, %v4586
        %v4588 = vpop.f32.mrb[0].mxu0
        %4589 = vmatprep.mubr.f32.mxu0 0.0
        %4590 = vmatmul.mubr.f32.gmra.mrb[0].mxu0 %v4493
        %v4591 = vpop.f32.mrb[0].mxu0
        %v4592 = vadd.f32 0.0, %v4591
        %v4593 = vpop.f32.mrb[0].mxu0
        %4594 = vmatprep.mubr.f32.mxu0 0.0
        %4595 = vmatmul.mubr.f32.gmra.mrb[0].mxu0 %v4494
        %v4596 = vpop.f32.mrb[0].mxu0
        %v4597 = vadd.f32 0.0, %v4596
        %v4598 = vpop.f32.mrb[0].mxu0
        %4599 = vdwg.mxu0
        %v4600 = vadd.f32 %v4479, %v4562
        %v4601 = vadd.f32 %v4480, %v4567
        %v4602 = vadd.f32 %v4481, %v4572
        %v4603 = vadd.f32 %v4482, %v4577
        %v4604 = vadd.f32 %v4483, %v4582
        %v4605 = vadd.f32 %v4484, %v4587
        %v4606 = vadd.f32 %v4485, %v4592
        %v4607 = vadd.f32 %v4486, %v4597
        %v4608 = vld [vmem:[%s2502 + $0x1] sm:$0xff]
        %v4609 = vld [vmem:[%s2502 + $0x11] sm:$0xff]
        %v4610 = vld [vmem:[%s2502 + $0x21] sm:$0xff]
        %v4611 = vld [vmem:[%s2502 + $0x31] sm:$0xff]
        %v4612 = vld [vmem:[%s2502 + $0x41] sm:$0xff]
        %v4613 = vld [vmem:[%s2502 + $0x51] sm:$0xff]
        %v4614 = vld [vmem:[%s2502 + $0x61] sm:$0xff]
        %v4615 = vld [vmem:[%s2502 + $0x71] sm:$0xff]
        %4616 = vmatprep.subr.mxu0 0.0
        %4617 = vmatpush1.msra.mxu0 %v2638
        %4618 = vmatprep.subr.mxu0 0.0
        %4619 = vmatpush1.msra.mxu0 %v2639
        %4620 = vmatprep.subr.mxu0 0.0
        %4621 = vmatpush1.msra.mxu0 %v2640
        %4622 = vmatprep.subr.mxu0 0.0
        %4623 = vmatpush1.msra.mxu0 %v2641
        %4624 = vmatprep.subr.mxu0 0.0
        %4625 = vmatpush1.msra.mxu0 %v2642
        %4626 = vmatprep.subr.mxu0 0.0
        %4627 = vmatpush1.msra.mxu0 %v2643
        %4628 = vmatprep.subr.mxu0 0.0
        %4629 = vmatpush1.msra.mxu0 %v2644
        %4630 = vmatprep.subr.mxu0 0.0
        %4631 = vmatpush1.msra.mxu0 %v2645
        %4632 = vmatprep.subr.mxu0 0.0
        %4633 = vmatpush1.msra.mxu0 %v2646
        %4634 = vmatprep.subr.mxu0 0.0
        %4635 = vmatpush1.msra.mxu0 %v2647
        %4636 = vmatprep.subr.mxu0 0.0
        %4637 = vmatpush1.msra.mxu0 %v2648
        %4638 = vmatprep.subr.mxu0 0.0
        %4639 = vmatpush1.msra.mxu0 %v2649
        %4640 = vmatprep.subr.mxu0 0.0
        %4641 = vmatpush1.msra.mxu0 %v2650
        %4642 = vmatprep.subr.mxu0 0.0
        %4643 = vmatpush1.msra.mxu0 %v2651
        %4644 = vmatprep.subr.mxu0 0.0
        %4645 = vmatpush1.msra.mxu0 %v2652
        %4646 = vmatprep.subr.mxu0 0.0
        %4647 = vmatpush1.msra.mxu0 %v2653
        %4648 = vmatprep.subr.mxu0 0.0
        %4649 = vmatpush1.msra.mxu0 0.0
        %4650 = vmatprep.subr.mxu0 0.0
        %4651 = vmatpush1.msra.mxu0 0.0
        %4652 = vmatprep.subr.mxu0 0.0
        %4653 = vmatpush1.msra.mxu0 0.0
        %4654 = vmatprep.subr.mxu0 0.0
        %4655 = vmatpush1.msra.mxu0 0.0
        %4656 = vmatprep.subr.mxu0 0.0
        %4657 = vmatpush1.msra.mxu0 0.0
        %4658 = vmatprep.subr.mxu0 0.0
        %4659 = vmatpush1.msra.mxu0 0.0
        %4660 = vmatprep.subr.mxu0 0.0
        %4661 = vmatpush1.msra.mxu0 0.0
        %4662 = vmatprep.subr.mxu0 0.0
        %4663 = vmatpush1.msra.mxu0 0.0
        %4664 = vmatprep.subr.mxu0 0.0
        %4665 = vmatpush1.msra.mxu0 0.0
        %4666 = vmatprep.subr.mxu0 0.0
        %4667 = vmatpush1.msra.mxu0 0.0
        %4668 = vmatprep.subr.mxu0 0.0
        %4669 = vmatpush1.msra.mxu0 0.0
        %4670 = vmatprep.subr.mxu0 0.0
        %4671 = vmatpush1.msra.mxu0 0.0
        %4672 = vmatprep.subr.mxu0 0.0
        %4673 = vmatpush1.msra.mxu0 0.0
        %4674 = vmatprep.subr.mxu0 0.0
        %4675 = vmatpush1.msra.mxu0 0.0
        %4676 = vmatprep.subr.mxu0 0.0
        %4677 = vmatpush1.msra.mxu0 0.0
        %4678 = vmatprep.subr.mxu0 0.0
        %4679 = vmatpush1.msra.mxu0 0.0
        %4680 = vmatprep.mubr.f32.mxu0 0.0
        %4681 = vmatmul.mubr.f32.gmra.mrb[0].mxu0 %v4608
        %v4682 = vpop.f32.mrb[0].mxu0
        %v4683 = vadd.f32 0.0, %v4682
        %v4684 = vpop.f32.mrb[0].mxu0
        %4685 = vmatprep.mubr.f32.mxu0 0.0
        %4686 = vmatmul.mubr.f32.gmra.mrb[0].mxu0 %v4609
        %v4687 = vpop.f32.mrb[0].mxu0
        %v4688 = vadd.f32 0.0, %v4687
        %v4689 = vpop.f32.mrb[0].mxu0
        %4690 = vmatprep.mubr.f32.mxu0 0.0
        %4691 = vmatmul.mubr.f32.gmra.mrb[0].mxu0 %v4610
        %v4692 = vpop.f32.mrb[0].mxu0
        %v4693 = vadd.f32 0.0, %v4692
        %v4694 = vpop.f32.mrb[0].mxu0
        %4695 = vmatprep.mubr.f32.mxu0 0.0
        %4696 = vmatmul.mubr.f32.gmra.mrb[0].mxu0 %v4611
        %v4697 = vpop.f32.mrb[0].mxu0
        %v4698 = vadd.f32 0.0, %v4697
        %v4699 = vpop.f32.mrb[0].mxu0
        %4700 = vmatprep.mubr.f32.mxu0 0.0
        %4701 = vmatmul.mubr.f32.gmra.mrb[0].mxu0 %v4612
        %v4702 = vpop.f32.mrb[0].mxu0
        %v4703 = vadd.f32 0.0, %v4702
        %v4704 = vpop.f32.mrb[0].mxu0
        %4705 = vmatprep.mubr.f32.mxu0 0.0
        %4706 = vmatmul.mubr.f32.gmra.mrb[0].mxu0 %v4613
        %v4707 = vpop.f32.mrb[0].mxu0
        %v4708 = vadd.f32 0.0, %v4707
        %v4709 = vpop.f32.mrb[0].mxu0
        %4710 = vmatprep.mubr.f32.mxu0 0.0
        %4711 = vmatmul.mubr.f32.gmra.mrb[0].mxu0 %v4614
        %v4712 = vpop.f32.mrb[0].mxu0
        %v4713 = vadd.f32 0.0, %v4712
        %v4714 = vpop.f32.mrb[0].mxu0
        %4715 = vmatprep.mubr.f32.mxu0 0.0
        %4716 = vmatmul.mubr.f32.gmra.mrb[0].mxu0 %v4615
        %v4717 = vpop.f32.mrb[0].mxu0
        %v4718 = vadd.f32 0.0, %v4717
        %v4719 = vpop.f32.mrb[0].mxu0
        %4720 = vdwg.mxu0
        %v4721 = vadd.f32 %v4600, %v4683
        %v4722 = vadd.f32 %v4601, %v4688
        %v4723 = vadd.f32 %v4602, %v4693
        %v4724 = vadd.f32 %v4603, %v4698
        %v4725 = vadd.f32 %v4604, %v4703
        %v4726 = vadd.f32 %v4605, %v4708
        %v4727 = vadd.f32 %v4606, %v4713
        %v4728 = vadd.f32 %v4607, %v4718
        %v4729 = vld [vmem:[%s2341 + $0x2] sm:$0xff]
        %v4730 = vld [vmem:[%s2341 + $0x12] sm:$0xff]
        %v4731 = vld [vmem:[%s2341 + $0x22] sm:$0xff]
        %v4732 = vld [vmem:[%s2341 + $0x32] sm:$0xff]
        %v4733 = vld [vmem:[%s2341 + $0x42] sm:$0xff]
        %v4734 = vld [vmem:[%s2341 + $0x52] sm:$0xff]
        %v4735 = vld [vmem:[%s2341 + $0x62] sm:$0xff]
        %v4736 = vld [vmem:[%s2341 + $0x72] sm:$0xff]
        %4737 = vmatprep.subr.mxu0 0.0
        %4738 = vmatpush1.msra.mxu0 %v2655
        %4739 = vmatprep.subr.mxu0 0.0
        %4740 = vmatpush1.msra.mxu0 %v2656
        %4741 = vmatprep.subr.mxu0 0.0
        %4742 = vmatpush1.msra.mxu0 %v2657
        %4743 = vmatprep.subr.mxu0 0.0
        %4744 = vmatpush1.msra.mxu0 %v2658
        %4745 = vmatprep.subr.mxu0 0.0
        %4746 = vmatpush1.msra.mxu0 %v2659
        %4747 = vmatprep.subr.mxu0 0.0
        %4748 = vmatpush1.msra.mxu0 %v2660
        %4749 = vmatprep.subr.mxu0 0.0
        %4750 = vmatpush1.msra.mxu0 %v2661
        %4751 = vmatprep.subr.mxu0 0.0
        %4752 = vmatpush1.msra.mxu0 %v2662
        %4753 = vmatprep.subr.mxu0 0.0
        %4754 = vmatpush1.msra.mxu0 %v2663
        %4755 = vmatprep.subr.mxu0 0.0
        %4756 = vmatpush1.msra.mxu0 %v2664
        %4757 = vmatprep.subr.mxu0 0.0
        %4758 = vmatpush1.msra.mxu0 %v2665
        %4759 = vmatprep.subr.mxu0 0.0
        %4760 = vmatpush1.msra.mxu0 %v2666
        %4761 = vmatprep.subr.mxu0 0.0
        %4762 = vmatpush1.msra.mxu0 %v2667
        %4763 = vmatprep.subr.mxu0 0.0
        %4764 = vmatpush1.msra.mxu0 %v2668
        %4765 = vmatprep.subr.mxu0 0.0
        %4766 = vmatpush1.msra.mxu0 %v2669
        %4767 = vmatprep.subr.mxu0 0.0
        %4768 = vmatpush1.msra.mxu0 %v2670
        %4769 = vmatprep.subr.mxu0 0.0
        %4770 = vmatpush1.msra.mxu0 0.0
        %4771 = vmatprep.subr.mxu0 0.0
        %4772 = vmatpush1.msra.mxu0 0.0
        %4773 = vmatprep.subr.mxu0 0.0
        %4774 = vmatpush1.msra.mxu0 0.0
        %4775 = vmatprep.subr.mxu0 0.0
        %4776 = vmatpush1.msra.mxu0 0.0
        %4777 = vmatprep.subr.mxu0 0.0
        %4778 = vmatpush1.msra.mxu0 0.0
        %4779 = vmatprep.subr.mxu0 0.0
        %4780 = vmatpush1.msra.mxu0 0.0
        %4781 = vmatprep.subr.mxu0 0.0
        %4782 = vmatpush1.msra.mxu0 0.0
        %4783 = vmatprep.subr.mxu0 0.0
        %4784 = vmatpush1.msra.mxu0 0.0
        %4785 = vmatprep.subr.mxu0 0.0
        %4786 = vmatpush1.msra.mxu0 0.0
        %4787 = vmatprep.subr.mxu0 0.0
        %4788 = vmatpush1.msra.mxu0 0.0
        %4789 = vmatprep.subr.mxu0 0.0
        %4790 = vmatpush1.msra.mxu0 0.0
        %4791 = vmatprep.subr.mxu0 0.0
        %4792 = vmatpush1.msra.mxu0 0.0
        %4793 = vmatprep.subr.mxu0 0.0
        %4794 = vmatpush1.msra.mxu0 0.0
        %4795 = vmatprep.subr.mxu0 0.0
        %4796 = vmatpush1.msra.mxu0 0.0
        %4797 = vmatprep.subr.mxu0 0.0
        %4798 = vmatpush1.msra.mxu0 0.0
        %4799 = vmatprep.subr.mxu0 0.0
        %4800 = vmatpush1.msra.mxu0 0.0
        %4801 = vmatprep.mubr.f32.mxu0 0.0
        %4802 = vmatmul.mubr.f32.gmra.mrb[0].mxu0 %v4729
        %v4803 = vpop.f32.mrb[0].mxu0
        %v4804 = vadd.f32 0.0, %v4803
        %v4805 = vpop.f32.mrb[0].mxu0
        %4806 = vmatprep.mubr.f32.mxu0 0.0
        %4807 = vmatmul.mubr.f32.gmra.mrb[0].mxu0 %v4730
        %v4808 = vpop.f32.mrb[0].mxu0
        %v4809 = vadd.f32 0.0, %v4808
        %v4810 = vpop.f32.mrb[0].mxu0
        %4811 = vmatprep.mubr.f32.mxu0 0.0
        %4812 = vmatmul.mubr.f32.gmra.mrb[0].mxu0 %v4731
        %v4813 = vpop.f32.mrb[0].mxu0
        %v4814 = vadd.f32 0.0, %v4813
        %v4815 = vpop.f32.mrb[0].mxu0
        %4816 = vmatprep.mubr.f32.mxu0 0.0
        %4817 = vmatmul.mubr.f32.gmra.mrb[0].mxu0 %v4732
        %v4818 = vpop.f32.mrb[0].mxu0
        %v4819 = vadd.f32 0.0, %v4818
        %v4820 = vpop.f32.mrb[0].mxu0
        %4821 = vmatprep.mubr.f32.mxu0 0.0
        %4822 = vmatmul.mubr.f32.gmra.mrb[0].mxu0 %v4733
        %v4823 = vpop.f32.mrb[0].mxu0
        %v4824 = vadd.f32 0.0, %v4823
        %v4825 = vpop.f32.mrb[0].mxu0
        %4826 = vmatprep.mubr.f32.mxu0 0.0
        %4827 = vmatmul.mubr.f32.gmra.mrb[0].mxu0 %v4734
        %v4828 = vpop.f32.mrb[0].mxu0
        %v4829 = vadd.f32 0.0, %v4828
        %v4830 = vpop.f32.mrb[0].mxu0
        %4831 = vmatprep.mubr.f32.mxu0 0.0
        %4832 = vmatmul.mubr.f32.gmra.mrb[0].mxu0 %v4735
        %v4833 = vpop.f32.mrb[0].mxu0
        %v4834 = vadd.f32 0.0, %v4833
        %v4835 = vpop.f32.mrb[0].mxu0
        %4836 = vmatprep.mubr.f32.mxu0 0.0
        %4837 = vmatmul.mubr.f32.gmra.mrb[0].mxu0 %v4736
        %v4838 = vpop.f32.mrb[0].mxu0
        %v4839 = vadd.f32 0.0, %v4838
        %v4840 = vpop.f32.mrb[0].mxu0
        %4841 = vdwg.mxu0
        %v4842 = vadd.f32 %v4721, %v4804
        %v4843 = vadd.f32 %v4722, %v4809
        %v4844 = vadd.f32 %v4723, %v4814
        %v4845 = vadd.f32 %v4724, %v4819
        %v4846 = vadd.f32 %v4725, %v4824
        %v4847 = vadd.f32 %v4726, %v4829
        %v4848 = vadd.f32 %v4727, %v4834
        %v4849 = vadd.f32 %v4728, %v4839
        %v4850 = vadd.f32 %v4842, %v3751
        %v4851 = vadd.f32 %v4843, %v3751
        %v4852 = vadd.f32 %v4844, %v3751
        %v4853 = vadd.f32 %v4845, %v3751
        %v4854 = vadd.f32 %v4846, %v3751
        %v4855 = vadd.f32 %v4847, %v3751
        %v4856 = vadd.f32 %v4848, %v3751
        %v4857 = vadd.f32 %v4849, %v3751
        %v4858 = vmax.f32 %v4850, 0.0
        %v4859 = vmax.f32 %v4851, 0.0
        %v4860 = vmax.f32 %v4852, 0.0
        %v4861 = vmax.f32 %v4853, 0.0
        %v4862 = vmax.f32 %v4854, 0.0
        %v4863 = vmax.f32 %v4855, 0.0
        %v4864 = vmax.f32 %v4856, 0.0
        %v4865 = vmax.f32 %v4857, 0.0
        %4866 = vst [vmem:[%s365 + $0x8] sm:$0xff] %v4858
        %4867 = vst [vmem:[%s365 + $0x28] sm:$0xff] %v4859
        %4868 = vst [vmem:[%s365 + $0x48] sm:$0xff] %v4860
        %4869 = vst [vmem:[%s365 + $0x68] sm:$0xff] %v4861
        %4870 = vst [vmem:[%s365 + $0x88] sm:$0xff] %v4862
        %4871 = vst [vmem:[%s365 + $0xa8] sm:$0xff] %v4863
        %4872 = vst [vmem:[%s365 + $0xc8] sm:$0xff] %v4864
        %4873 = vst [vmem:[%s365 + $0xe8] sm:$0xff] %v4865
        %v4874 = vld [vmem:[%s2146] sm:$0xff]
        %v4875 = vld [vmem:[%s2146 + $0x10] sm:$0xff]
        %v4876 = vld [vmem:[%s2146 + $0x20] sm:$0xff]
        %v4877 = vld [vmem:[%s2146 + $0x30] sm:$0xff]
        %v4878 = vld [vmem:[%s2146 + $0x40] sm:$0xff]
        %v4879 = vld [vmem:[%s2146 + $0x50] sm:$0xff]
        %v4880 = vld [vmem:[%s2146 + $0x60] sm:$0xff]
        %v4881 = vld [vmem:[%s2146 + $0x70] sm:$0xff]
        %v4882 = vld [vmem:[%s1977 + $0x1] sm:$0xff]
        %v4883 = vld [vmem:[%s1977 + $0x11] sm:$0xff]
        %v4884 = vld [vmem:[%s1977 + $0x21] sm:$0xff]
        %v4885 = vld [vmem:[%s1977 + $0x31] sm:$0xff]
        %v4886 = vld [vmem:[%s1977 + $0x41] sm:$0xff]
        %v4887 = vld [vmem:[%s1977 + $0x51] sm:$0xff]
        %v4888 = vld [vmem:[%s1977 + $0x61] sm:$0xff]
        %v4889 = vld [vmem:[%s1977 + $0x71] sm:$0xff]
        %4890 = vmatprep.subr.mxu0 0.0
        %4891 = vmatpush1.msra.mxu0 %v2536
        %4892 = vmatprep.subr.mxu0 0.0
        %4893 = vmatpush1.msra.mxu0 %v2537
        %4894 = vmatprep.subr.mxu0 0.0
        %4895 = vmatpush1.msra.mxu0 %v2538
        %4896 = vmatprep.subr.mxu0 0.0
        %4897 = vmatpush1.msra.mxu0 %v2539
        %4898 = vmatprep.subr.mxu0 0.0
        %4899 = vmatpush1.msra.mxu0 %v2540
        %4900 = vmatprep.subr.mxu0 0.0
        %4901 = vmatpush1.msra.mxu0 %v2541
        %4902 = vmatprep.subr.mxu0 0.0
        %4903 = vmatpush1.msra.mxu0 %v2542
        %4904 = vmatprep.subr.mxu0 0.0
        %4905 = vmatpush1.msra.mxu0 %v2543
        %4906 = vmatprep.subr.mxu0 0.0
        %4907 = vmatpush1.msra.mxu0 %v2544
        %4908 = vmatprep.subr.mxu0 0.0
        %4909 = vmatpush1.msra.mxu0 %v2545
        %4910 = vmatprep.subr.mxu0 0.0
        %4911 = vmatpush1.msra.mxu0 %v2546
        %4912 = vmatprep.subr.mxu0 0.0
        %4913 = vmatpush1.msra.mxu0 %v2547
        %4914 = vmatprep.subr.mxu0 0.0
        %4915 = vmatpush1.msra.mxu0 %v2548
        %4916 = vmatprep.subr.mxu0 0.0
        %4917 = vmatpush1.msra.mxu0 %v2549
        %4918 = vmatprep.subr.mxu0 0.0
        %4919 = vmatpush1.msra.mxu0 %v2550
        %4920 = vmatprep.subr.mxu0 0.0
        %4921 = vmatpush1.msra.mxu0 %v2551
        %4922 = vmatprep.subr.mxu0 0.0
        %4923 = vmatpush1.msra.mxu0 0.0
        %4924 = vmatprep.subr.mxu0 0.0
        %4925 = vmatpush1.msra.mxu0 0.0
        %4926 = vmatprep.subr.mxu0 0.0
        %4927 = vmatpush1.msra.mxu0 0.0
        %4928 = vmatprep.subr.mxu0 0.0
        %4929 = vmatpush1.msra.mxu0 0.0
        %4930 = vmatprep.subr.mxu0 0.0
        %4931 = vmatpush1.msra.mxu0 0.0
        %4932 = vmatprep.subr.mxu0 0.0
        %4933 = vmatpush1.msra.mxu0 0.0
        %4934 = vmatprep.subr.mxu0 0.0
        %4935 = vmatpush1.msra.mxu0 0.0
        %4936 = vmatprep.subr.mxu0 0.0
        %4937 = vmatpush1.msra.mxu0 0.0
        %4938 = vmatprep.subr.mxu0 0.0
        %4939 = vmatpush1.msra.mxu0 0.0
        %4940 = vmatprep.subr.mxu0 0.0
        %4941 = vmatpush1.msra.mxu0 0.0
        %4942 = vmatprep.subr.mxu0 0.0
        %4943 = vmatpush1.msra.mxu0 0.0
        %4944 = vmatprep.subr.mxu0 0.0
        %4945 = vmatpush1.msra.mxu0 0.0
        %4946 = vmatprep.subr.mxu0 0.0
        %4947 = vmatpush1.msra.mxu0 0.0
        %4948 = vmatprep.subr.mxu0 0.0
        %4949 = vmatpush1.msra.mxu0 0.0
        %4950 = vmatprep.subr.mxu0 0.0
        %4951 = vmatpush1.msra.mxu0 0.0
        %4952 = vmatprep.subr.mxu0 0.0
        %4953 = vmatpush1.msra.mxu0 0.0
        %4954 = vmatprep.mubr.f32.mxu0 0.0
        %4955 = vmatmul.mubr.f32.gmra.mrb[0].mxu0 %v4882
        %v4956 = vpop.f32.mrb[0].mxu0
        %v4957 = vadd.f32 0.0, %v4956
        %v4958 = vpop.f32.mrb[0].mxu0
        %4959 = vmatprep.mubr.f32.mxu0 0.0
        %4960 = vmatmul.mubr.f32.gmra.mrb[0].mxu0 %v4883
        %v4961 = vpop.f32.mrb[0].mxu0
        %v4962 = vadd.f32 0.0, %v4961
        %v4963 = vpop.f32.mrb[0].mxu0
        %4964 = vmatprep.mubr.f32.mxu0 0.0
        %4965 = vmatmul.mubr.f32.gmra.mrb[0].mxu0 %v4884
        %v4966 = vpop.f32.mrb[0].mxu0
        %v4967 = vadd.f32 0.0, %v4966
        %v4968 = vpop.f32.mrb[0].mxu0
        %4969 = vmatprep.mubr.f32.mxu0 0.0
        %4970 = vmatmul.mubr.f32.gmra.mrb[0].mxu0 %v4885
        %v4971 = vpop.f32.mrb[0].mxu0
        %v4972 = vadd.f32 0.0, %v4971
        %v4973 = vpop.f32.mrb[0].mxu0
        %4974 = vmatprep.mubr.f32.mxu0 0.0
        %4975 = vmatmul.mubr.f32.gmra.mrb[0].mxu0 %v4886
        %v4976 = vpop.f32.mrb[0].mxu0
        %v4977 = vadd.f32 0.0, %v4976
        %v4978 = vpop.f32.mrb[0].mxu0
        %4979 = vmatprep.mubr.f32.mxu0 0.0
        %4980 = vmatmul.mubr.f32.gmra.mrb[0].mxu0 %v4887
        %v4981 = vpop.f32.mrb[0].mxu0
        %v4982 = vadd.f32 0.0, %v4981
        %v4983 = vpop.f32.mrb[0].mxu0
        %4984 = vmatprep.mubr.f32.mxu0 0.0
        %4985 = vmatmul.mubr.f32.gmra.mrb[0].mxu0 %v4888
        %v4986 = vpop.f32.mrb[0].mxu0
        %v4987 = vadd.f32 0.0, %v4986
        %v4988 = vpop.f32.mrb[0].mxu0
        %4989 = vmatprep.mubr.f32.mxu0 0.0
        %4990 = vmatmul.mubr.f32.gmra.mrb[0].mxu0 %v4889
        %v4991 = vpop.f32.mrb[0].mxu0
        %v4992 = vadd.f32 0.0, %v4991
        %v4993 = vpop.f32.mrb[0].mxu0
        %4994 = vdwg.mxu0
        %4995 = vmatprep.subr.mxu0 0.0
        %4996 = vmatpush1.msra.mxu0 %v2519
        %4997 = vmatprep.subr.mxu0 0.0
        %4998 = vmatpush1.msra.mxu0 %v2520
        %4999 = vmatprep.subr.mxu0 0.0
        %5000 = vmatpush1.msra.mxu0 %v2521
        %5001 = vmatprep.subr.mxu0 0.0
        %5002 = vmatpush1.msra.mxu0 %v2522
        %5003 = vmatprep.subr.mxu0 0.0
        %5004 = vmatpush1.msra.mxu0 %v2523
        %5005 = vmatprep.subr.mxu0 0.0
        %5006 = vmatpush1.msra.mxu0 %v2524
        %5007 = vmatprep.subr.mxu0 0.0
        %5008 = vmatpush1.msra.mxu0 %v2525
        %5009 = vmatprep.subr.mxu0 0.0
        %5010 = vmatpush1.msra.mxu0 %v2526
        %5011 = vmatprep.subr.mxu0 0.0
        %5012 = vmatpush1.msra.mxu0 %v2527
        %5013 = vmatprep.subr.mxu0 0.0
        %5014 = vmatpush1.msra.mxu0 %v2528
        %5015 = vmatprep.subr.mxu0 0.0
        %5016 = vmatpush1.msra.mxu0 %v2529
        %5017 = vmatprep.subr.mxu0 0.0
        %5018 = vmatpush1.msra.mxu0 %v2530
        %5019 = vmatprep.subr.mxu0 0.0
        %5020 = vmatpush1.msra.mxu0 %v2531
        %5021 = vmatprep.subr.mxu0 0.0
        %5022 = vmatpush1.msra.mxu0 %v2532
        %5023 = vmatprep.subr.mxu0 0.0
        %5024 = vmatpush1.msra.mxu0 %v2533
        %5025 = vmatprep.subr.mxu0 0.0
        %5026 = vmatpush1.msra.mxu0 %v2534
        %5027 = vmatprep.subr.mxu0 0.0
        %5028 = vmatpush1.msra.mxu0 0.0
        %5029 = vmatprep.subr.mxu0 0.0
        %5030 = vmatpush1.msra.mxu0 0.0
        %5031 = vmatprep.subr.mxu0 0.0
        %5032 = vmatpush1.msra.mxu0 0.0
        %5033 = vmatprep.subr.mxu0 0.0
        %5034 = vmatpush1.msra.mxu0 0.0
        %5035 = vmatprep.subr.mxu0 0.0
        %5036 = vmatpush1.msra.mxu0 0.0
        %5037 = vmatprep.subr.mxu0 0.0
        %5038 = vmatpush1.msra.mxu0 0.0
        %5039 = vmatprep.subr.mxu0 0.0
        %5040 = vmatpush1.msra.mxu0 0.0
        %5041 = vmatprep.subr.mxu0 0.0
        %5042 = vmatpush1.msra.mxu0 0.0
        %5043 = vmatprep.subr.mxu0 0.0
        %5044 = vmatpush1.msra.mxu0 0.0
        %5045 = vmatprep.subr.mxu0 0.0
        %5046 = vmatpush1.msra.mxu0 0.0
        %5047 = vmatprep.subr.mxu0 0.0
        %5048 = vmatpush1.msra.mxu0 0.0
        %5049 = vmatprep.subr.mxu0 0.0
        %5050 = vmatpush1.msra.mxu0 0.0
        %5051 = vmatprep.subr.mxu0 0.0
        %5052 = vmatpush1.msra.mxu0 0.0
        %5053 = vmatprep.subr.mxu0 0.0
        %5054 = vmatpush1.msra.mxu0 0.0
        %5055 = vmatprep.subr.mxu0 0.0
        %5056 = vmatpush1.msra.mxu0 0.0
        %5057 = vmatprep.subr.mxu0 0.0
        %5058 = vmatpush1.msra.mxu0 0.0
        %5059 = vmatprep.mubr.f32.mxu0 0.0
        %5060 = vmatmul.mubr.f32.gmra.mrb[0].mxu0 %v4874
        %v5061 = vpop.f32.mrb[0].mxu0
        %v5062 = vadd.f32 %v4957, %v5061
        %v5063 = vpop.f32.mrb[0].mxu0
        %5064 = vmatprep.mubr.f32.mxu0 0.0
        %5065 = vmatmul.mubr.f32.gmra.mrb[0].mxu0 %v4875
        %v5066 = vpop.f32.mrb[0].mxu0
        %v5067 = vadd.f32 %v4962, %v5066
        %v5068 = vpop.f32.mrb[0].mxu0
        %5069 = vmatprep.mubr.f32.mxu0 0.0
        %5070 = vmatmul.mubr.f32.gmra.mrb[0].mxu0 %v4876
        %v5071 = vpop.f32.mrb[0].mxu0
        %v5072 = vadd.f32 %v4967, %v5071
        %v5073 = vpop.f32.mrb[0].mxu0
        %5074 = vmatprep.mubr.f32.mxu0 0.0
        %5075 = vmatmul.mubr.f32.gmra.mrb[0].mxu0 %v4877
        %v5076 = vpop.f32.mrb[0].mxu0
        %v5077 = vadd.f32 %v4972, %v5076
        %v5078 = vpop.f32.mrb[0].mxu0
        %5079 = vmatprep.mubr.f32.mxu0 0.0
        %5080 = vmatmul.mubr.f32.gmra.mrb[0].mxu0 %v4878
        %v5081 = vpop.f32.mrb[0].mxu0
        %v5082 = vadd.f32 %v4977, %v5081
        %v5083 = vpop.f32.mrb[0].mxu0
        %5084 = vmatprep.mubr.f32.mxu0 0.0
        %5085 = vmatmul.mubr.f32.gmra.mrb[0].mxu0 %v4879
        %v5086 = vpop.f32.mrb[0].mxu0
        %v5087 = vadd.f32 %v4982, %v5086
        %v5088 = vpop.f32.mrb[0].mxu0
        %5089 = vmatprep.mubr.f32.mxu0 0.0
        %5090 = vmatmul.mubr.f32.gmra.mrb[0].mxu0 %v4880
        %v5091 = vpop.f32.mrb[0].mxu0
        %v5092 = vadd.f32 %v4987, %v5091
        %v5093 = vpop.f32.mrb[0].mxu0
        %5094 = vmatprep.mubr.f32.mxu0 0.0
        %5095 = vmatmul.mubr.f32.gmra.mrb[0].mxu0 %v4881
        %v5096 = vpop.f32.mrb[0].mxu0
        %v5097 = vadd.f32 %v4992, %v5096
        %v5098 = vpop.f32.mrb[0].mxu0
        %5099 = vdwg.mxu0
        %v5100 = vld [vmem:[%s2146 + $0x1] sm:$0xff]
        %v5101 = vld [vmem:[%s2146 + $0x11] sm:$0xff]
        %v5102 = vld [vmem:[%s2146 + $0x21] sm:$0xff]
        %v5103 = vld [vmem:[%s2146 + $0x31] sm:$0xff]
        %v5104 = vld [vmem:[%s2146 + $0x41] sm:$0xff]
        %v5105 = vld [vmem:[%s2146 + $0x51] sm:$0xff]
        %v5106 = vld [vmem:[%s2146 + $0x61] sm:$0xff]
        %v5107 = vld [vmem:[%s2146 + $0x71] sm:$0xff]
        %5108 = vmatprep.subr.mxu0 0.0
        %5109 = vmatpush1.msra.mxu0 %v2553
        %5110 = vmatprep.subr.mxu0 0.0
        %5111 = vmatpush1.msra.mxu0 %v2554
        %5112 = vmatprep.subr.mxu0 0.0
        %5113 = vmatpush1.msra.mxu0 %v2555
        %5114 = vmatprep.subr.mxu0 0.0
        %5115 = vmatpush1.msra.mxu0 %v2556
        %5116 = vmatprep.subr.mxu0 0.0
        %5117 = vmatpush1.msra.mxu0 %v2557
        %5118 = vmatprep.subr.mxu0 0.0
        %5119 = vmatpush1.msra.mxu0 %v2558
        %5120 = vmatprep.subr.mxu0 0.0
        %5121 = vmatpush1.msra.mxu0 %v2559
        %5122 = vmatprep.subr.mxu0 0.0
        %5123 = vmatpush1.msra.mxu0 %v2560
        %5124 = vmatprep.subr.mxu0 0.0
        %5125 = vmatpush1.msra.mxu0 %v2561
        %5126 = vmatprep.subr.mxu0 0.0
        %5127 = vmatpush1.msra.mxu0 %v2562
        %5128 = vmatprep.subr.mxu0 0.0
        %5129 = vmatpush1.msra.mxu0 %v2563
        %5130 = vmatprep.subr.mxu0 0.0
        %5131 = vmatpush1.msra.mxu0 %v2564
        %5132 = vmatprep.subr.mxu0 0.0
        %5133 = vmatpush1.msra.mxu0 %v2565
        %5134 = vmatprep.subr.mxu0 0.0
        %5135 = vmatpush1.msra.mxu0 %v2566
        %5136 = vmatprep.subr.mxu0 0.0
        %5137 = vmatpush1.msra.mxu0 %v2567
        %5138 = vmatprep.subr.mxu0 0.0
        %5139 = vmatpush1.msra.mxu0 %v2568
        %5140 = vmatprep.subr.mxu0 0.0
        %5141 = vmatpush1.msra.mxu0 0.0
        %5142 = vmatprep.subr.mxu0 0.0
        %5143 = vmatpush1.msra.mxu0 0.0
        %5144 = vmatprep.subr.mxu0 0.0
        %5145 = vmatpush1.msra.mxu0 0.0
        %5146 = vmatprep.subr.mxu0 0.0
        %5147 = vmatpush1.msra.mxu0 0.0
        %5148 = vmatprep.subr.mxu0 0.0
        %5149 = vmatpush1.msra.mxu0 0.0
        %5150 = vmatprep.subr.mxu0 0.0
        %5151 = vmatpush1.msra.mxu0 0.0
        %5152 = vmatprep.subr.mxu0 0.0
        %5153 = vmatpush1.msra.mxu0 0.0
        %5154 = vmatprep.subr.mxu0 0.0
        %5155 = vmatpush1.msra.mxu0 0.0
        %5156 = vmatprep.subr.mxu0 0.0
        %5157 = vmatpush1.msra.mxu0 0.0
        %5158 = vmatprep.subr.mxu0 0.0
        %5159 = vmatpush1.msra.mxu0 0.0
        %5160 = vmatprep.subr.mxu0 0.0
        %5161 = vmatpush1.msra.mxu0 0.0
        %5162 = vmatprep.subr.mxu0 0.0
        %5163 = vmatpush1.msra.mxu0 0.0
        %5164 = vmatprep.subr.mxu0 0.0
        %5165 = vmatpush1.msra.mxu0 0.0
        %5166 = vmatprep.subr.mxu0 0.0
        %5167 = vmatpush1.msra.mxu0 0.0
        %5168 = vmatprep.subr.mxu0 0.0
        %5169 = vmatpush1.msra.mxu0 0.0
        %5170 = vmatprep.subr.mxu0 0.0
        %5171 = vmatpush1.msra.mxu0 0.0
        %5172 = vmatprep.mubr.f32.mxu0 0.0
        %5173 = vmatmul.mubr.f32.gmra.mrb[0].mxu0 %v5100
        %v5174 = vpop.f32.mrb[0].mxu0
        %v5175 = vadd.f32 0.0, %v5174
        %v5176 = vpop.f32.mrb[0].mxu0
        %5177 = vmatprep.mubr.f32.mxu0 0.0
        %5178 = vmatmul.mubr.f32.gmra.mrb[0].mxu0 %v5101
        %v5179 = vpop.f32.mrb[0].mxu0
        %v5180 = vadd.f32 0.0, %v5179
        %v5181 = vpop.f32.mrb[0].mxu0
        %5182 = vmatprep.mubr.f32.mxu0 0.0
        %5183 = vmatmul.mubr.f32.gmra.mrb[0].mxu0 %v5102
        %v5184 = vpop.f32.mrb[0].mxu0
        %v5185 = vadd.f32 0.0, %v5184
        %v5186 = vpop.f32.mrb[0].mxu0
        %5187 = vmatprep.mubr.f32.mxu0 0.0
        %5188 = vmatmul.mubr.f32.gmra.mrb[0].mxu0 %v5103
        %v5189 = vpop.f32.mrb[0].mxu0
        %v5190 = vadd.f32 0.0, %v5189
        %v5191 = vpop.f32.mrb[0].mxu0
        %5192 = vmatprep.mubr.f32.mxu0 0.0
        %5193 = vmatmul.mubr.f32.gmra.mrb[0].mxu0 %v5104
        %v5194 = vpop.f32.mrb[0].mxu0
        %v5195 = vadd.f32 0.0, %v5194
        %v5196 = vpop.f32.mrb[0].mxu0
        %5197 = vmatprep.mubr.f32.mxu0 0.0
        %5198 = vmatmul.mubr.f32.gmra.mrb[0].mxu0 %v5105
        %v5199 = vpop.f32.mrb[0].mxu0
        %v5200 = vadd.f32 0.0, %v5199
        %v5201 = vpop.f32.mrb[0].mxu0
        %5202 = vmatprep.mubr.f32.mxu0 0.0
        %5203 = vmatmul.mubr.f32.gmra.mrb[0].mxu0 %v5106
        %v5204 = vpop.f32.mrb[0].mxu0
        %v5205 = vadd.f32 0.0, %v5204
        %v5206 = vpop.f32.mrb[0].mxu0
        %5207 = vmatprep.mubr.f32.mxu0 0.0
        %5208 = vmatmul.mubr.f32.gmra.mrb[0].mxu0 %v5107
        %v5209 = vpop.f32.mrb[0].mxu0
        %v5210 = vadd.f32 0.0, %v5209
        %v5211 = vpop.f32.mrb[0].mxu0
        %5212 = vdwg.mxu0
        %v5213 = vadd.f32 %v5062, %v5175
        %v5214 = vadd.f32 %v5067, %v5180
        %v5215 = vadd.f32 %v5072, %v5185
        %v5216 = vadd.f32 %v5077, %v5190
        %v5217 = vadd.f32 %v5082, %v5195
        %v5218 = vadd.f32 %v5087, %v5200
        %v5219 = vadd.f32 %v5092, %v5205
        %v5220 = vadd.f32 %v5097, %v5210
        %v5221 = vld [vmem:[%s2502] sm:$0xff]
        %v5222 = vld [vmem:[%s2502 + $0x10] sm:$0xff]
        %v5223 = vld [vmem:[%s2502 + $0x20] sm:$0xff]
        %v5224 = vld [vmem:[%s2502 + $0x30] sm:$0xff]
        %v5225 = vld [vmem:[%s2502 + $0x40] sm:$0xff]
        %v5226 = vld [vmem:[%s2502 + $0x50] sm:$0xff]
        %v5227 = vld [vmem:[%s2502 + $0x60] sm:$0xff]
        %v5228 = vld [vmem:[%s2502 + $0x70] sm:$0xff]
        %5229 = vmatprep.subr.mxu0 0.0
        %5230 = vmatpush1.msra.mxu0 %v2570
        %5231 = vmatprep.subr.mxu0 0.0
        %5232 = vmatpush1.msra.mxu0 %v2571
        %5233 = vmatprep.subr.mxu0 0.0
        %5234 = vmatpush1.msra.mxu0 %v2572
        %5235 = vmatprep.subr.mxu0 0.0
        %5236 = vmatpush1.msra.mxu0 %v2573
        %5237 = vmatprep.subr.mxu0 0.0
        %5238 = vmatpush1.msra.mxu0 %v2574
        %5239 = vmatprep.subr.mxu0 0.0
        %5240 = vmatpush1.msra.mxu0 %v2575
        %5241 = vmatprep.subr.mxu0 0.0
        %5242 = vmatpush1.msra.mxu0 %v2576
        %5243 = vmatprep.subr.mxu0 0.0
        %5244 = vmatpush1.msra.mxu0 %v2577
        %5245 = vmatprep.subr.mxu0 0.0
        %5246 = vmatpush1.msra.mxu0 %v2578
        %5247 = vmatprep.subr.mxu0 0.0
        %5248 = vmatpush1.msra.mxu0 %v2579
        %5249 = vmatprep.subr.mxu0 0.0
        %5250 = vmatpush1.msra.mxu0 %v2580
        %5251 = vmatprep.subr.mxu0 0.0
        %5252 = vmatpush1.msra.mxu0 %v2581
        %5253 = vmatprep.subr.mxu0 0.0
        %5254 = vmatpush1.msra.mxu0 %v2582
        %5255 = vmatprep.subr.mxu0 0.0
        %5256 = vmatpush1.msra.mxu0 %v2583
        %5257 = vmatprep.subr.mxu0 0.0
        %5258 = vmatpush1.msra.mxu0 %v2584
        %5259 = vmatprep.subr.mxu0 0.0
        %5260 = vmatpush1.msra.mxu0 %v2585
        %5261 = vmatprep.subr.mxu0 0.0
        %5262 = vmatpush1.msra.mxu0 0.0
        %5263 = vmatprep.subr.mxu0 0.0
        %5264 = vmatpush1.msra.mxu0 0.0
        %5265 = vmatprep.subr.mxu0 0.0
        %5266 = vmatpush1.msra.mxu0 0.0
        %5267 = vmatprep.subr.mxu0 0.0
        %5268 = vmatpush1.msra.mxu0 0.0
        %5269 = vmatprep.subr.mxu0 0.0
        %5270 = vmatpush1.msra.mxu0 0.0
        %5271 = vmatprep.subr.mxu0 0.0
        %5272 = vmatpush1.msra.mxu0 0.0
        %5273 = vmatprep.subr.mxu0 0.0
        %5274 = vmatpush1.msra.mxu0 0.0
        %5275 = vmatprep.subr.mxu0 0.0
        %5276 = vmatpush1.msra.mxu0 0.0
        %5277 = vmatprep.subr.mxu0 0.0
        %5278 = vmatpush1.msra.mxu0 0.0
        %5279 = vmatprep.subr.mxu0 0.0
        %5280 = vmatpush1.msra.mxu0 0.0
        %5281 = vmatprep.subr.mxu0 0.0
        %5282 = vmatpush1.msra.mxu0 0.0
        %5283 = vmatprep.subr.mxu0 0.0
        %5284 = vmatpush1.msra.mxu0 0.0
        %5285 = vmatprep.subr.mxu0 0.0
        %5286 = vmatpush1.msra.mxu0 0.0
        %5287 = vmatprep.subr.mxu0 0.0
        %5288 = vmatpush1.msra.mxu0 0.0
        %5289 = vmatprep.subr.mxu0 0.0
        %5290 = vmatpush1.msra.mxu0 0.0
        %5291 = vmatprep.subr.mxu0 0.0
        %5292 = vmatpush1.msra.mxu0 0.0
        %5293 = vmatprep.mubr.f32.mxu0 0.0
        %5294 = vmatmul.mubr.f32.gmra.mrb[0].mxu0 %v5221
        %v5295 = vpop.f32.mrb[0].mxu0
        %v5296 = vadd.f32 0.0, %v5295
        %v5297 = vpop.f32.mrb[0].mxu0
        %5298 = vmatprep.mubr.f32.mxu0 0.0
        %5299 = vmatmul.mubr.f32.gmra.mrb[0].mxu0 %v5222
        %v5300 = vpop.f32.mrb[0].mxu0
        %v5301 = vadd.f32 0.0, %v5300
        %v5302 = vpop.f32.mrb[0].mxu0
        %5303 = vmatprep.mubr.f32.mxu0 0.0
        %5304 = vmatmul.mubr.f32.gmra.mrb[0].mxu0 %v5223
        %v5305 = vpop.f32.mrb[0].mxu0
        %v5306 = vadd.f32 0.0, %v5305
        %v5307 = vpop.f32.mrb[0].mxu0
        %5308 = vmatprep.mubr.f32.mxu0 0.0
        %5309 = vmatmul.mubr.f32.gmra.mrb[0].mxu0 %v5224
        %v5310 = vpop.f32.mrb[0].mxu0
        %v5311 = vadd.f32 0.0, %v5310
        %v5312 = vpop.f32.mrb[0].mxu0
        %5313 = vmatprep.mubr.f32.mxu0 0.0
        %5314 = vmatmul.mubr.f32.gmra.mrb[0].mxu0 %v5225
        %v5315 = vpop.f32.mrb[0].mxu0
        %v5316 = vadd.f32 0.0, %v5315
        %v5317 = vpop.f32.mrb[0].mxu0
        %5318 = vmatprep.mubr.f32.mxu0 0.0
        %5319 = vmatmul.mubr.f32.gmra.mrb[0].mxu0 %v5226
        %v5320 = vpop.f32.mrb[0].mxu0
        %v5321 = vadd.f32 0.0, %v5320
        %v5322 = vpop.f32.mrb[0].mxu0
        %5323 = vmatprep.mubr.f32.mxu0 0.0
        %5324 = vmatmul.mubr.f32.gmra.mrb[0].mxu0 %v5227
        %v5325 = vpop.f32.mrb[0].mxu0
        %v5326 = vadd.f32 0.0, %v5325
        %v5327 = vpop.f32.mrb[0].mxu0
        %5328 = vmatprep.mubr.f32.mxu0 0.0
        %5329 = vmatmul.mubr.f32.gmra.mrb[0].mxu0 %v5228
        %v5330 = vpop.f32.mrb[0].mxu0
        %v5331 = vadd.f32 0.0, %v5330
        %v5332 = vpop.f32.mrb[0].mxu0
        %5333 = vdwg.mxu0
        %v5334 = vadd.f32 %v5213, %v5296
        %v5335 = vadd.f32 %v5214, %v5301
        %v5336 = vadd.f32 %v5215, %v5306
        %v5337 = vadd.f32 %v5216, %v5311
        %v5338 = vadd.f32 %v5217, %v5316
        %v5339 = vadd.f32 %v5218, %v5321
        %v5340 = vadd.f32 %v5219, %v5326
        %v5341 = vadd.f32 %v5220, %v5331
        %v5342 = vld [vmem:[%s2341 + $0x1] sm:$0xff]
        %v5343 = vld [vmem:[%s2341 + $0x11] sm:$0xff]
        %v5344 = vld [vmem:[%s2341 + $0x21] sm:$0xff]
        %v5345 = vld [vmem:[%s2341 + $0x31] sm:$0xff]
        %v5346 = vld [vmem:[%s2341 + $0x41] sm:$0xff]
        %v5347 = vld [vmem:[%s2341 + $0x51] sm:$0xff]
        %v5348 = vld [vmem:[%s2341 + $0x61] sm:$0xff]
        %v5349 = vld [vmem:[%s2341 + $0x71] sm:$0xff]
        %5350 = vmatprep.subr.mxu0 0.0
        %5351 = vmatpush1.msra.mxu0 %v2587
        %5352 = vmatprep.subr.mxu0 0.0
        %5353 = vmatpush1.msra.mxu0 %v2588
        %5354 = vmatprep.subr.mxu0 0.0
        %5355 = vmatpush1.msra.mxu0 %v2589
        %5356 = vmatprep.subr.mxu0 0.0
        %5357 = vmatpush1.msra.mxu0 %v2590
        %5358 = vmatprep.subr.mxu0 0.0
        %5359 = vmatpush1.msra.mxu0 %v2591
        %5360 = vmatprep.subr.mxu0 0.0
        %5361 = vmatpush1.msra.mxu0 %v2592
        %5362 = vmatprep.subr.mxu0 0.0
        %5363 = vmatpush1.msra.mxu0 %v2593
        %5364 = vmatprep.subr.mxu0 0.0
        %5365 = vmatpush1.msra.mxu0 %v2594
        %5366 = vmatprep.subr.mxu0 0.0
        %5367 = vmatpush1.msra.mxu0 %v2595
        %5368 = vmatprep.subr.mxu0 0.0
        %5369 = vmatpush1.msra.mxu0 %v2596
        %5370 = vmatprep.subr.mxu0 0.0
        %5371 = vmatpush1.msra.mxu0 %v2597
        %5372 = vmatprep.subr.mxu0 0.0
        %5373 = vmatpush1.msra.mxu0 %v2598
        %5374 = vmatprep.subr.mxu0 0.0
        %5375 = vmatpush1.msra.mxu0 %v2599
        %5376 = vmatprep.subr.mxu0 0.0
        %5377 = vmatpush1.msra.mxu0 %v2600
        %5378 = vmatprep.subr.mxu0 0.0
        %5379 = vmatpush1.msra.mxu0 %v2601
        %5380 = vmatprep.subr.mxu0 0.0
        %5381 = vmatpush1.msra.mxu0 %v2602
        %5382 = vmatprep.subr.mxu0 0.0
        %5383 = vmatpush1.msra.mxu0 0.0
        %5384 = vmatprep.subr.mxu0 0.0
        %5385 = vmatpush1.msra.mxu0 0.0
        %5386 = vmatprep.subr.mxu0 0.0
        %5387 = vmatpush1.msra.mxu0 0.0
        %5388 = vmatprep.subr.mxu0 0.0
        %5389 = vmatpush1.msra.mxu0 0.0
        %5390 = vmatprep.subr.mxu0 0.0
        %5391 = vmatpush1.msra.mxu0 0.0
        %5392 = vmatprep.subr.mxu0 0.0
        %5393 = vmatpush1.msra.mxu0 0.0
        %5394 = vmatprep.subr.mxu0 0.0
        %5395 = vmatpush1.msra.mxu0 0.0
        %5396 = vmatprep.subr.mxu0 0.0
        %5397 = vmatpush1.msra.mxu0 0.0
        %5398 = vmatprep.subr.mxu0 0.0
        %5399 = vmatpush1.msra.mxu0 0.0
        %5400 = vmatprep.subr.mxu0 0.0
        %5401 = vmatpush1.msra.mxu0 0.0
        %5402 = vmatprep.subr.mxu0 0.0
        %5403 = vmatpush1.msra.mxu0 0.0
        %5404 = vmatprep.subr.mxu0 0.0
        %5405 = vmatpush1.msra.mxu0 0.0
        %5406 = vmatprep.subr.mxu0 0.0
        %5407 = vmatpush1.msra.mxu0 0.0
        %5408 = vmatprep.subr.mxu0 0.0
        %5409 = vmatpush1.msra.mxu0 0.0
        %5410 = vmatprep.subr.mxu0 0.0
        %5411 = vmatpush1.msra.mxu0 0.0
        %5412 = vmatprep.subr.mxu0 0.0
        %5413 = vmatpush1.msra.mxu0 0.0
        %5414 = vmatprep.mubr.f32.mxu0 0.0
        %5415 = vmatmul.mubr.f32.gmra.mrb[0].mxu0 %v5342
        %v5416 = vpop.f32.mrb[0].mxu0
        %v5417 = vadd.f32 0.0, %v5416
        %v5418 = vpop.f32.mrb[0].mxu0
        %5419 = vmatprep.mubr.f32.mxu0 0.0
        %5420 = vmatmul.mubr.f32.gmra.mrb[0].mxu0 %v5343
        %v5421 = vpop.f32.mrb[0].mxu0
        %v5422 = vadd.f32 0.0, %v5421
        %v5423 = vpop.f32.mrb[0].mxu0
        %5424 = vmatprep.mubr.f32.mxu0 0.0
        %5425 = vmatmul.mubr.f32.gmra.mrb[0].mxu0 %v5344
        %v5426 = vpop.f32.mrb[0].mxu0
        %v5427 = vadd.f32 0.0, %v5426
        %v5428 = vpop.f32.mrb[0].mxu0
        %5429 = vmatprep.mubr.f32.mxu0 0.0
        %5430 = vmatmul.mubr.f32.gmra.mrb[0].mxu0 %v5345
        %v5431 = vpop.f32.mrb[0].mxu0
        %v5432 = vadd.f32 0.0, %v5431
        %v5433 = vpop.f32.mrb[0].mxu0
        %5434 = vmatprep.mubr.f32.mxu0 0.0
        %5435 = vmatmul.mubr.f32.gmra.mrb[0].mxu0 %v5346
        %v5436 = vpop.f32.mrb[0].mxu0
        %v5437 = vadd.f32 0.0, %v5436
        %v5438 = vpop.f32.mrb[0].mxu0
        %5439 = vmatprep.mubr.f32.mxu0 0.0
        %5440 = vmatmul.mubr.f32.gmra.mrb[0].mxu0 %v5347
        %v5441 = vpop.f32.mrb[0].mxu0
        %v5442 = vadd.f32 0.0, %v5441
        %v5443 = vpop.f32.mrb[0].mxu0
        %5444 = vmatprep.mubr.f32.mxu0 0.0
        %5445 = vmatmul.mubr.f32.gmra.mrb[0].mxu0 %v5348
        %v5446 = vpop.f32.mrb[0].mxu0
        %v5447 = vadd.f32 0.0, %v5446
        %v5448 = vpop.f32.mrb[0].mxu0
        %5449 = vmatprep.mubr.f32.mxu0 0.0
        %5450 = vmatmul.mubr.f32.gmra.mrb[0].mxu0 %v5349
        %v5451 = vpop.f32.mrb[0].mxu0
        %v5452 = vadd.f32 0.0, %v5451
        %v5453 = vpop.f32.mrb[0].mxu0
        %5454 = vdwg.mxu0
        %v5455 = vadd.f32 %v5334, %v5417
        %v5456 = vadd.f32 %v5335, %v5422
        %v5457 = vadd.f32 %v5336, %v5427
        %v5458 = vadd.f32 %v5337, %v5432
        %v5459 = vadd.f32 %v5338, %v5437
        %v5460 = vadd.f32 %v5339, %v5442
        %v5461 = vadd.f32 %v5340, %v5447
        %v5462 = vadd.f32 %v5341, %v5452
        %v5463 = vld [vmem:[%s2502 + $0x1] sm:$0xff]
        %v5464 = vld [vmem:[%s2502 + $0x11] sm:$0xff]
        %v5465 = vld [vmem:[%s2502 + $0x21] sm:$0xff]
        %v5466 = vld [vmem:[%s2502 + $0x31] sm:$0xff]
        %v5467 = vld [vmem:[%s2502 + $0x41] sm:$0xff]
        %v5468 = vld [vmem:[%s2502 + $0x51] sm:$0xff]
        %v5469 = vld [vmem:[%s2502 + $0x61] sm:$0xff]
        %v5470 = vld [vmem:[%s2502 + $0x71] sm:$0xff]
        %5471 = vmatprep.subr.mxu0 0.0
        %5472 = vmatpush1.msra.mxu0 %v2604
        %5473 = vmatprep.subr.mxu0 0.0
        %5474 = vmatpush1.msra.mxu0 %v2605
        %5475 = vmatprep.subr.mxu0 0.0
        %5476 = vmatpush1.msra.mxu0 %v2606
        %5477 = vmatprep.subr.mxu0 0.0
        %5478 = vmatpush1.msra.mxu0 %v2607
        %5479 = vmatprep.subr.mxu0 0.0
        %5480 = vmatpush1.msra.mxu0 %v2608
        %5481 = vmatprep.subr.mxu0 0.0
        %5482 = vmatpush1.msra.mxu0 %v2609
        %5483 = vmatprep.subr.mxu0 0.0
        %5484 = vmatpush1.msra.mxu0 %v2610
        %5485 = vmatprep.subr.mxu0 0.0
        %5486 = vmatpush1.msra.mxu0 %v2611
        %5487 = vmatprep.subr.mxu0 0.0
        %5488 = vmatpush1.msra.mxu0 %v2612
        %5489 = vmatprep.subr.mxu0 0.0
        %5490 = vmatpush1.msra.mxu0 %v2613
        %5491 = vmatprep.subr.mxu0 0.0
        %5492 = vmatpush1.msra.mxu0 %v2614
        %5493 = vmatprep.subr.mxu0 0.0
        %5494 = vmatpush1.msra.mxu0 %v2615
        %5495 = vmatprep.subr.mxu0 0.0
        %5496 = vmatpush1.msra.mxu0 %v2616
        %5497 = vmatprep.subr.mxu0 0.0
        %5498 = vmatpush1.msra.mxu0 %v2617
        %5499 = vmatprep.subr.mxu0 0.0
        %5500 = vmatpush1.msra.mxu0 %v2618
        %5501 = vmatprep.subr.mxu0 0.0
        %5502 = vmatpush1.msra.mxu0 %v2619
        %5503 = vmatprep.subr.mxu0 0.0
        %5504 = vmatpush1.msra.mxu0 0.0
        %5505 = vmatprep.subr.mxu0 0.0
        %5506 = vmatpush1.msra.mxu0 0.0
        %5507 = vmatprep.subr.mxu0 0.0
        %5508 = vmatpush1.msra.mxu0 0.0
        %5509 = vmatprep.subr.mxu0 0.0
        %5510 = vmatpush1.msra.mxu0 0.0
        %5511 = vmatprep.subr.mxu0 0.0
        %5512 = vmatpush1.msra.mxu0 0.0
        %5513 = vmatprep.subr.mxu0 0.0
        %5514 = vmatpush1.msra.mxu0 0.0
        %5515 = vmatprep.subr.mxu0 0.0
        %5516 = vmatpush1.msra.mxu0 0.0
        %5517 = vmatprep.subr.mxu0 0.0
        %5518 = vmatpush1.msra.mxu0 0.0
        %5519 = vmatprep.subr.mxu0 0.0
        %5520 = vmatpush1.msra.mxu0 0.0
        %5521 = vmatprep.subr.mxu0 0.0
        %5522 = vmatpush1.msra.mxu0 0.0
        %5523 = vmatprep.subr.mxu0 0.0
        %5524 = vmatpush1.msra.mxu0 0.0
        %5525 = vmatprep.subr.mxu0 0.0
        %5526 = vmatpush1.msra.mxu0 0.0
        %5527 = vmatprep.subr.mxu0 0.0
        %5528 = vmatpush1.msra.mxu0 0.0
        %5529 = vmatprep.subr.mxu0 0.0
        %5530 = vmatpush1.msra.mxu0 0.0
        %5531 = vmatprep.subr.mxu0 0.0
        %5532 = vmatpush1.msra.mxu0 0.0
        %5533 = vmatprep.subr.mxu0 0.0
        %5534 = vmatpush1.msra.mxu0 0.0
        %5535 = vmatprep.mubr.f32.mxu0 0.0
        %5536 = vmatmul.mubr.f32.gmra.mrb[0].mxu0 %v5463
        %v5537 = vpop.f32.mrb[0].mxu0
        %v5538 = vadd.f32 0.0, %v5537
        %v5539 = vpop.f32.mrb[0].mxu0
        %5540 = vmatprep.mubr.f32.mxu0 0.0
        %5541 = vmatmul.mubr.f32.gmra.mrb[0].mxu0 %v5464
        %v5542 = vpop.f32.mrb[0].mxu0
        %v5543 = vadd.f32 0.0, %v5542
        %v5544 = vpop.f32.mrb[0].mxu0
        %5545 = vmatprep.mubr.f32.mxu0 0.0
        %5546 = vmatmul.mubr.f32.gmra.mrb[0].mxu0 %v5465
        %v5547 = vpop.f32.mrb[0].mxu0
        %v5548 = vadd.f32 0.0, %v5547
        %v5549 = vpop.f32.mrb[0].mxu0
        %5550 = vmatprep.mubr.f32.mxu0 0.0
        %5551 = vmatmul.mubr.f32.gmra.mrb[0].mxu0 %v5466
        %v5552 = vpop.f32.mrb[0].mxu0
        %v5553 = vadd.f32 0.0, %v5552
        %v5554 = vpop.f32.mrb[0].mxu0
        %5555 = vmatprep.mubr.f32.mxu0 0.0
        %5556 = vmatmul.mubr.f32.gmra.mrb[0].mxu0 %v5467
        %v5557 = vpop.f32.mrb[0].mxu0
        %v5558 = vadd.f32 0.0, %v5557
        %v5559 = vpop.f32.mrb[0].mxu0
        %5560 = vmatprep.mubr.f32.mxu0 0.0
        %5561 = vmatmul.mubr.f32.gmra.mrb[0].mxu0 %v5468
        %v5562 = vpop.f32.mrb[0].mxu0
        %v5563 = vadd.f32 0.0, %v5562
        %v5564 = vpop.f32.mrb[0].mxu0
        %5565 = vmatprep.mubr.f32.mxu0 0.0
        %5566 = vmatmul.mubr.f32.gmra.mrb[0].mxu0 %v5469
        %v5567 = vpop.f32.mrb[0].mxu0
        %v5568 = vadd.f32 0.0, %v5567
        %v5569 = vpop.f32.mrb[0].mxu0
        %5570 = vmatprep.mubr.f32.mxu0 0.0
        %5571 = vmatmul.mubr.f32.gmra.mrb[0].mxu0 %v5470
        %v5572 = vpop.f32.mrb[0].mxu0
        %v5573 = vadd.f32 0.0, %v5572
        %v5574 = vpop.f32.mrb[0].mxu0
        %5575 = vdwg.mxu0
        %v5576 = vadd.f32 %v5455, %v5538
        %v5577 = vadd.f32 %v5456, %v5543
        %v5578 = vadd.f32 %v5457, %v5548
        %v5579 = vadd.f32 %v5458, %v5553
        %v5580 = vadd.f32 %v5459, %v5558
        %v5581 = vadd.f32 %v5460, %v5563
        %v5582 = vadd.f32 %v5461, %v5568
        %v5583 = vadd.f32 %v5462, %v5573
        %s5584 = scalar_lea.vmem [#allocation4], 192
        %v5585 = vld [vmem:[%s5584] sm:$0xff]
        %v5586 = vld [vmem:[%s5584 + $0x10] sm:$0xff]
        %v5587 = vld [vmem:[%s5584 + $0x20] sm:$0xff]
        %v5588 = vld [vmem:[%s5584 + $0x30] sm:$0xff]
        %v5589 = vld [vmem:[%s5584 + $0x40] sm:$0xff]
        %v5590 = vld [vmem:[%s5584 + $0x50] sm:$0xff]
        %v5591 = vld [vmem:[%s5584 + $0x60] sm:$0xff]
        %v5592 = vld [vmem:[%s5584 + $0x70] sm:$0xff]
        %5593 = vmatprep.subr.mxu0 0.0
        %5594 = vmatpush1.msra.mxu0 %v2621
        %5595 = vmatprep.subr.mxu0 0.0
        %5596 = vmatpush1.msra.mxu0 %v2622
        %5597 = vmatprep.subr.mxu0 0.0
        %5598 = vmatpush1.msra.mxu0 %v2623
        %5599 = vmatprep.subr.mxu0 0.0
        %5600 = vmatpush1.msra.mxu0 %v2624
        %5601 = vmatprep.subr.mxu0 0.0
        %5602 = vmatpush1.msra.mxu0 %v2625
        %5603 = vmatprep.subr.mxu0 0.0
        %5604 = vmatpush1.msra.mxu0 %v2626
        %5605 = vmatprep.subr.mxu0 0.0
        %5606 = vmatpush1.msra.mxu0 %v2627
        %5607 = vmatprep.subr.mxu0 0.0
        %5608 = vmatpush1.msra.mxu0 %v2628
        %5609 = vmatprep.subr.mxu0 0.0
        %5610 = vmatpush1.msra.mxu0 %v2629
        %5611 = vmatprep.subr.mxu0 0.0
        %5612 = vmatpush1.msra.mxu0 %v2630
        %5613 = vmatprep.subr.mxu0 0.0
        %5614 = vmatpush1.msra.mxu0 %v2631
        %5615 = vmatprep.subr.mxu0 0.0
        %5616 = vmatpush1.msra.mxu0 %v2632
        %5617 = vmatprep.subr.mxu0 0.0
        %5618 = vmatpush1.msra.mxu0 %v2633
        %5619 = vmatprep.subr.mxu0 0.0
        %5620 = vmatpush1.msra.mxu0 %v2634
        %5621 = vmatprep.subr.mxu0 0.0
        %5622 = vmatpush1.msra.mxu0 %v2635
        %5623 = vmatprep.subr.mxu0 0.0
        %5624 = vmatpush1.msra.mxu0 %v2636
        %5625 = vmatprep.subr.mxu0 0.0
        %5626 = vmatpush1.msra.mxu0 0.0
        %5627 = vmatprep.subr.mxu0 0.0
        %5628 = vmatpush1.msra.mxu0 0.0
        %5629 = vmatprep.subr.mxu0 0.0
        %5630 = vmatpush1.msra.mxu0 0.0
        %5631 = vmatprep.subr.mxu0 0.0
        %5632 = vmatpush1.msra.mxu0 0.0
        %5633 = vmatprep.subr.mxu0 0.0
        %5634 = vmatpush1.msra.mxu0 0.0
        %5635 = vmatprep.subr.mxu0 0.0
        %5636 = vmatpush1.msra.mxu0 0.0
        %5637 = vmatprep.subr.mxu0 0.0
        %5638 = vmatpush1.msra.mxu0 0.0
        %5639 = vmatprep.subr.mxu0 0.0
        %5640 = vmatpush1.msra.mxu0 0.0
        %5641 = vmatprep.subr.mxu0 0.0
        %5642 = vmatpush1.msra.mxu0 0.0
        %5643 = vmatprep.subr.mxu0 0.0
        %5644 = vmatpush1.msra.mxu0 0.0
        %5645 = vmatprep.subr.mxu0 0.0
        %5646 = vmatpush1.msra.mxu0 0.0
        %5647 = vmatprep.subr.mxu0 0.0
        %5648 = vmatpush1.msra.mxu0 0.0
        %5649 = vmatprep.subr.mxu0 0.0
        %5650 = vmatpush1.msra.mxu0 0.0
        %5651 = vmatprep.subr.mxu0 0.0
        %5652 = vmatpush1.msra.mxu0 0.0
        %5653 = vmatprep.subr.mxu0 0.0
        %5654 = vmatpush1.msra.mxu0 0.0
        %5655 = vmatprep.subr.mxu0 0.0
        %5656 = vmatpush1.msra.mxu0 0.0
        %5657 = vmatprep.mubr.f32.mxu0 0.0
        %5658 = vmatmul.mubr.f32.gmra.mrb[0].mxu0 %v5585
        %v5659 = vpop.f32.mrb[0].mxu0
        %v5660 = vadd.f32 0.0, %v5659
        %v5661 = vpop.f32.mrb[0].mxu0
        %5662 = vmatprep.mubr.f32.mxu0 0.0
        %5663 = vmatmul.mubr.f32.gmra.mrb[0].mxu0 %v5586
        %v5664 = vpop.f32.mrb[0].mxu0
        %v5665 = vadd.f32 0.0, %v5664
        %v5666 = vpop.f32.mrb[0].mxu0
        %5667 = vmatprep.mubr.f32.mxu0 0.0
        %5668 = vmatmul.mubr.f32.gmra.mrb[0].mxu0 %v5587
        %v5669 = vpop.f32.mrb[0].mxu0
        %v5670 = vadd.f32 0.0, %v5669
        %v5671 = vpop.f32.mrb[0].mxu0
        %5672 = vmatprep.mubr.f32.mxu0 0.0
        %5673 = vmatmul.mubr.f32.gmra.mrb[0].mxu0 %v5588
        %v5674 = vpop.f32.mrb[0].mxu0
        %v5675 = vadd.f32 0.0, %v5674
        %v5676 = vpop.f32.mrb[0].mxu0
        %5677 = vmatprep.mubr.f32.mxu0 0.0
        %5678 = vmatmul.mubr.f32.gmra.mrb[0].mxu0 %v5589
        %v5679 = vpop.f32.mrb[0].mxu0
        %v5680 = vadd.f32 0.0, %v5679
        %v5681 = vpop.f32.mrb[0].mxu0
        %5682 = vmatprep.mubr.f32.mxu0 0.0
        %5683 = vmatmul.mubr.f32.gmra.mrb[0].mxu0 %v5590
        %v5684 = vpop.f32.mrb[0].mxu0
        %v5685 = vadd.f32 0.0, %v5684
        %v5686 = vpop.f32.mrb[0].mxu0
        %5687 = vmatprep.mubr.f32.mxu0 0.0
        %5688 = vmatmul.mubr.f32.gmra.mrb[0].mxu0 %v5591
        %v5689 = vpop.f32.mrb[0].mxu0
        %v5690 = vadd.f32 0.0, %v5689
        %v5691 = vpop.f32.mrb[0].mxu0
        %5692 = vmatprep.mubr.f32.mxu0 0.0
        %5693 = vmatmul.mubr.f32.gmra.mrb[0].mxu0 %v5592
        %v5694 = vpop.f32.mrb[0].mxu0
        %v5695 = vadd.f32 0.0, %v5694
        %v5696 = vpop.f32.mrb[0].mxu0
        %5697 = vdwg.mxu0
        %v5698 = vadd.f32 %v5576, %v5660
        %v5699 = vadd.f32 %v5577, %v5665
        %v5700 = vadd.f32 %v5578, %v5670
        %v5701 = vadd.f32 %v5579, %v5675
        %v5702 = vadd.f32 %v5580, %v5680
        %v5703 = vadd.f32 %v5581, %v5685
        %v5704 = vadd.f32 %v5582, %v5690
        %v5705 = vadd.f32 %v5583, %v5695
        %s5706 = scalar_lea.vmem [#allocation4], 32
        %v5707 = vld [vmem:[%s5706 + $0x1] sm:$0xff]
        %v5708 = vld [vmem:[%s5706 + $0x11] sm:$0xff]
        %v5709 = vld [vmem:[%s5706 + $0x21] sm:$0xff]
        %v5710 = vld [vmem:[%s5706 + $0x31] sm:$0xff]
        %v5711 = vld [vmem:[%s5706 + $0x41] sm:$0xff]
        %v5712 = vld [vmem:[%s5706 + $0x51] sm:$0xff]
        %v5713 = vld [vmem:[%s5706 + $0x61] sm:$0xff]
        %v5714 = vld [vmem:[%s5706 + $0x71] sm:$0xff]
        %5715 = vmatprep.subr.mxu0 0.0
        %5716 = vmatpush1.msra.mxu0 %v2638
        %5717 = vmatprep.subr.mxu0 0.0
        %5718 = vmatpush1.msra.mxu0 %v2639
        %5719 = vmatprep.subr.mxu0 0.0
        %5720 = vmatpush1.msra.mxu0 %v2640
        %5721 = vmatprep.subr.mxu0 0.0
        %5722 = vmatpush1.msra.mxu0 %v2641
        %5723 = vmatprep.subr.mxu0 0.0
        %5724 = vmatpush1.msra.mxu0 %v2642
        %5725 = vmatprep.subr.mxu0 0.0
        %5726 = vmatpush1.msra.mxu0 %v2643
        %5727 = vmatprep.subr.mxu0 0.0
        %5728 = vmatpush1.msra.mxu0 %v2644
        %5729 = vmatprep.subr.mxu0 0.0
        %5730 = vmatpush1.msra.mxu0 %v2645
        %5731 = vmatprep.subr.mxu0 0.0
        %5732 = vmatpush1.msra.mxu0 %v2646
        %5733 = vmatprep.subr.mxu0 0.0
        %5734 = vmatpush1.msra.mxu0 %v2647
        %5735 = vmatprep.subr.mxu0 0.0
        %5736 = vmatpush1.msra.mxu0 %v2648
        %5737 = vmatprep.subr.mxu0 0.0
        %5738 = vmatpush1.msra.mxu0 %v2649
        %5739 = vmatprep.subr.mxu0 0.0
        %5740 = vmatpush1.msra.mxu0 %v2650
        %5741 = vmatprep.subr.mxu0 0.0
        %5742 = vmatpush1.msra.mxu0 %v2651
        %5743 = vmatprep.subr.mxu0 0.0
        %5744 = vmatpush1.msra.mxu0 %v2652
        %5745 = vmatprep.subr.mxu0 0.0
        %5746 = vmatpush1.msra.mxu0 %v2653
        %5747 = vmatprep.subr.mxu0 0.0
        %5748 = vmatpush1.msra.mxu0 0.0
        %5749 = vmatprep.subr.mxu0 0.0
        %5750 = vmatpush1.msra.mxu0 0.0
        %5751 = vmatprep.subr.mxu0 0.0
        %5752 = vmatpush1.msra.mxu0 0.0
        %5753 = vmatprep.subr.mxu0 0.0
        %5754 = vmatpush1.msra.mxu0 0.0
        %5755 = vmatprep.subr.mxu0 0.0
        %5756 = vmatpush1.msra.mxu0 0.0
        %5757 = vmatprep.subr.mxu0 0.0
        %5758 = vmatpush1.msra.mxu0 0.0
        %5759 = vmatprep.subr.mxu0 0.0
        %5760 = vmatpush1.msra.mxu0 0.0
        %5761 = vmatprep.subr.mxu0 0.0
        %5762 = vmatpush1.msra.mxu0 0.0
        %5763 = vmatprep.subr.mxu0 0.0
        %5764 = vmatpush1.msra.mxu0 0.0
        %5765 = vmatprep.subr.mxu0 0.0
        %5766 = vmatpush1.msra.mxu0 0.0
        %5767 = vmatprep.subr.mxu0 0.0
        %5768 = vmatpush1.msra.mxu0 0.0
        %5769 = vmatprep.subr.mxu0 0.0
        %5770 = vmatpush1.msra.mxu0 0.0
        %5771 = vmatprep.subr.mxu0 0.0
        %5772 = vmatpush1.msra.mxu0 0.0
        %5773 = vmatprep.subr.mxu0 0.0
        %5774 = vmatpush1.msra.mxu0 0.0
        %5775 = vmatprep.subr.mxu0 0.0
        %5776 = vmatpush1.msra.mxu0 0.0
        %5777 = vmatprep.subr.mxu0 0.0
        %5778 = vmatpush1.msra.mxu0 0.0
        %5779 = vmatprep.mubr.f32.mxu0 0.0
        %5780 = vmatmul.mubr.f32.gmra.mrb[0].mxu0 %v5707
        %v5781 = vpop.f32.mrb[0].mxu0
        %v5782 = vadd.f32 0.0, %v5781
        %v5783 = vpop.f32.mrb[0].mxu0
        %5784 = vmatprep.mubr.f32.mxu0 0.0
        %5785 = vmatmul.mubr.f32.gmra.mrb[0].mxu0 %v5708
        %v5786 = vpop.f32.mrb[0].mxu0
        %v5787 = vadd.f32 0.0, %v5786
        %v5788 = vpop.f32.mrb[0].mxu0
        %5789 = vmatprep.mubr.f32.mxu0 0.0
        %5790 = vmatmul.mubr.f32.gmra.mrb[0].mxu0 %v5709
        %v5791 = vpop.f32.mrb[0].mxu0
        %v5792 = vadd.f32 0.0, %v5791
        %v5793 = vpop.f32.mrb[0].mxu0
        %5794 = vmatprep.mubr.f32.mxu0 0.0
        %5795 = vmatmul.mubr.f32.gmra.mrb[0].mxu0 %v5710
        %v5796 = vpop.f32.mrb[0].mxu0
        %v5797 = vadd.f32 0.0, %v5796
        %v5798 = vpop.f32.mrb[0].mxu0
        %5799 = vmatprep.mubr.f32.mxu0 0.0
        %5800 = vmatmul.mubr.f32.gmra.mrb[0].mxu0 %v5711
        %v5801 = vpop.f32.mrb[0].mxu0
        %v5802 = vadd.f32 0.0, %v5801
        %v5803 = vpop.f32.mrb[0].mxu0
        %5804 = vmatprep.mubr.f32.mxu0 0.0
        %5805 = vmatmul.mubr.f32.gmra.mrb[0].mxu0 %v5712
        %v5806 = vpop.f32.mrb[0].mxu0
        %v5807 = vadd.f32 0.0, %v5806
        %v5808 = vpop.f32.mrb[0].mxu0
        %5809 = vmatprep.mubr.f32.mxu0 0.0
        %5810 = vmatmul.mubr.f32.gmra.mrb[0].mxu0 %v5713
        %v5811 = vpop.f32.mrb[0].mxu0
        %v5812 = vadd.f32 0.0, %v5811
        %v5813 = vpop.f32.mrb[0].mxu0
        %5814 = vmatprep.mubr.f32.mxu0 0.0
        %5815 = vmatmul.mubr.f32.gmra.mrb[0].mxu0 %v5714
        %v5816 = vpop.f32.mrb[0].mxu0
        %v5817 = vadd.f32 0.0, %v5816
        %v5818 = vpop.f32.mrb[0].mxu0
        %5819 = vdwg.mxu0
        %v5820 = vadd.f32 %v5698, %v5782
        %v5821 = vadd.f32 %v5699, %v5787
        %v5822 = vadd.f32 %v5700, %v5792
        %v5823 = vadd.f32 %v5701, %v5797
        %v5824 = vadd.f32 %v5702, %v5802
        %v5825 = vadd.f32 %v5703, %v5807
        %v5826 = vadd.f32 %v5704, %v5812
        %v5827 = vadd.f32 %v5705, %v5817
        %v5828 = vld [vmem:[%s5584 + $0x1] sm:$0xff]
        %v5829 = vld [vmem:[%s5584 + $0x11] sm:$0xff]
        %v5830 = vld [vmem:[%s5584 + $0x21] sm:$0xff]
        %v5831 = vld [vmem:[%s5584 + $0x31] sm:$0xff]
        %v5832 = vld [vmem:[%s5584 + $0x41] sm:$0xff]
        %v5833 = vld [vmem:[%s5584 + $0x51] sm:$0xff]
        %v5834 = vld [vmem:[%s5584 + $0x61] sm:$0xff]
        %v5835 = vld [vmem:[%s5584 + $0x71] sm:$0xff]
        %5836 = vmatprep.subr.mxu0 0.0
        %5837 = vmatpush1.msra.mxu0 %v2655
        %5838 = vmatprep.subr.mxu0 0.0
        %5839 = vmatpush1.msra.mxu0 %v2656
        %5840 = vmatprep.subr.mxu0 0.0
        %5841 = vmatpush1.msra.mxu0 %v2657
        %5842 = vmatprep.subr.mxu0 0.0
        %5843 = vmatpush1.msra.mxu0 %v2658
        %5844 = vmatprep.subr.mxu0 0.0
        %5845 = vmatpush1.msra.mxu0 %v2659
        %5846 = vmatprep.subr.mxu0 0.0
        %5847 = vmatpush1.msra.mxu0 %v2660
        %5848 = vmatprep.subr.mxu0 0.0
        %5849 = vmatpush1.msra.mxu0 %v2661
        %5850 = vmatprep.subr.mxu0 0.0
        %5851 = vmatpush1.msra.mxu0 %v2662
        %5852 = vmatprep.subr.mxu0 0.0
        %5853 = vmatpush1.msra.mxu0 %v2663
        %5854 = vmatprep.subr.mxu0 0.0
        %5855 = vmatpush1.msra.mxu0 %v2664
        %5856 = vmatprep.subr.mxu0 0.0
        %5857 = vmatpush1.msra.mxu0 %v2665
        %5858 = vmatprep.subr.mxu0 0.0
        %5859 = vmatpush1.msra.mxu0 %v2666
        %5860 = vmatprep.subr.mxu0 0.0
        %5861 = vmatpush1.msra.mxu0 %v2667
        %5862 = vmatprep.subr.mxu0 0.0
        %5863 = vmatpush1.msra.mxu0 %v2668
        %5864 = vmatprep.subr.mxu0 0.0
        %5865 = vmatpush1.msra.mxu0 %v2669
        %5866 = vmatprep.subr.mxu0 0.0
        %5867 = vmatpush1.msra.mxu0 %v2670
        %5868 = vmatprep.subr.mxu0 0.0
        %5869 = vmatpush1.msra.mxu0 0.0
        %5870 = vmatprep.subr.mxu0 0.0
        %5871 = vmatpush1.msra.mxu0 0.0
        %5872 = vmatprep.subr.mxu0 0.0
        %5873 = vmatpush1.msra.mxu0 0.0
        %5874 = vmatprep.subr.mxu0 0.0
        %5875 = vmatpush1.msra.mxu0 0.0
        %5876 = vmatprep.subr.mxu0 0.0
        %5877 = vmatpush1.msra.mxu0 0.0
        %5878 = vmatprep.subr.mxu0 0.0
        %5879 = vmatpush1.msra.mxu0 0.0
        %5880 = vmatprep.subr.mxu0 0.0
        %5881 = vmatpush1.msra.mxu0 0.0
        %5882 = vmatprep.subr.mxu0 0.0
        %5883 = vmatpush1.msra.mxu0 0.0
        %5884 = vmatprep.subr.mxu0 0.0
        %5885 = vmatpush1.msra.mxu0 0.0
        %5886 = vmatprep.subr.mxu0 0.0
        %5887 = vmatpush1.msra.mxu0 0.0
        %5888 = vmatprep.subr.mxu0 0.0
        %5889 = vmatpush1.msra.mxu0 0.0
        %5890 = vmatprep.subr.mxu0 0.0
        %5891 = vmatpush1.msra.mxu0 0.0
        %5892 = vmatprep.subr.mxu0 0.0
        %5893 = vmatpush1.msra.mxu0 0.0
        %5894 = vmatprep.subr.mxu0 0.0
        %5895 = vmatpush1.msra.mxu0 0.0
        %5896 = vmatprep.subr.mxu0 0.0
        %5897 = vmatpush1.msra.mxu0 0.0
        %5898 = vmatprep.subr.mxu0 0.0
        %5899 = vmatpush1.msra.mxu0 0.0
        %5900 = vmatprep.mubr.f32.mxu0 0.0
        %5901 = vmatmul.mubr.f32.gmra.mrb[0].mxu0 %v5828
        %v5902 = vpop.f32.mrb[0].mxu0
        %v5903 = vadd.f32 0.0, %v5902
        %v5904 = vpop.f32.mrb[0].mxu0
        %5905 = vmatprep.mubr.f32.mxu0 0.0
        %5906 = vmatmul.mubr.f32.gmra.mrb[0].mxu0 %v5829
        %v5907 = vpop.f32.mrb[0].mxu0
        %v5908 = vadd.f32 0.0, %v5907
        %v5909 = vpop.f32.mrb[0].mxu0
        %5910 = vmatprep.mubr.f32.mxu0 0.0
        %5911 = vmatmul.mubr.f32.gmra.mrb[0].mxu0 %v5830
        %v5912 = vpop.f32.mrb[0].mxu0
        %v5913 = vadd.f32 0.0, %v5912
        %v5914 = vpop.f32.mrb[0].mxu0
        %5915 = vmatprep.mubr.f32.mxu0 0.0
        %5916 = vmatmul.mubr.f32.gmra.mrb[0].mxu0 %v5831
        %v5917 = vpop.f32.mrb[0].mxu0
        %v5918 = vadd.f32 0.0, %v5917
        %v5919 = vpop.f32.mrb[0].mxu0
        %5920 = vmatprep.mubr.f32.mxu0 0.0
        %5921 = vmatmul.mubr.f32.gmra.mrb[0].mxu0 %v5832
        %v5922 = vpop.f32.mrb[0].mxu0
        %v5923 = vadd.f32 0.0, %v5922
        %v5924 = vpop.f32.mrb[0].mxu0
        %5925 = vmatprep.mubr.f32.mxu0 0.0
        %5926 = vmatmul.mubr.f32.gmra.mrb[0].mxu0 %v5833
        %v5927 = vpop.f32.mrb[0].mxu0
        %v5928 = vadd.f32 0.0, %v5927
        %v5929 = vpop.f32.mrb[0].mxu0
        %5930 = vmatprep.mubr.f32.mxu0 0.0
        %5931 = vmatmul.mubr.f32.gmra.mrb[0].mxu0 %v5834
        %v5932 = vpop.f32.mrb[0].mxu0
        %v5933 = vadd.f32 0.0, %v5932
        %v5934 = vpop.f32.mrb[0].mxu0
        %5935 = vmatprep.mubr.f32.mxu0 0.0
        %5936 = vmatmul.mubr.f32.gmra.mrb[0].mxu0 %v5835
        %v5937 = vpop.f32.mrb[0].mxu0
        %v5938 = vadd.f32 0.0, %v5937
        %v5939 = vpop.f32.mrb[0].mxu0
        %5940 = vdwg.mxu0
        %v5941 = vadd.f32 %v5820, %v5903
        %v5942 = vadd.f32 %v5821, %v5908
        %v5943 = vadd.f32 %v5822, %v5913
        %v5944 = vadd.f32 %v5823, %v5918
        %v5945 = vadd.f32 %v5824, %v5923
        %v5946 = vadd.f32 %v5825, %v5928
        %v5947 = vadd.f32 %v5826, %v5933
        %v5948 = vadd.f32 %v5827, %v5938
        %v5949 = vadd.f32 %v5941, %v3751
        %v5950 = vadd.f32 %v5942, %v3751
        %v5951 = vadd.f32 %v5943, %v3751
        %v5952 = vadd.f32 %v5944, %v3751
        %v5953 = vadd.f32 %v5945, %v3751
        %v5954 = vadd.f32 %v5946, %v3751
        %v5955 = vadd.f32 %v5947, %v3751
        %v5956 = vadd.f32 %v5948, %v3751
        %v5957 = vmax.f32 %v5949, 0.0
        %v5958 = vmax.f32 %v5950, 0.0
        %v5959 = vmax.f32 %v5951, 0.0
        %v5960 = vmax.f32 %v5952, 0.0
        %v5961 = vmax.f32 %v5953, 0.0
        %v5962 = vmax.f32 %v5954, 0.0
        %v5963 = vmax.f32 %v5955, 0.0
        %v5964 = vmax.f32 %v5956, 0.0
        %s5965 = scalar_lea.vmem %s365, 16 [#allocation13]
        %5966 = vst [vmem:[%s5965] sm:$0xff] %v5957
        %5967 = vst [vmem:[%s5965 + $0x20] sm:$0xff] %v5958
        %5968 = vst [vmem:[%s5965 + $0x40] sm:$0xff] %v5959
        %5969 = vst [vmem:[%s5965 + $0x60] sm:$0xff] %v5960
        %5970 = vst [vmem:[%s5965 + $0x80] sm:$0xff] %v5961
        %5971 = vst [vmem:[%s5965 + $0xa0] sm:$0xff] %v5962
        %5972 = vst [vmem:[%s5965 + $0xc0] sm:$0xff] %v5963
        %5973 = vst [vmem:[%s5965 + $0xe0] sm:$0xff] %v5964
        %v5974 = vld [vmem:[%s1977 + $0x1] sm:$0xff]
        %v5975 = vld [vmem:[%s1977 + $0x11] sm:$0xff]
        %v5976 = vld [vmem:[%s1977 + $0x21] sm:$0xff]
        %v5977 = vld [vmem:[%s1977 + $0x31] sm:$0xff]
        %v5978 = vld [vmem:[%s1977 + $0x41] sm:$0xff]
        %v5979 = vld [vmem:[%s1977 + $0x51] sm:$0xff]
        %v5980 = vld [vmem:[%s1977 + $0x61] sm:$0xff]
        %v5981 = vld [vmem:[%s1977 + $0x71] sm:$0xff]
        %v5982 = vld [vmem:[%s2146 + $0x1] sm:$0xff]
        %v5983 = vld [vmem:[%s2146 + $0x11] sm:$0xff]
        %v5984 = vld [vmem:[%s2146 + $0x21] sm:$0xff]
        %v5985 = vld [vmem:[%s2146 + $0x31] sm:$0xff]
        %v5986 = vld [vmem:[%s2146 + $0x41] sm:$0xff]
        %v5987 = vld [vmem:[%s2146 + $0x51] sm:$0xff]
        %v5988 = vld [vmem:[%s2146 + $0x61] sm:$0xff]
        %v5989 = vld [vmem:[%s2146 + $0x71] sm:$0xff]
        %5990 = vmatprep.subr.mxu0 0.0
        %5991 = vmatpush1.msra.mxu0 %v2536
        %5992 = vmatprep.subr.mxu0 0.0
        %5993 = vmatpush1.msra.mxu0 %v2537
        %5994 = vmatprep.subr.mxu0 0.0
        %5995 = vmatpush1.msra.mxu0 %v2538
        %5996 = vmatprep.subr.mxu0 0.0
        %5997 = vmatpush1.msra.mxu0 %v2539
        %5998 = vmatprep.subr.mxu0 0.0
        %5999 = vmatpush1.msra.mxu0 %v2540
        %6000 = vmatprep.subr.mxu0 0.0
        %6001 = vmatpush1.msra.mxu0 %v2541
        %6002 = vmatprep.subr.mxu0 0.0
        %6003 = vmatpush1.msra.mxu0 %v2542
        %6004 = vmatprep.subr.mxu0 0.0
        %6005 = vmatpush1.msra.mxu0 %v2543
        %6006 = vmatprep.subr.mxu0 0.0
        %6007 = vmatpush1.msra.mxu0 %v2544
        %6008 = vmatprep.subr.mxu0 0.0
        %6009 = vmatpush1.msra.mxu0 %v2545
        %6010 = vmatprep.subr.mxu0 0.0
        %6011 = vmatpush1.msra.mxu0 %v2546
        %6012 = vmatprep.subr.mxu0 0.0
        %6013 = vmatpush1.msra.mxu0 %v2547
        %6014 = vmatprep.subr.mxu0 0.0
        %6015 = vmatpush1.msra.mxu0 %v2548
        %6016 = vmatprep.subr.mxu0 0.0
        %6017 = vmatpush1.msra.mxu0 %v2549
        %6018 = vmatprep.subr.mxu0 0.0
        %6019 = vmatpush1.msra.mxu0 %v2550
        %6020 = vmatprep.subr.mxu0 0.0
        %6021 = vmatpush1.msra.mxu0 %v2551
        %6022 = vmatprep.subr.mxu0 0.0
        %6023 = vmatpush1.msra.mxu0 0.0
        %6024 = vmatprep.subr.mxu0 0.0
        %6025 = vmatpush1.msra.mxu0 0.0
        %6026 = vmatprep.subr.mxu0 0.0
        %6027 = vmatpush1.msra.mxu0 0.0
        %6028 = vmatprep.subr.mxu0 0.0
        %6029 = vmatpush1.msra.mxu0 0.0
        %6030 = vmatprep.subr.mxu0 0.0
        %6031 = vmatpush1.msra.mxu0 0.0
        %6032 = vmatprep.subr.mxu0 0.0
        %6033 = vmatpush1.msra.mxu0 0.0
        %6034 = vmatprep.subr.mxu0 0.0
        %6035 = vmatpush1.msra.mxu0 0.0
        %6036 = vmatprep.subr.mxu0 0.0
        %6037 = vmatpush1.msra.mxu0 0.0
        %6038 = vmatprep.subr.mxu0 0.0
        %6039 = vmatpush1.msra.mxu0 0.0
        %6040 = vmatprep.subr.mxu0 0.0
        %6041 = vmatpush1.msra.mxu0 0.0
        %6042 = vmatprep.subr.mxu0 0.0
        %6043 = vmatpush1.msra.mxu0 0.0
        %6044 = vmatprep.subr.mxu0 0.0
        %6045 = vmatpush1.msra.mxu0 0.0
        %6046 = vmatprep.subr.mxu0 0.0
        %6047 = vmatpush1.msra.mxu0 0.0
        %6048 = vmatprep.subr.mxu0 0.0
        %6049 = vmatpush1.msra.mxu0 0.0
        %6050 = vmatprep.subr.mxu0 0.0
        %6051 = vmatpush1.msra.mxu0 0.0
        %6052 = vmatprep.subr.mxu0 0.0
        %6053 = vmatpush1.msra.mxu0 0.0
        %6054 = vmatprep.mubr.f32.mxu0 0.0
        %6055 = vmatmul.mubr.f32.gmra.mrb[0].mxu0 %v5982
        %v6056 = vpop.f32.mrb[0].mxu0
        %v6057 = vadd.f32 0.0, %v6056
        %v6058 = vpop.f32.mrb[0].mxu0
        %6059 = vmatprep.mubr.f32.mxu0 0.0
        %6060 = vmatmul.mubr.f32.gmra.mrb[0].mxu0 %v5983
        %v6061 = vpop.f32.mrb[0].mxu0
        %v6062 = vadd.f32 0.0, %v6061
        %v6063 = vpop.f32.mrb[0].mxu0
        %6064 = vmatprep.mubr.f32.mxu0 0.0
        %6065 = vmatmul.mubr.f32.gmra.mrb[0].mxu0 %v5984
        %v6066 = vpop.f32.mrb[0].mxu0
        %v6067 = vadd.f32 0.0, %v6066
        %v6068 = vpop.f32.mrb[0].mxu0
        %6069 = vmatprep.mubr.f32.mxu0 0.0
        %6070 = vmatmul.mubr.f32.gmra.mrb[0].mxu0 %v5985
        %v6071 = vpop.f32.mrb[0].mxu0
        %v6072 = vadd.f32 0.0, %v6071
        %v6073 = vpop.f32.mrb[0].mxu0
        %6074 = vmatprep.mubr.f32.mxu0 0.0
        %6075 = vmatmul.mubr.f32.gmra.mrb[0].mxu0 %v5986
        %v6076 = vpop.f32.mrb[0].mxu0
        %v6077 = vadd.f32 0.0, %v6076
        %v6078 = vpop.f32.mrb[0].mxu0
        %6079 = vmatprep.mubr.f32.mxu0 0.0
        %6080 = vmatmul.mubr.f32.gmra.mrb[0].mxu0 %v5987
        %v6081 = vpop.f32.mrb[0].mxu0
        %v6082 = vadd.f32 0.0, %v6081
        %v6083 = vpop.f32.mrb[0].mxu0
        %6084 = vmatprep.mubr.f32.mxu0 0.0
        %6085 = vmatmul.mubr.f32.gmra.mrb[0].mxu0 %v5988
        %v6086 = vpop.f32.mrb[0].mxu0
        %v6087 = vadd.f32 0.0, %v6086
        %v6088 = vpop.f32.mrb[0].mxu0
        %6089 = vmatprep.mubr.f32.mxu0 0.0
        %6090 = vmatmul.mubr.f32.gmra.mrb[0].mxu0 %v5989
        %v6091 = vpop.f32.mrb[0].mxu0
        %v6092 = vadd.f32 0.0, %v6091
        %v6093 = vpop.f32.mrb[0].mxu0
        %6094 = vdwg.mxu0
        %6095 = vmatprep.subr.mxu0 0.0
        %6096 = vmatpush1.msra.mxu0 %v2519
        %6097 = vmatprep.subr.mxu0 0.0
        %6098 = vmatpush1.msra.mxu0 %v2520
        %6099 = vmatprep.subr.mxu0 0.0
        %6100 = vmatpush1.msra.mxu0 %v2521
        %6101 = vmatprep.subr.mxu0 0.0
        %6102 = vmatpush1.msra.mxu0 %v2522
        %6103 = vmatprep.subr.mxu0 0.0
        %6104 = vmatpush1.msra.mxu0 %v2523
        %6105 = vmatprep.subr.mxu0 0.0
        %6106 = vmatpush1.msra.mxu0 %v2524
        %6107 = vmatprep.subr.mxu0 0.0
        %6108 = vmatpush1.msra.mxu0 %v2525
        %6109 = vmatprep.subr.mxu0 0.0
        %6110 = vmatpush1.msra.mxu0 %v2526
        %6111 = vmatprep.subr.mxu0 0.0
        %6112 = vmatpush1.msra.mxu0 %v2527
        %6113 = vmatprep.subr.mxu0 0.0
        %6114 = vmatpush1.msra.mxu0 %v2528
        %6115 = vmatprep.subr.mxu0 0.0
        %6116 = vmatpush1.msra.mxu0 %v2529
        %6117 = vmatprep.subr.mxu0 0.0
        %6118 = vmatpush1.msra.mxu0 %v2530
        %6119 = vmatprep.subr.mxu0 0.0
        %6120 = vmatpush1.msra.mxu0 %v2531
        %6121 = vmatprep.subr.mxu0 0.0
        %6122 = vmatpush1.msra.mxu0 %v2532
        %6123 = vmatprep.subr.mxu0 0.0
        %6124 = vmatpush1.msra.mxu0 %v2533
        %6125 = vmatprep.subr.mxu0 0.0
        %6126 = vmatpush1.msra.mxu0 %v2534
        %6127 = vmatprep.subr.mxu0 0.0
        %6128 = vmatpush1.msra.mxu0 0.0
        %6129 = vmatprep.subr.mxu0 0.0
        %6130 = vmatpush1.msra.mxu0 0.0
        %6131 = vmatprep.subr.mxu0 0.0
        %6132 = vmatpush1.msra.mxu0 0.0
        %6133 = vmatprep.subr.mxu0 0.0
        %6134 = vmatpush1.msra.mxu0 0.0
        %6135 = vmatprep.subr.mxu0 0.0
        %6136 = vmatpush1.msra.mxu0 0.0
        %6137 = vmatprep.subr.mxu0 0.0
        %6138 = vmatpush1.msra.mxu0 0.0
        %6139 = vmatprep.subr.mxu0 0.0
        %6140 = vmatpush1.msra.mxu0 0.0
        %6141 = vmatprep.subr.mxu0 0.0
        %6142 = vmatpush1.msra.mxu0 0.0
        %6143 = vmatprep.subr.mxu0 0.0
        %6144 = vmatpush1.msra.mxu0 0.0
        %6145 = vmatprep.subr.mxu0 0.0
        %6146 = vmatpush1.msra.mxu0 0.0
        %6147 = vmatprep.subr.mxu0 0.0
        %6148 = vmatpush1.msra.mxu0 0.0
        %6149 = vmatprep.subr.mxu0 0.0
        %6150 = vmatpush1.msra.mxu0 0.0
        %6151 = vmatprep.subr.mxu0 0.0
        %6152 = vmatpush1.msra.mxu0 0.0
        %6153 = vmatprep.subr.mxu0 0.0
        %6154 = vmatpush1.msra.mxu0 0.0
        %6155 = vmatprep.subr.mxu0 0.0
        %6156 = vmatpush1.msra.mxu0 0.0
        %6157 = vmatprep.subr.mxu0 0.0
        %6158 = vmatpush1.msra.mxu0 0.0
        %6159 = vmatprep.mubr.f32.mxu0 0.0
        %6160 = vmatmul.mubr.f32.gmra.mrb[0].mxu0 %v5974
        %v6161 = vpop.f32.mrb[0].mxu0
        %v6162 = vadd.f32 %v6057, %v6161
        %v6163 = vpop.f32.mrb[0].mxu0
        %6164 = vmatprep.mubr.f32.mxu0 0.0
        %6165 = vmatmul.mubr.f32.gmra.mrb[0].mxu0 %v5975
        %v6166 = vpop.f32.mrb[0].mxu0
        %v6167 = vadd.f32 %v6062, %v6166
        %v6168 = vpop.f32.mrb[0].mxu0
        %6169 = vmatprep.mubr.f32.mxu0 0.0
        %6170 = vmatmul.mubr.f32.gmra.mrb[0].mxu0 %v5976
        %v6171 = vpop.f32.mrb[0].mxu0
        %v6172 = vadd.f32 %v6067, %v6171
        %v6173 = vpop.f32.mrb[0].mxu0
        %6174 = vmatprep.mubr.f32.mxu0 0.0
        %6175 = vmatmul.mubr.f32.gmra.mrb[0].mxu0 %v5977
        %v6176 = vpop.f32.mrb[0].mxu0
        %v6177 = vadd.f32 %v6072, %v6176
        %v6178 = vpop.f32.mrb[0].mxu0
        %6179 = vmatprep.mubr.f32.mxu0 0.0
        %6180 = vmatmul.mubr.f32.gmra.mrb[0].mxu0 %v5978
        %v6181 = vpop.f32.mrb[0].mxu0
        %v6182 = vadd.f32 %v6077, %v6181
        %v6183 = vpop.f32.mrb[0].mxu0
        %6184 = vmatprep.mubr.f32.mxu0 0.0
        %6185 = vmatmul.mubr.f32.gmra.mrb[0].mxu0 %v5979
        %v6186 = vpop.f32.mrb[0].mxu0
        %v6187 = vadd.f32 %v6082, %v6186
        %v6188 = vpop.f32.mrb[0].mxu0
        %6189 = vmatprep.mubr.f32.mxu0 0.0
        %6190 = vmatmul.mubr.f32.gmra.mrb[0].mxu0 %v5980
        %v6191 = vpop.f32.mrb[0].mxu0
        %v6192 = vadd.f32 %v6087, %v6191
        %v6193 = vpop.f32.mrb[0].mxu0
        %6194 = vmatprep.mubr.f32.mxu0 0.0
        %6195 = vmatmul.mubr.f32.gmra.mrb[0].mxu0 %v5981
        %v6196 = vpop.f32.mrb[0].mxu0
        %v6197 = vadd.f32 %v6092, %v6196
        %v6198 = vpop.f32.mrb[0].mxu0
        %6199 = vdwg.mxu0
        %v6200 = vld [vmem:[%s1977 + $0x2] sm:$0xff]
        %v6201 = vld [vmem:[%s1977 + $0x12] sm:$0xff]
        %v6202 = vld [vmem:[%s1977 + $0x22] sm:$0xff]
        %v6203 = vld [vmem:[%s1977 + $0x32] sm:$0xff]
        %v6204 = vld [vmem:[%s1977 + $0x42] sm:$0xff]
        %v6205 = vld [vmem:[%s1977 + $0x52] sm:$0xff]
        %v6206 = vld [vmem:[%s1977 + $0x62] sm:$0xff]
        %v6207 = vld [vmem:[%s1977 + $0x72] sm:$0xff]
        %6208 = vmatprep.subr.mxu0 0.0
        %6209 = vmatpush1.msra.mxu0 %v2553
        %6210 = vmatprep.subr.mxu0 0.0
        %6211 = vmatpush1.msra.mxu0 %v2554
        %6212 = vmatprep.subr.mxu0 0.0
        %6213 = vmatpush1.msra.mxu0 %v2555
        %6214 = vmatprep.subr.mxu0 0.0
        %6215 = vmatpush1.msra.mxu0 %v2556
        %6216 = vmatprep.subr.mxu0 0.0
        %6217 = vmatpush1.msra.mxu0 %v2557
        %6218 = vmatprep.subr.mxu0 0.0
        %6219 = vmatpush1.msra.mxu0 %v2558
        %6220 = vmatprep.subr.mxu0 0.0
        %6221 = vmatpush1.msra.mxu0 %v2559
        %6222 = vmatprep.subr.mxu0 0.0
        %6223 = vmatpush1.msra.mxu0 %v2560
        %6224 = vmatprep.subr.mxu0 0.0
        %6225 = vmatpush1.msra.mxu0 %v2561
        %6226 = vmatprep.subr.mxu0 0.0
        %6227 = vmatpush1.msra.mxu0 %v2562
        %6228 = vmatprep.subr.mxu0 0.0
        %6229 = vmatpush1.msra.mxu0 %v2563
        %6230 = vmatprep.subr.mxu0 0.0
        %6231 = vmatpush1.msra.mxu0 %v2564
        %6232 = vmatprep.subr.mxu0 0.0
        %6233 = vmatpush1.msra.mxu0 %v2565
        %6234 = vmatprep.subr.mxu0 0.0
        %6235 = vmatpush1.msra.mxu0 %v2566
        %6236 = vmatprep.subr.mxu0 0.0
        %6237 = vmatpush1.msra.mxu0 %v2567
        %6238 = vmatprep.subr.mxu0 0.0
        %6239 = vmatpush1.msra.mxu0 %v2568
        %6240 = vmatprep.subr.mxu0 0.0
        %6241 = vmatpush1.msra.mxu0 0.0
        %6242 = vmatprep.subr.mxu0 0.0
        %6243 = vmatpush1.msra.mxu0 0.0
        %6244 = vmatprep.subr.mxu0 0.0
        %6245 = vmatpush1.msra.mxu0 0.0
        %6246 = vmatprep.subr.mxu0 0.0
        %6247 = vmatpush1.msra.mxu0 0.0
        %6248 = vmatprep.subr.mxu0 0.0
        %6249 = vmatpush1.msra.mxu0 0.0
        %6250 = vmatprep.subr.mxu0 0.0
        %6251 = vmatpush1.msra.mxu0 0.0
        %6252 = vmatprep.subr.mxu0 0.0
        %6253 = vmatpush1.msra.mxu0 0.0
        %6254 = vmatprep.subr.mxu0 0.0
        %6255 = vmatpush1.msra.mxu0 0.0
        %6256 = vmatprep.subr.mxu0 0.0
        %6257 = vmatpush1.msra.mxu0 0.0
        %6258 = vmatprep.subr.mxu0 0.0
        %6259 = vmatpush1.msra.mxu0 0.0
        %6260 = vmatprep.subr.mxu0 0.0
        %6261 = vmatpush1.msra.mxu0 0.0
        %6262 = vmatprep.subr.mxu0 0.0
        %6263 = vmatpush1.msra.mxu0 0.0
        %6264 = vmatprep.subr.mxu0 0.0
        %6265 = vmatpush1.msra.mxu0 0.0
        %6266 = vmatprep.subr.mxu0 0.0
        %6267 = vmatpush1.msra.mxu0 0.0
        %6268 = vmatprep.subr.mxu0 0.0
        %6269 = vmatpush1.msra.mxu0 0.0
        %6270 = vmatprep.subr.mxu0 0.0
        %6271 = vmatpush1.msra.mxu0 0.0
        %6272 = vmatprep.mubr.f32.mxu0 0.0
        %6273 = vmatmul.mubr.f32.gmra.mrb[0].mxu0 %v6200
        %v6274 = vpop.f32.mrb[0].mxu0
        %v6275 = vadd.f32 0.0, %v6274
        %v6276 = vpop.f32.mrb[0].mxu0
        %6277 = vmatprep.mubr.f32.mxu0 0.0
        %6278 = vmatmul.mubr.f32.gmra.mrb[0].mxu0 %v6201
        %v6279 = vpop.f32.mrb[0].mxu0
        %v6280 = vadd.f32 0.0, %v6279
        %v6281 = vpop.f32.mrb[0].mxu0
        %6282 = vmatprep.mubr.f32.mxu0 0.0
        %6283 = vmatmul.mubr.f32.gmra.mrb[0].mxu0 %v6202
        %v6284 = vpop.f32.mrb[0].mxu0
        %v6285 = vadd.f32 0.0, %v6284
        %v6286 = vpop.f32.mrb[0].mxu0
        %6287 = vmatprep.mubr.f32.mxu0 0.0
        %6288 = vmatmul.mubr.f32.gmra.mrb[0].mxu0 %v6203
        %v6289 = vpop.f32.mrb[0].mxu0
        %v6290 = vadd.f32 0.0, %v6289
        %v6291 = vpop.f32.mrb[0].mxu0
        %6292 = vmatprep.mubr.f32.mxu0 0.0
        %6293 = vmatmul.mubr.f32.gmra.mrb[0].mxu0 %v6204
        %v6294 = vpop.f32.mrb[0].mxu0
        %v6295 = vadd.f32 0.0, %v6294
        %v6296 = vpop.f32.mrb[0].mxu0
        %6297 = vmatprep.mubr.f32.mxu0 0.0
        %6298 = vmatmul.mubr.f32.gmra.mrb[0].mxu0 %v6205
        %v6299 = vpop.f32.mrb[0].mxu0
        %v6300 = vadd.f32 0.0, %v6299
        %v6301 = vpop.f32.mrb[0].mxu0
        %6302 = vmatprep.mubr.f32.mxu0 0.0
        %6303 = vmatmul.mubr.f32.gmra.mrb[0].mxu0 %v6206
        %v6304 = vpop.f32.mrb[0].mxu0
        %v6305 = vadd.f32 0.0, %v6304
        %v6306 = vpop.f32.mrb[0].mxu0
        %6307 = vmatprep.mubr.f32.mxu0 0.0
        %6308 = vmatmul.mubr.f32.gmra.mrb[0].mxu0 %v6207
        %v6309 = vpop.f32.mrb[0].mxu0
        %v6310 = vadd.f32 0.0, %v6309
        %v6311 = vpop.f32.mrb[0].mxu0
        %6312 = vdwg.mxu0
        %v6313 = vadd.f32 %v6162, %v6275
        %v6314 = vadd.f32 %v6167, %v6280
        %v6315 = vadd.f32 %v6172, %v6285
        %v6316 = vadd.f32 %v6177, %v6290
        %v6317 = vadd.f32 %v6182, %v6295
        %v6318 = vadd.f32 %v6187, %v6300
        %v6319 = vadd.f32 %v6192, %v6305
        %v6320 = vadd.f32 %v6197, %v6310
        %v6321 = vld [vmem:[%s2341 + $0x1] sm:$0xff]
        %v6322 = vld [vmem:[%s2341 + $0x11] sm:$0xff]
        %v6323 = vld [vmem:[%s2341 + $0x21] sm:$0xff]
        %v6324 = vld [vmem:[%s2341 + $0x31] sm:$0xff]
        %v6325 = vld [vmem:[%s2341 + $0x41] sm:$0xff]
        %v6326 = vld [vmem:[%s2341 + $0x51] sm:$0xff]
        %v6327 = vld [vmem:[%s2341 + $0x61] sm:$0xff]
        %v6328 = vld [vmem:[%s2341 + $0x71] sm:$0xff]
        %6329 = vmatprep.subr.mxu0 0.0
        %6330 = vmatpush1.msra.mxu0 %v2570
        %6331 = vmatprep.subr.mxu0 0.0
        %6332 = vmatpush1.msra.mxu0 %v2571
        %6333 = vmatprep.subr.mxu0 0.0
        %6334 = vmatpush1.msra.mxu0 %v2572
        %6335 = vmatprep.subr.mxu0 0.0
        %6336 = vmatpush1.msra.mxu0 %v2573
        %6337 = vmatprep.subr.mxu0 0.0
        %6338 = vmatpush1.msra.mxu0 %v2574
        %6339 = vmatprep.subr.mxu0 0.0
        %6340 = vmatpush1.msra.mxu0 %v2575
        %6341 = vmatprep.subr.mxu0 0.0
        %6342 = vmatpush1.msra.mxu0 %v2576
        %6343 = vmatprep.subr.mxu0 0.0
        %6344 = vmatpush1.msra.mxu0 %v2577
        %6345 = vmatprep.subr.mxu0 0.0
        %6346 = vmatpush1.msra.mxu0 %v2578
        %6347 = vmatprep.subr.mxu0 0.0
        %6348 = vmatpush1.msra.mxu0 %v2579
        %6349 = vmatprep.subr.mxu0 0.0
        %6350 = vmatpush1.msra.mxu0 %v2580
        %6351 = vmatprep.subr.mxu0 0.0
        %6352 = vmatpush1.msra.mxu0 %v2581
        %6353 = vmatprep.subr.mxu0 0.0
        %6354 = vmatpush1.msra.mxu0 %v2582
        %6355 = vmatprep.subr.mxu0 0.0
        %6356 = vmatpush1.msra.mxu0 %v2583
        %6357 = vmatprep.subr.mxu0 0.0
        %6358 = vmatpush1.msra.mxu0 %v2584
        %6359 = vmatprep.subr.mxu0 0.0
        %6360 = vmatpush1.msra.mxu0 %v2585
        %6361 = vmatprep.subr.mxu0 0.0
        %6362 = vmatpush1.msra.mxu0 0.0
        %6363 = vmatprep.subr.mxu0 0.0
        %6364 = vmatpush1.msra.mxu0 0.0
        %6365 = vmatprep.subr.mxu0 0.0
        %6366 = vmatpush1.msra.mxu0 0.0
        %6367 = vmatprep.subr.mxu0 0.0
        %6368 = vmatpush1.msra.mxu0 0.0
        %6369 = vmatprep.subr.mxu0 0.0
        %6370 = vmatpush1.msra.mxu0 0.0
        %6371 = vmatprep.subr.mxu0 0.0
        %6372 = vmatpush1.msra.mxu0 0.0
        %6373 = vmatprep.subr.mxu0 0.0
        %6374 = vmatpush1.msra.mxu0 0.0
        %6375 = vmatprep.subr.mxu0 0.0
        %6376 = vmatpush1.msra.mxu0 0.0
        %6377 = vmatprep.subr.mxu0 0.0
        %6378 = vmatpush1.msra.mxu0 0.0
        %6379 = vmatprep.subr.mxu0 0.0
        %6380 = vmatpush1.msra.mxu0 0.0
        %6381 = vmatprep.subr.mxu0 0.0
        %6382 = vmatpush1.msra.mxu0 0.0
        %6383 = vmatprep.subr.mxu0 0.0
        %6384 = vmatpush1.msra.mxu0 0.0
        %6385 = vmatprep.subr.mxu0 0.0
        %6386 = vmatpush1.msra.mxu0 0.0
        %6387 = vmatprep.subr.mxu0 0.0
        %6388 = vmatpush1.msra.mxu0 0.0
        %6389 = vmatprep.subr.mxu0 0.0
        %6390 = vmatpush1.msra.mxu0 0.0
        %6391 = vmatprep.subr.mxu0 0.0
        %6392 = vmatpush1.msra.mxu0 0.0
        %6393 = vmatprep.mubr.f32.mxu0 0.0
        %6394 = vmatmul.mubr.f32.gmra.mrb[0].mxu0 %v6321
        %v6395 = vpop.f32.mrb[0].mxu0
        %v6396 = vadd.f32 0.0, %v6395
        %v6397 = vpop.f32.mrb[0].mxu0
        %6398 = vmatprep.mubr.f32.mxu0 0.0
        %6399 = vmatmul.mubr.f32.gmra.mrb[0].mxu0 %v6322
        %v6400 = vpop.f32.mrb[0].mxu0
        %v6401 = vadd.f32 0.0, %v6400
        %v6402 = vpop.f32.mrb[0].mxu0
        %6403 = vmatprep.mubr.f32.mxu0 0.0
        %6404 = vmatmul.mubr.f32.gmra.mrb[0].mxu0 %v6323
        %v6405 = vpop.f32.mrb[0].mxu0
        %v6406 = vadd.f32 0.0, %v6405
        %v6407 = vpop.f32.mrb[0].mxu0
        %6408 = vmatprep.mubr.f32.mxu0 0.0
        %6409 = vmatmul.mubr.f32.gmra.mrb[0].mxu0 %v6324
        %v6410 = vpop.f32.mrb[0].mxu0
        %v6411 = vadd.f32 0.0, %v6410
        %v6412 = vpop.f32.mrb[0].mxu0
        %6413 = vmatprep.mubr.f32.mxu0 0.0
        %6414 = vmatmul.mubr.f32.gmra.mrb[0].mxu0 %v6325
        %v6415 = vpop.f32.mrb[0].mxu0
        %v6416 = vadd.f32 0.0, %v6415
        %v6417 = vpop.f32.mrb[0].mxu0
        %6418 = vmatprep.mubr.f32.mxu0 0.0
        %6419 = vmatmul.mubr.f32.gmra.mrb[0].mxu0 %v6326
        %v6420 = vpop.f32.mrb[0].mxu0
        %v6421 = vadd.f32 0.0, %v6420
        %v6422 = vpop.f32.mrb[0].mxu0
        %6423 = vmatprep.mubr.f32.mxu0 0.0
        %6424 = vmatmul.mubr.f32.gmra.mrb[0].mxu0 %v6327
        %v6425 = vpop.f32.mrb[0].mxu0
        %v6426 = vadd.f32 0.0, %v6425
        %v6427 = vpop.f32.mrb[0].mxu0
        %6428 = vmatprep.mubr.f32.mxu0 0.0
        %6429 = vmatmul.mubr.f32.gmra.mrb[0].mxu0 %v6328
        %v6430 = vpop.f32.mrb[0].mxu0
        %v6431 = vadd.f32 0.0, %v6430
        %v6432 = vpop.f32.mrb[0].mxu0
        %6433 = vdwg.mxu0
        %v6434 = vadd.f32 %v6313, %v6396
        %v6435 = vadd.f32 %v6314, %v6401
        %v6436 = vadd.f32 %v6315, %v6406
        %v6437 = vadd.f32 %v6316, %v6411
        %v6438 = vadd.f32 %v6317, %v6416
        %v6439 = vadd.f32 %v6318, %v6421
        %v6440 = vadd.f32 %v6319, %v6426
        %v6441 = vadd.f32 %v6320, %v6431
        %v6442 = vld [vmem:[%s2502 + $0x1] sm:$0xff]
        %v6443 = vld [vmem:[%s2502 + $0x11] sm:$0xff]
        %v6444 = vld [vmem:[%s2502 + $0x21] sm:$0xff]
        %v6445 = vld [vmem:[%s2502 + $0x31] sm:$0xff]
        %v6446 = vld [vmem:[%s2502 + $0x41] sm:$0xff]
        %v6447 = vld [vmem:[%s2502 + $0x51] sm:$0xff]
        %v6448 = vld [vmem:[%s2502 + $0x61] sm:$0xff]
        %v6449 = vld [vmem:[%s2502 + $0x71] sm:$0xff]
        %6450 = vmatprep.subr.mxu0 0.0
        %6451 = vmatpush1.msra.mxu0 %v2587
        %6452 = vmatprep.subr.mxu0 0.0
        %6453 = vmatpush1.msra.mxu0 %v2588
        %6454 = vmatprep.subr.mxu0 0.0
        %6455 = vmatpush1.msra.mxu0 %v2589
        %6456 = vmatprep.subr.mxu0 0.0
        %6457 = vmatpush1.msra.mxu0 %v2590
        %6458 = vmatprep.subr.mxu0 0.0
        %6459 = vmatpush1.msra.mxu0 %v2591
        %6460 = vmatprep.subr.mxu0 0.0
        %6461 = vmatpush1.msra.mxu0 %v2592
        %6462 = vmatprep.subr.mxu0 0.0
        %6463 = vmatpush1.msra.mxu0 %v2593
        %6464 = vmatprep.subr.mxu0 0.0
        %6465 = vmatpush1.msra.mxu0 %v2594
        %6466 = vmatprep.subr.mxu0 0.0
        %6467 = vmatpush1.msra.mxu0 %v2595
        %6468 = vmatprep.subr.mxu0 0.0
        %6469 = vmatpush1.msra.mxu0 %v2596
        %6470 = vmatprep.subr.mxu0 0.0
        %6471 = vmatpush1.msra.mxu0 %v2597
        %6472 = vmatprep.subr.mxu0 0.0
        %6473 = vmatpush1.msra.mxu0 %v2598
        %6474 = vmatprep.subr.mxu0 0.0
        %6475 = vmatpush1.msra.mxu0 %v2599
        %6476 = vmatprep.subr.mxu0 0.0
        %6477 = vmatpush1.msra.mxu0 %v2600
        %6478 = vmatprep.subr.mxu0 0.0
        %6479 = vmatpush1.msra.mxu0 %v2601
        %6480 = vmatprep.subr.mxu0 0.0
        %6481 = vmatpush1.msra.mxu0 %v2602
        %6482 = vmatprep.subr.mxu0 0.0
        %6483 = vmatpush1.msra.mxu0 0.0
        %6484 = vmatprep.subr.mxu0 0.0
        %6485 = vmatpush1.msra.mxu0 0.0
        %6486 = vmatprep.subr.mxu0 0.0
        %6487 = vmatpush1.msra.mxu0 0.0
        %6488 = vmatprep.subr.mxu0 0.0
        %6489 = vmatpush1.msra.mxu0 0.0
        %6490 = vmatprep.subr.mxu0 0.0
        %6491 = vmatpush1.msra.mxu0 0.0
        %6492 = vmatprep.subr.mxu0 0.0
        %6493 = vmatpush1.msra.mxu0 0.0
        %6494 = vmatprep.subr.mxu0 0.0
        %6495 = vmatpush1.msra.mxu0 0.0
        %6496 = vmatprep.subr.mxu0 0.0
        %6497 = vmatpush1.msra.mxu0 0.0
        %6498 = vmatprep.subr.mxu0 0.0
        %6499 = vmatpush1.msra.mxu0 0.0
        %6500 = vmatprep.subr.mxu0 0.0
        %6501 = vmatpush1.msra.mxu0 0.0
        %6502 = vmatprep.subr.mxu0 0.0
        %6503 = vmatpush1.msra.mxu0 0.0
        %6504 = vmatprep.subr.mxu0 0.0
        %6505 = vmatpush1.msra.mxu0 0.0
        %6506 = vmatprep.subr.mxu0 0.0
        %6507 = vmatpush1.msra.mxu0 0.0
        %6508 = vmatprep.subr.mxu0 0.0
        %6509 = vmatpush1.msra.mxu0 0.0
        %6510 = vmatprep.subr.mxu0 0.0
        %6511 = vmatpush1.msra.mxu0 0.0
        %6512 = vmatprep.subr.mxu0 0.0
        %6513 = vmatpush1.msra.mxu0 0.0
        %6514 = vmatprep.mubr.f32.mxu0 0.0
        %6515 = vmatmul.mubr.f32.gmra.mrb[0].mxu0 %v6442
        %v6516 = vpop.f32.mrb[0].mxu0
        %v6517 = vadd.f32 0.0, %v6516
        %v6518 = vpop.f32.mrb[0].mxu0
        %6519 = vmatprep.mubr.f32.mxu0 0.0
        %6520 = vmatmul.mubr.f32.gmra.mrb[0].mxu0 %v6443
        %v6521 = vpop.f32.mrb[0].mxu0
        %v6522 = vadd.f32 0.0, %v6521
        %v6523 = vpop.f32.mrb[0].mxu0
        %6524 = vmatprep.mubr.f32.mxu0 0.0
        %6525 = vmatmul.mubr.f32.gmra.mrb[0].mxu0 %v6444
        %v6526 = vpop.f32.mrb[0].mxu0
        %v6527 = vadd.f32 0.0, %v6526
        %v6528 = vpop.f32.mrb[0].mxu0
        %6529 = vmatprep.mubr.f32.mxu0 0.0
        %6530 = vmatmul.mubr.f32.gmra.mrb[0].mxu0 %v6445
        %v6531 = vpop.f32.mrb[0].mxu0
        %v6532 = vadd.f32 0.0, %v6531
        %v6533 = vpop.f32.mrb[0].mxu0
        %6534 = vmatprep.mubr.f32.mxu0 0.0
        %6535 = vmatmul.mubr.f32.gmra.mrb[0].mxu0 %v6446
        %v6536 = vpop.f32.mrb[0].mxu0
        %v6537 = vadd.f32 0.0, %v6536
        %v6538 = vpop.f32.mrb[0].mxu0
        %6539 = vmatprep.mubr.f32.mxu0 0.0
        %6540 = vmatmul.mubr.f32.gmra.mrb[0].mxu0 %v6447
        %v6541 = vpop.f32.mrb[0].mxu0
        %v6542 = vadd.f32 0.0, %v6541
        %v6543 = vpop.f32.mrb[0].mxu0
        %6544 = vmatprep.mubr.f32.mxu0 0.0
        %6545 = vmatmul.mubr.f32.gmra.mrb[0].mxu0 %v6448
        %v6546 = vpop.f32.mrb[0].mxu0
        %v6547 = vadd.f32 0.0, %v6546
        %v6548 = vpop.f32.mrb[0].mxu0
        %6549 = vmatprep.mubr.f32.mxu0 0.0
        %6550 = vmatmul.mubr.f32.gmra.mrb[0].mxu0 %v6449
        %v6551 = vpop.f32.mrb[0].mxu0
        %v6552 = vadd.f32 0.0, %v6551
        %v6553 = vpop.f32.mrb[0].mxu0
        %6554 = vdwg.mxu0
        %v6555 = vadd.f32 %v6434, %v6517
        %v6556 = vadd.f32 %v6435, %v6522
        %v6557 = vadd.f32 %v6436, %v6527
        %v6558 = vadd.f32 %v6437, %v6532
        %v6559 = vadd.f32 %v6438, %v6537
        %v6560 = vadd.f32 %v6439, %v6542
        %v6561 = vadd.f32 %v6440, %v6547
        %v6562 = vadd.f32 %v6441, %v6552
        %v6563 = vld [vmem:[%s2341 + $0x2] sm:$0xff]
        %v6564 = vld [vmem:[%s2341 + $0x12] sm:$0xff]
        %v6565 = vld [vmem:[%s2341 + $0x22] sm:$0xff]
        %v6566 = vld [vmem:[%s2341 + $0x32] sm:$0xff]
        %v6567 = vld [vmem:[%s2341 + $0x42] sm:$0xff]
        %v6568 = vld [vmem:[%s2341 + $0x52] sm:$0xff]
        %v6569 = vld [vmem:[%s2341 + $0x62] sm:$0xff]
        %v6570 = vld [vmem:[%s2341 + $0x72] sm:$0xff]
        %6571 = vmatprep.subr.mxu0 0.0
        %6572 = vmatpush1.msra.mxu0 %v2604
        %6573 = vmatprep.subr.mxu0 0.0
        %6574 = vmatpush1.msra.mxu0 %v2605
        %6575 = vmatprep.subr.mxu0 0.0
        %6576 = vmatpush1.msra.mxu0 %v2606
        %6577 = vmatprep.subr.mxu0 0.0
        %6578 = vmatpush1.msra.mxu0 %v2607
        %6579 = vmatprep.subr.mxu0 0.0
        %6580 = vmatpush1.msra.mxu0 %v2608
        %6581 = vmatprep.subr.mxu0 0.0
        %6582 = vmatpush1.msra.mxu0 %v2609
        %6583 = vmatprep.subr.mxu0 0.0
        %6584 = vmatpush1.msra.mxu0 %v2610
        %6585 = vmatprep.subr.mxu0 0.0
        %6586 = vmatpush1.msra.mxu0 %v2611
        %6587 = vmatprep.subr.mxu0 0.0
        %6588 = vmatpush1.msra.mxu0 %v2612
        %6589 = vmatprep.subr.mxu0 0.0
        %6590 = vmatpush1.msra.mxu0 %v2613
        %6591 = vmatprep.subr.mxu0 0.0
        %6592 = vmatpush1.msra.mxu0 %v2614
        %6593 = vmatprep.subr.mxu0 0.0
        %6594 = vmatpush1.msra.mxu0 %v2615
        %6595 = vmatprep.subr.mxu0 0.0
        %6596 = vmatpush1.msra.mxu0 %v2616
        %6597 = vmatprep.subr.mxu0 0.0
        %6598 = vmatpush1.msra.mxu0 %v2617
        %6599 = vmatprep.subr.mxu0 0.0
        %6600 = vmatpush1.msra.mxu0 %v2618
        %6601 = vmatprep.subr.mxu0 0.0
        %6602 = vmatpush1.msra.mxu0 %v2619
        %6603 = vmatprep.subr.mxu0 0.0
        %6604 = vmatpush1.msra.mxu0 0.0
        %6605 = vmatprep.subr.mxu0 0.0
        %6606 = vmatpush1.msra.mxu0 0.0
        %6607 = vmatprep.subr.mxu0 0.0
        %6608 = vmatpush1.msra.mxu0 0.0
        %6609 = vmatprep.subr.mxu0 0.0
        %6610 = vmatpush1.msra.mxu0 0.0
        %6611 = vmatprep.subr.mxu0 0.0
        %6612 = vmatpush1.msra.mxu0 0.0
        %6613 = vmatprep.subr.mxu0 0.0
        %6614 = vmatpush1.msra.mxu0 0.0
        %6615 = vmatprep.subr.mxu0 0.0
        %6616 = vmatpush1.msra.mxu0 0.0
        %6617 = vmatprep.subr.mxu0 0.0
        %6618 = vmatpush1.msra.mxu0 0.0
        %6619 = vmatprep.subr.mxu0 0.0
        %6620 = vmatpush1.msra.mxu0 0.0
        %6621 = vmatprep.subr.mxu0 0.0
        %6622 = vmatpush1.msra.mxu0 0.0
        %6623 = vmatprep.subr.mxu0 0.0
        %6624 = vmatpush1.msra.mxu0 0.0
        %6625 = vmatprep.subr.mxu0 0.0
        %6626 = vmatpush1.msra.mxu0 0.0
        %6627 = vmatprep.subr.mxu0 0.0
        %6628 = vmatpush1.msra.mxu0 0.0
        %6629 = vmatprep.subr.mxu0 0.0
        %6630 = vmatpush1.msra.mxu0 0.0
        %6631 = vmatprep.subr.mxu0 0.0
        %6632 = vmatpush1.msra.mxu0 0.0
        %6633 = vmatprep.subr.mxu0 0.0
        %6634 = vmatpush1.msra.mxu0 0.0
        %6635 = vmatprep.mubr.f32.mxu0 0.0
        %6636 = vmatmul.mubr.f32.gmra.mrb[0].mxu0 %v6563
        %v6637 = vpop.f32.mrb[0].mxu0
        %v6638 = vadd.f32 0.0, %v6637
        %v6639 = vpop.f32.mrb[0].mxu0
        %6640 = vmatprep.mubr.f32.mxu0 0.0
        %6641 = vmatmul.mubr.f32.gmra.mrb[0].mxu0 %v6564
        %v6642 = vpop.f32.mrb[0].mxu0
        %v6643 = vadd.f32 0.0, %v6642
        %v6644 = vpop.f32.mrb[0].mxu0
        %6645 = vmatprep.mubr.f32.mxu0 0.0
        %6646 = vmatmul.mubr.f32.gmra.mrb[0].mxu0 %v6565
        %v6647 = vpop.f32.mrb[0].mxu0
        %v6648 = vadd.f32 0.0, %v6647
        %v6649 = vpop.f32.mrb[0].mxu0
        %6650 = vmatprep.mubr.f32.mxu0 0.0
        %6651 = vmatmul.mubr.f32.gmra.mrb[0].mxu0 %v6566
        %v6652 = vpop.f32.mrb[0].mxu0
        %v6653 = vadd.f32 0.0, %v6652
        %v6654 = vpop.f32.mrb[0].mxu0
        %6655 = vmatprep.mubr.f32.mxu0 0.0
        %6656 = vmatmul.mubr.f32.gmra.mrb[0].mxu0 %v6567
        %v6657 = vpop.f32.mrb[0].mxu0
        %v6658 = vadd.f32 0.0, %v6657
        %v6659 = vpop.f32.mrb[0].mxu0
        %6660 = vmatprep.mubr.f32.mxu0 0.0
        %6661 = vmatmul.mubr.f32.gmra.mrb[0].mxu0 %v6568
        %v6662 = vpop.f32.mrb[0].mxu0
        %v6663 = vadd.f32 0.0, %v6662
        %v6664 = vpop.f32.mrb[0].mxu0
        %6665 = vmatprep.mubr.f32.mxu0 0.0
        %6666 = vmatmul.mubr.f32.gmra.mrb[0].mxu0 %v6569
        %v6667 = vpop.f32.mrb[0].mxu0
        %v6668 = vadd.f32 0.0, %v6667
        %v6669 = vpop.f32.mrb[0].mxu0
        %6670 = vmatprep.mubr.f32.mxu0 0.0
        %6671 = vmatmul.mubr.f32.gmra.mrb[0].mxu0 %v6570
        %v6672 = vpop.f32.mrb[0].mxu0
        %v6673 = vadd.f32 0.0, %v6672
        %v6674 = vpop.f32.mrb[0].mxu0
        %6675 = vdwg.mxu0
        %v6676 = vadd.f32 %v6555, %v6638
        %v6677 = vadd.f32 %v6556, %v6643
        %v6678 = vadd.f32 %v6557, %v6648
        %v6679 = vadd.f32 %v6558, %v6653
        %v6680 = vadd.f32 %v6559, %v6658
        %v6681 = vadd.f32 %v6560, %v6663
        %v6682 = vadd.f32 %v6561, %v6668
        %v6683 = vadd.f32 %v6562, %v6673
        %v6684 = vld [vmem:[%s5706 + $0x1] sm:$0xff]
        %v6685 = vld [vmem:[%s5706 + $0x11] sm:$0xff]
        %v6686 = vld [vmem:[%s5706 + $0x21] sm:$0xff]
        %v6687 = vld [vmem:[%s5706 + $0x31] sm:$0xff]
        %v6688 = vld [vmem:[%s5706 + $0x41] sm:$0xff]
        %v6689 = vld [vmem:[%s5706 + $0x51] sm:$0xff]
        %v6690 = vld [vmem:[%s5706 + $0x61] sm:$0xff]
        %v6691 = vld [vmem:[%s5706 + $0x71] sm:$0xff]
        %6692 = vmatprep.subr.mxu0 0.0
        %6693 = vmatpush1.msra.mxu0 %v2621
        %6694 = vmatprep.subr.mxu0 0.0
        %6695 = vmatpush1.msra.mxu0 %v2622
        %6696 = vmatprep.subr.mxu0 0.0
        %6697 = vmatpush1.msra.mxu0 %v2623
        %6698 = vmatprep.subr.mxu0 0.0
        %6699 = vmatpush1.msra.mxu0 %v2624
        %6700 = vmatprep.subr.mxu0 0.0
        %6701 = vmatpush1.msra.mxu0 %v2625
        %6702 = vmatprep.subr.mxu0 0.0
        %6703 = vmatpush1.msra.mxu0 %v2626
        %6704 = vmatprep.subr.mxu0 0.0
        %6705 = vmatpush1.msra.mxu0 %v2627
        %6706 = vmatprep.subr.mxu0 0.0
        %6707 = vmatpush1.msra.mxu0 %v2628
        %6708 = vmatprep.subr.mxu0 0.0
        %6709 = vmatpush1.msra.mxu0 %v2629
        %6710 = vmatprep.subr.mxu0 0.0
        %6711 = vmatpush1.msra.mxu0 %v2630
        %6712 = vmatprep.subr.mxu0 0.0
        %6713 = vmatpush1.msra.mxu0 %v2631
        %6714 = vmatprep.subr.mxu0 0.0
        %6715 = vmatpush1.msra.mxu0 %v2632
        %6716 = vmatprep.subr.mxu0 0.0
        %6717 = vmatpush1.msra.mxu0 %v2633
        %6718 = vmatprep.subr.mxu0 0.0
        %6719 = vmatpush1.msra.mxu0 %v2634
        %6720 = vmatprep.subr.mxu0 0.0
        %6721 = vmatpush1.msra.mxu0 %v2635
        %6722 = vmatprep.subr.mxu0 0.0
        %6723 = vmatpush1.msra.mxu0 %v2636
        %6724 = vmatprep.subr.mxu0 0.0
        %6725 = vmatpush1.msra.mxu0 0.0
        %6726 = vmatprep.subr.mxu0 0.0
        %6727 = vmatpush1.msra.mxu0 0.0
        %6728 = vmatprep.subr.mxu0 0.0
        %6729 = vmatpush1.msra.mxu0 0.0
        %6730 = vmatprep.subr.mxu0 0.0
        %6731 = vmatpush1.msra.mxu0 0.0
        %6732 = vmatprep.subr.mxu0 0.0
        %6733 = vmatpush1.msra.mxu0 0.0
        %6734 = vmatprep.subr.mxu0 0.0
        %6735 = vmatpush1.msra.mxu0 0.0
        %6736 = vmatprep.subr.mxu0 0.0
        %6737 = vmatpush1.msra.mxu0 0.0
        %6738 = vmatprep.subr.mxu0 0.0
        %6739 = vmatpush1.msra.mxu0 0.0
        %6740 = vmatprep.subr.mxu0 0.0
        %6741 = vmatpush1.msra.mxu0 0.0
        %6742 = vmatprep.subr.mxu0 0.0
        %6743 = vmatpush1.msra.mxu0 0.0
        %6744 = vmatprep.subr.mxu0 0.0
        %6745 = vmatpush1.msra.mxu0 0.0
        %6746 = vmatprep.subr.mxu0 0.0
        %6747 = vmatpush1.msra.mxu0 0.0
        %6748 = vmatprep.subr.mxu0 0.0
        %6749 = vmatpush1.msra.mxu0 0.0
        %6750 = vmatprep.subr.mxu0 0.0
        %6751 = vmatpush1.msra.mxu0 0.0
        %6752 = vmatprep.subr.mxu0 0.0
        %6753 = vmatpush1.msra.mxu0 0.0
        %6754 = vmatprep.subr.mxu0 0.0
        %6755 = vmatpush1.msra.mxu0 0.0
        %6756 = vmatprep.mubr.f32.mxu0 0.0
        %6757 = vmatmul.mubr.f32.gmra.mrb[0].mxu0 %v6684
        %v6758 = vpop.f32.mrb[0].mxu0
        %v6759 = vadd.f32 0.0, %v6758
        %v6760 = vpop.f32.mrb[0].mxu0
        %6761 = vmatprep.mubr.f32.mxu0 0.0
        %6762 = vmatmul.mubr.f32.gmra.mrb[0].mxu0 %v6685
        %v6763 = vpop.f32.mrb[0].mxu0
        %v6764 = vadd.f32 0.0, %v6763
        %v6765 = vpop.f32.mrb[0].mxu0
        %6766 = vmatprep.mubr.f32.mxu0 0.0
        %6767 = vmatmul.mubr.f32.gmra.mrb[0].mxu0 %v6686
        %v6768 = vpop.f32.mrb[0].mxu0
        %v6769 = vadd.f32 0.0, %v6768
        %v6770 = vpop.f32.mrb[0].mxu0
        %6771 = vmatprep.mubr.f32.mxu0 0.0
        %6772 = vmatmul.mubr.f32.gmra.mrb[0].mxu0 %v6687
        %v6773 = vpop.f32.mrb[0].mxu0
        %v6774 = vadd.f32 0.0, %v6773
        %v6775 = vpop.f32.mrb[0].mxu0
        %6776 = vmatprep.mubr.f32.mxu0 0.0
        %6777 = vmatmul.mubr.f32.gmra.mrb[0].mxu0 %v6688
        %v6778 = vpop.f32.mrb[0].mxu0
        %v6779 = vadd.f32 0.0, %v6778
        %v6780 = vpop.f32.mrb[0].mxu0
        %6781 = vmatprep.mubr.f32.mxu0 0.0
        %6782 = vmatmul.mubr.f32.gmra.mrb[0].mxu0 %v6689
        %v6783 = vpop.f32.mrb[0].mxu0
        %v6784 = vadd.f32 0.0, %v6783
        %v6785 = vpop.f32.mrb[0].mxu0
        %6786 = vmatprep.mubr.f32.mxu0 0.0
        %6787 = vmatmul.mubr.f32.gmra.mrb[0].mxu0 %v6690
        %v6788 = vpop.f32.mrb[0].mxu0
        %v6789 = vadd.f32 0.0, %v6788
        %v6790 = vpop.f32.mrb[0].mxu0
        %6791 = vmatprep.mubr.f32.mxu0 0.0
        %6792 = vmatmul.mubr.f32.gmra.mrb[0].mxu0 %v6691
        %v6793 = vpop.f32.mrb[0].mxu0
        %v6794 = vadd.f32 0.0, %v6793
        %v6795 = vpop.f32.mrb[0].mxu0
        %6796 = vdwg.mxu0
        %v6797 = vadd.f32 %v6676, %v6759
        %v6798 = vadd.f32 %v6677, %v6764
        %v6799 = vadd.f32 %v6678, %v6769
        %v6800 = vadd.f32 %v6679, %v6774
        %v6801 = vadd.f32 %v6680, %v6779
        %v6802 = vadd.f32 %v6681, %v6784
        %v6803 = vadd.f32 %v6682, %v6789
        %v6804 = vadd.f32 %v6683, %v6794
        %v6805 = vld [vmem:[%s5584 + $0x1] sm:$0xff]
        %v6806 = vld [vmem:[%s5584 + $0x11] sm:$0xff]
        %v6807 = vld [vmem:[%s5584 + $0x21] sm:$0xff]
        %v6808 = vld [vmem:[%s5584 + $0x31] sm:$0xff]
        %v6809 = vld [vmem:[%s5584 + $0x41] sm:$0xff]
        %v6810 = vld [vmem:[%s5584 + $0x51] sm:$0xff]
        %v6811 = vld [vmem:[%s5584 + $0x61] sm:$0xff]
        %v6812 = vld [vmem:[%s5584 + $0x71] sm:$0xff]
        %6813 = vmatprep.subr.mxu0 0.0
        %6814 = vmatpush1.msra.mxu0 %v2638
        %6815 = vmatprep.subr.mxu0 0.0
        %6816 = vmatpush1.msra.mxu0 %v2639
        %6817 = vmatprep.subr.mxu0 0.0
        %6818 = vmatpush1.msra.mxu0 %v2640
        %6819 = vmatprep.subr.mxu0 0.0
        %6820 = vmatpush1.msra.mxu0 %v2641
        %6821 = vmatprep.subr.mxu0 0.0
        %6822 = vmatpush1.msra.mxu0 %v2642
        %6823 = vmatprep.subr.mxu0 0.0
        %6824 = vmatpush1.msra.mxu0 %v2643
        %6825 = vmatprep.subr.mxu0 0.0
        %6826 = vmatpush1.msra.mxu0 %v2644
        %6827 = vmatprep.subr.mxu0 0.0
        %6828 = vmatpush1.msra.mxu0 %v2645
        %6829 = vmatprep.subr.mxu0 0.0
        %6830 = vmatpush1.msra.mxu0 %v2646
        %6831 = vmatprep.subr.mxu0 0.0
        %6832 = vmatpush1.msra.mxu0 %v2647
        %6833 = vmatprep.subr.mxu0 0.0
        %6834 = vmatpush1.msra.mxu0 %v2648
        %6835 = vmatprep.subr.mxu0 0.0
        %6836 = vmatpush1.msra.mxu0 %v2649
        %6837 = vmatprep.subr.mxu0 0.0
        %6838 = vmatpush1.msra.mxu0 %v2650
        %6839 = vmatprep.subr.mxu0 0.0
        %6840 = vmatpush1.msra.mxu0 %v2651
        %6841 = vmatprep.subr.mxu0 0.0
        %6842 = vmatpush1.msra.mxu0 %v2652
        %6843 = vmatprep.subr.mxu0 0.0
        %6844 = vmatpush1.msra.mxu0 %v2653
        %6845 = vmatprep.subr.mxu0 0.0
        %6846 = vmatpush1.msra.mxu0 0.0
        %6847 = vmatprep.subr.mxu0 0.0
        %6848 = vmatpush1.msra.mxu0 0.0
        %6849 = vmatprep.subr.mxu0 0.0
        %6850 = vmatpush1.msra.mxu0 0.0
        %6851 = vmatprep.subr.mxu0 0.0
        %6852 = vmatpush1.msra.mxu0 0.0
        %6853 = vmatprep.subr.mxu0 0.0
        %6854 = vmatpush1.msra.mxu0 0.0
        %6855 = vmatprep.subr.mxu0 0.0
        %6856 = vmatpush1.msra.mxu0 0.0
        %6857 = vmatprep.subr.mxu0 0.0
        %6858 = vmatpush1.msra.mxu0 0.0
        %6859 = vmatprep.subr.mxu0 0.0
        %6860 = vmatpush1.msra.mxu0 0.0
        %6861 = vmatprep.subr.mxu0 0.0
        %6862 = vmatpush1.msra.mxu0 0.0
        %6863 = vmatprep.subr.mxu0 0.0
        %6864 = vmatpush1.msra.mxu0 0.0
        %6865 = vmatprep.subr.mxu0 0.0
        %6866 = vmatpush1.msra.mxu0 0.0
        %6867 = vmatprep.subr.mxu0 0.0
        %6868 = vmatpush1.msra.mxu0 0.0
        %6869 = vmatprep.subr.mxu0 0.0
        %6870 = vmatpush1.msra.mxu0 0.0
        %6871 = vmatprep.subr.mxu0 0.0
        %6872 = vmatpush1.msra.mxu0 0.0
        %6873 = vmatprep.subr.mxu0 0.0
        %6874 = vmatpush1.msra.mxu0 0.0
        %6875 = vmatprep.subr.mxu0 0.0
        %6876 = vmatpush1.msra.mxu0 0.0
        %6877 = vmatprep.mubr.f32.mxu0 0.0
        %6878 = vmatmul.mubr.f32.gmra.mrb[0].mxu0 %v6805
        %v6879 = vpop.f32.mrb[0].mxu0
        %v6880 = vadd.f32 0.0, %v6879
        %v6881 = vpop.f32.mrb[0].mxu0
        %6882 = vmatprep.mubr.f32.mxu0 0.0
        %6883 = vmatmul.mubr.f32.gmra.mrb[0].mxu0 %v6806
        %v6884 = vpop.f32.mrb[0].mxu0
        %v6885 = vadd.f32 0.0, %v6884
        %v6886 = vpop.f32.mrb[0].mxu0
        %6887 = vmatprep.mubr.f32.mxu0 0.0
        %6888 = vmatmul.mubr.f32.gmra.mrb[0].mxu0 %v6807
        %v6889 = vpop.f32.mrb[0].mxu0
        %v6890 = vadd.f32 0.0, %v6889
        %v6891 = vpop.f32.mrb[0].mxu0
        %6892 = vmatprep.mubr.f32.mxu0 0.0
        %6893 = vmatmul.mubr.f32.gmra.mrb[0].mxu0 %v6808
        %v6894 = vpop.f32.mrb[0].mxu0
        %v6895 = vadd.f32 0.0, %v6894
        %v6896 = vpop.f32.mrb[0].mxu0
        %6897 = vmatprep.mubr.f32.mxu0 0.0
        %6898 = vmatmul.mubr.f32.gmra.mrb[0].mxu0 %v6809
        %v6899 = vpop.f32.mrb[0].mxu0
        %v6900 = vadd.f32 0.0, %v6899
        %v6901 = vpop.f32.mrb[0].mxu0
        %6902 = vmatprep.mubr.f32.mxu0 0.0
        %6903 = vmatmul.mubr.f32.gmra.mrb[0].mxu0 %v6810
        %v6904 = vpop.f32.mrb[0].mxu0
        %v6905 = vadd.f32 0.0, %v6904
        %v6906 = vpop.f32.mrb[0].mxu0
        %6907 = vmatprep.mubr.f32.mxu0 0.0
        %6908 = vmatmul.mubr.f32.gmra.mrb[0].mxu0 %v6811
        %v6909 = vpop.f32.mrb[0].mxu0
        %v6910 = vadd.f32 0.0, %v6909
        %v6911 = vpop.f32.mrb[0].mxu0
        %6912 = vmatprep.mubr.f32.mxu0 0.0
        %6913 = vmatmul.mubr.f32.gmra.mrb[0].mxu0 %v6812
        %v6914 = vpop.f32.mrb[0].mxu0
        %v6915 = vadd.f32 0.0, %v6914
        %v6916 = vpop.f32.mrb[0].mxu0
        %6917 = vdwg.mxu0
        %v6918 = vadd.f32 %v6797, %v6880
        %v6919 = vadd.f32 %v6798, %v6885
        %v6920 = vadd.f32 %v6799, %v6890
        %v6921 = vadd.f32 %v6800, %v6895
        %v6922 = vadd.f32 %v6801, %v6900
        %v6923 = vadd.f32 %v6802, %v6905
        %v6924 = vadd.f32 %v6803, %v6910
        %v6925 = vadd.f32 %v6804, %v6915
        %v6926 = vld [vmem:[%s5706 + $0x2] sm:$0xff]
        %v6927 = vld [vmem:[%s5706 + $0x12] sm:$0xff]
        %v6928 = vld [vmem:[%s5706 + $0x22] sm:$0xff]
        %v6929 = vld [vmem:[%s5706 + $0x32] sm:$0xff]
        %v6930 = vld [vmem:[%s5706 + $0x42] sm:$0xff]
        %v6931 = vld [vmem:[%s5706 + $0x52] sm:$0xff]
        %v6932 = vld [vmem:[%s5706 + $0x62] sm:$0xff]
        %v6933 = vld [vmem:[%s5706 + $0x72] sm:$0xff]
        %6934 = vmatprep.subr.mxu0 0.0
        %6935 = vmatpush1.msra.mxu0 %v2655
        %6936 = vmatprep.subr.mxu0 0.0
        %6937 = vmatpush1.msra.mxu0 %v2656
        %6938 = vmatprep.subr.mxu0 0.0
        %6939 = vmatpush1.msra.mxu0 %v2657
        %6940 = vmatprep.subr.mxu0 0.0
        %6941 = vmatpush1.msra.mxu0 %v2658
        %6942 = vmatprep.subr.mxu0 0.0
        %6943 = vmatpush1.msra.mxu0 %v2659
        %6944 = vmatprep.subr.mxu0 0.0
        %6945 = vmatpush1.msra.mxu0 %v2660
        %6946 = vmatprep.subr.mxu0 0.0
        %6947 = vmatpush1.msra.mxu0 %v2661
        %6948 = vmatprep.subr.mxu0 0.0
        %6949 = vmatpush1.msra.mxu0 %v2662
        %6950 = vmatprep.subr.mxu0 0.0
        %6951 = vmatpush1.msra.mxu0 %v2663
        %6952 = vmatprep.subr.mxu0 0.0
        %6953 = vmatpush1.msra.mxu0 %v2664
        %6954 = vmatprep.subr.mxu0 0.0
        %6955 = vmatpush1.msra.mxu0 %v2665
        %6956 = vmatprep.subr.mxu0 0.0
        %6957 = vmatpush1.msra.mxu0 %v2666
        %6958 = vmatprep.subr.mxu0 0.0
        %6959 = vmatpush1.msra.mxu0 %v2667
        %6960 = vmatprep.subr.mxu0 0.0
        %6961 = vmatpush1.msra.mxu0 %v2668
        %6962 = vmatprep.subr.mxu0 0.0
        %6963 = vmatpush1.msra.mxu0 %v2669
        %6964 = vmatprep.subr.mxu0 0.0
        %6965 = vmatpush1.msra.mxu0 %v2670
        %6966 = vmatprep.subr.mxu0 0.0
        %6967 = vmatpush1.msra.mxu0 0.0
        %6968 = vmatprep.subr.mxu0 0.0
        %6969 = vmatpush1.msra.mxu0 0.0
        %6970 = vmatprep.subr.mxu0 0.0
        %6971 = vmatpush1.msra.mxu0 0.0
        %6972 = vmatprep.subr.mxu0 0.0
        %6973 = vmatpush1.msra.mxu0 0.0
        %6974 = vmatprep.subr.mxu0 0.0
        %6975 = vmatpush1.msra.mxu0 0.0
        %6976 = vmatprep.subr.mxu0 0.0
        %6977 = vmatpush1.msra.mxu0 0.0
        %6978 = vmatprep.subr.mxu0 0.0
        %6979 = vmatpush1.msra.mxu0 0.0
        %6980 = vmatprep.subr.mxu0 0.0
        %6981 = vmatpush1.msra.mxu0 0.0
        %6982 = vmatprep.subr.mxu0 0.0
        %6983 = vmatpush1.msra.mxu0 0.0
        %6984 = vmatprep.subr.mxu0 0.0
        %6985 = vmatpush1.msra.mxu0 0.0
        %6986 = vmatprep.subr.mxu0 0.0
        %6987 = vmatpush1.msra.mxu0 0.0
        %6988 = vmatprep.subr.mxu0 0.0
        %6989 = vmatpush1.msra.mxu0 0.0
        %6990 = vmatprep.subr.mxu0 0.0
        %6991 = vmatpush1.msra.mxu0 0.0
        %6992 = vmatprep.subr.mxu0 0.0
        %6993 = vmatpush1.msra.mxu0 0.0
        %6994 = vmatprep.subr.mxu0 0.0
        %6995 = vmatpush1.msra.mxu0 0.0
        %6996 = vmatprep.subr.mxu0 0.0
        %6997 = vmatpush1.msra.mxu0 0.0
        %6998 = vmatprep.mubr.f32.mxu0 0.0
        %6999 = vmatmul.mubr.f32.gmra.mrb[0].mxu0 %v6926
        %v7000 = vpop.f32.mrb[0].mxu0
        %v7001 = vadd.f32 0.0, %v7000
        %v7002 = vpop.f32.mrb[0].mxu0
        %7003 = vmatprep.mubr.f32.mxu0 0.0
        %7004 = vmatmul.mubr.f32.gmra.mrb[0].mxu0 %v6927
        %v7005 = vpop.f32.mrb[0].mxu0
        %v7006 = vadd.f32 0.0, %v7005
        %v7007 = vpop.f32.mrb[0].mxu0
        %7008 = vmatprep.mubr.f32.mxu0 0.0
        %7009 = vmatmul.mubr.f32.gmra.mrb[0].mxu0 %v6928
        %v7010 = vpop.f32.mrb[0].mxu0
        %v7011 = vadd.f32 0.0, %v7010
        %v7012 = vpop.f32.mrb[0].mxu0
        %7013 = vmatprep.mubr.f32.mxu0 0.0
        %7014 = vmatmul.mubr.f32.gmra.mrb[0].mxu0 %v6929
        %v7015 = vpop.f32.mrb[0].mxu0
        %v7016 = vadd.f32 0.0, %v7015
        %v7017 = vpop.f32.mrb[0].mxu0
        %7018 = vmatprep.mubr.f32.mxu0 0.0
        %7019 = vmatmul.mubr.f32.gmra.mrb[0].mxu0 %v6930
        %v7020 = vpop.f32.mrb[0].mxu0
        %v7021 = vadd.f32 0.0, %v7020
        %v7022 = vpop.f32.mrb[0].mxu0
        %7023 = vmatprep.mubr.f32.mxu0 0.0
        %7024 = vmatmul.mubr.f32.gmra.mrb[0].mxu0 %v6931
        %v7025 = vpop.f32.mrb[0].mxu0
        %v7026 = vadd.f32 0.0, %v7025
        %v7027 = vpop.f32.mrb[0].mxu0
        %7028 = vmatprep.mubr.f32.mxu0 0.0
        %7029 = vmatmul.mubr.f32.gmra.mrb[0].mxu0 %v6932
        %v7030 = vpop.f32.mrb[0].mxu0
        %v7031 = vadd.f32 0.0, %v7030
        %v7032 = vpop.f32.mrb[0].mxu0
        %7033 = vmatprep.mubr.f32.mxu0 0.0
        %7034 = vmatmul.mubr.f32.gmra.mrb[0].mxu0 %v6933
        %v7035 = vpop.f32.mrb[0].mxu0
        %v7036 = vadd.f32 0.0, %v7035
        %v7037 = vpop.f32.mrb[0].mxu0
        %7038 = vdwg.mxu0
        %v7039 = vadd.f32 %v6918, %v7001
        %v7040 = vadd.f32 %v6919, %v7006
        %v7041 = vadd.f32 %v6920, %v7011
        %v7042 = vadd.f32 %v6921, %v7016
        %v7043 = vadd.f32 %v6922, %v7021
        %v7044 = vadd.f32 %v6923, %v7026
        %v7045 = vadd.f32 %v6924, %v7031
        %v7046 = vadd.f32 %v6925, %v7036
        %v7047 = vadd.f32 %v7039, %v3751
        %v7048 = vadd.f32 %v7040, %v3751
        %v7049 = vadd.f32 %v7041, %v3751
        %v7050 = vadd.f32 %v7042, %v3751
        %v7051 = vadd.f32 %v7043, %v3751
        %v7052 = vadd.f32 %v7044, %v3751
        %v7053 = vadd.f32 %v7045, %v3751
        %v7054 = vadd.f32 %v7046, %v3751
        %v7055 = vmax.f32 %v7047, 0.0
        %v7056 = vmax.f32 %v7048, 0.0
        %v7057 = vmax.f32 %v7049, 0.0
        %v7058 = vmax.f32 %v7050, 0.0
        %v7059 = vmax.f32 %v7051, 0.0
        %v7060 = vmax.f32 %v7052, 0.0
        %v7061 = vmax.f32 %v7053, 0.0
        %v7062 = vmax.f32 %v7054, 0.0
        %7063 = vst [vmem:[%s5965 + $0x8] sm:$0xff] %v7055
        %7064 = vst [vmem:[%s5965 + $0x28] sm:$0xff] %v7056
        %7065 = vst [vmem:[%s5965 + $0x48] sm:$0xff] %v7057
        %7066 = vst [vmem:[%s5965 + $0x68] sm:$0xff] %v7058
        %7067 = vst [vmem:[%s5965 + $0x88] sm:$0xff] %v7059
        %7068 = vst [vmem:[%s5965 + $0xa8] sm:$0xff] %v7060
        %7069 = vst [vmem:[%s5965 + $0xc8] sm:$0xff] %v7061
        %7070 = vst [vmem:[%s5965 + $0xe8] sm:$0xff] %v7062
        %s7071 = sand.u32 %s193, 1
        %s7072 = scalar_lea.sflag [#allocation7], %s7071
        %s7073 = sand.u32 %s193, 1
        %s7074 = smul.addr %s7073, 256
        %s7075 = scalar_lea.vmem [#allocation13], %s7074
        // Predicated region
        $region65: #{tpu_custom_call.1} parent=47 // pred_check
          %p7076 = pneg %p203
        $region66: #{tpu_custom_call.1} parent=47 // pred_check_branch
          %7078 = sbr.rel (%p7076) target = $region68
        $region67: #{tpu_custom_call.1} parent=47 // pred_region
          %s7080 = ssub.s32 4096, 4096
          %7081 = vsyncadd %s7072, %s7080
          %s7082 = smul.addr %s28, 32
          %s7083 = smul.addr %s7082, 128
          %s7084 = scalar_lea.hbm %s7, %s7083
          %s7085 = sshll.u32 %s7075, 4
          %s7086 = int_to_ptr.vmem [resolvable:$true] %s7085
          %7091 = dma.vmem_to_hbm [thread:$0]  %s7086, 4096, %s7084, %s7072, 256, 256, 16
        $region68: #{tpu_custom_call.1} parent=47 // pred_fallthru
          _
      $region48: #{tpu_custom_call.1} parent=5 // pred_fallthru
        _
      %p7092 = scmp.le.s32.totalorder 2, %s23
      // Predicated region
      $region69: #{tpu_custom_call.1} parent=5 // pred_check
        %p7093 = pneg %p7092
      $region70: #{tpu_custom_call.1} parent=5 // pred_check_branch
        %7095 = sbr.rel (%p7093) target = $region72
      $region71: #{tpu_custom_call.1} parent=5 // pred_region
        %s7096 = ssub.s32 %s23, 2
        // Predicated region
        $region73: #{tpu_custom_call.1} parent=71 // pred_check
          %p7097 = pneg %p209
        $region74: #{tpu_custom_call.1} parent=71 // pred_check_branch
          %7099 = sbr.rel (%p7097) target = $region76
        $region75: #{tpu_custom_call.1} parent=71 // pred_region
          %s7100 = sand.u32 %s194, 1
          %s7101 = scalar_lea.sflag [#allocation7], %s7100
          %s7102 = sand.u32 %s194, 1
          %s7103 = smul.addr %s7102, 256
          %s7104 = scalar_lea.vmem [#allocation13], %s7103
          %7105 = dma.done %s7101, 4096
        $region76: #{tpu_custom_call.1} parent=71 // pred_fallthru
          _
      $region72: #{tpu_custom_call.1} parent=5 // pred_fallthru
        _
    $region6: #{tpu_custom_call.1} parent=1 // loop_footer
      %s27 = sadd.s32 1, %s23
    $region7: #{tpu_custom_call.1} parent=1 // loop_footer_branch
      %22 = sbr.rel target = $region3
    $region8: #{tpu_custom_call.1} parent=1 // loop_exit
      _
    %7106 = vsyncpa [#allocation6], 1
    %s7107 = scalar_lea.sflag [#allocation6], 1
    %7108 = vsyncpa %s7107, 1
    %7109 = vsyncpa [#allocation9], 1
    %s7110 = scalar_lea.sflag [#allocation9], 1
    %7111 = vsyncpa %s7110, 1
    %7112 = vsyncpa [#allocation12], 1
    %7113 = vsyncpa [#allocation7], 1
    %s7114 = scalar_lea.sflag [#allocation7], 1
    %7115 = vsyncpa %s7114, 1

</llo_original>
